<compile_context>
chip_gen: v7x
topology: tpu7x:2x2x1
jax: 0.10.0
libtpu: 0.0.40
codegen_flags: <defaults>
</compile_context>

<pallas_src>
import functools

import jax
import jax.numpy as jnp
from jax import lax
from jax.experimental import pallas as pl
from jax.experimental.pallas import tpu as pltpu


# ---------------------------------------------------------------------------
# Pallas kernel: the whole Block for `B` samples per grid step
# ---------------------------------------------------------------------------
def _block_kernel(x_ref, w1_ref, w2_ref, o_ref, patch1_ref, patch2_ref, *,
                  B, H, W, Cin, Cout, eps, use_norm):
    """x_ref:      (B, P2, Cin)       zero-padded, spatially-flattened images (bf16)
       w1_ref:     (9*Cin, Cout)      conv1 weights, rows tap-major             (bf16)
       w2_ref:     (9*Cout, Cout)     conv2 weights, rows tap-major             (bf16)
       o_ref:      (B, H*W, Cout)     compact output rows h*W + w               (f32)
       patch1_ref: (B*M, 9*Cin)       conv1 im2col scratch                      (bf16)
       patch2_ref: (B*M, 9*Cout)      conv2 im2col scratch                      (bf16)
       with M = H*(W+2): conv rows carry 2 junk columns per image row (masked out).
    """
    Wp = W + 2
    M = H * Wp                 # conv row space per sample
    BM = B * M
    ctr = Wp + 1               # flat offset of interior origin in a padded image

    # ---- conv1: build im2col patch (BM, 9*Cin), then ONE MXU matmul ---------
    for b in range(B):
        for tap in range(9):
            off = (tap // 3) * Wp + (tap % 3)            # static row shift
            patch1_ref[pl.ds(b * M, M), pl.ds(tap * Cin, Cin)] = \
                x_ref[b, pl.ds(off, M), :]

    acc1 = jnp.dot(patch1_ref[...], w1_ref[...],
                   preferred_element_type=jnp.float32)    # (BM, Cout) f32

    # ReLU + zero junk columns (they double as conv2's left/right border zeros).
    # Mask is a (BM, 1) predicate, used once and dropped (not live across matmuls).
    valid1 = (lax.broadcasted_iota(jnp.int32, (BM, 1), 0) % Wp) < W
    y1 = jnp.where(valid1, jnp.maximum(acc1, 0.0), 0.0).astype(jnp.bfloat16)

    # ---- conv2: scatter y1 straight into the (BM, 9*Cout) im2col patch ------
    # patch2[r, tap_block] = padded_conv1[r + off]; interior rows come from y1,
    # the (small) head/tail border row ranges are explicitly zeroed each step.
    for b in range(B):
        for tap in range(9):
            off = (tap // 3) * Wp + (tap % 3)
            d = off - ctr                                 # shift in y1 row space
            lo = max(0, -d)                               # interior dest rows [lo, hi)
            hi = M - max(0, d)
            cols = pl.ds(tap * Cout, Cout)
            if lo > 0:                                    # top border rows -> 0
                patch2_ref[pl.ds(b * M, lo), cols] = jnp.zeros((lo, Cout), jnp.bfloat16)
            if hi < M:                                    # bottom border rows -> 0
                patch2_ref[pl.ds(b * M + hi, M - hi), cols] = \
                    jnp.zeros((M - hi, Cout), jnp.bfloat16)
            src = b * M + max(0, d)
            patch2_ref[pl.ds(b * M + lo, hi - lo), cols] = y1[src:src + (hi - lo), :]

    acc2 = jnp.dot(patch2_ref[...], w2_ref[...],
                   preferred_element_type=jnp.float32)    # (BM, Cout) f32

    # ---- fused epilogue: InstanceNorm2d(affine=False) + ReLU + compact store -
    valid2 = (lax.broadcasted_iota(jnp.int32, (M, 1), 0) % Wp) < W
    inv_n = 1.0 / float(H * W)
    for b in range(B):
        xb = acc2[b * M:(b + 1) * M, :]                   # 8-aligned static slice
        if use_norm:
            xv = jnp.where(valid2, xb, 0.0)               # exclude junk columns
            s = jnp.sum(xv, axis=0, keepdims=True)        # (1, Cout)
            ss = jnp.sum(xv * xv, axis=0, keepdims=True)  # single-pass stats
            mean = s * inv_n
            var = jnp.maximum(ss * inv_n - mean * mean, 0.0)   # biased variance
            yb = jnp.maximum((xb - mean) * lax.rsqrt(var + eps), 0.0)
        else:
            yb = jnp.maximum(xb, 0.0)
        yb = yb.astype(o_ref.dtype)
        # compact store: drop the 2 junk columns of each image row in-kernel
        for h in range(H):
            o_ref[b, pl.ds(h * W, W), :] = yb[h * Wp:h * Wp + W, :]


# ---------------------------------------------------------------------------
# Wrapper (glue: pad/flatten input, re-pack weights; output needs only a reshape)
# ---------------------------------------------------------------------------
def block_forward(params, x, *, normalization_layer="instance", eps=1e-5,
                  samples_per_step=1):
    """Forward of the PyTorch `Block` module. x is NHWC (Nb, H, W, Cin)."""
    if normalization_layer in ("batch", "spectral"):
        # TODO(synk): 'batch' (running stats) and 'spectral' norms are not lowered.
        raise NotImplementedError(normalization_layer)

    Nb, H, W, Cin = x.shape
    w1, w2 = params["w1"], params["w2"]                   # (Cout,Cin,3,3), (Cout,Cout,3,3)
    assert w1.shape[1:] == (Cin, 3, 3) and w2.shape[2:] == (3, 3)
    Cout = w1.shape[0]
    assert w2.shape[:2] == (Cout, Cout)

    B_blk = samples_per_step
    assert Nb % B_blk == 0, (Nb, B_blk)

    Wp = W + 2
    P = (H + 2) * Wp
    P2 = ((P + 2 + 7) // 8) * 8                # >= P+2 slack so shifted reads stay in-bounds
    M = H * Wp

    # zero-pad once, flatten spatial dims to rows, cast to bf16 (half the DMA bytes)
    xp = jnp.pad(x, ((0, 0), (1, 1), (1, 1), (0, 0)))
    x_flat = jnp.pad(xp.reshape(Nb, P, Cin),
                     ((0, 0), (0, P2 - P), (0, 0))).astype(jnp.bfloat16)

    # tap-major (kh, kw, ci) rows -> single matmul RHS per conv, bf16 for the MXU
    w1_mat = jnp.transpose(w1, (2, 3, 1, 0)).reshape(9 * Cin, Cout).astype(jnp.bfloat16)
    w2_mat = jnp.transpose(w2, (2, 3, 1, 0)).reshape(9 * Cout, Cout).astype(jnp.bfloat16)

    use_norm = normalization_layer != "False"
    kernel = functools.partial(_block_kernel, B=B_blk, H=H, W=W, Cin=Cin,
                               Cout=Cout, eps=eps, use_norm=use_norm)

    out = pl.pallas_call(
        kernel,
        out_shape=jax.ShapeDtypeStruct((Nb, H * W, Cout), jnp.float32),
        grid_spec=pltpu.PrefetchScalarGridSpec(
            num_scalar_prefetch=0,
            grid=(Nb // B_blk,),                          # B_blk samples per step
            in_specs=[
                pl.BlockSpec((B_blk, P2, Cin), lambda n: (n, 0, 0)),
                pl.BlockSpec((9 * Cin, Cout), lambda n: (0, 0)),
                pl.BlockSpec((9 * Cout, Cout), lambda n: (0, 0)),
            ],
            out_specs=pl.BlockSpec((B_blk, H * W, Cout), lambda n: (n, 0, 0)),
            scratch_shapes=[
                pltpu.VMEM((B_blk * M, 9 * Cin), jnp.bfloat16),   # conv1 im2col
                pltpu.VMEM((B_blk * M, 9 * Cout), jnp.bfloat16),  # conv2 im2col
            ],
        ),
        compiler_params=pltpu.CompilerParams(
            dimension_semantics=("parallel",),
            vmem_limit_bytes=32 * 1024 * 1024,            # modest; safe on v5e/v6e/v7x
        ),
    )(x_flat, w1_mat, w2_mat)

    # output is already compact -> reshape is metadata-only (no extra HBM pass)
    return out.reshape(Nb, H, W, Cout)


# ---------------------------------------------------------------------------
# Pure-JAX reference (module semantics, f32)
# ---------------------------------------------------------------------------
def _block_reference(params, x, *, normalization_layer="instance", eps=1e-5):
    def conv(a, w):
        w_hwio = jnp.transpose(w, (2, 3, 1, 0))
        return lax.conv_general_dilated(a, w_hwio, (1, 1), "SAME",
                                        dimension_numbers=("NHWC", "HWIO", "NHWC"))
    y = jax.nn.relu(conv(x, params["w1"]))
    y = conv(y, params["w2"])
    if normalization_layer != "False":
        mean = jnp.mean(y, axis=(1, 2), keepdims=True)
        var = jnp.var(y, axis=(1, 2), keepdims=True)      # biased, like InstanceNorm2d
        y = (y - mean) * lax.rsqrt(var + eps)
    return jax.nn.relu(y)


# ---------------------------------------------------------------------------
# Main
# ---------------------------------------------------------------------------
if __name__ == "__main__":
    Nb, H, W, Cin, Cout = 4, 16, 16, 4, 32
    key = jax.random.PRNGKey(0)
    kx, k1, k2 = jax.random.split(key, 3)

    x = jax.random.normal(kx, (Nb, H, W, Cin), jnp.float32)          # NHWC
    params = {
        "w1": jax.random.normal(k1, (Cout, Cin, 3, 3), jnp.float32) / jnp.sqrt(9.0 * Cin),
        "w2": jax.random.normal(k2, (Cout, Cout, 3, 3), jnp.float32) / jnp.sqrt(9.0 * Cout),
    }

    ref = _block_reference(params, x, normalization_layer="instance")

    # primary path: 2 samples per grid step (grid length stays a multiple of 2)
    fwd2 = jax.jit(functools.partial(block_forward, normalization_layer="instance",
                                     samples_per_step=2))
    out2 = jax.block_until_ready(fwd2(params, x))
    assert out2.shape == (Nb, H, W, Cout), out2.shape
    assert bool(jnp.all(jnp.isfinite(out2)))
    err2 = float(jnp.max(jnp.abs(out2 - ref)))
    # bf16 MXU operands vs. f32 reference -> small numerical noise only
    assert err2 < 0.25, f"max abs err (2 samples/step) vs reference: {err2}"

    # also exercise the 1-sample-per-step path
    fwd1 = jax.jit(functools.partial(block_forward, normalization_layer="instance",
                                     samples_per_step=1))
    out1 = jax.block_until_ready(fwd1(params, x))
    err1 = float(jnp.max(jnp.abs(out1 - ref)))
    assert err1 < 0.25, f"max abs err (1 sample/step) vs reference: {err1}"

    print("KERNEL_OK")
</pallas_src>

<mosaic_0001>
module attributes {stable_mosaic.version = 11 : i64} {
  func.func @_block_kernel(%arg0: i32, %arg1: memref<2x328x4xbf16, #tpu.memory_space<vmem>>, %arg2: memref<36x32xbf16, #tpu.memory_space<vmem>>, %arg3: memref<288x32xbf16, #tpu.memory_space<vmem>>, %arg4: memref<2x256x32xf32, #tpu.memory_space<vmem>>, %arg5: memref<576x36xbf16, #tpu.memory_space<vmem>>, %arg6: memref<576x288xbf16, #tpu.memory_space<vmem>>) attributes {dimension_semantics = [#tpu.dimension_semantics<parallel>], iteration_bounds = array<i64: 2>, scalar_prefetch = 0 : i64, scratch_operands = 2 : i64, tpu.core_type = #tpu.core_type<tc>, window_params = [{transform_indices = @transform_0, window_bounds = array<i64: 2, 328, 4>}, {pipeline_mode = #tpu.pipeline_mode<synchronous>, transform_indices = @transform_1, window_bounds = array<i64: 36, 32>}, {pipeline_mode = #tpu.pipeline_mode<synchronous>, transform_indices = @transform_2, window_bounds = array<i64: 288, 32>}, {transform_indices = @transform_3, window_bounds = array<i64: 2, 256, 32>}]} {
    %c0 = arith.constant 0 : index
    %c0_0 = arith.constant 0 : index
    %c0_1 = arith.constant 0 : index
    %0 = vector.load %arg1[%c0, %c0_0, %c0_1] : memref<2x328x4xbf16, #tpu.memory_space<vmem>>, vector<1x288x4xbf16>
    %1 = vector.shape_cast %0 : vector<1x288x4xbf16> to vector<288x4xbf16>
    %c0_2 = arith.constant 0 : index
    %c0_3 = arith.constant 0 : index
    %2 = vector.load %arg5[%c0_2, %c0_3] : memref<576x36xbf16, #tpu.memory_space<vmem>>, vector<288x4xbf16>
    tpu.vector_store %arg5[%c0_2, %c0_3], %1 {strides = array<i32>} : memref<576x36xbf16, #tpu.memory_space<vmem>>, vector<288x4xbf16>,
    %c0_4 = arith.constant 0 : index
    %c1 = arith.constant 1 : index
    %c0_5 = arith.constant 0 : index
    %3 = vector.load %arg1[%c0_4, %c1, %c0_5] : memref<2x328x4xbf16, #tpu.memory_space<vmem>>, vector<1x288x4xbf16>
    %4 = vector.shape_cast %3 : vector<1x288x4xbf16> to vector<288x4xbf16>
    %c0_6 = arith.constant 0 : index
    %c4 = arith.constant 4 : index
    %5 = vector.load %arg5[%c0_6, %c4] : memref<576x36xbf16, #tpu.memory_space<vmem>>, vector<288x4xbf16>
    tpu.vector_store %arg5[%c0_6, %c4], %4 {strides = array<i32>} : memref<576x36xbf16, #tpu.memory_space<vmem>>, vector<288x4xbf16>,
    %c0_7 = arith.constant 0 : index
    %c2 = arith.constant 2 : index
    %c0_8 = arith.constant 0 : index
    %6 = vector.load %arg1[%c0_7, %c2, %c0_8] : memref<2x328x4xbf16, #tpu.memory_space<vmem>>, vector<1x288x4xbf16>
    %7 = vector.shape_cast %6 : vector<1x288x4xbf16> to vector<288x4xbf16>
    %c0_9 = arith.constant 0 : index
    %c8 = arith.constant 8 : index
    %8 = vector.load %arg5[%c0_9, %c8] : memref<576x36xbf16, #tpu.memory_space<vmem>>, vector<288x4xbf16>
    tpu.vector_store %arg5[%c0_9, %c8], %7 {strides = array<i32>} : memref<576x36xbf16, #tpu.memory_space<vmem>>, vector<288x4xbf16>,
    %c0_10 = arith.constant 0 : index
    %c18 = arith.constant 18 : index
    %c0_11 = arith.constant 0 : index
    %9 = vector.load %arg1[%c0_10, %c18, %c0_11] : memref<2x328x4xbf16, #tpu.memory_space<vmem>>, vector<1x288x4xbf16>
    %10 = vector.shape_cast %9 : vector<1x288x4xbf16> to vector<288x4xbf16>
    %c0_12 = arith.constant 0 : index
    %c12 = arith.constant 12 : index
    %11 = vector.load %arg5[%c0_12, %c12] : memref<576x36xbf16, #tpu.memory_space<vmem>>, vector<288x4xbf16>
    tpu.vector_store %arg5[%c0_12, %c12], %10 {strides = array<i32>} : memref<576x36xbf16, #tpu.memory_space<vmem>>, vector<288x4xbf16>,
    %c0_13 = arith.constant 0 : index
    %c19 = arith.constant 19 : index
    %c0_14 = arith.constant 0 : index
    %12 = vector.load %arg1[%c0_13, %c19, %c0_14] : memref<2x328x4xbf16, #tpu.memory_space<vmem>>, vector<1x288x4xbf16>
    %13 = vector.shape_cast %12 : vector<1x288x4xbf16> to vector<288x4xbf16>
    %c0_15 = arith.constant 0 : index
    %c16 = arith.constant 16 : index
    %14 = vector.load %arg5[%c0_15, %c16] : memref<576x36xbf16, #tpu.memory_space<vmem>>, vector<288x4xbf16>
    tpu.vector_store %arg5[%c0_15, %c16], %13 {strides = array<i32>} : memref<576x36xbf16, #tpu.memory_space<vmem>>, vector<288x4xbf16>,
    %c0_16 = arith.constant 0 : index
    %c20 = arith.constant 20 : index
    %c0_17 = arith.constant 0 : index
    %15 = vector.load %arg1[%c0_16, %c20, %c0_17] : memref<2x328x4xbf16, #tpu.memory_space<vmem>>, vector<1x288x4xbf16>
    %16 = vector.shape_cast %15 : vector<1x288x4xbf16> to vector<288x4xbf16>
    %c0_18 = arith.constant 0 : index
    %c20_19 = arith.constant 20 : index
    %17 = vector.load %arg5[%c0_18, %c20_19] : memref<576x36xbf16, #tpu.memory_space<vmem>>, vector<288x4xbf16>
    tpu.vector_store %arg5[%c0_18, %c20_19], %16 {strides = array<i32>} : memref<576x36xbf16, #tpu.memory_space<vmem>>, vector<288x4xbf16>,
    %c0_20 = arith.constant 0 : index
    %c36 = arith.constant 36 : index
    %c0_21 = arith.constant 0 : index
    %18 = vector.load %arg1[%c0_20, %c36, %c0_21] : memref<2x328x4xbf16, #tpu.memory_space<vmem>>, vector<1x288x4xbf16>
    %19 = vector.shape_cast %18 : vector<1x288x4xbf16> to vector<288x4xbf16>
    %c0_22 = arith.constant 0 : index
    %c24 = arith.constant 24 : index
    %20 = vector.load %arg5[%c0_22, %c24] : memref<576x36xbf16, #tpu.memory_space<vmem>>, vector<288x4xbf16>
    tpu.vector_store %arg5[%c0_22, %c24], %19 {strides = array<i32>} : memref<576x36xbf16, #tpu.memory_space<vmem>>, vector<288x4xbf16>,
    %c0_23 = arith.constant 0 : index
    %c37 = arith.constant 37 : index
    %c0_24 = arith.constant 0 : index
    %21 = vector.load %arg1[%c0_23, %c37, %c0_24] : memref<2x328x4xbf16, #tpu.memory_space<vmem>>, vector<1x288x4xbf16>
    %22 = vector.shape_cast %21 : vector<1x288x4xbf16> to vector<288x4xbf16>
    %c0_25 = arith.constant 0 : index
    %c28 = arith.constant 28 : index
    %23 = vector.load %arg5[%c0_25, %c28] : memref<576x36xbf16, #tpu.memory_space<vmem>>, vector<288x4xbf16>
    tpu.vector_store %arg5[%c0_25, %c28], %22 {strides = array<i32>} : memref<576x36xbf16, #tpu.memory_space<vmem>>, vector<288x4xbf16>,
    %c0_26 = arith.constant 0 : index
    %c38 = arith.constant 38 : index
    %c0_27 = arith.constant 0 : index
    %24 = vector.load %arg1[%c0_26, %c38, %c0_27] : memref<2x328x4xbf16, #tpu.memory_space<vmem>>, vector<1x288x4xbf16>
    %25 = vector.shape_cast %24 : vector<1x288x4xbf16> to vector<288x4xbf16>
    %c0_28 = arith.constant 0 : index
    %c32 = arith.constant 32 : index
    %26 = vector.load %arg5[%c0_28, %c32] : memref<576x36xbf16, #tpu.memory_space<vmem>>, vector<288x4xbf16>
    tpu.vector_store %arg5[%c0_28, %c32], %25 {strides = array<i32>} : memref<576x36xbf16, #tpu.memory_space<vmem>>, vector<288x4xbf16>,
    %c1_29 = arith.constant 1 : index
    %c0_30 = arith.constant 0 : index
    %c0_31 = arith.constant 0 : index
    %27 = vector.load %arg1[%c1_29, %c0_30, %c0_31] : memref<2x328x4xbf16, #tpu.memory_space<vmem>>, vector<1x288x4xbf16>
    %28 = vector.shape_cast %27 : vector<1x288x4xbf16> to vector<288x4xbf16>
    %c288 = arith.constant 288 : index
    %c0_32 = arith.constant 0 : index
    %29 = vector.load %arg5[%c288, %c0_32] : memref<576x36xbf16, #tpu.memory_space<vmem>>, vector<288x4xbf16>
    tpu.vector_store %arg5[%c288, %c0_32], %28 {strides = array<i32>} : memref<576x36xbf16, #tpu.memory_space<vmem>>, vector<288x4xbf16>,
    %c1_33 = arith.constant 1 : index
    %c1_34 = arith.constant 1 : index
    %c0_35 = arith.constant 0 : index
    %30 = vector.load %arg1[%c1_33, %c1_34, %c0_35] : memref<2x328x4xbf16, #tpu.memory_space<vmem>>, vector<1x288x4xbf16>
    %31 = vector.shape_cast %30 : vector<1x288x4xbf16> to vector<288x4xbf16>
    %c288_36 = arith.constant 288 : index
    %c4_37 = arith.constant 4 : index
    %32 = vector.load %arg5[%c288_36, %c4_37] : memref<576x36xbf16, #tpu.memory_space<vmem>>, vector<288x4xbf16>
    tpu.vector_store %arg5[%c288_36, %c4_37], %31 {strides = array<i32>} : memref<576x36xbf16, #tpu.memory_space<vmem>>, vector<288x4xbf16>,
    %c1_38 = arith.constant 1 : index
    %c2_39 = arith.constant 2 : index
    %c0_40 = arith.constant 0 : index
    %33 = vector.load %arg1[%c1_38, %c2_39, %c0_40] : memref<2x328x4xbf16, #tpu.memory_space<vmem>>, vector<1x288x4xbf16>
    %34 = vector.shape_cast %33 : vector<1x288x4xbf16> to vector<288x4xbf16>
    %c288_41 = arith.constant 288 : index
    %c8_42 = arith.constant 8 : index
    %35 = vector.load %arg5[%c288_41, %c8_42] : memref<576x36xbf16, #tpu.memory_space<vmem>>, vector<288x4xbf16>
    tpu.vector_store %arg5[%c288_41, %c8_42], %34 {strides = array<i32>} : memref<576x36xbf16, #tpu.memory_space<vmem>>, vector<288x4xbf16>,
    %c1_43 = arith.constant 1 : index
    %c18_44 = arith.constant 18 : index
    %c0_45 = arith.constant 0 : index
    %36 = vector.load %arg1[%c1_43, %c18_44, %c0_45] : memref<2x328x4xbf16, #tpu.memory_space<vmem>>, vector<1x288x4xbf16>
    %37 = vector.shape_cast %36 : vector<1x288x4xbf16> to vector<288x4xbf16>
    %c288_46 = arith.constant 288 : index
    %c12_47 = arith.constant 12 : index
    %38 = vector.load %arg5[%c288_46, %c12_47] : memref<576x36xbf16, #tpu.memory_space<vmem>>, vector<288x4xbf16>
    tpu.vector_store %arg5[%c288_46, %c12_47], %37 {strides = array<i32>} : memref<576x36xbf16, #tpu.memory_space<vmem>>, vector<288x4xbf16>,
    %c1_48 = arith.constant 1 : index
    %c19_49 = arith.constant 19 : index
    %c0_50 = arith.constant 0 : index
    %39 = vector.load %arg1[%c1_48, %c19_49, %c0_50] : memref<2x328x4xbf16, #tpu.memory_space<vmem>>, vector<1x288x4xbf16>
    %40 = vector.shape_cast %39 : vector<1x288x4xbf16> to vector<288x4xbf16>
    %c288_51 = arith.constant 288 : index
    %c16_52 = arith.constant 16 : index
    %41 = vector.load %arg5[%c288_51, %c16_52] : memref<576x36xbf16, #tpu.memory_space<vmem>>, vector<288x4xbf16>
    tpu.vector_store %arg5[%c288_51, %c16_52], %40 {strides = array<i32>} : memref<576x36xbf16, #tpu.memory_space<vmem>>, vector<288x4xbf16>,
    %c1_53 = arith.constant 1 : index
    %c20_54 = arith.constant 20 : index
    %c0_55 = arith.constant 0 : index
    %42 = vector.load %arg1[%c1_53, %c20_54, %c0_55] : memref<2x328x4xbf16, #tpu.memory_space<vmem>>, vector<1x288x4xbf16>
    %43 = vector.shape_cast %42 : vector<1x288x4xbf16> to vector<288x4xbf16>
    %c288_56 = arith.constant 288 : index
    %c20_57 = arith.constant 20 : index
    %44 = vector.load %arg5[%c288_56, %c20_57] : memref<576x36xbf16, #tpu.memory_space<vmem>>, vector<288x4xbf16>
    tpu.vector_store %arg5[%c288_56, %c20_57], %43 {strides = array<i32>} : memref<576x36xbf16, #tpu.memory_space<vmem>>, vector<288x4xbf16>,
    %c1_58 = arith.constant 1 : index
    %c36_59 = arith.constant 36 : index
    %c0_60 = arith.constant 0 : index
    %45 = vector.load %arg1[%c1_58, %c36_59, %c0_60] : memref<2x328x4xbf16, #tpu.memory_space<vmem>>, vector<1x288x4xbf16>
    %46 = vector.shape_cast %45 : vector<1x288x4xbf16> to vector<288x4xbf16>
    %c288_61 = arith.constant 288 : index
    %c24_62 = arith.constant 24 : index
    %47 = vector.load %arg5[%c288_61, %c24_62] : memref<576x36xbf16, #tpu.memory_space<vmem>>, vector<288x4xbf16>
    tpu.vector_store %arg5[%c288_61, %c24_62], %46 {strides = array<i32>} : memref<576x36xbf16, #tpu.memory_space<vmem>>, vector<288x4xbf16>,
    %c1_63 = arith.constant 1 : index
    %c37_64 = arith.constant 37 : index
    %c0_65 = arith.constant 0 : index
    %48 = vector.load %arg1[%c1_63, %c37_64, %c0_65] : memref<2x328x4xbf16, #tpu.memory_space<vmem>>, vector<1x288x4xbf16>
    %49 = vector.shape_cast %48 : vector<1x288x4xbf16> to vector<288x4xbf16>
    %c288_66 = arith.constant 288 : index
    %c28_67 = arith.constant 28 : index
    %50 = vector.load %arg5[%c288_66, %c28_67] : memref<576x36xbf16, #tpu.memory_space<vmem>>, vector<288x4xbf16>
    tpu.vector_store %arg5[%c288_66, %c28_67], %49 {strides = array<i32>} : memref<576x36xbf16, #tpu.memory_space<vmem>>, vector<288x4xbf16>,
    %c1_68 = arith.constant 1 : index
    %c38_69 = arith.constant 38 : index
    %c0_70 = arith.constant 0 : index
    %51 = vector.load %arg1[%c1_68, %c38_69, %c0_70] : memref<2x328x4xbf16, #tpu.memory_space<vmem>>, vector<1x288x4xbf16>
    %52 = vector.shape_cast %51 : vector<1x288x4xbf16> to vector<288x4xbf16>
    %c288_71 = arith.constant 288 : index
    %c32_72 = arith.constant 32 : index
    %53 = vector.load %arg5[%c288_71, %c32_72] : memref<576x36xbf16, #tpu.memory_space<vmem>>, vector<288x4xbf16>
    tpu.vector_store %arg5[%c288_71, %c32_72], %52 {strides = array<i32>} : memref<576x36xbf16, #tpu.memory_space<vmem>>, vector<288x4xbf16>,
    %c0_73 = arith.constant 0 : index
    %c0_74 = arith.constant 0 : index
    %54 = vector.load %arg5[%c0_73, %c0_74] : memref<576x36xbf16, #tpu.memory_space<vmem>>, vector<576x36xbf16>
    %c0_75 = arith.constant 0 : index
    %c0_76 = arith.constant 0 : index
    %55 = vector.load %arg2[%c0_75, %c0_76] : memref<36x32xbf16, #tpu.memory_space<vmem>>, vector<36x32xbf16>
    %cst = arith.constant dense<0.000000e+00> : vector<576x32xf32>
    %56 = tpu.matmul %54, %55, %cst {dimension_numbers = #tpu.dot_dimension_numbers<[1], [0], [0], [1], [0, 0, 1, 1], [], []>} : vector<576x36xbf16>, vector<36x32xbf16>, vector<576x32xf32> -> vector<576x32xf32>
    %57 = tpu.iota {dimensions = array<i32: 0>} : vector<576x1xi32>
    %c18_i32 = arith.constant 18 : i32
    %c0_i32 = arith.constant 0 : i32
    %58 = arith.cmpi eq, %c18_i32, %c0_i32 : i32
    %c1_i32 = arith.constant 1 : i32
    %59 = arith.select %58, %c1_i32, %c18_i32 : i32
    %60 = vector.broadcast %59 : i32 to vector<576x1xi32>
    %61 = arith.remsi %57, %60 : vector<576x1xi32>
    %c0_i32_77 = arith.constant 0 : i32
    %62 = vector.broadcast %c0_i32_77 : i32 to vector<576x1xi32>
    %63 = arith.cmpi ne, %61, %62 : vector<576x1xi32>
    %c0_i32_78 = arith.constant 0 : i32
    %64 = vector.broadcast %c0_i32_78 : i32 to vector<576x1xi32>
    %65 = arith.cmpi slt, %61, %64 : vector<576x1xi32>
    %c0_i32_79 = arith.constant 0 : i32
    %66 = arith.cmpi slt, %59, %c0_i32_79 : i32
    %67 = vector.broadcast %66 : i1 to vector<576x1xi1>
    %68 = vector.broadcast %67 : vector<576x1xi1> to vector<576x1xi1>
    %69 = arith.xori %65, %68 : vector<576x1xi1>
    %70 = arith.andi %69, %63 : vector<576x1xi1>
    %71 = vector.broadcast %59 : i32 to vector<576x1xi32>
    %72 = arith.addi %61, %71 : vector<576x1xi32>
    %73 = arith.select %70, %72, %61 : vector<576x1xi1>, vector<576x1xi32>
    %c16_i32 = arith.constant 16 : i32
    %74 = vector.broadcast %c16_i32 : i32 to vector<576x1xi32>
    %75 = arith.cmpi slt, %73, %74 : vector<576x1xi32>
    %cst_80 = arith.constant 0.000000e+00 : f32
    %76 = vector.broadcast %cst_80 : f32 to vector<576x32xf32>
    %77 = arith.maximumf %56, %76 : vector<576x32xf32>
    %cst_81 = arith.constant 0.000000e+00 : f32
    %78 = vector.shape_cast %75 : vector<576x1xi1> to vector<576x1xi1>
    %79 = vector.broadcast %78 : vector<576x1xi1> to vector<576x32xi1>
    %80 = vector.broadcast %cst_81 : f32 to vector<576x32xf32>
    %81 = arith.select %79, %77, %80 : vector<576x32xi1>, vector<576x32xf32>
    %82 = arith.truncf %81 : vector<576x32xf32> to vector<576x32xbf16>
    %cst_82 = arith.constant 0.000000e+00 : bf16
    %83 = vector.broadcast %cst_82 : bf16 to vector<19x32xbf16>
    %c0_83 = arith.constant 0 : index
    %c0_84 = arith.constant 0 : index
    %84 = vector.load %arg6[%c0_83, %c0_84] : memref<576x288xbf16, #tpu.memory_space<vmem>>, vector<19x32xbf16>
    tpu.vector_store %arg6[%c0_83, %c0_84], %83 {strides = array<i32>} : memref<576x288xbf16, #tpu.memory_space<vmem>>, vector<19x32xbf16>,
    %85 = vector.extract_strided_slice %82 {offsets = [0, 0], sizes = [269, 32], strides = [1, 1]} : vector<576x32xbf16> to vector<269x32xbf16>
    %c19_85 = arith.constant 19 : index
    %c0_86 = arith.constant 0 : index
    %86 = vector.load %arg6[%c19_85, %c0_86] : memref<576x288xbf16, #tpu.memory_space<vmem>>, vector<269x32xbf16>
    tpu.vector_store %arg6[%c19_85, %c0_86], %85 {strides = array<i32>} : memref<576x288xbf16, #tpu.memory_space<vmem>>, vector<269x32xbf16>,
    %cst_87 = arith.constant 0.000000e+00 : bf16
    %87 = vector.broadcast %cst_87 : bf16 to vector<18x32xbf16>
    %c0_88 = arith.constant 0 : index
    %c32_89 = arith.constant 32 : index
    %88 = vector.load %arg6[%c0_88, %c32_89] : memref<576x288xbf16, #tpu.memory_space<vmem>>, vector<18x32xbf16>
    tpu.vector_store %arg6[%c0_88, %c32_89], %87 {strides = array<i32>} : memref<576x288xbf16, #tpu.memory_space<vmem>>, vector<18x32xbf16>,
    %89 = vector.extract_strided_slice %82 {offsets = [0, 0], sizes = [270, 32], strides = [1, 1]} : vector<576x32xbf16> to vector<270x32xbf16>
    %c18_90 = arith.constant 18 : index
    %c32_91 = arith.constant 32 : index
    %90 = vector.load %arg6[%c18_90, %c32_91] : memref<576x288xbf16, #tpu.memory_space<vmem>>, vector<270x32xbf16>
    tpu.vector_store %arg6[%c18_90, %c32_91], %89 {strides = array<i32>} : memref<576x288xbf16, #tpu.memory_space<vmem>>, vector<270x32xbf16>,
    %cst_92 = arith.constant 0.000000e+00 : bf16
    %91 = vector.broadcast %cst_92 : bf16 to vector<17x32xbf16>
    %c0_93 = arith.constant 0 : index
    %c64 = arith.constant 64 : index
    %92 = vector.load %arg6[%c0_93, %c64] : memref<576x288xbf16, #tpu.memory_space<vmem>>, vector<17x32xbf16>
    tpu.vector_store %arg6[%c0_93, %c64], %91 {strides = array<i32>} : memref<576x288xbf16, #tpu.memory_space<vmem>>, vector<17x32xbf16>,
    %93 = vector.extract_strided_slice %82 {offsets = [0, 0], sizes = [271, 32], strides = [1, 1]} : vector<576x32xbf16> to vector<271x32xbf16>
    %c17 = arith.constant 17 : index
    %c64_94 = arith.constant 64 : index
    %94 = vector.load %arg6[%c17, %c64_94] : memref<576x288xbf16, #tpu.memory_space<vmem>>, vector<271x32xbf16>
    tpu.vector_store %arg6[%c17, %c64_94], %93 {strides = array<i32>} : memref<576x288xbf16, #tpu.memory_space<vmem>>, vector<271x32xbf16>,
    %cst_95 = arith.constant 0.000000e+00 : bf16
    %95 = vector.broadcast %cst_95 : bf16 to vector<1x32xbf16>
    %c0_96 = arith.constant 0 : index
    %c96 = arith.constant 96 : index
    %96 = vector.load %arg6[%c0_96, %c96] : memref<576x288xbf16, #tpu.memory_space<vmem>>, vector<1x32xbf16>
    tpu.vector_store %arg6[%c0_96, %c96], %95 {strides = array<i32>} : memref<576x288xbf16, #tpu.memory_space<vmem>>, vector<1x32xbf16>,
    %97 = vector.extract_strided_slice %82 {offsets = [0, 0], sizes = [287, 32], strides = [1, 1]} : vector<576x32xbf16> to vector<287x32xbf16>
    %c1_97 = arith.constant 1 : index
    %c96_98 = arith.constant 96 : index
    %98 = vector.load %arg6[%c1_97, %c96_98] : memref<576x288xbf16, #tpu.memory_space<vmem>>, vector<287x32xbf16>
    tpu.vector_store %arg6[%c1_97, %c96_98], %97 {strides = array<i32>} : memref<576x288xbf16, #tpu.memory_space<vmem>>, vector<287x32xbf16>,
    %99 = vector.extract_strided_slice %82 {offsets = [0, 0], sizes = [288, 32], strides = [1, 1]} : vector<576x32xbf16> to vector<288x32xbf16>
    %c0_99 = arith.constant 0 : index
    %c128 = arith.constant 128 : index
    %100 = vector.load %arg6[%c0_99, %c128] : memref<576x288xbf16, #tpu.memory_space<vmem>>, vector<288x32xbf16>
    tpu.vector_store %arg6[%c0_99, %c128], %99 {strides = array<i32>} : memref<576x288xbf16, #tpu.memory_space<vmem>>, vector<288x32xbf16>,
    %cst_100 = arith.constant 0.000000e+00 : bf16
    %101 = vector.broadcast %cst_100 : bf16 to vector<1x32xbf16>
    %c287 = arith.constant 287 : index
    %c160 = arith.constant 160 : index
    %102 = vector.load %arg6[%c287, %c160] : memref<576x288xbf16, #tpu.memory_space<vmem>>, vector<1x32xbf16>
    tpu.vector_store %arg6[%c287, %c160], %101 {strides = array<i32>} : memref<576x288xbf16, #tpu.memory_space<vmem>>, vector<1x32xbf16>,
    %103 = vector.extract_strided_slice %82 {offsets = [1, 0], sizes = [287, 32], strides = [1, 1]} : vector<576x32xbf16> to vector<287x32xbf16>
    %c0_101 = arith.constant 0 : index
    %c160_102 = arith.constant 160 : index
    %104 = vector.load %arg6[%c0_101, %c160_102] : memref<576x288xbf16, #tpu.memory_space<vmem>>, vector<287x32xbf16>
    tpu.vector_store %arg6[%c0_101, %c160_102], %103 {strides = array<i32>} : memref<576x288xbf16, #tpu.memory_space<vmem>>, vector<287x32xbf16>,
    %cst_103 = arith.constant 0.000000e+00 : bf16
    %105 = vector.broadcast %cst_103 : bf16 to vector<17x32xbf16>
    %c271 = arith.constant 271 : index
    %c192 = arith.constant 192 : index
    %106 = vector.load %arg6[%c271, %c192] : memref<576x288xbf16, #tpu.memory_space<vmem>>, vector<17x32xbf16>
    tpu.vector_store %arg6[%c271, %c192], %105 {strides = array<i32>} : memref<576x288xbf16, #tpu.memory_space<vmem>>, vector<17x32xbf16>,
    %107 = vector.extract_strided_slice %82 {offsets = [17, 0], sizes = [271, 32], strides = [1, 1]} : vector<576x32xbf16> to vector<271x32xbf16>
    %c0_104 = arith.constant 0 : index
    %c192_105 = arith.constant 192 : index
    %108 = vector.load %arg6[%c0_104, %c192_105] : memref<576x288xbf16, #tpu.memory_space<vmem>>, vector<271x32xbf16>
    tpu.vector_store %arg6[%c0_104, %c192_105], %107 {strides = array<i32>} : memref<576x288xbf16, #tpu.memory_space<vmem>>, vector<271x32xbf16>,
    %cst_106 = arith.constant 0.000000e+00 : bf16
    %109 = vector.broadcast %cst_106 : bf16 to vector<18x32xbf16>
    %c270 = arith.constant 270 : index
    %c224 = arith.constant 224 : index
    %110 = vector.load %arg6[%c270, %c224] : memref<576x288xbf16, #tpu.memory_space<vmem>>, vector<18x32xbf16>
    tpu.vector_store %arg6[%c270, %c224], %109 {strides = array<i32>} : memref<576x288xbf16, #tpu.memory_space<vmem>>, vector<18x32xbf16>,
    %111 = vector.extract_strided_slice %82 {offsets = [18, 0], sizes = [270, 32], strides = [1, 1]} : vector<576x32xbf16> to vector<270x32xbf16>
    %c0_107 = arith.constant 0 : index
    %c224_108 = arith.constant 224 : index
    %112 = vector.load %arg6[%c0_107, %c224_108] : memref<576x288xbf16, #tpu.memory_space<vmem>>, vector<270x32xbf16>
    tpu.vector_store %arg6[%c0_107, %c224_108], %111 {strides = array<i32>} : memref<576x288xbf16, #tpu.memory_space<vmem>>, vector<270x32xbf16>,
    %cst_109 = arith.constant 0.000000e+00 : bf16
    %113 = vector.broadcast %cst_109 : bf16 to vector<19x32xbf16>
    %c269 = arith.constant 269 : index
    %c256 = arith.constant 256 : index
    %114 = vector.load %arg6[%c269, %c256] : memref<576x288xbf16, #tpu.memory_space<vmem>>, vector<19x32xbf16>
    tpu.vector_store %arg6[%c269, %c256], %113 {strides = array<i32>} : memref<576x288xbf16, #tpu.memory_space<vmem>>, vector<19x32xbf16>,
    %115 = vector.extract_strided_slice %82 {offsets = [19, 0], sizes = [269, 32], strides = [1, 1]} : vector<576x32xbf16> to vector<269x32xbf16>
    %c0_110 = arith.constant 0 : index
    %c256_111 = arith.constant 256 : index
    %116 = vector.load %arg6[%c0_110, %c256_111] : memref<576x288xbf16, #tpu.memory_space<vmem>>, vector<269x32xbf16>
    tpu.vector_store %arg6[%c0_110, %c256_111], %115 {strides = array<i32>} : memref<576x288xbf16, #tpu.memory_space<vmem>>, vector<269x32xbf16>,
    %cst_112 = arith.constant 0.000000e+00 : bf16
    %117 = vector.broadcast %cst_112 : bf16 to vector<19x32xbf16>
    %c288_113 = arith.constant 288 : index
    %c0_114 = arith.constant 0 : index
    %118 = vector.load %arg6[%c288_113, %c0_114] : memref<576x288xbf16, #tpu.memory_space<vmem>>, vector<19x32xbf16>
    tpu.vector_store %arg6[%c288_113, %c0_114], %117 {strides = array<i32>} : memref<576x288xbf16, #tpu.memory_space<vmem>>, vector<19x32xbf16>,
    %119 = vector.extract_strided_slice %82 {offsets = [288, 0], sizes = [269, 32], strides = [1, 1]} : vector<576x32xbf16> to vector<269x32xbf16>
    %c307 = arith.constant 307 : index
    %c0_115 = arith.constant 0 : index
    %120 = vector.load %arg6[%c307, %c0_115] : memref<576x288xbf16, #tpu.memory_space<vmem>>, vector<269x32xbf16>
    tpu.vector_store %arg6[%c307, %c0_115], %119 {strides = array<i32>} : memref<576x288xbf16, #tpu.memory_space<vmem>>, vector<269x32xbf16>,
    %cst_116 = arith.constant 0.000000e+00 : bf16
    %121 = vector.broadcast %cst_116 : bf16 to vector<18x32xbf16>
    %c288_117 = arith.constant 288 : index
    %c32_118 = arith.constant 32 : index
    %122 = vector.load %arg6[%c288_117, %c32_118] : memref<576x288xbf16, #tpu.memory_space<vmem>>, vector<18x32xbf16>
    tpu.vector_store %arg6[%c288_117, %c32_118], %121 {strides = array<i32>} : memref<576x288xbf16, #tpu.memory_space<vmem>>, vector<18x32xbf16>,
    %123 = vector.extract_strided_slice %82 {offsets = [288, 0], sizes = [270, 32], strides = [1, 1]} : vector<576x32xbf16> to vector<270x32xbf16>
    %c306 = arith.constant 306 : index
    %c32_119 = arith.constant 32 : index
    %124 = vector.load %arg6[%c306, %c32_119] : memref<576x288xbf16, #tpu.memory_space<vmem>>, vector<270x32xbf16>
    tpu.vector_store %arg6[%c306, %c32_119], %123 {strides = array<i32>} : memref<576x288xbf16, #tpu.memory_space<vmem>>, vector<270x32xbf16>,
    %cst_120 = arith.constant 0.000000e+00 : bf16
    %125 = vector.broadcast %cst_120 : bf16 to vector<17x32xbf16>
    %c288_121 = arith.constant 288 : index
    %c64_122 = arith.constant 64 : index
    %126 = vector.load %arg6[%c288_121, %c64_122] : memref<576x288xbf16, #tpu.memory_space<vmem>>, vector<17x32xbf16>
    tpu.vector_store %arg6[%c288_121, %c64_122], %125 {strides = array<i32>} : memref<576x288xbf16, #tpu.memory_space<vmem>>, vector<17x32xbf16>,
    %127 = vector.extract_strided_slice %82 {offsets = [288, 0], sizes = [271, 32], strides = [1, 1]} : vector<576x32xbf16> to vector<271x32xbf16>
    %c305 = arith.constant 305 : index
    %c64_123 = arith.constant 64 : index
    %128 = vector.load %arg6[%c305, %c64_123] : memref<576x288xbf16, #tpu.memory_space<vmem>>, vector<271x32xbf16>
    tpu.vector_store %arg6[%c305, %c64_123], %127 {strides = array<i32>} : memref<576x288xbf16, #tpu.memory_space<vmem>>, vector<271x32xbf16>,
    %cst_124 = arith.constant 0.000000e+00 : bf16
    %129 = vector.broadcast %cst_124 : bf16 to vector<1x32xbf16>
    %c288_125 = arith.constant 288 : index
    %c96_126 = arith.constant 96 : index
    %130 = vector.load %arg6[%c288_125, %c96_126] : memref<576x288xbf16, #tpu.memory_space<vmem>>, vector<1x32xbf16>
    tpu.vector_store %arg6[%c288_125, %c96_126], %129 {strides = array<i32>} : memref<576x288xbf16, #tpu.memory_space<vmem>>, vector<1x32xbf16>,
    %131 = vector.extract_strided_slice %82 {offsets = [288, 0], sizes = [287, 32], strides = [1, 1]} : vector<576x32xbf16> to vector<287x32xbf16>
    %c289 = arith.constant 289 : index
    %c96_127 = arith.constant 96 : index
    %132 = vector.load %arg6[%c289, %c96_127] : memref<576x288xbf16, #tpu.memory_space<vmem>>, vector<287x32xbf16>
    tpu.vector_store %arg6[%c289, %c96_127], %131 {strides = array<i32>} : memref<576x288xbf16, #tpu.memory_space<vmem>>, vector<287x32xbf16>,
    %133 = vector.extract_strided_slice %82 {offsets = [288, 0], sizes = [288, 32], strides = [1, 1]} : vector<576x32xbf16> to vector<288x32xbf16>
    %c288_128 = arith.constant 288 : index
    %c128_129 = arith.constant 128 : index
    %134 = vector.load %arg6[%c288_128, %c128_129] : memref<576x288xbf16, #tpu.memory_space<vmem>>, vector<288x32xbf16>
    tpu.vector_store %arg6[%c288_128, %c128_129], %133 {strides = array<i32>} : memref<576x288xbf16, #tpu.memory_space<vmem>>, vector<288x32xbf16>,
    %cst_130 = arith.constant 0.000000e+00 : bf16
    %135 = vector.broadcast %cst_130 : bf16 to vector<1x32xbf16>
    %c575 = arith.constant 575 : index
    %c160_131 = arith.constant 160 : index
    %136 = vector.load %arg6[%c575, %c160_131] : memref<576x288xbf16, #tpu.memory_space<vmem>>, vector<1x32xbf16>
    tpu.vector_store %arg6[%c575, %c160_131], %135 {strides = array<i32>} : memref<576x288xbf16, #tpu.memory_space<vmem>>, vector<1x32xbf16>,
    %137 = vector.extract_strided_slice %82 {offsets = [289, 0], sizes = [287, 32], strides = [1, 1]} : vector<576x32xbf16> to vector<287x32xbf16>
    %c288_132 = arith.constant 288 : index
    %c160_133 = arith.constant 160 : index
    %138 = vector.load %arg6[%c288_132, %c160_133] : memref<576x288xbf16, #tpu.memory_space<vmem>>, vector<287x32xbf16>
    tpu.vector_store %arg6[%c288_132, %c160_133], %137 {strides = array<i32>} : memref<576x288xbf16, #tpu.memory_space<vmem>>, vector<287x32xbf16>,
    %cst_134 = arith.constant 0.000000e+00 : bf16
    %139 = vector.broadcast %cst_134 : bf16 to vector<17x32xbf16>
    %c559 = arith.constant 559 : index
    %c192_135 = arith.constant 192 : index
    %140 = vector.load %arg6[%c559, %c192_135] : memref<576x288xbf16, #tpu.memory_space<vmem>>, vector<17x32xbf16>
    tpu.vector_store %arg6[%c559, %c192_135], %139 {strides = array<i32>} : memref<576x288xbf16, #tpu.memory_space<vmem>>, vector<17x32xbf16>,
    %141 = vector.extract_strided_slice %82 {offsets = [305, 0], sizes = [271, 32], strides = [1, 1]} : vector<576x32xbf16> to vector<271x32xbf16>
    %c288_136 = arith.constant 288 : index
    %c192_137 = arith.constant 192 : index
    %142 = vector.load %arg6[%c288_136, %c192_137] : memref<576x288xbf16, #tpu.memory_space<vmem>>, vector<271x32xbf16>
    tpu.vector_store %arg6[%c288_136, %c192_137], %141 {strides = array<i32>} : memref<576x288xbf16, #tpu.memory_space<vmem>>, vector<271x32xbf16>,
    %cst_138 = arith.constant 0.000000e+00 : bf16
    %143 = vector.broadcast %cst_138 : bf16 to vector<18x32xbf16>
    %c558 = arith.constant 558 : index
    %c224_139 = arith.constant 224 : index
    %144 = vector.load %arg6[%c558, %c224_139] : memref<576x288xbf16, #tpu.memory_space<vmem>>, vector<18x32xbf16>
    tpu.vector_store %arg6[%c558, %c224_139], %143 {strides = array<i32>} : memref<576x288xbf16, #tpu.memory_space<vmem>>, vector<18x32xbf16>,
    %145 = vector.extract_strided_slice %82 {offsets = [306, 0], sizes = [270, 32], strides = [1, 1]} : vector<576x32xbf16> to vector<270x32xbf16>
    %c288_140 = arith.constant 288 : index
    %c224_141 = arith.constant 224 : index
    %146 = vector.load %arg6[%c288_140, %c224_141] : memref<576x288xbf16, #tpu.memory_space<vmem>>, vector<270x32xbf16>
    tpu.vector_store %arg6[%c288_140, %c224_141], %145 {strides = array<i32>} : memref<576x288xbf16, #tpu.memory_space<vmem>>, vector<270x32xbf16>,
    %cst_142 = arith.constant 0.000000e+00 : bf16
    %147 = vector.broadcast %cst_142 : bf16 to vector<19x32xbf16>
    %c557 = arith.constant 557 : index
    %c256_143 = arith.constant 256 : index
    %148 = vector.load %arg6[%c557, %c256_143] : memref<576x288xbf16, #tpu.memory_space<vmem>>, vector<19x32xbf16>
    tpu.vector_store %arg6[%c557, %c256_143], %147 {strides = array<i32>} : memref<576x288xbf16, #tpu.memory_space<vmem>>, vector<19x32xbf16>,
    %149 = vector.extract_strided_slice %82 {offsets = [307, 0], sizes = [269, 32], strides = [1, 1]} : vector<576x32xbf16> to vector<269x32xbf16>
    %c288_144 = arith.constant 288 : index
    %c256_145 = arith.constant 256 : index
    %150 = vector.load %arg6[%c288_144, %c256_145] : memref<576x288xbf16, #tpu.memory_space<vmem>>, vector<269x32xbf16>
    tpu.vector_store %arg6[%c288_144, %c256_145], %149 {strides = array<i32>} : memref<576x288xbf16, #tpu.memory_space<vmem>>, vector<269x32xbf16>,
    %c0_146 = arith.constant 0 : index
    %c0_147 = arith.constant 0 : index
    %151 = vector.load %arg6[%c0_146, %c0_147] : memref<576x288xbf16, #tpu.memory_space<vmem>>, vector<576x288xbf16>
    %c0_148 = arith.constant 0 : index
    %c0_149 = arith.constant 0 : index
    %152 = vector.load %arg3[%c0_148, %c0_149] : memref<288x32xbf16, #tpu.memory_space<vmem>>, vector<288x32xbf16>
    %cst_150 = arith.constant dense<0.000000e+00> : vector<576x32xf32>
    %153 = tpu.matmul %151, %152, %cst_150 {dimension_numbers = #tpu.dot_dimension_numbers<[1], [0], [0], [1], [0, 0, 1, 1], [], []>} : vector<576x288xbf16>, vector<288x32xbf16>, vector<576x32xf32> -> vector<576x32xf32>
    %154 = tpu.iota {dimensions = array<i32: 0>} : vector<288x1xi32>
    %c18_i32_151 = arith.constant 18 : i32
    %c0_i32_152 = arith.constant 0 : i32
    %155 = arith.cmpi eq, %c18_i32_151, %c0_i32_152 : i32
    %c1_i32_153 = arith.constant 1 : i32
    %156 = arith.select %155, %c1_i32_153, %c18_i32_151 : i32
    %157 = vector.broadcast %156 : i32 to vector<288x1xi32>
    %158 = arith.remsi %154, %157 : vector<288x1xi32>
    %c0_i32_154 = arith.constant 0 : i32
    %159 = vector.broadcast %c0_i32_154 : i32 to vector<288x1xi32>
    %160 = arith.cmpi ne, %158, %159 : vector<288x1xi32>
    %c0_i32_155 = arith.constant 0 : i32
    %161 = vector.broadcast %c0_i32_155 : i32 to vector<288x1xi32>
    %162 = arith.cmpi slt, %158, %161 : vector<288x1xi32>
    %c0_i32_156 = arith.constant 0 : i32
    %163 = arith.cmpi slt, %156, %c0_i32_156 : i32
    %164 = vector.broadcast %163 : i1 to vector<288x1xi1>
    %165 = vector.broadcast %164 : vector<288x1xi1> to vector<288x1xi1>
    %166 = arith.xori %162, %165 : vector<288x1xi1>
    %167 = arith.andi %166, %160 : vector<288x1xi1>
    %168 = vector.broadcast %156 : i32 to vector<288x1xi32>
    %169 = arith.addi %158, %168 : vector<288x1xi32>
    %170 = arith.select %167, %169, %158 : vector<288x1xi1>, vector<288x1xi32>
    %c16_i32_157 = arith.constant 16 : i32
    %171 = vector.broadcast %c16_i32_157 : i32 to vector<288x1xi32>
    %172 = arith.cmpi slt, %170, %171 : vector<288x1xi32>
    %173 = vector.extract_strided_slice %153 {offsets = [0, 0], sizes = [288, 32], strides = [1, 1]} : vector<576x32xf32> to vector<288x32xf32>
    %cst_158 = arith.constant 0.000000e+00 : f32
    %174 = vector.shape_cast %172 : vector<288x1xi1> to vector<288x1xi1>
    %175 = vector.broadcast %174 : vector<288x1xi1> to vector<288x32xi1>
    %176 = vector.broadcast %cst_158 : f32 to vector<288x32xf32>
    %177 = arith.select %175, %173, %176 : vector<288x32xi1>, vector<288x32xf32>
    %cst_159 = arith.constant dense<0.000000e+00> : vector<32xf32>
    %178 = vector.multi_reduction <add>, %177, %cst_159 [0] : vector<288x32xf32> to vector<32xf32>
    %179 = vector.shape_cast %178 : vector<32xf32> to vector<1x32xf32>
    %180 = arith.mulf %177, %177 : vector<288x32xf32>
    %cst_160 = arith.constant dense<0.000000e+00> : vector<32xf32>
    %181 = vector.multi_reduction <add>, %180, %cst_160 [0] : vector<288x32xf32> to vector<32xf32>
    %182 = vector.shape_cast %181 : vector<32xf32> to vector<1x32xf32>
    %cst_161 = arith.constant 3.906250e-03 : f32
    %183 = vector.broadcast %cst_161 : f32 to vector<1x32xf32>
    %184 = arith.mulf %179, %183 : vector<1x32xf32>
    %cst_162 = arith.constant 3.906250e-03 : f32
    %185 = vector.broadcast %cst_162 : f32 to vector<1x32xf32>
    %186 = arith.mulf %182, %185 : vector<1x32xf32>
    %187 = arith.mulf %184, %184 : vector<1x32xf32>
    %188 = arith.subf %186, %187 : vector<1x32xf32>
    %cst_163 = arith.constant 0.000000e+00 : f32
    %189 = vector.broadcast %cst_163 : f32 to vector<1x32xf32>
    %190 = arith.maximumf %188, %189 : vector<1x32xf32>
    %191 = vector.broadcast %184 : vector<1x32xf32> to vector<288x32xf32>
    %192 = arith.subf %173, %191 : vector<288x32xf32>
    %cst_164 = arith.constant 9.99999974E-6 : f32
    %193 = vector.broadcast %cst_164 : f32 to vector<1x32xf32>
    %194 = arith.addf %190, %193 : vector<1x32xf32>
    %195 = math.rsqrt %194 : vector<1x32xf32>
    %196 = vector.broadcast %195 : vector<1x32xf32> to vector<288x32xf32>
    %197 = arith.mulf %192, %196 : vector<288x32xf32>
    %cst_165 = arith.constant 0.000000e+00 : f32
    %198 = vector.broadcast %cst_165 : f32 to vector<288x32xf32>
    %199 = arith.maximumf %197, %198 : vector<288x32xf32>
    %200 = vector.extract_strided_slice %199 {offsets = [0, 0], sizes = [16, 32], strides = [1, 1]} : vector<288x32xf32> to vector<16x32xf32>
    %c0_166 = arith.constant 0 : index
    %c0_167 = arith.constant 0 : index
    %c0_168 = arith.constant 0 : index
    %201 = vector.load %arg4[%c0_166, %c0_167, %c0_168] : memref<2x256x32xf32, #tpu.memory_space<vmem>>, vector<1x16x32xf32>
    %202 = vector.shape_cast %201 : vector<1x16x32xf32> to vector<16x32xf32>
    %203 = vector.shape_cast %200 : vector<16x32xf32> to vector<1x16x32xf32>
    tpu.vector_store %arg4[%c0_166, %c0_167, %c0_168], %203 {strides = array<i32>} : memref<2x256x32xf32, #tpu.memory_space<vmem>>, vector<1x16x32xf32>,
    %204 = vector.extract_strided_slice %199 {offsets = [18, 0], sizes = [16, 32], strides = [1, 1]} : vector<288x32xf32> to vector<16x32xf32>
    %c0_169 = arith.constant 0 : index
    %c16_170 = arith.constant 16 : index
    %c0_171 = arith.constant 0 : index
    %205 = vector.load %arg4[%c0_169, %c16_170, %c0_171] : memref<2x256x32xf32, #tpu.memory_space<vmem>>, vector<1x16x32xf32>
    %206 = vector.shape_cast %205 : vector<1x16x32xf32> to vector<16x32xf32>
    %207 = vector.shape_cast %204 : vector<16x32xf32> to vector<1x16x32xf32>
    tpu.vector_store %arg4[%c0_169, %c16_170, %c0_171], %207 {strides = array<i32>} : memref<2x256x32xf32, #tpu.memory_space<vmem>>, vector<1x16x32xf32>,
    %208 = vector.extract_strided_slice %199 {offsets = [36, 0], sizes = [16, 32], strides = [1, 1]} : vector<288x32xf32> to vector<16x32xf32>
    %c0_172 = arith.constant 0 : index
    %c32_173 = arith.constant 32 : index
    %c0_174 = arith.constant 0 : index
    %209 = vector.load %arg4[%c0_172, %c32_173, %c0_174] : memref<2x256x32xf32, #tpu.memory_space<vmem>>, vector<1x16x32xf32>
    %210 = vector.shape_cast %209 : vector<1x16x32xf32> to vector<16x32xf32>
    %211 = vector.shape_cast %208 : vector<16x32xf32> to vector<1x16x32xf32>
    tpu.vector_store %arg4[%c0_172, %c32_173, %c0_174], %211 {strides = array<i32>} : memref<2x256x32xf32, #tpu.memory_space<vmem>>, vector<1x16x32xf32>,
    %212 = vector.extract_strided_slice %199 {offsets = [54, 0], sizes = [16, 32], strides = [1, 1]} : vector<288x32xf32> to vector<16x32xf32>
    %c0_175 = arith.constant 0 : index
    %c48 = arith.constant 48 : index
    %c0_176 = arith.constant 0 : index
    %213 = vector.load %arg4[%c0_175, %c48, %c0_176] : memref<2x256x32xf32, #tpu.memory_space<vmem>>, vector<1x16x32xf32>
    %214 = vector.shape_cast %213 : vector<1x16x32xf32> to vector<16x32xf32>
    %215 = vector.shape_cast %212 : vector<16x32xf32> to vector<1x16x32xf32>
    tpu.vector_store %arg4[%c0_175, %c48, %c0_176], %215 {strides = array<i32>} : memref<2x256x32xf32, #tpu.memory_space<vmem>>, vector<1x16x32xf32>,
    %216 = vector.extract_strided_slice %199 {offsets = [72, 0], sizes = [16, 32], strides = [1, 1]} : vector<288x32xf32> to vector<16x32xf32>
    %c0_177 = arith.constant 0 : index
    %c64_178 = arith.constant 64 : index
    %c0_179 = arith.constant 0 : index
    %217 = vector.load %arg4[%c0_177, %c64_178, %c0_179] : memref<2x256x32xf32, #tpu.memory_space<vmem>>, vector<1x16x32xf32>
    %218 = vector.shape_cast %217 : vector<1x16x32xf32> to vector<16x32xf32>
    %219 = vector.shape_cast %216 : vector<16x32xf32> to vector<1x16x32xf32>
    tpu.vector_store %arg4[%c0_177, %c64_178, %c0_179], %219 {strides = array<i32>} : memref<2x256x32xf32, #tpu.memory_space<vmem>>, vector<1x16x32xf32>,
    %220 = vector.extract_strided_slice %199 {offsets = [90, 0], sizes = [16, 32], strides = [1, 1]} : vector<288x32xf32> to vector<16x32xf32>
    %c0_180 = arith.constant 0 : index
    %c80 = arith.constant 80 : index
    %c0_181 = arith.constant 0 : index
    %221 = vector.load %arg4[%c0_180, %c80, %c0_181] : memref<2x256x32xf32, #tpu.memory_space<vmem>>, vector<1x16x32xf32>
    %222 = vector.shape_cast %221 : vector<1x16x32xf32> to vector<16x32xf32>
    %223 = vector.shape_cast %220 : vector<16x32xf32> to vector<1x16x32xf32>
    tpu.vector_store %arg4[%c0_180, %c80, %c0_181], %223 {strides = array<i32>} : memref<2x256x32xf32, #tpu.memory_space<vmem>>, vector<1x16x32xf32>,
    %224 = vector.extract_strided_slice %199 {offsets = [108, 0], sizes = [16, 32], strides = [1, 1]} : vector<288x32xf32> to vector<16x32xf32>
    %c0_182 = arith.constant 0 : index
    %c96_183 = arith.constant 96 : index
    %c0_184 = arith.constant 0 : index
    %225 = vector.load %arg4[%c0_182, %c96_183, %c0_184] : memref<2x256x32xf32, #tpu.memory_space<vmem>>, vector<1x16x32xf32>
    %226 = vector.shape_cast %225 : vector<1x16x32xf32> to vector<16x32xf32>
    %227 = vector.shape_cast %224 : vector<16x32xf32> to vector<1x16x32xf32>
    tpu.vector_store %arg4[%c0_182, %c96_183, %c0_184], %227 {strides = array<i32>} : memref<2x256x32xf32, #tpu.memory_space<vmem>>, vector<1x16x32xf32>,
    %228 = vector.extract_strided_slice %199 {offsets = [126, 0], sizes = [16, 32], strides = [1, 1]} : vector<288x32xf32> to vector<16x32xf32>
    %c0_185 = arith.constant 0 : index
    %c112 = arith.constant 112 : index
    %c0_186 = arith.constant 0 : index
    %229 = vector.load %arg4[%c0_185, %c112, %c0_186] : memref<2x256x32xf32, #tpu.memory_space<vmem>>, vector<1x16x32xf32>
    %230 = vector.shape_cast %229 : vector<1x16x32xf32> to vector<16x32xf32>
    %231 = vector.shape_cast %228 : vector<16x32xf32> to vector<1x16x32xf32>
    tpu.vector_store %arg4[%c0_185, %c112, %c0_186], %231 {strides = array<i32>} : memref<2x256x32xf32, #tpu.memory_space<vmem>>, vector<1x16x32xf32>,
    %232 = vector.extract_strided_slice %199 {offsets = [144, 0], sizes = [16, 32], strides = [1, 1]} : vector<288x32xf32> to vector<16x32xf32>
    %c0_187 = arith.constant 0 : index
    %c128_188 = arith.constant 128 : index
    %c0_189 = arith.constant 0 : index
    %233 = vector.load %arg4[%c0_187, %c128_188, %c0_189] : memref<2x256x32xf32, #tpu.memory_space<vmem>>, vector<1x16x32xf32>
    %234 = vector.shape_cast %233 : vector<1x16x32xf32> to vector<16x32xf32>
    %235 = vector.shape_cast %232 : vector<16x32xf32> to vector<1x16x32xf32>
    tpu.vector_store %arg4[%c0_187, %c128_188, %c0_189], %235 {strides = array<i32>} : memref<2x256x32xf32, #tpu.memory_space<vmem>>, vector<1x16x32xf32>,
    %236 = vector.extract_strided_slice %199 {offsets = [162, 0], sizes = [16, 32], strides = [1, 1]} : vector<288x32xf32> to vector<16x32xf32>
    %c0_190 = arith.constant 0 : index
    %c144 = arith.constant 144 : index
    %c0_191 = arith.constant 0 : index
    %237 = vector.load %arg4[%c0_190, %c144, %c0_191] : memref<2x256x32xf32, #tpu.memory_space<vmem>>, vector<1x16x32xf32>
    %238 = vector.shape_cast %237 : vector<1x16x32xf32> to vector<16x32xf32>
    %239 = vector.shape_cast %236 : vector<16x32xf32> to vector<1x16x32xf32>
    tpu.vector_store %arg4[%c0_190, %c144, %c0_191], %239 {strides = array<i32>} : memref<2x256x32xf32, #tpu.memory_space<vmem>>, vector<1x16x32xf32>,
    %240 = vector.extract_strided_slice %199 {offsets = [180, 0], sizes = [16, 32], strides = [1, 1]} : vector<288x32xf32> to vector<16x32xf32>
    %c0_192 = arith.constant 0 : index
    %c160_193 = arith.constant 160 : index
    %c0_194 = arith.constant 0 : index
    %241 = vector.load %arg4[%c0_192, %c160_193, %c0_194] : memref<2x256x32xf32, #tpu.memory_space<vmem>>, vector<1x16x32xf32>
    %242 = vector.shape_cast %241 : vector<1x16x32xf32> to vector<16x32xf32>
    %243 = vector.shape_cast %240 : vector<16x32xf32> to vector<1x16x32xf32>
    tpu.vector_store %arg4[%c0_192, %c160_193, %c0_194], %243 {strides = array<i32>} : memref<2x256x32xf32, #tpu.memory_space<vmem>>, vector<1x16x32xf32>,
    %244 = vector.extract_strided_slice %199 {offsets = [198, 0], sizes = [16, 32], strides = [1, 1]} : vector<288x32xf32> to vector<16x32xf32>
    %c0_195 = arith.constant 0 : index
    %c176 = arith.constant 176 : index
    %c0_196 = arith.constant 0 : index
    %245 = vector.load %arg4[%c0_195, %c176, %c0_196] : memref<2x256x32xf32, #tpu.memory_space<vmem>>, vector<1x16x32xf32>
    %246 = vector.shape_cast %245 : vector<1x16x32xf32> to vector<16x32xf32>
    %247 = vector.shape_cast %244 : vector<16x32xf32> to vector<1x16x32xf32>
    tpu.vector_store %arg4[%c0_195, %c176, %c0_196], %247 {strides = array<i32>} : memref<2x256x32xf32, #tpu.memory_space<vmem>>, vector<1x16x32xf32>,
    %248 = vector.extract_strided_slice %199 {offsets = [216, 0], sizes = [16, 32], strides = [1, 1]} : vector<288x32xf32> to vector<16x32xf32>
    %c0_197 = arith.constant 0 : index
    %c192_198 = arith.constant 192 : index
    %c0_199 = arith.constant 0 : index
    %249 = vector.load %arg4[%c0_197, %c192_198, %c0_199] : memref<2x256x32xf32, #tpu.memory_space<vmem>>, vector<1x16x32xf32>
    %250 = vector.shape_cast %249 : vector<1x16x32xf32> to vector<16x32xf32>
    %251 = vector.shape_cast %248 : vector<16x32xf32> to vector<1x16x32xf32>
    tpu.vector_store %arg4[%c0_197, %c192_198, %c0_199], %251 {strides = array<i32>} : memref<2x256x32xf32, #tpu.memory_space<vmem>>, vector<1x16x32xf32>,
    %252 = vector.extract_strided_slice %199 {offsets = [234, 0], sizes = [16, 32], strides = [1, 1]} : vector<288x32xf32> to vector<16x32xf32>
    %c0_200 = arith.constant 0 : index
    %c208 = arith.constant 208 : index
    %c0_201 = arith.constant 0 : index
    %253 = vector.load %arg4[%c0_200, %c208, %c0_201] : memref<2x256x32xf32, #tpu.memory_space<vmem>>, vector<1x16x32xf32>
    %254 = vector.shape_cast %253 : vector<1x16x32xf32> to vector<16x32xf32>
    %255 = vector.shape_cast %252 : vector<16x32xf32> to vector<1x16x32xf32>
    tpu.vector_store %arg4[%c0_200, %c208, %c0_201], %255 {strides = array<i32>} : memref<2x256x32xf32, #tpu.memory_space<vmem>>, vector<1x16x32xf32>,
    %256 = vector.extract_strided_slice %199 {offsets = [252, 0], sizes = [16, 32], strides = [1, 1]} : vector<288x32xf32> to vector<16x32xf32>
    %c0_202 = arith.constant 0 : index
    %c224_203 = arith.constant 224 : index
    %c0_204 = arith.constant 0 : index
    %257 = vector.load %arg4[%c0_202, %c224_203, %c0_204] : memref<2x256x32xf32, #tpu.memory_space<vmem>>, vector<1x16x32xf32>
    %258 = vector.shape_cast %257 : vector<1x16x32xf32> to vector<16x32xf32>
    %259 = vector.shape_cast %256 : vector<16x32xf32> to vector<1x16x32xf32>
    tpu.vector_store %arg4[%c0_202, %c224_203, %c0_204], %259 {strides = array<i32>} : memref<2x256x32xf32, #tpu.memory_space<vmem>>, vector<1x16x32xf32>,
    %260 = vector.extract_strided_slice %199 {offsets = [270, 0], sizes = [16, 32], strides = [1, 1]} : vector<288x32xf32> to vector<16x32xf32>
    %c0_205 = arith.constant 0 : index
    %c240 = arith.constant 240 : index
    %c0_206 = arith.constant 0 : index
    %261 = vector.load %arg4[%c0_205, %c240, %c0_206] : memref<2x256x32xf32, #tpu.memory_space<vmem>>, vector<1x16x32xf32>
    %262 = vector.shape_cast %261 : vector<1x16x32xf32> to vector<16x32xf32>
    %263 = vector.shape_cast %260 : vector<16x32xf32> to vector<1x16x32xf32>
    tpu.vector_store %arg4[%c0_205, %c240, %c0_206], %263 {strides = array<i32>} : memref<2x256x32xf32, #tpu.memory_space<vmem>>, vector<1x16x32xf32>,
    %264 = vector.extract_strided_slice %153 {offsets = [288, 0], sizes = [288, 32], strides = [1, 1]} : vector<576x32xf32> to vector<288x32xf32>
    %cst_207 = arith.constant 0.000000e+00 : f32
    %265 = vector.shape_cast %172 : vector<288x1xi1> to vector<288x1xi1>
    %266 = vector.broadcast %265 : vector<288x1xi1> to vector<288x32xi1>
    %267 = vector.broadcast %cst_207 : f32 to vector<288x32xf32>
    %268 = arith.select %266, %264, %267 : vector<288x32xi1>, vector<288x32xf32>
    %cst_208 = arith.constant dense<0.000000e+00> : vector<32xf32>
    %269 = vector.multi_reduction <add>, %268, %cst_208 [0] : vector<288x32xf32> to vector<32xf32>
    %270 = vector.shape_cast %269 : vector<32xf32> to vector<1x32xf32>
    %271 = arith.mulf %268, %268 : vector<288x32xf32>
    %cst_209 = arith.constant dense<0.000000e+00> : vector<32xf32>
    %272 = vector.multi_reduction <add>, %271, %cst_209 [0] : vector<288x32xf32> to vector<32xf32>
    %273 = vector.shape_cast %272 : vector<32xf32> to vector<1x32xf32>
    %cst_210 = arith.constant 3.906250e-03 : f32
    %274 = vector.broadcast %cst_210 : f32 to vector<1x32xf32>
    %275 = arith.mulf %270, %274 : vector<1x32xf32>
    %cst_211 = arith.constant 3.906250e-03 : f32
    %276 = vector.broadcast %cst_211 : f32 to vector<1x32xf32>
    %277 = arith.mulf %273, %276 : vector<1x32xf32>
    %278 = arith.mulf %275, %275 : vector<1x32xf32>
    %279 = arith.subf %277, %278 : vector<1x32xf32>
    %cst_212 = arith.constant 0.000000e+00 : f32
    %280 = vector.broadcast %cst_212 : f32 to vector<1x32xf32>
    %281 = arith.maximumf %279, %280 : vector<1x32xf32>
    %282 = vector.broadcast %275 : vector<1x32xf32> to vector<288x32xf32>
    %283 = arith.subf %264, %282 : vector<288x32xf32>
    %cst_213 = arith.constant 9.99999974E-6 : f32
    %284 = vector.broadcast %cst_213 : f32 to vector<1x32xf32>
    %285 = arith.addf %281, %284 : vector<1x32xf32>
    %286 = math.rsqrt %285 : vector<1x32xf32>
    %287 = vector.broadcast %286 : vector<1x32xf32> to vector<288x32xf32>
    %288 = arith.mulf %283, %287 : vector<288x32xf32>
    %cst_214 = arith.constant 0.000000e+00 : f32
    %289 = vector.broadcast %cst_214 : f32 to vector<288x32xf32>
    %290 = arith.maximumf %288, %289 : vector<288x32xf32>
    %291 = vector.extract_strided_slice %290 {offsets = [0, 0], sizes = [16, 32], strides = [1, 1]} : vector<288x32xf32> to vector<16x32xf32>
    %c1_215 = arith.constant 1 : index
    %c0_216 = arith.constant 0 : index
    %c0_217 = arith.constant 0 : index
    %292 = vector.load %arg4[%c1_215, %c0_216, %c0_217] : memref<2x256x32xf32, #tpu.memory_space<vmem>>, vector<1x16x32xf32>
    %293 = vector.shape_cast %292 : vector<1x16x32xf32> to vector<16x32xf32>
    %294 = vector.shape_cast %291 : vector<16x32xf32> to vector<1x16x32xf32>
    tpu.vector_store %arg4[%c1_215, %c0_216, %c0_217], %294 {strides = array<i32>} : memref<2x256x32xf32, #tpu.memory_space<vmem>>, vector<1x16x32xf32>,
    %295 = vector.extract_strided_slice %290 {offsets = [18, 0], sizes = [16, 32], strides = [1, 1]} : vector<288x32xf32> to vector<16x32xf32>
    %c1_218 = arith.constant 1 : index
    %c16_219 = arith.constant 16 : index
    %c0_220 = arith.constant 0 : index
    %296 = vector.load %arg4[%c1_218, %c16_219, %c0_220] : memref<2x256x32xf32, #tpu.memory_space<vmem>>, vector<1x16x32xf32>
    %297 = vector.shape_cast %296 : vector<1x16x32xf32> to vector<16x32xf32>
    %298 = vector.shape_cast %295 : vector<16x32xf32> to vector<1x16x32xf32>
    tpu.vector_store %arg4[%c1_218, %c16_219, %c0_220], %298 {strides = array<i32>} : memref<2x256x32xf32, #tpu.memory_space<vmem>>, vector<1x16x32xf32>,
    %299 = vector.extract_strided_slice %290 {offsets = [36, 0], sizes = [16, 32], strides = [1, 1]} : vector<288x32xf32> to vector<16x32xf32>
    %c1_221 = arith.constant 1 : index
    %c32_222 = arith.constant 32 : index
    %c0_223 = arith.constant 0 : index
    %300 = vector.load %arg4[%c1_221, %c32_222, %c0_223] : memref<2x256x32xf32, #tpu.memory_space<vmem>>, vector<1x16x32xf32>
    %301 = vector.shape_cast %300 : vector<1x16x32xf32> to vector<16x32xf32>
    %302 = vector.shape_cast %299 : vector<16x32xf32> to vector<1x16x32xf32>
    tpu.vector_store %arg4[%c1_221, %c32_222, %c0_223], %302 {strides = array<i32>} : memref<2x256x32xf32, #tpu.memory_space<vmem>>, vector<1x16x32xf32>,
    %303 = vector.extract_strided_slice %290 {offsets = [54, 0], sizes = [16, 32], strides = [1, 1]} : vector<288x32xf32> to vector<16x32xf32>
    %c1_224 = arith.constant 1 : index
    %c48_225 = arith.constant 48 : index
    %c0_226 = arith.constant 0 : index
    %304 = vector.load %arg4[%c1_224, %c48_225, %c0_226] : memref<2x256x32xf32, #tpu.memory_space<vmem>>, vector<1x16x32xf32>
    %305 = vector.shape_cast %304 : vector<1x16x32xf32> to vector<16x32xf32>
    %306 = vector.shape_cast %303 : vector<16x32xf32> to vector<1x16x32xf32>
    tpu.vector_store %arg4[%c1_224, %c48_225, %c0_226], %306 {strides = array<i32>} : memref<2x256x32xf32, #tpu.memory_space<vmem>>, vector<1x16x32xf32>,
    %307 = vector.extract_strided_slice %290 {offsets = [72, 0], sizes = [16, 32], strides = [1, 1]} : vector<288x32xf32> to vector<16x32xf32>
    %c1_227 = arith.constant 1 : index
    %c64_228 = arith.constant 64 : index
    %c0_229 = arith.constant 0 : index
    %308 = vector.load %arg4[%c1_227, %c64_228, %c0_229] : memref<2x256x32xf32, #tpu.memory_space<vmem>>, vector<1x16x32xf32>
    %309 = vector.shape_cast %308 : vector<1x16x32xf32> to vector<16x32xf32>
    %310 = vector.shape_cast %307 : vector<16x32xf32> to vector<1x16x32xf32>
    tpu.vector_store %arg4[%c1_227, %c64_228, %c0_229], %310 {strides = array<i32>} : memref<2x256x32xf32, #tpu.memory_space<vmem>>, vector<1x16x32xf32>,
    %311 = vector.extract_strided_slice %290 {offsets = [90, 0], sizes = [16, 32], strides = [1, 1]} : vector<288x32xf32> to vector<16x32xf32>
    %c1_230 = arith.constant 1 : index
    %c80_231 = arith.constant 80 : index
    %c0_232 = arith.constant 0 : index
    %312 = vector.load %arg4[%c1_230, %c80_231, %c0_232] : memref<2x256x32xf32, #tpu.memory_space<vmem>>, vector<1x16x32xf32>
    %313 = vector.shape_cast %312 : vector<1x16x32xf32> to vector<16x32xf32>
    %314 = vector.shape_cast %311 : vector<16x32xf32> to vector<1x16x32xf32>
    tpu.vector_store %arg4[%c1_230, %c80_231, %c0_232], %314 {strides = array<i32>} : memref<2x256x32xf32, #tpu.memory_space<vmem>>, vector<1x16x32xf32>,
    %315 = vector.extract_strided_slice %290 {offsets = [108, 0], sizes = [16, 32], strides = [1, 1]} : vector<288x32xf32> to vector<16x32xf32>
    %c1_233 = arith.constant 1 : index
    %c96_234 = arith.constant 96 : index
    %c0_235 = arith.constant 0 : index
    %316 = vector.load %arg4[%c1_233, %c96_234, %c0_235] : memref<2x256x32xf32, #tpu.memory_space<vmem>>, vector<1x16x32xf32>
    %317 = vector.shape_cast %316 : vector<1x16x32xf32> to vector<16x32xf32>
    %318 = vector.shape_cast %315 : vector<16x32xf32> to vector<1x16x32xf32>
    tpu.vector_store %arg4[%c1_233, %c96_234, %c0_235], %318 {strides = array<i32>} : memref<2x256x32xf32, #tpu.memory_space<vmem>>, vector<1x16x32xf32>,
    %319 = vector.extract_strided_slice %290 {offsets = [126, 0], sizes = [16, 32], strides = [1, 1]} : vector<288x32xf32> to vector<16x32xf32>
    %c1_236 = arith.constant 1 : index
    %c112_237 = arith.constant 112 : index
    %c0_238 = arith.constant 0 : index
    %320 = vector.load %arg4[%c1_236, %c112_237, %c0_238] : memref<2x256x32xf32, #tpu.memory_space<vmem>>, vector<1x16x32xf32>
    %321 = vector.shape_cast %320 : vector<1x16x32xf32> to vector<16x32xf32>
    %322 = vector.shape_cast %319 : vector<16x32xf32> to vector<1x16x32xf32>
    tpu.vector_store %arg4[%c1_236, %c112_237, %c0_238], %322 {strides = array<i32>} : memref<2x256x32xf32, #tpu.memory_space<vmem>>, vector<1x16x32xf32>,
    %323 = vector.extract_strided_slice %290 {offsets = [144, 0], sizes = [16, 32], strides = [1, 1]} : vector<288x32xf32> to vector<16x32xf32>
    %c1_239 = arith.constant 1 : index
    %c128_240 = arith.constant 128 : index
    %c0_241 = arith.constant 0 : index
    %324 = vector.load %arg4[%c1_239, %c128_240, %c0_241] : memref<2x256x32xf32, #tpu.memory_space<vmem>>, vector<1x16x32xf32>
    %325 = vector.shape_cast %324 : vector<1x16x32xf32> to vector<16x32xf32>
    %326 = vector.shape_cast %323 : vector<16x32xf32> to vector<1x16x32xf32>
    tpu.vector_store %arg4[%c1_239, %c128_240, %c0_241], %326 {strides = array<i32>} : memref<2x256x32xf32, #tpu.memory_space<vmem>>, vector<1x16x32xf32>,
    %327 = vector.extract_strided_slice %290 {offsets = [162, 0], sizes = [16, 32], strides = [1, 1]} : vector<288x32xf32> to vector<16x32xf32>
    %c1_242 = arith.constant 1 : index
    %c144_243 = arith.constant 144 : index
    %c0_244 = arith.constant 0 : index
    %328 = vector.load %arg4[%c1_242, %c144_243, %c0_244] : memref<2x256x32xf32, #tpu.memory_space<vmem>>, vector<1x16x32xf32>
    %329 = vector.shape_cast %328 : vector<1x16x32xf32> to vector<16x32xf32>
    %330 = vector.shape_cast %327 : vector<16x32xf32> to vector<1x16x32xf32>
    tpu.vector_store %arg4[%c1_242, %c144_243, %c0_244], %330 {strides = array<i32>} : memref<2x256x32xf32, #tpu.memory_space<vmem>>, vector<1x16x32xf32>,
    %331 = vector.extract_strided_slice %290 {offsets = [180, 0], sizes = [16, 32], strides = [1, 1]} : vector<288x32xf32> to vector<16x32xf32>
    %c1_245 = arith.constant 1 : index
    %c160_246 = arith.constant 160 : index
    %c0_247 = arith.constant 0 : index
    %332 = vector.load %arg4[%c1_245, %c160_246, %c0_247] : memref<2x256x32xf32, #tpu.memory_space<vmem>>, vector<1x16x32xf32>
    %333 = vector.shape_cast %332 : vector<1x16x32xf32> to vector<16x32xf32>
    %334 = vector.shape_cast %331 : vector<16x32xf32> to vector<1x16x32xf32>
    tpu.vector_store %arg4[%c1_245, %c160_246, %c0_247], %334 {strides = array<i32>} : memref<2x256x32xf32, #tpu.memory_space<vmem>>, vector<1x16x32xf32>,
    %335 = vector.extract_strided_slice %290 {offsets = [198, 0], sizes = [16, 32], strides = [1, 1]} : vector<288x32xf32> to vector<16x32xf32>
    %c1_248 = arith.constant 1 : index
    %c176_249 = arith.constant 176 : index
    %c0_250 = arith.constant 0 : index
    %336 = vector.load %arg4[%c1_248, %c176_249, %c0_250] : memref<2x256x32xf32, #tpu.memory_space<vmem>>, vector<1x16x32xf32>
    %337 = vector.shape_cast %336 : vector<1x16x32xf32> to vector<16x32xf32>
    %338 = vector.shape_cast %335 : vector<16x32xf32> to vector<1x16x32xf32>
    tpu.vector_store %arg4[%c1_248, %c176_249, %c0_250], %338 {strides = array<i32>} : memref<2x256x32xf32, #tpu.memory_space<vmem>>, vector<1x16x32xf32>,
    %339 = vector.extract_strided_slice %290 {offsets = [216, 0], sizes = [16, 32], strides = [1, 1]} : vector<288x32xf32> to vector<16x32xf32>
    %c1_251 = arith.constant 1 : index
    %c192_252 = arith.constant 192 : index
    %c0_253 = arith.constant 0 : index
    %340 = vector.load %arg4[%c1_251, %c192_252, %c0_253] : memref<2x256x32xf32, #tpu.memory_space<vmem>>, vector<1x16x32xf32>
    %341 = vector.shape_cast %340 : vector<1x16x32xf32> to vector<16x32xf32>
    %342 = vector.shape_cast %339 : vector<16x32xf32> to vector<1x16x32xf32>
    tpu.vector_store %arg4[%c1_251, %c192_252, %c0_253], %342 {strides = array<i32>} : memref<2x256x32xf32, #tpu.memory_space<vmem>>, vector<1x16x32xf32>,
    %343 = vector.extract_strided_slice %290 {offsets = [234, 0], sizes = [16, 32], strides = [1, 1]} : vector<288x32xf32> to vector<16x32xf32>
    %c1_254 = arith.constant 1 : index
    %c208_255 = arith.constant 208 : index
    %c0_256 = arith.constant 0 : index
    %344 = vector.load %arg4[%c1_254, %c208_255, %c0_256] : memref<2x256x32xf32, #tpu.memory_space<vmem>>, vector<1x16x32xf32>
    %345 = vector.shape_cast %344 : vector<1x16x32xf32> to vector<16x32xf32>
    %346 = vector.shape_cast %343 : vector<16x32xf32> to vector<1x16x32xf32>
    tpu.vector_store %arg4[%c1_254, %c208_255, %c0_256], %346 {strides = array<i32>} : memref<2x256x32xf32, #tpu.memory_space<vmem>>, vector<1x16x32xf32>,
    %347 = vector.extract_strided_slice %290 {offsets = [252, 0], sizes = [16, 32], strides = [1, 1]} : vector<288x32xf32> to vector<16x32xf32>
    %c1_257 = arith.constant 1 : index
    %c224_258 = arith.constant 224 : index
    %c0_259 = arith.constant 0 : index
    %348 = vector.load %arg4[%c1_257, %c224_258, %c0_259] : memref<2x256x32xf32, #tpu.memory_space<vmem>>, vector<1x16x32xf32>
    %349 = vector.shape_cast %348 : vector<1x16x32xf32> to vector<16x32xf32>
    %350 = vector.shape_cast %347 : vector<16x32xf32> to vector<1x16x32xf32>
    tpu.vector_store %arg4[%c1_257, %c224_258, %c0_259], %350 {strides = array<i32>} : memref<2x256x32xf32, #tpu.memory_space<vmem>>, vector<1x16x32xf32>,
    %351 = vector.extract_strided_slice %290 {offsets = [270, 0], sizes = [16, 32], strides = [1, 1]} : vector<288x32xf32> to vector<16x32xf32>
    %c1_260 = arith.constant 1 : index
    %c240_261 = arith.constant 240 : index
    %c0_262 = arith.constant 0 : index
    %352 = vector.load %arg4[%c1_260, %c240_261, %c0_262] : memref<2x256x32xf32, #tpu.memory_space<vmem>>, vector<1x16x32xf32>
    %353 = vector.shape_cast %352 : vector<1x16x32xf32> to vector<16x32xf32>
    %354 = vector.shape_cast %351 : vector<16x32xf32> to vector<1x16x32xf32>
    tpu.vector_store %arg4[%c1_260, %c240_261, %c0_262], %354 {strides = array<i32>} : memref<2x256x32xf32, #tpu.memory_space<vmem>>, vector<1x16x32xf32>,
    return
  }
  func.func @transform_0(%arg0: i32) -> (i32, i32, i32) {
    %c0_i32 = arith.constant 0 : i32
    %c0_i32_0 = arith.constant 0 : i32
    %c0_i32_1 = arith.constant 0 : i32
    return %arg0, %c0_i32, %c0_i32_0 : i32, i32, i32
  }
  func.func @transform_1(%arg0: i32) -> (i32, i32) {
    %c0_i32 = arith.constant 0 : i32
    %c0_i32_0 = arith.constant 0 : i32
    %c0_i32_1 = arith.constant 0 : i32
    return %c0_i32, %c0_i32_0 : i32, i32
  }
  func.func @transform_2(%arg0: i32) -> (i32, i32) {
    %c0_i32 = arith.constant 0 : i32
    %c0_i32_0 = arith.constant 0 : i32
    %c0_i32_1 = arith.constant 0 : i32
    return %c0_i32, %c0_i32_0 : i32, i32
  }
  func.func @transform_3(%arg0: i32) -> (i32, i32, i32) {
    %c0_i32 = arith.constant 0 : i32
    %c0_i32_0 = arith.constant 0 : i32
    %c0_i32_1 = arith.constant 0 : i32
    return %arg0, %c0_i32, %c0_i32_0 : i32, i32, i32
  }
}

</mosaic_0001>

<llo_original>
// kernel: block_forward.1
$region0: #{block_forward.1}
  #allocation0 [shape = 'u32[]', space=smem, size = 0x4, offset = 0x4, fixed_abs, tag = 'smem constant byte address 0x4 - core index']
  #allocation1 [shape = 'u32[144,128]{1,0:T(1,128)}', space=vmem, size = 0x12000, scoped, tag = 'internal scratch']
  #allocation2 [shape = 'bf16[576,36]{1,0:T(16,128)(2,1)}', space=vmem, size = 0x24000, scoped, tag = 'scratch operand']
  #allocation3 [shape = 'bf16[576,288]{1,0:T(16,128)(2,1)}', space=vmem, size = 0x6c000, scoped, tag = 'scratch operand']
  %s0 = inlined_call_operand.vmem [shape: bf16[4,328,4], index: 0, kind: input, shape index: {}]
  %s1 = inlined_call_operand.vmem [shape: bf16[36,32], index: 1, kind: input, shape index: {}]
  %s2 = inlined_call_operand.vmem [shape: bf16[288,32], index: 2, kind: input, shape index: {}]
  %s3 = inlined_call_operand.hbm [shape: f32[4,256,32], index: 3, kind: output, shape index: {}]
  %s4 = sld [smem:[#allocation0]]
  $region45: #{block_forward.1} parent=0
    _
  %s6 = ssub.s32 1, %s4
  %s7 = scalar_select 0, %s6, %s4
  $region1: #{block_forward.1} parent=0
    #allocation4 [shape = 'u8[524288]{0}', space=vmem, size = 0x80000, scoped, tag = 'output window, operand 0']
    #allocation5 [shape = 's32[2]{0}', space=sflag, size = 0x8, scoped, tag = 'scoped memory for block_forward.1']
    %8 = vsyncpa [#allocation5], 0
    %s9 = scalar_lea.sflag [#allocation5], 1
    %10 = vsyncpa %s9, 0
    loop: start=0, step=1, limit=4
    $region2: #{block_forward.1} parent=1 // loop_pre_header
      _
    $region3: #{block_forward.1} parent=1 // loop_header
      %s12 = sphi 0, %s16
      %p13 = scmp.ge.s32.totalorder %s12, 4
      %s22 = sphi 0, %s24
      %s25 = sphi 0, %s22
      %s26 = sphi 0, %s25
      %s42 = sphi 0, %s26
      %s46 = sphi 0, %s46
      %s48 = sphi 0, %s46
      %s49 = sphi 0, %s48
      %s63 = sphi 0, %s49
      %s67 = sphi 0, %s67
      %s69 = sphi 0, %s67
      %s70 = sphi 0, %s69
      %s84 = sphi 0, %s70
      %s90 = sphi 0, %s92
      %s93 = sphi 0, %s90
      %s94 = sphi 0, %s93
      %s110 = sphi 0, %s94
    $region4: #{block_forward.1} parent=1 // loop_header_branch
      %15 = sbr.rel (%p13) target = $region8
    $region5: #{block_forward.1} parent=1 // loop_body
      %s17 = ssub.s32 %s12, 1
      %s18 = ssub.s32 %s12, 2
      %s19 = sadd.s32 %s12, 1
      %s20 = ssub.s32 %s12, %s19
      %p21 = scmp.eq.s32.totalorder %s20, 0
      %s23 = sadd.s32 %s22, 1
      %s24 = scalar_select %p21, %s22, %s23
      %p27 = pneg %p21
      %p28 = scmp.eq.s32.totalorder %s12, 1
      %p29 = por %p27, %p28
      %p30 = scmp.ne.s32.totalorder %s22, %s25
      %p31 = scmp.eq.s32.totalorder %s12, 0
      %p32 = por %p30, %p31
      %p33 = scmp.ne.s32.totalorder %s22, %s25
      %p34 = scmp.eq.s32.totalorder %s17, 1
      %p35 = por %p33, %p34
      %p36 = scmp.ne.s32.totalorder %s25, %s26
      %p37 = scmp.eq.s32.totalorder %s17, 0
      %p38 = por %p36, %p37
      %p39 = scmp.ne.s32.totalorder %s25, %s26
      %p40 = scmp.eq.s32.totalorder %s18, 1
      %p41 = por %p39, %p40
      %p43 = scmp.ne.s32.totalorder %s26, %s42
      %p44 = scmp.eq.s32.totalorder %s18, 0
      %p45 = por %p43, %p44
      %s47 = sadd.s32 %s46, 1
      %p50 = scmp.eq.s32.totalorder %s12, 1
      %p51 = scmp.ne.s32.totalorder %s46, %s48
      %p52 = scmp.eq.s32.totalorder %s12, 0
      %p53 = por %p51, %p52
      %p54 = scmp.ne.s32.totalorder %s46, %s48
      %p55 = scmp.eq.s32.totalorder %s17, 1
      %p56 = por %p54, %p55
      %p57 = scmp.ne.s32.totalorder %s48, %s49
      %p58 = scmp.eq.s32.totalorder %s17, 0
      %p59 = por %p57, %p58
      %p60 = scmp.ne.s32.totalorder %s48, %s49
      %p61 = scmp.eq.s32.totalorder %s18, 1
      %p62 = por %p60, %p61
      %p64 = scmp.ne.s32.totalorder %s49, %s63
      %p65 = scmp.eq.s32.totalorder %s18, 0
      %p66 = por %p64, %p65
      %s68 = sadd.s32 %s67, 1
      %p71 = scmp.eq.s32.totalorder %s12, 1
      %p72 = scmp.ne.s32.totalorder %s67, %s69
      %p73 = scmp.eq.s32.totalorder %s12, 0
      %p74 = por %p72, %p73
      %p75 = scmp.ne.s32.totalorder %s67, %s69
      %p76 = scmp.eq.s32.totalorder %s17, 1
      %p77 = por %p75, %p76
      %p78 = scmp.ne.s32.totalorder %s69, %s70
      %p79 = scmp.eq.s32.totalorder %s17, 0
      %p80 = por %p78, %p79
      %p81 = scmp.ne.s32.totalorder %s69, %s70
      %p82 = scmp.eq.s32.totalorder %s18, 1
      %p83 = por %p81, %p82
      %p85 = scmp.ne.s32.totalorder %s70, %s84
      %p86 = scmp.eq.s32.totalorder %s18, 0
      %p87 = por %p85, %p86
      %s88 = ssub.s32 %s12, %s19
      %p89 = scmp.eq.s32.totalorder %s88, 0
      %s91 = sadd.s32 %s90, 1
      %s92 = scalar_select %p89, %s90, %s91
      %p95 = pneg %p89
      %p96 = scmp.eq.s32.totalorder %s12, 1
      %p97 = por %p95, %p96
      %p98 = scmp.ne.s32.totalorder %s90, %s93
      %p99 = scmp.eq.s32.totalorder %s12, 0
      %p100 = por %p98, %p99
      %p101 = scmp.ne.s32.totalorder %s90, %s93
      %p102 = scmp.eq.s32.totalorder %s17, 1
      %p103 = por %p101, %p102
      %p104 = scmp.ne.s32.totalorder %s93, %s94
      %p105 = scmp.eq.s32.totalorder %s17, 0
      %p106 = por %p104, %p105
      %p107 = scmp.ne.s32.totalorder %s93, %s94
      %p108 = scmp.eq.s32.totalorder %s18, 1
      %p109 = por %p107, %p108
      %p111 = scmp.ne.s32.totalorder %s94, %s110
      %p112 = scmp.eq.s32.totalorder %s18, 0
      %p113 = por %p111, %p112
      %p114 = scmp.le.s32.totalorder 1, %s12
      %p115 = scmp.lt.s32.totalorder %s12, 3
      %p116 = pnand %p114, %p115
      %p117 = pneg %p116
      // Predicated region
      $region9: #{block_forward.1} parent=5 // pred_check
        _
      $region10: #{block_forward.1} parent=5 // pred_check_branch
        %119 = sbr.rel (%p116) target = $region12
      $region11: #{block_forward.1} parent=5 // pred_region
        %s120 = ssub.s32 %s12, 1
        // Predicated region
        $region13: #{block_forward.1} parent=11 // pred_check
          %p121 = pneg %p59
        $region14: #{block_forward.1} parent=11 // pred_check_branch
          %123 = sbr.rel (%p121) target = $region16
        $region15: #{block_forward.1} parent=11 // pred_region
          _
        $region16: #{block_forward.1} parent=11 // pred_fallthru
          _
        // Predicated region
        $region17: #{block_forward.1} parent=11 // pred_check
          %p124 = pneg %p80
        $region18: #{block_forward.1} parent=11 // pred_check_branch
          %126 = sbr.rel (%p124) target = $region20
        $region19: #{block_forward.1} parent=11 // pred_region
          _
        $region20: #{block_forward.1} parent=11 // pred_fallthru
          _
      $region12: #{block_forward.1} parent=5 // pred_fallthru
        _
      %p127 = scmp.lt.s32.totalorder %s12, 2
      // Predicated region
      $region21: #{block_forward.1} parent=5 // pred_check
        %p128 = pneg %p127
      $region22: #{block_forward.1} parent=5 // pred_check_branch
        %130 = sbr.rel (%p128) target = $region24
      $region23: #{block_forward.1} parent=5 // pred_region
        // Predicated region
        $region25: #{block_forward.1} parent=23 // pred_check
          %p131 = pneg %p32
        $region26: #{block_forward.1} parent=23 // pred_check_branch
          %133 = sbr.rel (%p131) target = $region28
        $region27: #{block_forward.1} parent=23 // pred_region
          %s134 = smul.u32 2, %s12
          %p135 = scmp.lt.s32.totalorder %s134, 3
          %s136 = scalar_select %p135, %s134, 3
          %s137 = smul.addr %s136, 41
          %s138 = smul.addr %s137, 4
          %s139 = scalar_lea.vmem %s0, %s138
          %s140 = smul.u32 2, %s12
        $region28: #{block_forward.1} parent=23 // pred_fallthru
          _
      $region24: #{block_forward.1} parent=5 // pred_fallthru
        _
      %p141 = scmp.le.s32.totalorder 1, %s12
      %p142 = scmp.lt.s32.totalorder %s12, 3
      %p143 = pnand %p141, %p142
      %p144 = pneg %p143
      // Predicated region
      $region29: #{block_forward.1} parent=5 // pred_check
        _
      $region30: #{block_forward.1} parent=5 // pred_check_branch
        %146 = sbr.rel (%p143) target = $region32
      $region31: #{block_forward.1} parent=5 // pred_region
        %s147 = ssub.s32 %s12, 1
        %s148 = smul.u32 2, %s17
        %p149 = scmp.lt.s32.totalorder %s148, 3
        %s150 = scalar_select %p149, %s148, 3
        %s151 = smul.addr %s150, 41
        %s152 = smul.addr %s151, 4
        %s153 = scalar_lea.vmem %s0, %s152
        %p154 = pneg %p38
        %p155 = pneg %p35
        %p156 = pneg %p59
        %p157 = pneg %p56
        %p158 = pneg %p80
        %p159 = pneg %p77
        %p160 = pneg %p106
        %p161 = pneg %p103
        %s162 = sand.u32 %s93, 1
        %s163 = scalar_lea.sflag [#allocation5], %s162
        %s164 = sand.u32 %s93, 1
        %s165 = smul.addr %s164, 512
        %s166 = scalar_lea.vmem [#allocation4], %s165
        %s167 = smul.u32 2, %s17
        %p168 = scmp.lt.s32.totalorder %s167, 3
        %s169 = scalar_select %p168, %s167, 3
        %s170 = smul.addr %s169, 41
        %s171 = smul.addr %s170, 4
        %s172 = scalar_lea.vmem %s0, %s171
        %s173 = smul.u32 2, %s17
        %s174 = smul.u32 2, %s17
        %v176 = vld [vmem:[%s172] sm:$0xf]
        %v177 = vld [vmem:[%s172 + $0x4] sm:$0xf]
        %v178 = vld [vmem:[%s172 + $0x8] sm:$0xf]
        %v179 = vld [vmem:[%s172 + $0xc] sm:$0xf]
        %v180 = vld [vmem:[%s172 + $0x10] sm:$0xf]
        %v181 = vld [vmem:[%s172 + $0x14] sm:$0xf]
        %v182 = vld [vmem:[%s172 + $0x18] sm:$0xf]
        %v183 = vld [vmem:[%s172 + $0x1c] sm:$0xf]
        %v184 = vld [vmem:[%s172 + $0x20] sm:$0xf]
        %v185 = vld [vmem:[%s172 + $0x24] sm:$0xf]
        %v186 = vld [vmem:[%s172 + $0x28] sm:$0xf]
        %v187 = vld [vmem:[%s172 + $0x2c] sm:$0xf]
        %v188 = vld [vmem:[%s172 + $0x30] sm:$0xf]
        %v189 = vld [vmem:[%s172 + $0x34] sm:$0xf]
        %v190 = vld [vmem:[%s172 + $0x38] sm:$0xf]
        %v191 = vld [vmem:[%s172 + $0x3c] sm:$0xf]
        %v192 = vld [vmem:[%s172 + $0x40] sm:$0xf]
        %v193 = vld [vmem:[%s172 + $0x44] sm:$0xf]
        %v194 = vld [vmem:[%s172 + $0x48] sm:$0xf]
        %v195 = vld [vmem:[%s172 + $0x4c] sm:$0xf]
        %v196 = vld [vmem:[%s172 + $0x50] sm:$0xf]
        %v197 = vld [vmem:[%s172 + $0x54] sm:$0xf]
        %v198 = vld [vmem:[%s172 + $0x58] sm:$0xf]
        %v199 = vld [vmem:[%s172 + $0x5c] sm:$0xf]
        %v200 = vld [vmem:[%s172 + $0x60] sm:$0xf]
        %v201 = vld [vmem:[%s172 + $0x64] sm:$0xf]
        %v202 = vld [vmem:[%s172 + $0x68] sm:$0xf]
        %v203 = vld [vmem:[%s172 + $0x6c] sm:$0xf]
        %v204 = vld [vmem:[%s172 + $0x70] sm:$0xf]
        %v205 = vld [vmem:[%s172 + $0x74] sm:$0xf]
        %v206 = vld [vmem:[%s172 + $0x78] sm:$0xf]
        %v207 = vld [vmem:[%s172 + $0x7c] sm:$0xf]
        %v208 = vld [vmem:[%s172 + $0x80] sm:$0xf]
        %v209 = vld [vmem:[%s172 + $0x84] sm:$0xf]
        %v210 = vld [vmem:[%s172 + $0x88] sm:$0xf]
        %v211 = vld [vmem:[%s172 + $0x8c] sm:$0xf]
        %v248 = vunpack.c.l.b16 %v176
        %v249 = vunpack.c.l.b16 %v177
        %v250 = vunpack.c.l.b16 %v178
        %v251 = vunpack.c.l.b16 %v179
        %v252 = vunpack.c.l.b16 %v180
        %v253 = vunpack.c.l.b16 %v181
        %v254 = vunpack.c.l.b16 %v182
        %v255 = vunpack.c.l.b16 %v183
        %v256 = vunpack.c.l.b16 %v184
        %v257 = vunpack.c.l.b16 %v185
        %v258 = vunpack.c.l.b16 %v186
        %v259 = vunpack.c.l.b16 %v187
        %v260 = vunpack.c.l.b16 %v188
        %v261 = vunpack.c.l.b16 %v189
        %v262 = vunpack.c.l.b16 %v190
        %v263 = vunpack.c.l.b16 %v191
        %v264 = vunpack.c.l.b16 %v192
        %v265 = vunpack.c.l.b16 %v193
        %v266 = vunpack.c.l.b16 %v194
        %v267 = vunpack.c.l.b16 %v195
        %v268 = vunpack.c.l.b16 %v196
        %v269 = vunpack.c.l.b16 %v197
        %v270 = vunpack.c.l.b16 %v198
        %v271 = vunpack.c.l.b16 %v199
        %v272 = vunpack.c.l.b16 %v200
        %v273 = vunpack.c.l.b16 %v201
        %v274 = vunpack.c.l.b16 %v202
        %v275 = vunpack.c.l.b16 %v203
        %v276 = vunpack.c.l.b16 %v204
        %v277 = vunpack.c.l.b16 %v205
        %v278 = vunpack.c.l.b16 %v206
        %v279 = vunpack.c.l.b16 %v207
        %v280 = vunpack.c.l.b16 %v208
        %v281 = vunpack.c.l.b16 %v209
        %v282 = vunpack.c.l.b16 %v210
        %v283 = vunpack.c.l.b16 %v211
        %v284 = vpack.c.b16 %v249, %v248
        %v285 = vpack.c.b16 %v251, %v250
        %v286 = vpack.c.b16 %v253, %v252
        %v287 = vpack.c.b16 %v255, %v254
        %v288 = vpack.c.b16 %v257, %v256
        %v289 = vpack.c.b16 %v259, %v258
        %v290 = vpack.c.b16 %v261, %v260
        %v291 = vpack.c.b16 %v263, %v262
        %v292 = vpack.c.b16 %v265, %v264
        %v293 = vpack.c.b16 %v267, %v266
        %v294 = vpack.c.b16 %v269, %v268
        %v295 = vpack.c.b16 %v271, %v270
        %v296 = vpack.c.b16 %v273, %v272
        %v297 = vpack.c.b16 %v275, %v274
        %v298 = vpack.c.b16 %v277, %v276
        %v299 = vpack.c.b16 %v279, %v278
        %v300 = vpack.c.b16 %v281, %v280
        %v301 = vpack.c.b16 %v283, %v282
        %vm320 = vcmask 31744
        %321 = vst.msk [vmem:[#allocation2] sm:$0xff] %vm320, %v284
        %322 = vst.msk [vmem:[#allocation2 + $0x8] sm:$0xff] %vm320, %v285
        %323 = vst.msk [vmem:[#allocation2 + $0x10] sm:$0xff] %vm320, %v286
        %324 = vst.msk [vmem:[#allocation2 + $0x18] sm:$0xff] %vm320, %v287
        %325 = vst.msk [vmem:[#allocation2 + $0x20] sm:$0xff] %vm320, %v288
        %326 = vst.msk [vmem:[#allocation2 + $0x28] sm:$0xff] %vm320, %v289
        %327 = vst.msk [vmem:[#allocation2 + $0x30] sm:$0xff] %vm320, %v290
        %328 = vst.msk [vmem:[#allocation2 + $0x38] sm:$0xff] %vm320, %v291
        %329 = vst.msk [vmem:[#allocation2 + $0x40] sm:$0xff] %vm320, %v292
        %330 = vst.msk [vmem:[#allocation2 + $0x48] sm:$0xff] %vm320, %v293
        %331 = vst.msk [vmem:[#allocation2 + $0x50] sm:$0xff] %vm320, %v294
        %332 = vst.msk [vmem:[#allocation2 + $0x58] sm:$0xff] %vm320, %v295
        %333 = vst.msk [vmem:[#allocation2 + $0x60] sm:$0xff] %vm320, %v296
        %334 = vst.msk [vmem:[#allocation2 + $0x68] sm:$0xff] %vm320, %v297
        %335 = vst.msk [vmem:[#allocation2 + $0x70] sm:$0xff] %vm320, %v298
        %336 = vst.msk [vmem:[#allocation2 + $0x78] sm:$0xff] %vm320, %v299
        %337 = vst.msk [vmem:[#allocation2 + $0x80] sm:$0xff] %vm320, %v300
        %338 = vst.msk [vmem:[#allocation2 + $0x88] sm:$0xff] %vm320, %v301
        %v339 = vld [vmem:[%s172] sm:$0xf]
        %v340 = vld [vmem:[%s172 + $0x4] sm:$0xf]
        %v341 = vld [vmem:[%s172 + $0x8] sm:$0xf]
        %v342 = vld [vmem:[%s172 + $0xc] sm:$0xf]
        %v343 = vld [vmem:[%s172 + $0x10] sm:$0xf]
        %v344 = vld [vmem:[%s172 + $0x14] sm:$0xf]
        %v345 = vld [vmem:[%s172 + $0x18] sm:$0xf]
        %v346 = vld [vmem:[%s172 + $0x1c] sm:$0xf]
        %v347 = vld [vmem:[%s172 + $0x20] sm:$0xf]
        %v348 = vld [vmem:[%s172 + $0x24] sm:$0xf]
        %v349 = vld [vmem:[%s172 + $0x28] sm:$0xf]
        %v350 = vld [vmem:[%s172 + $0x2c] sm:$0xf]
        %v351 = vld [vmem:[%s172 + $0x30] sm:$0xf]
        %v352 = vld [vmem:[%s172 + $0x34] sm:$0xf]
        %v353 = vld [vmem:[%s172 + $0x38] sm:$0xf]
        %v354 = vld [vmem:[%s172 + $0x3c] sm:$0xf]
        %v355 = vld [vmem:[%s172 + $0x40] sm:$0xf]
        %v356 = vld [vmem:[%s172 + $0x44] sm:$0xf]
        %v357 = vld [vmem:[%s172 + $0x48] sm:$0xf]
        %v358 = vld [vmem:[%s172 + $0x4c] sm:$0xf]
        %v359 = vld [vmem:[%s172 + $0x50] sm:$0xf]
        %v360 = vld [vmem:[%s172 + $0x54] sm:$0xf]
        %v361 = vld [vmem:[%s172 + $0x58] sm:$0xf]
        %v362 = vld [vmem:[%s172 + $0x5c] sm:$0xf]
        %v363 = vld [vmem:[%s172 + $0x60] sm:$0xf]
        %v364 = vld [vmem:[%s172 + $0x64] sm:$0xf]
        %v365 = vld [vmem:[%s172 + $0x68] sm:$0xf]
        %v366 = vld [vmem:[%s172 + $0x6c] sm:$0xf]
        %v367 = vld [vmem:[%s172 + $0x70] sm:$0xf]
        %v368 = vld [vmem:[%s172 + $0x74] sm:$0xf]
        %v369 = vld [vmem:[%s172 + $0x78] sm:$0xf]
        %v370 = vld [vmem:[%s172 + $0x7c] sm:$0xf]
        %v371 = vld [vmem:[%s172 + $0x80] sm:$0xf]
        %v372 = vld [vmem:[%s172 + $0x84] sm:$0xf]
        %v373 = vld [vmem:[%s172 + $0x88] sm:$0xf]
        %v374 = vld [vmem:[%s172 + $0x8c] sm:$0xf]
        %v375 = vld [vmem:[%s172 + $0x90] sm:$0x1]
        %v413 = vunpack.c.l.b16 %v339
        %v414 = vunpack.c.l.b16 %v340
        %v415 = vunpack.c.l.b16 %v341
        %v416 = vunpack.c.l.b16 %v342
        %v417 = vunpack.c.l.b16 %v343
        %v418 = vunpack.c.l.b16 %v344
        %v419 = vunpack.c.l.b16 %v345
        %v420 = vunpack.c.l.b16 %v346
        %v421 = vunpack.c.l.b16 %v347
        %v422 = vunpack.c.l.b16 %v348
        %v423 = vunpack.c.l.b16 %v349
        %v424 = vunpack.c.l.b16 %v350
        %v425 = vunpack.c.l.b16 %v351
        %v426 = vunpack.c.l.b16 %v352
        %v427 = vunpack.c.l.b16 %v353
        %v428 = vunpack.c.l.b16 %v354
        %v429 = vunpack.c.l.b16 %v355
        %v430 = vunpack.c.l.b16 %v356
        %v431 = vunpack.c.l.b16 %v357
        %v432 = vunpack.c.l.b16 %v358
        %v433 = vunpack.c.l.b16 %v359
        %v434 = vunpack.c.l.b16 %v360
        %v435 = vunpack.c.l.b16 %v361
        %v436 = vunpack.c.l.b16 %v362
        %v437 = vunpack.c.l.b16 %v363
        %v438 = vunpack.c.l.b16 %v364
        %v439 = vunpack.c.l.b16 %v365
        %v440 = vunpack.c.l.b16 %v366
        %v441 = vunpack.c.l.b16 %v367
        %v442 = vunpack.c.l.b16 %v368
        %v443 = vunpack.c.l.b16 %v369
        %v444 = vunpack.c.l.b16 %v370
        %v445 = vunpack.c.l.b16 %v371
        %v446 = vunpack.c.l.b16 %v372
        %v447 = vunpack.c.l.b16 %v373
        %v448 = vunpack.c.l.b16 %v374
        %v449 = vunpack.c.l.b16 %v375
        %v450 = vpack.c.b16 %v414, %v413
        %v451 = vpack.c.b16 %v416, %v415
        %v452 = vpack.c.b16 %v418, %v417
        %v453 = vpack.c.b16 %v420, %v419
        %v454 = vpack.c.b16 %v422, %v421
        %v455 = vpack.c.b16 %v424, %v423
        %v456 = vpack.c.b16 %v426, %v425
        %v457 = vpack.c.b16 %v428, %v427
        %v458 = vpack.c.b16 %v430, %v429
        %v459 = vpack.c.b16 %v432, %v431
        %v460 = vpack.c.b16 %v434, %v433
        %v461 = vpack.c.b16 %v436, %v435
        %v462 = vpack.c.b16 %v438, %v437
        %v463 = vpack.c.b16 %v440, %v439
        %v464 = vpack.c.b16 %v442, %v441
        %v465 = vpack.c.b16 %v444, %v443
        %v466 = vpack.c.b16 %v446, %v445
        %v467 = vpack.c.b16 %v448, %v447
        %v468 = vpack.c.b16 %v449, %v449
        %vm469 = vsmask.f32 7424
        %v471 = vshrl.u32 %v450, 16
        %v473 = vshll.u32 %v450, 16
        %v475 = vrot.slane %v473, 1
        %v476 = vor.u32 %v471, %v475
        %v478 = vshll.u32 %v451, 16
        %v480 = vrot.slane %v478, 1
        %v481 = vsel %vm469, %v476, %v480
        %v482 = vshrl.u32 %v451, 16
        %v484 = vor.u32 %v482, %v480
        %v486 = vshll.u32 %v452, 16
        %v488 = vrot.slane %v486, 1
        %v489 = vsel %vm469, %v484, %v488
        %v490 = vshrl.u32 %v452, 16
        %v492 = vor.u32 %v490, %v488
        %v494 = vshll.u32 %v453, 16
        %v496 = vrot.slane %v494, 1
        %v497 = vsel %vm469, %v492, %v496
        %v498 = vshrl.u32 %v453, 16
        %v500 = vor.u32 %v498, %v496
        %v502 = vshll.u32 %v454, 16
        %v504 = vrot.slane %v502, 1
        %v505 = vsel %vm469, %v500, %v504
        %v506 = vshrl.u32 %v454, 16
        %v508 = vor.u32 %v506, %v504
        %v510 = vshll.u32 %v455, 16
        %v512 = vrot.slane %v510, 1
        %v513 = vsel %vm469, %v508, %v512
        %v514 = vshrl.u32 %v455, 16
        %v516 = vor.u32 %v514, %v512
        %v518 = vshll.u32 %v456, 16
        %v520 = vrot.slane %v518, 1
        %v521 = vsel %vm469, %v516, %v520
        %v522 = vshrl.u32 %v456, 16
        %v524 = vor.u32 %v522, %v520
        %v526 = vshll.u32 %v457, 16
        %v528 = vrot.slane %v526, 1
        %v529 = vsel %vm469, %v524, %v528
        %v530 = vshrl.u32 %v457, 16
        %v532 = vor.u32 %v530, %v528
        %v534 = vshll.u32 %v458, 16
        %v536 = vrot.slane %v534, 1
        %v537 = vsel %vm469, %v532, %v536
        %v538 = vshrl.u32 %v458, 16
        %v540 = vor.u32 %v538, %v536
        %v542 = vshll.u32 %v459, 16
        %v544 = vrot.slane %v542, 1
        %v545 = vsel %vm469, %v540, %v544
        %v546 = vshrl.u32 %v459, 16
        %v548 = vor.u32 %v546, %v544
        %v550 = vshll.u32 %v460, 16
        %v552 = vrot.slane %v550, 1
        %v553 = vsel %vm469, %v548, %v552
        %v554 = vshrl.u32 %v460, 16
        %v556 = vor.u32 %v554, %v552
        %v558 = vshll.u32 %v461, 16
        %v560 = vrot.slane %v558, 1
        %v561 = vsel %vm469, %v556, %v560
        %v562 = vshrl.u32 %v461, 16
        %v564 = vor.u32 %v562, %v560
        %v566 = vshll.u32 %v462, 16
        %v568 = vrot.slane %v566, 1
        %v569 = vsel %vm469, %v564, %v568
        %v570 = vshrl.u32 %v462, 16
        %v572 = vor.u32 %v570, %v568
        %v574 = vshll.u32 %v463, 16
        %v576 = vrot.slane %v574, 1
        %v577 = vsel %vm469, %v572, %v576
        %v578 = vshrl.u32 %v463, 16
        %v580 = vor.u32 %v578, %v576
        %v582 = vshll.u32 %v464, 16
        %v584 = vrot.slane %v582, 1
        %v585 = vsel %vm469, %v580, %v584
        %v586 = vshrl.u32 %v464, 16
        %v588 = vor.u32 %v586, %v584
        %v590 = vshll.u32 %v465, 16
        %v592 = vrot.slane %v590, 1
        %v593 = vsel %vm469, %v588, %v592
        %v594 = vshrl.u32 %v465, 16
        %v596 = vor.u32 %v594, %v592
        %v598 = vshll.u32 %v466, 16
        %v600 = vrot.slane %v598, 1
        %v601 = vsel %vm469, %v596, %v600
        %v602 = vshrl.u32 %v466, 16
        %v604 = vor.u32 %v602, %v600
        %v606 = vshll.u32 %v467, 16
        %v608 = vrot.slane %v606, 1
        %v609 = vsel %vm469, %v604, %v608
        %v610 = vshrl.u32 %v467, 16
        %v612 = vor.u32 %v610, %v608
        %v614 = vshll.u32 %v468, 16
        %v616 = vrot.slane %v614, 1
        %v617 = vsel %vm469, %v612, %v616
        %618 = vrot.lane.b32.xlu0 %v481, 4
        %v619 = vpop.permute.xlu0 %618
        %620 = vrot.lane.b32.xlu0 %v489, 4
        %v621 = vpop.permute.xlu0 %620
        %622 = vrot.lane.b32.xlu0 %v497, 4
        %v623 = vpop.permute.xlu0 %622
        %624 = vrot.lane.b32.xlu0 %v505, 4
        %v625 = vpop.permute.xlu0 %624
        %626 = vrot.lane.b32.xlu0 %v513, 4
        %v627 = vpop.permute.xlu0 %626
        %628 = vrot.lane.b32.xlu0 %v521, 4
        %v629 = vpop.permute.xlu0 %628
        %630 = vrot.lane.b32.xlu0 %v529, 4
        %v631 = vpop.permute.xlu0 %630
        %632 = vrot.lane.b32.xlu0 %v537, 4
        %v633 = vpop.permute.xlu0 %632
        %634 = vrot.lane.b32.xlu0 %v545, 4
        %v635 = vpop.permute.xlu0 %634
        %636 = vrot.lane.b32.xlu0 %v553, 4
        %v637 = vpop.permute.xlu0 %636
        %638 = vrot.lane.b32.xlu0 %v561, 4
        %v639 = vpop.permute.xlu0 %638
        %640 = vrot.lane.b32.xlu0 %v569, 4
        %v641 = vpop.permute.xlu0 %640
        %642 = vrot.lane.b32.xlu0 %v577, 4
        %v643 = vpop.permute.xlu0 %642
        %644 = vrot.lane.b32.xlu0 %v585, 4
        %v645 = vpop.permute.xlu0 %644
        %646 = vrot.lane.b32.xlu0 %v593, 4
        %v647 = vpop.permute.xlu0 %646
        %648 = vrot.lane.b32.xlu0 %v601, 4
        %v649 = vpop.permute.xlu0 %648
        %650 = vrot.lane.b32.xlu0 %v609, 4
        %v651 = vpop.permute.xlu0 %650
        %652 = vrot.lane.b32.xlu0 %v617, 4
        %v653 = vpop.permute.xlu0 %652
        %vm672 = vcmask 64544
        %673 = vst.msk [vmem:[#allocation2] sm:$0xff] %vm672, %v619
        %674 = vst.msk [vmem:[#allocation2 + $0x8] sm:$0xff] %vm672, %v621
        %675 = vst.msk [vmem:[#allocation2 + $0x10] sm:$0xff] %vm672, %v623
        %676 = vst.msk [vmem:[#allocation2 + $0x18] sm:$0xff] %vm672, %v625
        %677 = vst.msk [vmem:[#allocation2 + $0x20] sm:$0xff] %vm672, %v627
        %678 = vst.msk [vmem:[#allocation2 + $0x28] sm:$0xff] %vm672, %v629
        %679 = vst.msk [vmem:[#allocation2 + $0x30] sm:$0xff] %vm672, %v631
        %680 = vst.msk [vmem:[#allocation2 + $0x38] sm:$0xff] %vm672, %v633
        %681 = vst.msk [vmem:[#allocation2 + $0x40] sm:$0xff] %vm672, %v635
        %682 = vst.msk [vmem:[#allocation2 + $0x48] sm:$0xff] %vm672, %v637
        %683 = vst.msk [vmem:[#allocation2 + $0x50] sm:$0xff] %vm672, %v639
        %684 = vst.msk [vmem:[#allocation2 + $0x58] sm:$0xff] %vm672, %v641
        %685 = vst.msk [vmem:[#allocation2 + $0x60] sm:$0xff] %vm672, %v643
        %686 = vst.msk [vmem:[#allocation2 + $0x68] sm:$0xff] %vm672, %v645
        %687 = vst.msk [vmem:[#allocation2 + $0x70] sm:$0xff] %vm672, %v647
        %688 = vst.msk [vmem:[#allocation2 + $0x78] sm:$0xff] %vm672, %v649
        %689 = vst.msk [vmem:[#allocation2 + $0x80] sm:$0xff] %vm672, %v651
        %690 = vst.msk [vmem:[#allocation2 + $0x88] sm:$0xff] %vm672, %v653
        %v691 = vld [vmem:[%s172] sm:$0xe]
        %v692 = vld [vmem:[%s172 + $0x4] sm:$0xf]
        %v693 = vld [vmem:[%s172 + $0x8] sm:$0xf]
        %v694 = vld [vmem:[%s172 + $0xc] sm:$0xf]
        %v695 = vld [vmem:[%s172 + $0x10] sm:$0xf]
        %v696 = vld [vmem:[%s172 + $0x14] sm:$0xf]
        %v697 = vld [vmem:[%s172 + $0x18] sm:$0xf]
        %v698 = vld [vmem:[%s172 + $0x1c] sm:$0xf]
        %v699 = vld [vmem:[%s172 + $0x20] sm:$0xf]
        %v700 = vld [vmem:[%s172 + $0x24] sm:$0xf]
        %v701 = vld [vmem:[%s172 + $0x28] sm:$0xf]
        %v702 = vld [vmem:[%s172 + $0x2c] sm:$0xf]
        %v703 = vld [vmem:[%s172 + $0x30] sm:$0xf]
        %v704 = vld [vmem:[%s172 + $0x34] sm:$0xf]
        %v705 = vld [vmem:[%s172 + $0x38] sm:$0xf]
        %v706 = vld [vmem:[%s172 + $0x3c] sm:$0xf]
        %v707 = vld [vmem:[%s172 + $0x40] sm:$0xf]
        %v708 = vld [vmem:[%s172 + $0x44] sm:$0xf]
        %v709 = vld [vmem:[%s172 + $0x48] sm:$0xf]
        %v710 = vld [vmem:[%s172 + $0x4c] sm:$0xf]
        %v711 = vld [vmem:[%s172 + $0x50] sm:$0xf]
        %v712 = vld [vmem:[%s172 + $0x54] sm:$0xf]
        %v713 = vld [vmem:[%s172 + $0x58] sm:$0xf]
        %v714 = vld [vmem:[%s172 + $0x5c] sm:$0xf]
        %v715 = vld [vmem:[%s172 + $0x60] sm:$0xf]
        %v716 = vld [vmem:[%s172 + $0x64] sm:$0xf]
        %v717 = vld [vmem:[%s172 + $0x68] sm:$0xf]
        %v718 = vld [vmem:[%s172 + $0x6c] sm:$0xf]
        %v719 = vld [vmem:[%s172 + $0x70] sm:$0xf]
        %v720 = vld [vmem:[%s172 + $0x74] sm:$0xf]
        %v721 = vld [vmem:[%s172 + $0x78] sm:$0xf]
        %v722 = vld [vmem:[%s172 + $0x7c] sm:$0xf]
        %v723 = vld [vmem:[%s172 + $0x80] sm:$0xf]
        %v724 = vld [vmem:[%s172 + $0x84] sm:$0xf]
        %v725 = vld [vmem:[%s172 + $0x88] sm:$0xf]
        %v726 = vld [vmem:[%s172 + $0x8c] sm:$0xf]
        %v727 = vld [vmem:[%s172 + $0x90] sm:$0x1]
        %v765 = vunpack.c.l.b16 %v691
        %v766 = vunpack.c.l.b16 %v692
        %v767 = vunpack.c.l.b16 %v693
        %v768 = vunpack.c.l.b16 %v694
        %v769 = vunpack.c.l.b16 %v695
        %v770 = vunpack.c.l.b16 %v696
        %v771 = vunpack.c.l.b16 %v697
        %v772 = vunpack.c.l.b16 %v698
        %v773 = vunpack.c.l.b16 %v699
        %v774 = vunpack.c.l.b16 %v700
        %v775 = vunpack.c.l.b16 %v701
        %v776 = vunpack.c.l.b16 %v702
        %v777 = vunpack.c.l.b16 %v703
        %v778 = vunpack.c.l.b16 %v704
        %v779 = vunpack.c.l.b16 %v705
        %v780 = vunpack.c.l.b16 %v706
        %v781 = vunpack.c.l.b16 %v707
        %v782 = vunpack.c.l.b16 %v708
        %v783 = vunpack.c.l.b16 %v709
        %v784 = vunpack.c.l.b16 %v710
        %v785 = vunpack.c.l.b16 %v711
        %v786 = vunpack.c.l.b16 %v712
        %v787 = vunpack.c.l.b16 %v713
        %v788 = vunpack.c.l.b16 %v714
        %v789 = vunpack.c.l.b16 %v715
        %v790 = vunpack.c.l.b16 %v716
        %v791 = vunpack.c.l.b16 %v717
        %v792 = vunpack.c.l.b16 %v718
        %v793 = vunpack.c.l.b16 %v719
        %v794 = vunpack.c.l.b16 %v720
        %v795 = vunpack.c.l.b16 %v721
        %v796 = vunpack.c.l.b16 %v722
        %v797 = vunpack.c.l.b16 %v723
        %v798 = vunpack.c.l.b16 %v724
        %v799 = vunpack.c.l.b16 %v725
        %v800 = vunpack.c.l.b16 %v726
        %v801 = vunpack.c.l.b16 %v727
        %v802 = vpack.c.b16 %v766, %v765
        %v803 = vpack.c.b16 %v768, %v767
        %v804 = vpack.c.b16 %v770, %v769
        %v805 = vpack.c.b16 %v772, %v771
        %v806 = vpack.c.b16 %v774, %v773
        %v807 = vpack.c.b16 %v776, %v775
        %v808 = vpack.c.b16 %v778, %v777
        %v809 = vpack.c.b16 %v780, %v779
        %v810 = vpack.c.b16 %v782, %v781
        %v811 = vpack.c.b16 %v784, %v783
        %v812 = vpack.c.b16 %v786, %v785
        %v813 = vpack.c.b16 %v788, %v787
        %v814 = vpack.c.b16 %v790, %v789
        %v815 = vpack.c.b16 %v792, %v791
        %v816 = vpack.c.b16 %v794, %v793
        %v817 = vpack.c.b16 %v796, %v795
        %v818 = vpack.c.b16 %v798, %v797
        %v819 = vpack.c.b16 %v800, %v799
        %v820 = vpack.c.b16 %v801, %v801
        %vm821 = vcmask 1046528
        %v822 = vrot.slane %v802, 1
        %v823 = vrot.slane %v803, 1
        %v824 = vsel %vm821, %v822, %v823
        %v825 = vrot.slane %v804, 1
        %v826 = vsel %vm821, %v823, %v825
        %v827 = vrot.slane %v805, 1
        %v828 = vsel %vm821, %v825, %v827
        %v829 = vrot.slane %v806, 1
        %v830 = vsel %vm821, %v827, %v829
        %v831 = vrot.slane %v807, 1
        %v832 = vsel %vm821, %v829, %v831
        %v833 = vrot.slane %v808, 1
        %v834 = vsel %vm821, %v831, %v833
        %v835 = vrot.slane %v809, 1
        %v836 = vsel %vm821, %v833, %v835
        %v837 = vrot.slane %v810, 1
        %v838 = vsel %vm821, %v835, %v837
        %v839 = vrot.slane %v811, 1
        %v840 = vsel %vm821, %v837, %v839
        %v841 = vrot.slane %v812, 1
        %v842 = vsel %vm821, %v839, %v841
        %v843 = vrot.slane %v813, 1
        %v844 = vsel %vm821, %v841, %v843
        %v845 = vrot.slane %v814, 1
        %v846 = vsel %vm821, %v843, %v845
        %v847 = vrot.slane %v815, 1
        %v848 = vsel %vm821, %v845, %v847
        %v849 = vrot.slane %v816, 1
        %v850 = vsel %vm821, %v847, %v849
        %v851 = vrot.slane %v817, 1
        %v852 = vsel %vm821, %v849, %v851
        %v853 = vrot.slane %v818, 1
        %v854 = vsel %vm821, %v851, %v853
        %v855 = vrot.slane %v819, 1
        %v856 = vsel %vm821, %v853, %v855
        %v857 = vrot.slane %v820, 1
        %v858 = vsel %vm821, %v855, %v857
        %859 = vrot.lane.b32.xlu0 %v824, 8
        %v860 = vpop.permute.xlu0 %859
        %861 = vrot.lane.b32.xlu0 %v826, 8
        %v862 = vpop.permute.xlu0 %861
        %863 = vrot.lane.b32.xlu0 %v828, 8
        %v864 = vpop.permute.xlu0 %863
        %865 = vrot.lane.b32.xlu0 %v830, 8
        %v866 = vpop.permute.xlu0 %865
        %867 = vrot.lane.b32.xlu0 %v832, 8
        %v868 = vpop.permute.xlu0 %867
        %869 = vrot.lane.b32.xlu0 %v834, 8
        %v870 = vpop.permute.xlu0 %869
        %871 = vrot.lane.b32.xlu0 %v836, 8
        %v872 = vpop.permute.xlu0 %871
        %873 = vrot.lane.b32.xlu0 %v838, 8
        %v874 = vpop.permute.xlu0 %873
        %875 = vrot.lane.b32.xlu0 %v840, 8
        %v876 = vpop.permute.xlu0 %875
        %877 = vrot.lane.b32.xlu0 %v842, 8
        %v878 = vpop.permute.xlu0 %877
        %879 = vrot.lane.b32.xlu0 %v844, 8
        %v880 = vpop.permute.xlu0 %879
        %881 = vrot.lane.b32.xlu0 %v846, 8
        %v882 = vpop.permute.xlu0 %881
        %883 = vrot.lane.b32.xlu0 %v848, 8
        %v884 = vpop.permute.xlu0 %883
        %885 = vrot.lane.b32.xlu0 %v850, 8
        %v886 = vpop.permute.xlu0 %885
        %887 = vrot.lane.b32.xlu0 %v852, 8
        %v888 = vpop.permute.xlu0 %887
        %889 = vrot.lane.b32.xlu0 %v854, 8
        %v890 = vpop.permute.xlu0 %889
        %891 = vrot.lane.b32.xlu0 %v856, 8
        %v892 = vpop.permute.xlu0 %891
        %893 = vrot.lane.b32.xlu0 %v858, 8
        %v894 = vpop.permute.xlu0 %893
        %vm913 = vcmask 97344
        %914 = vst.msk [vmem:[#allocation2] sm:$0xff] %vm913, %v860
        %915 = vst.msk [vmem:[#allocation2 + $0x8] sm:$0xff] %vm913, %v862
        %916 = vst.msk [vmem:[#allocation2 + $0x10] sm:$0xff] %vm913, %v864
        %917 = vst.msk [vmem:[#allocation2 + $0x18] sm:$0xff] %vm913, %v866
        %918 = vst.msk [vmem:[#allocation2 + $0x20] sm:$0xff] %vm913, %v868
        %919 = vst.msk [vmem:[#allocation2 + $0x28] sm:$0xff] %vm913, %v870
        %920 = vst.msk [vmem:[#allocation2 + $0x30] sm:$0xff] %vm913, %v872
        %921 = vst.msk [vmem:[#allocation2 + $0x38] sm:$0xff] %vm913, %v874
        %922 = vst.msk [vmem:[#allocation2 + $0x40] sm:$0xff] %vm913, %v876
        %923 = vst.msk [vmem:[#allocation2 + $0x48] sm:$0xff] %vm913, %v878
        %924 = vst.msk [vmem:[#allocation2 + $0x50] sm:$0xff] %vm913, %v880
        %925 = vst.msk [vmem:[#allocation2 + $0x58] sm:$0xff] %vm913, %v882
        %926 = vst.msk [vmem:[#allocation2 + $0x60] sm:$0xff] %vm913, %v884
        %927 = vst.msk [vmem:[#allocation2 + $0x68] sm:$0xff] %vm913, %v886
        %928 = vst.msk [vmem:[#allocation2 + $0x70] sm:$0xff] %vm913, %v888
        %929 = vst.msk [vmem:[#allocation2 + $0x78] sm:$0xff] %vm913, %v890
        %930 = vst.msk [vmem:[#allocation2 + $0x80] sm:$0xff] %vm913, %v892
        %931 = vst.msk [vmem:[#allocation2 + $0x88] sm:$0xff] %vm913, %v894
        %v932 = vld [vmem:[%s172 + $0x8] sm:$0xe]
        %v933 = vld [vmem:[%s172 + $0xc] sm:$0xf]
        %v934 = vld [vmem:[%s172 + $0x10] sm:$0xf]
        %v935 = vld [vmem:[%s172 + $0x14] sm:$0xf]
        %v936 = vld [vmem:[%s172 + $0x18] sm:$0xf]
        %v937 = vld [vmem:[%s172 + $0x1c] sm:$0xf]
        %v938 = vld [vmem:[%s172 + $0x20] sm:$0xf]
        %v939 = vld [vmem:[%s172 + $0x24] sm:$0xf]
        %v940 = vld [vmem:[%s172 + $0x28] sm:$0xf]
        %v941 = vld [vmem:[%s172 + $0x2c] sm:$0xf]
        %v942 = vld [vmem:[%s172 + $0x30] sm:$0xf]
        %v943 = vld [vmem:[%s172 + $0x34] sm:$0xf]
        %v944 = vld [vmem:[%s172 + $0x38] sm:$0xf]
        %v945 = vld [vmem:[%s172 + $0x3c] sm:$0xf]
        %v946 = vld [vmem:[%s172 + $0x40] sm:$0xf]
        %v947 = vld [vmem:[%s172 + $0x44] sm:$0xf]
        %v948 = vld [vmem:[%s172 + $0x48] sm:$0xf]
        %v949 = vld [vmem:[%s172 + $0x4c] sm:$0xf]
        %v950 = vld [vmem:[%s172 + $0x50] sm:$0xf]
        %v951 = vld [vmem:[%s172 + $0x54] sm:$0xf]
        %v952 = vld [vmem:[%s172 + $0x58] sm:$0xf]
        %v953 = vld [vmem:[%s172 + $0x5c] sm:$0xf]
        %v954 = vld [vmem:[%s172 + $0x60] sm:$0xf]
        %v955 = vld [vmem:[%s172 + $0x64] sm:$0xf]
        %v956 = vld [vmem:[%s172 + $0x68] sm:$0xf]
        %v957 = vld [vmem:[%s172 + $0x6c] sm:$0xf]
        %v958 = vld [vmem:[%s172 + $0x70] sm:$0xf]
        %v959 = vld [vmem:[%s172 + $0x74] sm:$0xf]
        %v960 = vld [vmem:[%s172 + $0x78] sm:$0xf]
        %v961 = vld [vmem:[%s172 + $0x7c] sm:$0xf]
        %v962 = vld [vmem:[%s172 + $0x80] sm:$0xf]
        %v963 = vld [vmem:[%s172 + $0x84] sm:$0xf]
        %v964 = vld [vmem:[%s172 + $0x88] sm:$0xf]
        %v965 = vld [vmem:[%s172 + $0x8c] sm:$0xf]
        %v966 = vld [vmem:[%s172 + $0x90] sm:$0xf]
        %v967 = vld [vmem:[%s172 + $0x94] sm:$0xf]
        %v968 = vld [vmem:[%s172 + $0x98] sm:$0x1]
        %v1006 = vunpack.c.l.b16 %v932
        %v1007 = vunpack.c.l.b16 %v933
        %v1008 = vunpack.c.l.b16 %v934
        %v1009 = vunpack.c.l.b16 %v935
        %v1010 = vunpack.c.l.b16 %v936
        %v1011 = vunpack.c.l.b16 %v937
        %v1012 = vunpack.c.l.b16 %v938
        %v1013 = vunpack.c.l.b16 %v939
        %v1014 = vunpack.c.l.b16 %v940
        %v1015 = vunpack.c.l.b16 %v941
        %v1016 = vunpack.c.l.b16 %v942
        %v1017 = vunpack.c.l.b16 %v943
        %v1018 = vunpack.c.l.b16 %v944
        %v1019 = vunpack.c.l.b16 %v945
        %v1020 = vunpack.c.l.b16 %v946
        %v1021 = vunpack.c.l.b16 %v947
        %v1022 = vunpack.c.l.b16 %v948
        %v1023 = vunpack.c.l.b16 %v949
        %v1024 = vunpack.c.l.b16 %v950
        %v1025 = vunpack.c.l.b16 %v951
        %v1026 = vunpack.c.l.b16 %v952
        %v1027 = vunpack.c.l.b16 %v953
        %v1028 = vunpack.c.l.b16 %v954
        %v1029 = vunpack.c.l.b16 %v955
        %v1030 = vunpack.c.l.b16 %v956
        %v1031 = vunpack.c.l.b16 %v957
        %v1032 = vunpack.c.l.b16 %v958
        %v1033 = vunpack.c.l.b16 %v959
        %v1034 = vunpack.c.l.b16 %v960
        %v1035 = vunpack.c.l.b16 %v961
        %v1036 = vunpack.c.l.b16 %v962
        %v1037 = vunpack.c.l.b16 %v963
        %v1038 = vunpack.c.l.b16 %v964
        %v1039 = vunpack.c.l.b16 %v965
        %v1040 = vunpack.c.l.b16 %v966
        %v1041 = vunpack.c.l.b16 %v967
        %v1042 = vunpack.c.l.b16 %v968
        %v1043 = vpack.c.b16 %v1007, %v1006
        %v1044 = vpack.c.b16 %v1009, %v1008
        %v1045 = vpack.c.b16 %v1011, %v1010
        %v1046 = vpack.c.b16 %v1013, %v1012
        %v1047 = vpack.c.b16 %v1015, %v1014
        %v1048 = vpack.c.b16 %v1017, %v1016
        %v1049 = vpack.c.b16 %v1019, %v1018
        %v1050 = vpack.c.b16 %v1021, %v1020
        %v1051 = vpack.c.b16 %v1023, %v1022
        %v1052 = vpack.c.b16 %v1025, %v1024
        %v1053 = vpack.c.b16 %v1027, %v1026
        %v1054 = vpack.c.b16 %v1029, %v1028
        %v1055 = vpack.c.b16 %v1031, %v1030
        %v1056 = vpack.c.b16 %v1033, %v1032
        %v1057 = vpack.c.b16 %v1035, %v1034
        %v1058 = vpack.c.b16 %v1037, %v1036
        %v1059 = vpack.c.b16 %v1039, %v1038
        %v1060 = vpack.c.b16 %v1041, %v1040
        %v1061 = vpack.c.b16 %v1042, %v1042
        %v1062 = vrot.slane %v1043, 1
        %v1063 = vrot.slane %v1044, 1
        %v1064 = vsel %vm821, %v1062, %v1063
        %v1065 = vrot.slane %v1045, 1
        %v1066 = vsel %vm821, %v1063, %v1065
        %v1067 = vrot.slane %v1046, 1
        %v1068 = vsel %vm821, %v1065, %v1067
        %v1069 = vrot.slane %v1047, 1
        %v1070 = vsel %vm821, %v1067, %v1069
        %v1071 = vrot.slane %v1048, 1
        %v1072 = vsel %vm821, %v1069, %v1071
        %v1073 = vrot.slane %v1049, 1
        %v1074 = vsel %vm821, %v1071, %v1073
        %v1075 = vrot.slane %v1050, 1
        %v1076 = vsel %vm821, %v1073, %v1075
        %v1077 = vrot.slane %v1051, 1
        %v1078 = vsel %vm821, %v1075, %v1077
        %v1079 = vrot.slane %v1052, 1
        %v1080 = vsel %vm821, %v1077, %v1079
        %v1081 = vrot.slane %v1053, 1
        %v1082 = vsel %vm821, %v1079, %v1081
        %v1083 = vrot.slane %v1054, 1
        %v1084 = vsel %vm821, %v1081, %v1083
        %v1085 = vrot.slane %v1055, 1
        %v1086 = vsel %vm821, %v1083, %v1085
        %v1087 = vrot.slane %v1056, 1
        %v1088 = vsel %vm821, %v1085, %v1087
        %v1089 = vrot.slane %v1057, 1
        %v1090 = vsel %vm821, %v1087, %v1089
        %v1091 = vrot.slane %v1058, 1
        %v1092 = vsel %vm821, %v1089, %v1091
        %v1093 = vrot.slane %v1059, 1
        %v1094 = vsel %vm821, %v1091, %v1093
        %v1095 = vrot.slane %v1060, 1
        %v1096 = vsel %vm821, %v1093, %v1095
        %v1097 = vrot.slane %v1061, 1
        %v1098 = vsel %vm821, %v1095, %v1097
        %1099 = vrot.lane.b32.xlu0 %v1064, 12
        %v1100 = vpop.permute.xlu0 %1099
        %1101 = vrot.lane.b32.xlu0 %v1066, 12
        %v1102 = vpop.permute.xlu0 %1101
        %1103 = vrot.lane.b32.xlu0 %v1068, 12
        %v1104 = vpop.permute.xlu0 %1103
        %1105 = vrot.lane.b32.xlu0 %v1070, 12
        %v1106 = vpop.permute.xlu0 %1105
        %1107 = vrot.lane.b32.xlu0 %v1072, 12
        %v1108 = vpop.permute.xlu0 %1107
        %1109 = vrot.lane.b32.xlu0 %v1074, 12
        %v1110 = vpop.permute.xlu0 %1109
        %1111 = vrot.lane.b32.xlu0 %v1076, 12
        %v1112 = vpop.permute.xlu0 %1111
        %1113 = vrot.lane.b32.xlu0 %v1078, 12
        %v1114 = vpop.permute.xlu0 %1113
        %1115 = vrot.lane.b32.xlu0 %v1080, 12
        %v1116 = vpop.permute.xlu0 %1115
        %1117 = vrot.lane.b32.xlu0 %v1082, 12
        %v1118 = vpop.permute.xlu0 %1117
        %1119 = vrot.lane.b32.xlu0 %v1084, 12
        %v1120 = vpop.permute.xlu0 %1119
        %1121 = vrot.lane.b32.xlu0 %v1086, 12
        %v1122 = vpop.permute.xlu0 %1121
        %1123 = vrot.lane.b32.xlu0 %v1088, 12
        %v1124 = vpop.permute.xlu0 %1123
        %1125 = vrot.lane.b32.xlu0 %v1090, 12
        %v1126 = vpop.permute.xlu0 %1125
        %1127 = vrot.lane.b32.xlu0 %v1092, 12
        %v1128 = vpop.permute.xlu0 %1127
        %1129 = vrot.lane.b32.xlu0 %v1094, 12
        %v1130 = vpop.permute.xlu0 %1129
        %1131 = vrot.lane.b32.xlu0 %v1096, 12
        %v1132 = vpop.permute.xlu0 %1131
        %1133 = vrot.lane.b32.xlu0 %v1098, 12
        %v1134 = vpop.permute.xlu0 %1133
        %vm1153 = vcmask 130144
        %1154 = vst.msk [vmem:[#allocation2] sm:$0xff] %vm1153, %v1100
        %1155 = vst.msk [vmem:[#allocation2 + $0x8] sm:$0xff] %vm1153, %v1102
        %1156 = vst.msk [vmem:[#allocation2 + $0x10] sm:$0xff] %vm1153, %v1104
        %1157 = vst.msk [vmem:[#allocation2 + $0x18] sm:$0xff] %vm1153, %v1106
        %1158 = vst.msk [vmem:[#allocation2 + $0x20] sm:$0xff] %vm1153, %v1108
        %1159 = vst.msk [vmem:[#allocation2 + $0x28] sm:$0xff] %vm1153, %v1110
        %1160 = vst.msk [vmem:[#allocation2 + $0x30] sm:$0xff] %vm1153, %v1112
        %1161 = vst.msk [vmem:[#allocation2 + $0x38] sm:$0xff] %vm1153, %v1114
        %1162 = vst.msk [vmem:[#allocation2 + $0x40] sm:$0xff] %vm1153, %v1116
        %1163 = vst.msk [vmem:[#allocation2 + $0x48] sm:$0xff] %vm1153, %v1118
        %1164 = vst.msk [vmem:[#allocation2 + $0x50] sm:$0xff] %vm1153, %v1120
        %1165 = vst.msk [vmem:[#allocation2 + $0x58] sm:$0xff] %vm1153, %v1122
        %1166 = vst.msk [vmem:[#allocation2 + $0x60] sm:$0xff] %vm1153, %v1124
        %1167 = vst.msk [vmem:[#allocation2 + $0x68] sm:$0xff] %vm1153, %v1126
        %1168 = vst.msk [vmem:[#allocation2 + $0x70] sm:$0xff] %vm1153, %v1128
        %1169 = vst.msk [vmem:[#allocation2 + $0x78] sm:$0xff] %vm1153, %v1130
        %1170 = vst.msk [vmem:[#allocation2 + $0x80] sm:$0xff] %vm1153, %v1132
        %1171 = vst.msk [vmem:[#allocation2 + $0x88] sm:$0xff] %vm1153, %v1134
        %v1172 = vld [vmem:[%s172 + $0x8] sm:$0xe]
        %v1173 = vld [vmem:[%s172 + $0xc] sm:$0xf]
        %v1174 = vld [vmem:[%s172 + $0x10] sm:$0xf]
        %v1175 = vld [vmem:[%s172 + $0x14] sm:$0xf]
        %v1176 = vld [vmem:[%s172 + $0x18] sm:$0xf]
        %v1177 = vld [vmem:[%s172 + $0x1c] sm:$0xf]
        %v1178 = vld [vmem:[%s172 + $0x20] sm:$0xf]
        %v1179 = vld [vmem:[%s172 + $0x24] sm:$0xf]
        %v1180 = vld [vmem:[%s172 + $0x28] sm:$0xf]
        %v1181 = vld [vmem:[%s172 + $0x2c] sm:$0xf]
        %v1182 = vld [vmem:[%s172 + $0x30] sm:$0xf]
        %v1183 = vld [vmem:[%s172 + $0x34] sm:$0xf]
        %v1184 = vld [vmem:[%s172 + $0x38] sm:$0xf]
        %v1185 = vld [vmem:[%s172 + $0x3c] sm:$0xf]
        %v1186 = vld [vmem:[%s172 + $0x40] sm:$0xf]
        %v1187 = vld [vmem:[%s172 + $0x44] sm:$0xf]
        %v1188 = vld [vmem:[%s172 + $0x48] sm:$0xf]
        %v1189 = vld [vmem:[%s172 + $0x4c] sm:$0xf]
        %v1190 = vld [vmem:[%s172 + $0x50] sm:$0xf]
        %v1191 = vld [vmem:[%s172 + $0x54] sm:$0xf]
        %v1192 = vld [vmem:[%s172 + $0x58] sm:$0xf]
        %v1193 = vld [vmem:[%s172 + $0x5c] sm:$0xf]
        %v1194 = vld [vmem:[%s172 + $0x60] sm:$0xf]
        %v1195 = vld [vmem:[%s172 + $0x64] sm:$0xf]
        %v1196 = vld [vmem:[%s172 + $0x68] sm:$0xf]
        %v1197 = vld [vmem:[%s172 + $0x6c] sm:$0xf]
        %v1198 = vld [vmem:[%s172 + $0x70] sm:$0xf]
        %v1199 = vld [vmem:[%s172 + $0x74] sm:$0xf]
        %v1200 = vld [vmem:[%s172 + $0x78] sm:$0xf]
        %v1201 = vld [vmem:[%s172 + $0x7c] sm:$0xf]
        %v1202 = vld [vmem:[%s172 + $0x80] sm:$0xf]
        %v1203 = vld [vmem:[%s172 + $0x84] sm:$0xf]
        %v1204 = vld [vmem:[%s172 + $0x88] sm:$0xf]
        %v1205 = vld [vmem:[%s172 + $0x8c] sm:$0xf]
        %v1206 = vld [vmem:[%s172 + $0x90] sm:$0xf]
        %v1207 = vld [vmem:[%s172 + $0x94] sm:$0xf]
        %v1208 = vld [vmem:[%s172 + $0x98] sm:$0x3]
        %v1246 = vunpack.c.l.b16 %v1172
        %v1247 = vunpack.c.l.b16 %v1173
        %v1248 = vunpack.c.l.b16 %v1174
        %v1249 = vunpack.c.l.b16 %v1175
        %v1250 = vunpack.c.l.b16 %v1176
        %v1251 = vunpack.c.l.b16 %v1177
        %v1252 = vunpack.c.l.b16 %v1178
        %v1253 = vunpack.c.l.b16 %v1179
        %v1254 = vunpack.c.l.b16 %v1180
        %v1255 = vunpack.c.l.b16 %v1181
        %v1256 = vunpack.c.l.b16 %v1182
        %v1257 = vunpack.c.l.b16 %v1183
        %v1258 = vunpack.c.l.b16 %v1184
        %v1259 = vunpack.c.l.b16 %v1185
        %v1260 = vunpack.c.l.b16 %v1186
        %v1261 = vunpack.c.l.b16 %v1187
        %v1262 = vunpack.c.l.b16 %v1188
        %v1263 = vunpack.c.l.b16 %v1189
        %v1264 = vunpack.c.l.b16 %v1190
        %v1265 = vunpack.c.l.b16 %v1191
        %v1266 = vunpack.c.l.b16 %v1192
        %v1267 = vunpack.c.l.b16 %v1193
        %v1268 = vunpack.c.l.b16 %v1194
        %v1269 = vunpack.c.l.b16 %v1195
        %v1270 = vunpack.c.l.b16 %v1196
        %v1271 = vunpack.c.l.b16 %v1197
        %v1272 = vunpack.c.l.b16 %v1198
        %v1273 = vunpack.c.l.b16 %v1199
        %v1274 = vunpack.c.l.b16 %v1200
        %v1275 = vunpack.c.l.b16 %v1201
        %v1276 = vunpack.c.l.b16 %v1202
        %v1277 = vunpack.c.l.b16 %v1203
        %v1278 = vunpack.c.l.b16 %v1204
        %v1279 = vunpack.c.l.b16 %v1205
        %v1280 = vunpack.c.l.b16 %v1206
        %v1281 = vunpack.c.l.b16 %v1207
        %v1282 = vunpack.c.l.b16 %v1208
        %v1283 = vpack.c.b16 %v1247, %v1246
        %v1284 = vpack.c.b16 %v1249, %v1248
        %v1285 = vpack.c.b16 %v1251, %v1250
        %v1286 = vpack.c.b16 %v1253, %v1252
        %v1287 = vpack.c.b16 %v1255, %v1254
        %v1288 = vpack.c.b16 %v1257, %v1256
        %v1289 = vpack.c.b16 %v1259, %v1258
        %v1290 = vpack.c.b16 %v1261, %v1260
        %v1291 = vpack.c.b16 %v1263, %v1262
        %v1292 = vpack.c.b16 %v1265, %v1264
        %v1293 = vpack.c.b16 %v1267, %v1266
        %v1294 = vpack.c.b16 %v1269, %v1268
        %v1295 = vpack.c.b16 %v1271, %v1270
        %v1296 = vpack.c.b16 %v1273, %v1272
        %v1297 = vpack.c.b16 %v1275, %v1274
        %v1298 = vpack.c.b16 %v1277, %v1276
        %v1299 = vpack.c.b16 %v1279, %v1278
        %v1300 = vpack.c.b16 %v1281, %v1280
        %v1301 = vpack.c.b16 %v1282, %v1282
        %vm1302 = vsmask.f32 6400
        %v1304 = vshrl.u32 %v1283, 16
        %v1306 = vrot.slane %v1304, 1
        %v1307 = vshll.u32 %v1283, 16
        %v1309 = vrot.slane %v1307, 2
        %v1310 = vor.u32 %v1306, %v1309
        %v1312 = vshrl.u32 %v1284, 16
        %v1314 = vrot.slane %v1312, 1
        %v1315 = vshll.u32 %v1284, 16
        %v1317 = vrot.slane %v1315, 2
        %v1318 = vor.u32 %v1314, %v1317
        %v1319 = vsel %vm1302, %v1310, %v1318
        %v1321 = vshrl.u32 %v1285, 16
        %v1323 = vrot.slane %v1321, 1
        %v1324 = vshll.u32 %v1285, 16
        %v1326 = vrot.slane %v1324, 2
        %v1327 = vor.u32 %v1323, %v1326
        %v1328 = vsel %vm1302, %v1318, %v1327
        %v1330 = vshrl.u32 %v1286, 16
        %v1332 = vrot.slane %v1330, 1
        %v1333 = vshll.u32 %v1286, 16
        %v1335 = vrot.slane %v1333, 2
        %v1336 = vor.u32 %v1332, %v1335
        %v1337 = vsel %vm1302, %v1327, %v1336
        %v1339 = vshrl.u32 %v1287, 16
        %v1341 = vrot.slane %v1339, 1
        %v1342 = vshll.u32 %v1287, 16
        %v1344 = vrot.slane %v1342, 2
        %v1345 = vor.u32 %v1341, %v1344
        %v1346 = vsel %vm1302, %v1336, %v1345
        %v1348 = vshrl.u32 %v1288, 16
        %v1350 = vrot.slane %v1348, 1
        %v1351 = vshll.u32 %v1288, 16
        %v1353 = vrot.slane %v1351, 2
        %v1354 = vor.u32 %v1350, %v1353
        %v1355 = vsel %vm1302, %v1345, %v1354
        %v1357 = vshrl.u32 %v1289, 16
        %v1359 = vrot.slane %v1357, 1
        %v1360 = vshll.u32 %v1289, 16
        %v1362 = vrot.slane %v1360, 2
        %v1363 = vor.u32 %v1359, %v1362
        %v1364 = vsel %vm1302, %v1354, %v1363
        %v1366 = vshrl.u32 %v1290, 16
        %v1368 = vrot.slane %v1366, 1
        %v1369 = vshll.u32 %v1290, 16
        %v1371 = vrot.slane %v1369, 2
        %v1372 = vor.u32 %v1368, %v1371
        %v1373 = vsel %vm1302, %v1363, %v1372
        %v1375 = vshrl.u32 %v1291, 16
        %v1377 = vrot.slane %v1375, 1
        %v1378 = vshll.u32 %v1291, 16
        %v1380 = vrot.slane %v1378, 2
        %v1381 = vor.u32 %v1377, %v1380
        %v1382 = vsel %vm1302, %v1372, %v1381
        %v1384 = vshrl.u32 %v1292, 16
        %v1386 = vrot.slane %v1384, 1
        %v1387 = vshll.u32 %v1292, 16
        %v1389 = vrot.slane %v1387, 2
        %v1390 = vor.u32 %v1386, %v1389
        %v1391 = vsel %vm1302, %v1381, %v1390
        %v1393 = vshrl.u32 %v1293, 16
        %v1395 = vrot.slane %v1393, 1
        %v1396 = vshll.u32 %v1293, 16
        %v1398 = vrot.slane %v1396, 2
        %v1399 = vor.u32 %v1395, %v1398
        %v1400 = vsel %vm1302, %v1390, %v1399
        %v1402 = vshrl.u32 %v1294, 16
        %v1404 = vrot.slane %v1402, 1
        %v1405 = vshll.u32 %v1294, 16
        %v1407 = vrot.slane %v1405, 2
        %v1408 = vor.u32 %v1404, %v1407
        %v1409 = vsel %vm1302, %v1399, %v1408
        %v1411 = vshrl.u32 %v1295, 16
        %v1413 = vrot.slane %v1411, 1
        %v1414 = vshll.u32 %v1295, 16
        %v1416 = vrot.slane %v1414, 2
        %v1417 = vor.u32 %v1413, %v1416
        %v1418 = vsel %vm1302, %v1408, %v1417
        %v1420 = vshrl.u32 %v1296, 16
        %v1422 = vrot.slane %v1420, 1
        %v1423 = vshll.u32 %v1296, 16
        %v1425 = vrot.slane %v1423, 2
        %v1426 = vor.u32 %v1422, %v1425
        %v1427 = vsel %vm1302, %v1417, %v1426
        %v1429 = vshrl.u32 %v1297, 16
        %v1431 = vrot.slane %v1429, 1
        %v1432 = vshll.u32 %v1297, 16
        %v1434 = vrot.slane %v1432, 2
        %v1435 = vor.u32 %v1431, %v1434
        %v1436 = vsel %vm1302, %v1426, %v1435
        %v1438 = vshrl.u32 %v1298, 16
        %v1440 = vrot.slane %v1438, 1
        %v1441 = vshll.u32 %v1298, 16
        %v1443 = vrot.slane %v1441, 2
        %v1444 = vor.u32 %v1440, %v1443
        %v1445 = vsel %vm1302, %v1435, %v1444
        %v1447 = vshrl.u32 %v1299, 16
        %v1449 = vrot.slane %v1447, 1
        %v1450 = vshll.u32 %v1299, 16
        %v1452 = vrot.slane %v1450, 2
        %v1453 = vor.u32 %v1449, %v1452
        %v1454 = vsel %vm1302, %v1444, %v1453
        %v1456 = vshrl.u32 %v1300, 16
        %v1458 = vrot.slane %v1456, 1
        %v1459 = vshll.u32 %v1300, 16
        %v1461 = vrot.slane %v1459, 2
        %v1462 = vor.u32 %v1458, %v1461
        %v1463 = vsel %vm1302, %v1453, %v1462
        %v1465 = vshrl.u32 %v1301, 16
        %v1467 = vrot.slane %v1465, 1
        %v1468 = vshll.u32 %v1301, 16
        %v1470 = vrot.slane %v1468, 2
        %v1471 = vor.u32 %v1467, %v1470
        %v1472 = vsel %vm1302, %v1462, %v1471
        %1473 = vrot.lane.b32.xlu0 %v1319, 16
        %v1474 = vpop.permute.xlu0 %1473
        %1475 = vrot.lane.b32.xlu0 %v1328, 16
        %v1476 = vpop.permute.xlu0 %1475
        %1477 = vrot.lane.b32.xlu0 %v1337, 16
        %v1478 = vpop.permute.xlu0 %1477
        %1479 = vrot.lane.b32.xlu0 %v1346, 16
        %v1480 = vpop.permute.xlu0 %1479
        %1481 = vrot.lane.b32.xlu0 %v1355, 16
        %v1482 = vpop.permute.xlu0 %1481
        %1483 = vrot.lane.b32.xlu0 %v1364, 16
        %v1484 = vpop.permute.xlu0 %1483
        %1485 = vrot.lane.b32.xlu0 %v1373, 16
        %v1486 = vpop.permute.xlu0 %1485
        %1487 = vrot.lane.b32.xlu0 %v1382, 16
        %v1488 = vpop.permute.xlu0 %1487
        %1489 = vrot.lane.b32.xlu0 %v1391, 16
        %v1490 = vpop.permute.xlu0 %1489
        %1491 = vrot.lane.b32.xlu0 %v1400, 16
        %v1492 = vpop.permute.xlu0 %1491
        %1493 = vrot.lane.b32.xlu0 %v1409, 16
        %v1494 = vpop.permute.xlu0 %1493
        %1495 = vrot.lane.b32.xlu0 %v1418, 16
        %v1496 = vpop.permute.xlu0 %1495
        %1497 = vrot.lane.b32.xlu0 %v1427, 16
        %v1498 = vpop.permute.xlu0 %1497
        %1499 = vrot.lane.b32.xlu0 %v1436, 16
        %v1500 = vpop.permute.xlu0 %1499
        %1501 = vrot.lane.b32.xlu0 %v1445, 16
        %v1502 = vpop.permute.xlu0 %1501
        %1503 = vrot.lane.b32.xlu0 %v1454, 16
        %v1504 = vpop.permute.xlu0 %1503
        %1505 = vrot.lane.b32.xlu0 %v1463, 16
        %v1506 = vpop.permute.xlu0 %1505
        %1507 = vrot.lane.b32.xlu0 %v1472, 16
        %v1508 = vpop.permute.xlu0 %1507
        %vm1527 = vcmask 162944
        %1528 = vst.msk [vmem:[#allocation2] sm:$0xff] %vm1527, %v1474
        %1529 = vst.msk [vmem:[#allocation2 + $0x8] sm:$0xff] %vm1527, %v1476
        %1530 = vst.msk [vmem:[#allocation2 + $0x10] sm:$0xff] %vm1527, %v1478
        %1531 = vst.msk [vmem:[#allocation2 + $0x18] sm:$0xff] %vm1527, %v1480
        %1532 = vst.msk [vmem:[#allocation2 + $0x20] sm:$0xff] %vm1527, %v1482
        %1533 = vst.msk [vmem:[#allocation2 + $0x28] sm:$0xff] %vm1527, %v1484
        %1534 = vst.msk [vmem:[#allocation2 + $0x30] sm:$0xff] %vm1527, %v1486
        %1535 = vst.msk [vmem:[#allocation2 + $0x38] sm:$0xff] %vm1527, %v1488
        %1536 = vst.msk [vmem:[#allocation2 + $0x40] sm:$0xff] %vm1527, %v1490
        %1537 = vst.msk [vmem:[#allocation2 + $0x48] sm:$0xff] %vm1527, %v1492
        %1538 = vst.msk [vmem:[#allocation2 + $0x50] sm:$0xff] %vm1527, %v1494
        %1539 = vst.msk [vmem:[#allocation2 + $0x58] sm:$0xff] %vm1527, %v1496
        %1540 = vst.msk [vmem:[#allocation2 + $0x60] sm:$0xff] %vm1527, %v1498
        %1541 = vst.msk [vmem:[#allocation2 + $0x68] sm:$0xff] %vm1527, %v1500
        %1542 = vst.msk [vmem:[#allocation2 + $0x70] sm:$0xff] %vm1527, %v1502
        %1543 = vst.msk [vmem:[#allocation2 + $0x78] sm:$0xff] %vm1527, %v1504
        %1544 = vst.msk [vmem:[#allocation2 + $0x80] sm:$0xff] %vm1527, %v1506
        %1545 = vst.msk [vmem:[#allocation2 + $0x88] sm:$0xff] %vm1527, %v1508
        %v1546 = vld [vmem:[%s172 + $0x8] sm:$0xc]
        %v1547 = vld [vmem:[%s172 + $0xc] sm:$0xf]
        %v1548 = vld [vmem:[%s172 + $0x10] sm:$0xf]
        %v1549 = vld [vmem:[%s172 + $0x14] sm:$0xf]
        %v1550 = vld [vmem:[%s172 + $0x18] sm:$0xf]
        %v1551 = vld [vmem:[%s172 + $0x1c] sm:$0xf]
        %v1552 = vld [vmem:[%s172 + $0x20] sm:$0xf]
        %v1553 = vld [vmem:[%s172 + $0x24] sm:$0xf]
        %v1554 = vld [vmem:[%s172 + $0x28] sm:$0xf]
        %v1555 = vld [vmem:[%s172 + $0x2c] sm:$0xf]
        %v1556 = vld [vmem:[%s172 + $0x30] sm:$0xf]
        %v1557 = vld [vmem:[%s172 + $0x34] sm:$0xf]
        %v1558 = vld [vmem:[%s172 + $0x38] sm:$0xf]
        %v1559 = vld [vmem:[%s172 + $0x3c] sm:$0xf]
        %v1560 = vld [vmem:[%s172 + $0x40] sm:$0xf]
        %v1561 = vld [vmem:[%s172 + $0x44] sm:$0xf]
        %v1562 = vld [vmem:[%s172 + $0x48] sm:$0xf]
        %v1563 = vld [vmem:[%s172 + $0x4c] sm:$0xf]
        %v1564 = vld [vmem:[%s172 + $0x50] sm:$0xf]
        %v1565 = vld [vmem:[%s172 + $0x54] sm:$0xf]
        %v1566 = vld [vmem:[%s172 + $0x58] sm:$0xf]
        %v1567 = vld [vmem:[%s172 + $0x5c] sm:$0xf]
        %v1568 = vld [vmem:[%s172 + $0x60] sm:$0xf]
        %v1569 = vld [vmem:[%s172 + $0x64] sm:$0xf]
        %v1570 = vld [vmem:[%s172 + $0x68] sm:$0xf]
        %v1571 = vld [vmem:[%s172 + $0x6c] sm:$0xf]
        %v1572 = vld [vmem:[%s172 + $0x70] sm:$0xf]
        %v1573 = vld [vmem:[%s172 + $0x74] sm:$0xf]
        %v1574 = vld [vmem:[%s172 + $0x78] sm:$0xf]
        %v1575 = vld [vmem:[%s172 + $0x7c] sm:$0xf]
        %v1576 = vld [vmem:[%s172 + $0x80] sm:$0xf]
        %v1577 = vld [vmem:[%s172 + $0x84] sm:$0xf]
        %v1578 = vld [vmem:[%s172 + $0x88] sm:$0xf]
        %v1579 = vld [vmem:[%s172 + $0x8c] sm:$0xf]
        %v1580 = vld [vmem:[%s172 + $0x90] sm:$0xf]
        %v1581 = vld [vmem:[%s172 + $0x94] sm:$0xf]
        %v1582 = vld [vmem:[%s172 + $0x98] sm:$0x3]
        %v1620 = vunpack.c.l.b16 %v1546
        %v1621 = vunpack.c.l.b16 %v1547
        %v1622 = vunpack.c.l.b16 %v1548
        %v1623 = vunpack.c.l.b16 %v1549
        %v1624 = vunpack.c.l.b16 %v1550
        %v1625 = vunpack.c.l.b16 %v1551
        %v1626 = vunpack.c.l.b16 %v1552
        %v1627 = vunpack.c.l.b16 %v1553
        %v1628 = vunpack.c.l.b16 %v1554
        %v1629 = vunpack.c.l.b16 %v1555
        %v1630 = vunpack.c.l.b16 %v1556
        %v1631 = vunpack.c.l.b16 %v1557
        %v1632 = vunpack.c.l.b16 %v1558
        %v1633 = vunpack.c.l.b16 %v1559
        %v1634 = vunpack.c.l.b16 %v1560
        %v1635 = vunpack.c.l.b16 %v1561
        %v1636 = vunpack.c.l.b16 %v1562
        %v1637 = vunpack.c.l.b16 %v1563
        %v1638 = vunpack.c.l.b16 %v1564
        %v1639 = vunpack.c.l.b16 %v1565
        %v1640 = vunpack.c.l.b16 %v1566
        %v1641 = vunpack.c.l.b16 %v1567
        %v1642 = vunpack.c.l.b16 %v1568
        %v1643 = vunpack.c.l.b16 %v1569
        %v1644 = vunpack.c.l.b16 %v1570
        %v1645 = vunpack.c.l.b16 %v1571
        %v1646 = vunpack.c.l.b16 %v1572
        %v1647 = vunpack.c.l.b16 %v1573
        %v1648 = vunpack.c.l.b16 %v1574
        %v1649 = vunpack.c.l.b16 %v1575
        %v1650 = vunpack.c.l.b16 %v1576
        %v1651 = vunpack.c.l.b16 %v1577
        %v1652 = vunpack.c.l.b16 %v1578
        %v1653 = vunpack.c.l.b16 %v1579
        %v1654 = vunpack.c.l.b16 %v1580
        %v1655 = vunpack.c.l.b16 %v1581
        %v1656 = vunpack.c.l.b16 %v1582
        %v1657 = vpack.c.b16 %v1621, %v1620
        %v1658 = vpack.c.b16 %v1623, %v1622
        %v1659 = vpack.c.b16 %v1625, %v1624
        %v1660 = vpack.c.b16 %v1627, %v1626
        %v1661 = vpack.c.b16 %v1629, %v1628
        %v1662 = vpack.c.b16 %v1631, %v1630
        %v1663 = vpack.c.b16 %v1633, %v1632
        %v1664 = vpack.c.b16 %v1635, %v1634
        %v1665 = vpack.c.b16 %v1637, %v1636
        %v1666 = vpack.c.b16 %v1639, %v1638
        %v1667 = vpack.c.b16 %v1641, %v1640
        %v1668 = vpack.c.b16 %v1643, %v1642
        %v1669 = vpack.c.b16 %v1645, %v1644
        %v1670 = vpack.c.b16 %v1647, %v1646
        %v1671 = vpack.c.b16 %v1649, %v1648
        %v1672 = vpack.c.b16 %v1651, %v1650
        %v1673 = vpack.c.b16 %v1653, %v1652
        %v1674 = vpack.c.b16 %v1655, %v1654
        %v1675 = vpack.c.b16 %v1656, %v1656
        %vm1676 = vcmask 1045504
        %v1677 = vrot.slane %v1657, 2
        %v1678 = vrot.slane %v1658, 2
        %v1679 = vsel %vm1676, %v1677, %v1678
        %v1680 = vrot.slane %v1659, 2
        %v1681 = vsel %vm1676, %v1678, %v1680
        %v1682 = vrot.slane %v1660, 2
        %v1683 = vsel %vm1676, %v1680, %v1682
        %v1684 = vrot.slane %v1661, 2
        %v1685 = vsel %vm1676, %v1682, %v1684
        %v1686 = vrot.slane %v1662, 2
        %v1687 = vsel %vm1676, %v1684, %v1686
        %v1688 = vrot.slane %v1663, 2
        %v1689 = vsel %vm1676, %v1686, %v1688
        %v1690 = vrot.slane %v1664, 2
        %v1691 = vsel %vm1676, %v1688, %v1690
        %v1692 = vrot.slane %v1665, 2
        %v1693 = vsel %vm1676, %v1690, %v1692
        %v1694 = vrot.slane %v1666, 2
        %v1695 = vsel %vm1676, %v1692, %v1694
        %v1696 = vrot.slane %v1667, 2
        %v1697 = vsel %vm1676, %v1694, %v1696
        %v1698 = vrot.slane %v1668, 2
        %v1699 = vsel %vm1676, %v1696, %v1698
        %v1700 = vrot.slane %v1669, 2
        %v1701 = vsel %vm1676, %v1698, %v1700
        %v1702 = vrot.slane %v1670, 2
        %v1703 = vsel %vm1676, %v1700, %v1702
        %v1704 = vrot.slane %v1671, 2
        %v1705 = vsel %vm1676, %v1702, %v1704
        %v1706 = vrot.slane %v1672, 2
        %v1707 = vsel %vm1676, %v1704, %v1706
        %v1708 = vrot.slane %v1673, 2
        %v1709 = vsel %vm1676, %v1706, %v1708
        %v1710 = vrot.slane %v1674, 2
        %v1711 = vsel %vm1676, %v1708, %v1710
        %v1712 = vrot.slane %v1675, 2
        %v1713 = vsel %vm1676, %v1710, %v1712
        %1714 = vrot.lane.b32.xlu0 %v1679, 20
        %v1715 = vpop.permute.xlu0 %1714
        %1716 = vrot.lane.b32.xlu0 %v1681, 20
        %v1717 = vpop.permute.xlu0 %1716
        %1718 = vrot.lane.b32.xlu0 %v1683, 20
        %v1719 = vpop.permute.xlu0 %1718
        %1720 = vrot.lane.b32.xlu0 %v1685, 20
        %v1721 = vpop.permute.xlu0 %1720
        %1722 = vrot.lane.b32.xlu0 %v1687, 20
        %v1723 = vpop.permute.xlu0 %1722
        %1724 = vrot.lane.b32.xlu0 %v1689, 20
        %v1725 = vpop.permute.xlu0 %1724
        %1726 = vrot.lane.b32.xlu0 %v1691, 20
        %v1727 = vpop.permute.xlu0 %1726
        %1728 = vrot.lane.b32.xlu0 %v1693, 20
        %v1729 = vpop.permute.xlu0 %1728
        %1730 = vrot.lane.b32.xlu0 %v1695, 20
        %v1731 = vpop.permute.xlu0 %1730
        %1732 = vrot.lane.b32.xlu0 %v1697, 20
        %v1733 = vpop.permute.xlu0 %1732
        %1734 = vrot.lane.b32.xlu0 %v1699, 20
        %v1735 = vpop.permute.xlu0 %1734
        %1736 = vrot.lane.b32.xlu0 %v1701, 20
        %v1737 = vpop.permute.xlu0 %1736
        %1738 = vrot.lane.b32.xlu0 %v1703, 20
        %v1739 = vpop.permute.xlu0 %1738
        %1740 = vrot.lane.b32.xlu0 %v1705, 20
        %v1741 = vpop.permute.xlu0 %1740
        %1742 = vrot.lane.b32.xlu0 %v1707, 20
        %v1743 = vpop.permute.xlu0 %1742
        %1744 = vrot.lane.b32.xlu0 %v1709, 20
        %v1745 = vpop.permute.xlu0 %1744
        %1746 = vrot.lane.b32.xlu0 %v1711, 20
        %v1747 = vpop.permute.xlu0 %1746
        %1748 = vrot.lane.b32.xlu0 %v1713, 20
        %v1749 = vpop.permute.xlu0 %1748
        %vm1768 = vcmask 195744
        %1769 = vst.msk [vmem:[#allocation2] sm:$0xff] %vm1768, %v1715
        %1770 = vst.msk [vmem:[#allocation2 + $0x8] sm:$0xff] %vm1768, %v1717
        %1771 = vst.msk [vmem:[#allocation2 + $0x10] sm:$0xff] %vm1768, %v1719
        %1772 = vst.msk [vmem:[#allocation2 + $0x18] sm:$0xff] %vm1768, %v1721
        %1773 = vst.msk [vmem:[#allocation2 + $0x20] sm:$0xff] %vm1768, %v1723
        %1774 = vst.msk [vmem:[#allocation2 + $0x28] sm:$0xff] %vm1768, %v1725
        %1775 = vst.msk [vmem:[#allocation2 + $0x30] sm:$0xff] %vm1768, %v1727
        %1776 = vst.msk [vmem:[#allocation2 + $0x38] sm:$0xff] %vm1768, %v1729
        %1777 = vst.msk [vmem:[#allocation2 + $0x40] sm:$0xff] %vm1768, %v1731
        %1778 = vst.msk [vmem:[#allocation2 + $0x48] sm:$0xff] %vm1768, %v1733
        %1779 = vst.msk [vmem:[#allocation2 + $0x50] sm:$0xff] %vm1768, %v1735
        %1780 = vst.msk [vmem:[#allocation2 + $0x58] sm:$0xff] %vm1768, %v1737
        %1781 = vst.msk [vmem:[#allocation2 + $0x60] sm:$0xff] %vm1768, %v1739
        %1782 = vst.msk [vmem:[#allocation2 + $0x68] sm:$0xff] %vm1768, %v1741
        %1783 = vst.msk [vmem:[#allocation2 + $0x70] sm:$0xff] %vm1768, %v1743
        %1784 = vst.msk [vmem:[#allocation2 + $0x78] sm:$0xff] %vm1768, %v1745
        %1785 = vst.msk [vmem:[#allocation2 + $0x80] sm:$0xff] %vm1768, %v1747
        %1786 = vst.msk [vmem:[#allocation2 + $0x88] sm:$0xff] %vm1768, %v1749
        %v1787 = vld [vmem:[%s172 + $0x10] sm:$0xc]
        %v1788 = vld [vmem:[%s172 + $0x14] sm:$0xf]
        %v1789 = vld [vmem:[%s172 + $0x18] sm:$0xf]
        %v1790 = vld [vmem:[%s172 + $0x1c] sm:$0xf]
        %v1791 = vld [vmem:[%s172 + $0x20] sm:$0xf]
        %v1792 = vld [vmem:[%s172 + $0x24] sm:$0xf]
        %v1793 = vld [vmem:[%s172 + $0x28] sm:$0xf]
        %v1794 = vld [vmem:[%s172 + $0x2c] sm:$0xf]
        %v1795 = vld [vmem:[%s172 + $0x30] sm:$0xf]
        %v1796 = vld [vmem:[%s172 + $0x34] sm:$0xf]
        %v1797 = vld [vmem:[%s172 + $0x38] sm:$0xf]
        %v1798 = vld [vmem:[%s172 + $0x3c] sm:$0xf]
        %v1799 = vld [vmem:[%s172 + $0x40] sm:$0xf]
        %v1800 = vld [vmem:[%s172 + $0x44] sm:$0xf]
        %v1801 = vld [vmem:[%s172 + $0x48] sm:$0xf]
        %v1802 = vld [vmem:[%s172 + $0x4c] sm:$0xf]
        %v1803 = vld [vmem:[%s172 + $0x50] sm:$0xf]
        %v1804 = vld [vmem:[%s172 + $0x54] sm:$0xf]
        %v1805 = vld [vmem:[%s172 + $0x58] sm:$0xf]
        %v1806 = vld [vmem:[%s172 + $0x5c] sm:$0xf]
        %v1807 = vld [vmem:[%s172 + $0x60] sm:$0xf]
        %v1808 = vld [vmem:[%s172 + $0x64] sm:$0xf]
        %v1809 = vld [vmem:[%s172 + $0x68] sm:$0xf]
        %v1810 = vld [vmem:[%s172 + $0x6c] sm:$0xf]
        %v1811 = vld [vmem:[%s172 + $0x70] sm:$0xf]
        %v1812 = vld [vmem:[%s172 + $0x74] sm:$0xf]
        %v1813 = vld [vmem:[%s172 + $0x78] sm:$0xf]
        %v1814 = vld [vmem:[%s172 + $0x7c] sm:$0xf]
        %v1815 = vld [vmem:[%s172 + $0x80] sm:$0xf]
        %v1816 = vld [vmem:[%s172 + $0x84] sm:$0xf]
        %v1817 = vld [vmem:[%s172 + $0x88] sm:$0xf]
        %v1818 = vld [vmem:[%s172 + $0x8c] sm:$0xf]
        %v1819 = vld [vmem:[%s172 + $0x90] sm:$0xf]
        %v1820 = vld [vmem:[%s172 + $0x94] sm:$0xf]
        %v1821 = vld [vmem:[%s172 + $0x98] sm:$0xf]
        %v1822 = vld [vmem:[%s172 + $0x9c] sm:$0xf]
        %v1823 = vld [vmem:[%s172 + $0xa0] sm:$0x3]
        %v1861 = vunpack.c.l.b16 %v1787
        %v1862 = vunpack.c.l.b16 %v1788
        %v1863 = vunpack.c.l.b16 %v1789
        %v1864 = vunpack.c.l.b16 %v1790
        %v1865 = vunpack.c.l.b16 %v1791
        %v1866 = vunpack.c.l.b16 %v1792
        %v1867 = vunpack.c.l.b16 %v1793
        %v1868 = vunpack.c.l.b16 %v1794
        %v1869 = vunpack.c.l.b16 %v1795
        %v1870 = vunpack.c.l.b16 %v1796
        %v1871 = vunpack.c.l.b16 %v1797
        %v1872 = vunpack.c.l.b16 %v1798
        %v1873 = vunpack.c.l.b16 %v1799
        %v1874 = vunpack.c.l.b16 %v1800
        %v1875 = vunpack.c.l.b16 %v1801
        %v1876 = vunpack.c.l.b16 %v1802
        %v1877 = vunpack.c.l.b16 %v1803
        %v1878 = vunpack.c.l.b16 %v1804
        %v1879 = vunpack.c.l.b16 %v1805
        %v1880 = vunpack.c.l.b16 %v1806
        %v1881 = vunpack.c.l.b16 %v1807
        %v1882 = vunpack.c.l.b16 %v1808
        %v1883 = vunpack.c.l.b16 %v1809
        %v1884 = vunpack.c.l.b16 %v1810
        %v1885 = vunpack.c.l.b16 %v1811
        %v1886 = vunpack.c.l.b16 %v1812
        %v1887 = vunpack.c.l.b16 %v1813
        %v1888 = vunpack.c.l.b16 %v1814
        %v1889 = vunpack.c.l.b16 %v1815
        %v1890 = vunpack.c.l.b16 %v1816
        %v1891 = vunpack.c.l.b16 %v1817
        %v1892 = vunpack.c.l.b16 %v1818
        %v1893 = vunpack.c.l.b16 %v1819
        %v1894 = vunpack.c.l.b16 %v1820
        %v1895 = vunpack.c.l.b16 %v1821
        %v1896 = vunpack.c.l.b16 %v1822
        %v1897 = vunpack.c.l.b16 %v1823
        %v1898 = vpack.c.b16 %v1862, %v1861
        %v1899 = vpack.c.b16 %v1864, %v1863
        %v1900 = vpack.c.b16 %v1866, %v1865
        %v1901 = vpack.c.b16 %v1868, %v1867
        %v1902 = vpack.c.b16 %v1870, %v1869
        %v1903 = vpack.c.b16 %v1872, %v1871
        %v1904 = vpack.c.b16 %v1874, %v1873
        %v1905 = vpack.c.b16 %v1876, %v1875
        %v1906 = vpack.c.b16 %v1878, %v1877
        %v1907 = vpack.c.b16 %v1880, %v1879
        %v1908 = vpack.c.b16 %v1882, %v1881
        %v1909 = vpack.c.b16 %v1884, %v1883
        %v1910 = vpack.c.b16 %v1886, %v1885
        %v1911 = vpack.c.b16 %v1888, %v1887
        %v1912 = vpack.c.b16 %v1890, %v1889
        %v1913 = vpack.c.b16 %v1892, %v1891
        %v1914 = vpack.c.b16 %v1894, %v1893
        %v1915 = vpack.c.b16 %v1896, %v1895
        %v1916 = vpack.c.b16 %v1897, %v1897
        %v1917 = vrot.slane %v1898, 2
        %v1918 = vrot.slane %v1899, 2
        %v1919 = vsel %vm1676, %v1917, %v1918
        %v1920 = vrot.slane %v1900, 2
        %v1921 = vsel %vm1676, %v1918, %v1920
        %v1922 = vrot.slane %v1901, 2
        %v1923 = vsel %vm1676, %v1920, %v1922
        %v1924 = vrot.slane %v1902, 2
        %v1925 = vsel %vm1676, %v1922, %v1924
        %v1926 = vrot.slane %v1903, 2
        %v1927 = vsel %vm1676, %v1924, %v1926
        %v1928 = vrot.slane %v1904, 2
        %v1929 = vsel %vm1676, %v1926, %v1928
        %v1930 = vrot.slane %v1905, 2
        %v1931 = vsel %vm1676, %v1928, %v1930
        %v1932 = vrot.slane %v1906, 2
        %v1933 = vsel %vm1676, %v1930, %v1932
        %v1934 = vrot.slane %v1907, 2
        %v1935 = vsel %vm1676, %v1932, %v1934
        %v1936 = vrot.slane %v1908, 2
        %v1937 = vsel %vm1676, %v1934, %v1936
        %v1938 = vrot.slane %v1909, 2
        %v1939 = vsel %vm1676, %v1936, %v1938
        %v1940 = vrot.slane %v1910, 2
        %v1941 = vsel %vm1676, %v1938, %v1940
        %v1942 = vrot.slane %v1911, 2
        %v1943 = vsel %vm1676, %v1940, %v1942
        %v1944 = vrot.slane %v1912, 2
        %v1945 = vsel %vm1676, %v1942, %v1944
        %v1946 = vrot.slane %v1913, 2
        %v1947 = vsel %vm1676, %v1944, %v1946
        %v1948 = vrot.slane %v1914, 2
        %v1949 = vsel %vm1676, %v1946, %v1948
        %v1950 = vrot.slane %v1915, 2
        %v1951 = vsel %vm1676, %v1948, %v1950
        %v1952 = vrot.slane %v1916, 2
        %v1953 = vsel %vm1676, %v1950, %v1952
        %1954 = vrot.lane.b32.xlu0 %v1919, 24
        %v1955 = vpop.permute.xlu0 %1954
        %1956 = vrot.lane.b32.xlu0 %v1921, 24
        %v1957 = vpop.permute.xlu0 %1956
        %1958 = vrot.lane.b32.xlu0 %v1923, 24
        %v1959 = vpop.permute.xlu0 %1958
        %1960 = vrot.lane.b32.xlu0 %v1925, 24
        %v1961 = vpop.permute.xlu0 %1960
        %1962 = vrot.lane.b32.xlu0 %v1927, 24
        %v1963 = vpop.permute.xlu0 %1962
        %1964 = vrot.lane.b32.xlu0 %v1929, 24
        %v1965 = vpop.permute.xlu0 %1964
        %1966 = vrot.lane.b32.xlu0 %v1931, 24
        %v1967 = vpop.permute.xlu0 %1966
        %1968 = vrot.lane.b32.xlu0 %v1933, 24
        %v1969 = vpop.permute.xlu0 %1968
        %1970 = vrot.lane.b32.xlu0 %v1935, 24
        %v1971 = vpop.permute.xlu0 %1970
        %1972 = vrot.lane.b32.xlu0 %v1937, 24
        %v1973 = vpop.permute.xlu0 %1972
        %1974 = vrot.lane.b32.xlu0 %v1939, 24
        %v1975 = vpop.permute.xlu0 %1974
        %1976 = vrot.lane.b32.xlu0 %v1941, 24
        %v1977 = vpop.permute.xlu0 %1976
        %1978 = vrot.lane.b32.xlu0 %v1943, 24
        %v1979 = vpop.permute.xlu0 %1978
        %1980 = vrot.lane.b32.xlu0 %v1945, 24
        %v1981 = vpop.permute.xlu0 %1980
        %1982 = vrot.lane.b32.xlu0 %v1947, 24
        %v1983 = vpop.permute.xlu0 %1982
        %1984 = vrot.lane.b32.xlu0 %v1949, 24
        %v1985 = vpop.permute.xlu0 %1984
        %1986 = vrot.lane.b32.xlu0 %v1951, 24
        %v1987 = vpop.permute.xlu0 %1986
        %1988 = vrot.lane.b32.xlu0 %v1953, 24
        %v1989 = vpop.permute.xlu0 %1988
        %vm2008 = vcmask 228544
        %2009 = vst.msk [vmem:[#allocation2] sm:$0xff] %vm2008, %v1955
        %2010 = vst.msk [vmem:[#allocation2 + $0x8] sm:$0xff] %vm2008, %v1957
        %2011 = vst.msk [vmem:[#allocation2 + $0x10] sm:$0xff] %vm2008, %v1959
        %2012 = vst.msk [vmem:[#allocation2 + $0x18] sm:$0xff] %vm2008, %v1961
        %2013 = vst.msk [vmem:[#allocation2 + $0x20] sm:$0xff] %vm2008, %v1963
        %2014 = vst.msk [vmem:[#allocation2 + $0x28] sm:$0xff] %vm2008, %v1965
        %2015 = vst.msk [vmem:[#allocation2 + $0x30] sm:$0xff] %vm2008, %v1967
        %2016 = vst.msk [vmem:[#allocation2 + $0x38] sm:$0xff] %vm2008, %v1969
        %2017 = vst.msk [vmem:[#allocation2 + $0x40] sm:$0xff] %vm2008, %v1971
        %2018 = vst.msk [vmem:[#allocation2 + $0x48] sm:$0xff] %vm2008, %v1973
        %2019 = vst.msk [vmem:[#allocation2 + $0x50] sm:$0xff] %vm2008, %v1975
        %2020 = vst.msk [vmem:[#allocation2 + $0x58] sm:$0xff] %vm2008, %v1977
        %2021 = vst.msk [vmem:[#allocation2 + $0x60] sm:$0xff] %vm2008, %v1979
        %2022 = vst.msk [vmem:[#allocation2 + $0x68] sm:$0xff] %vm2008, %v1981
        %2023 = vst.msk [vmem:[#allocation2 + $0x70] sm:$0xff] %vm2008, %v1983
        %2024 = vst.msk [vmem:[#allocation2 + $0x78] sm:$0xff] %vm2008, %v1985
        %2025 = vst.msk [vmem:[#allocation2 + $0x80] sm:$0xff] %vm2008, %v1987
        %2026 = vst.msk [vmem:[#allocation2 + $0x88] sm:$0xff] %vm2008, %v1989
        %v2027 = vld [vmem:[%s172 + $0x10] sm:$0xc]
        %v2028 = vld [vmem:[%s172 + $0x14] sm:$0xf]
        %v2029 = vld [vmem:[%s172 + $0x18] sm:$0xf]
        %v2030 = vld [vmem:[%s172 + $0x1c] sm:$0xf]
        %v2031 = vld [vmem:[%s172 + $0x20] sm:$0xf]
        %v2032 = vld [vmem:[%s172 + $0x24] sm:$0xf]
        %v2033 = vld [vmem:[%s172 + $0x28] sm:$0xf]
        %v2034 = vld [vmem:[%s172 + $0x2c] sm:$0xf]
        %v2035 = vld [vmem:[%s172 + $0x30] sm:$0xf]
        %v2036 = vld [vmem:[%s172 + $0x34] sm:$0xf]
        %v2037 = vld [vmem:[%s172 + $0x38] sm:$0xf]
        %v2038 = vld [vmem:[%s172 + $0x3c] sm:$0xf]
        %v2039 = vld [vmem:[%s172 + $0x40] sm:$0xf]
        %v2040 = vld [vmem:[%s172 + $0x44] sm:$0xf]
        %v2041 = vld [vmem:[%s172 + $0x48] sm:$0xf]
        %v2042 = vld [vmem:[%s172 + $0x4c] sm:$0xf]
        %v2043 = vld [vmem:[%s172 + $0x50] sm:$0xf]
        %v2044 = vld [vmem:[%s172 + $0x54] sm:$0xf]
        %v2045 = vld [vmem:[%s172 + $0x58] sm:$0xf]
        %v2046 = vld [vmem:[%s172 + $0x5c] sm:$0xf]
        %v2047 = vld [vmem:[%s172 + $0x60] sm:$0xf]
        %v2048 = vld [vmem:[%s172 + $0x64] sm:$0xf]
        %v2049 = vld [vmem:[%s172 + $0x68] sm:$0xf]
        %v2050 = vld [vmem:[%s172 + $0x6c] sm:$0xf]
        %v2051 = vld [vmem:[%s172 + $0x70] sm:$0xf]
        %v2052 = vld [vmem:[%s172 + $0x74] sm:$0xf]
        %v2053 = vld [vmem:[%s172 + $0x78] sm:$0xf]
        %v2054 = vld [vmem:[%s172 + $0x7c] sm:$0xf]
        %v2055 = vld [vmem:[%s172 + $0x80] sm:$0xf]
        %v2056 = vld [vmem:[%s172 + $0x84] sm:$0xf]
        %v2057 = vld [vmem:[%s172 + $0x88] sm:$0xf]
        %v2058 = vld [vmem:[%s172 + $0x8c] sm:$0xf]
        %v2059 = vld [vmem:[%s172 + $0x90] sm:$0xf]
        %v2060 = vld [vmem:[%s172 + $0x94] sm:$0xf]
        %v2061 = vld [vmem:[%s172 + $0x98] sm:$0xf]
        %v2062 = vld [vmem:[%s172 + $0x9c] sm:$0xf]
        %v2063 = vld [vmem:[%s172 + $0xa0] sm:$0x7]
        %v2101 = vunpack.c.l.b16 %v2027
        %v2102 = vunpack.c.l.b16 %v2028
        %v2103 = vunpack.c.l.b16 %v2029
        %v2104 = vunpack.c.l.b16 %v2030
        %v2105 = vunpack.c.l.b16 %v2031
        %v2106 = vunpack.c.l.b16 %v2032
        %v2107 = vunpack.c.l.b16 %v2033
        %v2108 = vunpack.c.l.b16 %v2034
        %v2109 = vunpack.c.l.b16 %v2035
        %v2110 = vunpack.c.l.b16 %v2036
        %v2111 = vunpack.c.l.b16 %v2037
        %v2112 = vunpack.c.l.b16 %v2038
        %v2113 = vunpack.c.l.b16 %v2039
        %v2114 = vunpack.c.l.b16 %v2040
        %v2115 = vunpack.c.l.b16 %v2041
        %v2116 = vunpack.c.l.b16 %v2042
        %v2117 = vunpack.c.l.b16 %v2043
        %v2118 = vunpack.c.l.b16 %v2044
        %v2119 = vunpack.c.l.b16 %v2045
        %v2120 = vunpack.c.l.b16 %v2046
        %v2121 = vunpack.c.l.b16 %v2047
        %v2122 = vunpack.c.l.b16 %v2048
        %v2123 = vunpack.c.l.b16 %v2049
        %v2124 = vunpack.c.l.b16 %v2050
        %v2125 = vunpack.c.l.b16 %v2051
        %v2126 = vunpack.c.l.b16 %v2052
        %v2127 = vunpack.c.l.b16 %v2053
        %v2128 = vunpack.c.l.b16 %v2054
        %v2129 = vunpack.c.l.b16 %v2055
        %v2130 = vunpack.c.l.b16 %v2056
        %v2131 = vunpack.c.l.b16 %v2057
        %v2132 = vunpack.c.l.b16 %v2058
        %v2133 = vunpack.c.l.b16 %v2059
        %v2134 = vunpack.c.l.b16 %v2060
        %v2135 = vunpack.c.l.b16 %v2061
        %v2136 = vunpack.c.l.b16 %v2062
        %v2137 = vunpack.c.l.b16 %v2063
        %v2138 = vpack.c.b16 %v2102, %v2101
        %v2139 = vpack.c.b16 %v2104, %v2103
        %v2140 = vpack.c.b16 %v2106, %v2105
        %v2141 = vpack.c.b16 %v2108, %v2107
        %v2142 = vpack.c.b16 %v2110, %v2109
        %v2143 = vpack.c.b16 %v2112, %v2111
        %v2144 = vpack.c.b16 %v2114, %v2113
        %v2145 = vpack.c.b16 %v2116, %v2115
        %v2146 = vpack.c.b16 %v2118, %v2117
        %v2147 = vpack.c.b16 %v2120, %v2119
        %v2148 = vpack.c.b16 %v2122, %v2121
        %v2149 = vpack.c.b16 %v2124, %v2123
        %v2150 = vpack.c.b16 %v2126, %v2125
        %v2151 = vpack.c.b16 %v2128, %v2127
        %v2152 = vpack.c.b16 %v2130, %v2129
        %v2153 = vpack.c.b16 %v2132, %v2131
        %v2154 = vpack.c.b16 %v2134, %v2133
        %v2155 = vpack.c.b16 %v2136, %v2135
        %v2156 = vpack.c.b16 %v2137, %v2137
        %vm2157 = vsmask.f32 5376
        %v2159 = vshrl.u32 %v2138, 16
        %v2161 = vrot.slane %v2159, 2
        %v2162 = vshll.u32 %v2138, 16
        %v2164 = vrot.slane %v2162, 3
        %v2165 = vor.u32 %v2161, %v2164
        %v2167 = vshrl.u32 %v2139, 16
        %v2169 = vrot.slane %v2167, 2
        %v2170 = vshll.u32 %v2139, 16
        %v2172 = vrot.slane %v2170, 3
        %v2173 = vor.u32 %v2169, %v2172
        %v2174 = vsel %vm2157, %v2165, %v2173
        %v2176 = vshrl.u32 %v2140, 16
        %v2178 = vrot.slane %v2176, 2
        %v2179 = vshll.u32 %v2140, 16
        %v2181 = vrot.slane %v2179, 3
        %v2182 = vor.u32 %v2178, %v2181
        %v2183 = vsel %vm2157, %v2173, %v2182
        %v2185 = vshrl.u32 %v2141, 16
        %v2187 = vrot.slane %v2185, 2
        %v2188 = vshll.u32 %v2141, 16
        %v2190 = vrot.slane %v2188, 3
        %v2191 = vor.u32 %v2187, %v2190
        %v2192 = vsel %vm2157, %v2182, %v2191
        %v2194 = vshrl.u32 %v2142, 16
        %v2196 = vrot.slane %v2194, 2
        %v2197 = vshll.u32 %v2142, 16
        %v2199 = vrot.slane %v2197, 3
        %v2200 = vor.u32 %v2196, %v2199
        %v2201 = vsel %vm2157, %v2191, %v2200
        %v2203 = vshrl.u32 %v2143, 16
        %v2205 = vrot.slane %v2203, 2
        %v2206 = vshll.u32 %v2143, 16
        %v2208 = vrot.slane %v2206, 3
        %v2209 = vor.u32 %v2205, %v2208
        %v2210 = vsel %vm2157, %v2200, %v2209
        %v2212 = vshrl.u32 %v2144, 16
        %v2214 = vrot.slane %v2212, 2
        %v2215 = vshll.u32 %v2144, 16
        %v2217 = vrot.slane %v2215, 3
        %v2218 = vor.u32 %v2214, %v2217
        %v2219 = vsel %vm2157, %v2209, %v2218
        %v2221 = vshrl.u32 %v2145, 16
        %v2223 = vrot.slane %v2221, 2
        %v2224 = vshll.u32 %v2145, 16
        %v2226 = vrot.slane %v2224, 3
        %v2227 = vor.u32 %v2223, %v2226
        %v2228 = vsel %vm2157, %v2218, %v2227
        %v2230 = vshrl.u32 %v2146, 16
        %v2232 = vrot.slane %v2230, 2
        %v2233 = vshll.u32 %v2146, 16
        %v2235 = vrot.slane %v2233, 3
        %v2236 = vor.u32 %v2232, %v2235
        %v2237 = vsel %vm2157, %v2227, %v2236
        %v2239 = vshrl.u32 %v2147, 16
        %v2241 = vrot.slane %v2239, 2
        %v2242 = vshll.u32 %v2147, 16
        %v2244 = vrot.slane %v2242, 3
        %v2245 = vor.u32 %v2241, %v2244
        %v2246 = vsel %vm2157, %v2236, %v2245
        %v2248 = vshrl.u32 %v2148, 16
        %v2250 = vrot.slane %v2248, 2
        %v2251 = vshll.u32 %v2148, 16
        %v2253 = vrot.slane %v2251, 3
        %v2254 = vor.u32 %v2250, %v2253
        %v2255 = vsel %vm2157, %v2245, %v2254
        %v2257 = vshrl.u32 %v2149, 16
        %v2259 = vrot.slane %v2257, 2
        %v2260 = vshll.u32 %v2149, 16
        %v2262 = vrot.slane %v2260, 3
        %v2263 = vor.u32 %v2259, %v2262
        %v2264 = vsel %vm2157, %v2254, %v2263
        %v2266 = vshrl.u32 %v2150, 16
        %v2268 = vrot.slane %v2266, 2
        %v2269 = vshll.u32 %v2150, 16
        %v2271 = vrot.slane %v2269, 3
        %v2272 = vor.u32 %v2268, %v2271
        %v2273 = vsel %vm2157, %v2263, %v2272
        %v2275 = vshrl.u32 %v2151, 16
        %v2277 = vrot.slane %v2275, 2
        %v2278 = vshll.u32 %v2151, 16
        %v2280 = vrot.slane %v2278, 3
        %v2281 = vor.u32 %v2277, %v2280
        %v2282 = vsel %vm2157, %v2272, %v2281
        %v2284 = vshrl.u32 %v2152, 16
        %v2286 = vrot.slane %v2284, 2
        %v2287 = vshll.u32 %v2152, 16
        %v2289 = vrot.slane %v2287, 3
        %v2290 = vor.u32 %v2286, %v2289
        %v2291 = vsel %vm2157, %v2281, %v2290
        %v2293 = vshrl.u32 %v2153, 16
        %v2295 = vrot.slane %v2293, 2
        %v2296 = vshll.u32 %v2153, 16
        %v2298 = vrot.slane %v2296, 3
        %v2299 = vor.u32 %v2295, %v2298
        %v2300 = vsel %vm2157, %v2290, %v2299
        %v2302 = vshrl.u32 %v2154, 16
        %v2304 = vrot.slane %v2302, 2
        %v2305 = vshll.u32 %v2154, 16
        %v2307 = vrot.slane %v2305, 3
        %v2308 = vor.u32 %v2304, %v2307
        %v2309 = vsel %vm2157, %v2299, %v2308
        %v2311 = vshrl.u32 %v2155, 16
        %v2313 = vrot.slane %v2311, 2
        %v2314 = vshll.u32 %v2155, 16
        %v2316 = vrot.slane %v2314, 3
        %v2317 = vor.u32 %v2313, %v2316
        %v2318 = vsel %vm2157, %v2308, %v2317
        %v2320 = vshrl.u32 %v2156, 16
        %v2322 = vrot.slane %v2320, 2
        %v2323 = vshll.u32 %v2156, 16
        %v2325 = vrot.slane %v2323, 3
        %v2326 = vor.u32 %v2322, %v2325
        %v2327 = vsel %vm2157, %v2317, %v2326
        %2328 = vrot.lane.b32.xlu0 %v2174, 28
        %v2329 = vpop.permute.xlu0 %2328
        %2330 = vrot.lane.b32.xlu0 %v2183, 28
        %v2331 = vpop.permute.xlu0 %2330
        %2332 = vrot.lane.b32.xlu0 %v2192, 28
        %v2333 = vpop.permute.xlu0 %2332
        %2334 = vrot.lane.b32.xlu0 %v2201, 28
        %v2335 = vpop.permute.xlu0 %2334
        %2336 = vrot.lane.b32.xlu0 %v2210, 28
        %v2337 = vpop.permute.xlu0 %2336
        %2338 = vrot.lane.b32.xlu0 %v2219, 28
        %v2339 = vpop.permute.xlu0 %2338
        %2340 = vrot.lane.b32.xlu0 %v2228, 28
        %v2341 = vpop.permute.xlu0 %2340
        %2342 = vrot.lane.b32.xlu0 %v2237, 28
        %v2343 = vpop.permute.xlu0 %2342
        %2344 = vrot.lane.b32.xlu0 %v2246, 28
        %v2345 = vpop.permute.xlu0 %2344
        %2346 = vrot.lane.b32.xlu0 %v2255, 28
        %v2347 = vpop.permute.xlu0 %2346
        %2348 = vrot.lane.b32.xlu0 %v2264, 28
        %v2349 = vpop.permute.xlu0 %2348
        %2350 = vrot.lane.b32.xlu0 %v2273, 28
        %v2351 = vpop.permute.xlu0 %2350
        %2352 = vrot.lane.b32.xlu0 %v2282, 28
        %v2353 = vpop.permute.xlu0 %2352
        %2354 = vrot.lane.b32.xlu0 %v2291, 28
        %v2355 = vpop.permute.xlu0 %2354
        %2356 = vrot.lane.b32.xlu0 %v2300, 28
        %v2357 = vpop.permute.xlu0 %2356
        %2358 = vrot.lane.b32.xlu0 %v2309, 28
        %v2359 = vpop.permute.xlu0 %2358
        %2360 = vrot.lane.b32.xlu0 %v2318, 28
        %v2361 = vpop.permute.xlu0 %2360
        %2362 = vrot.lane.b32.xlu0 %v2327, 28
        %v2363 = vpop.permute.xlu0 %2362
        %vm2382 = vcmask 261344
        %2383 = vst.msk [vmem:[#allocation2] sm:$0xff] %vm2382, %v2329
        %2384 = vst.msk [vmem:[#allocation2 + $0x8] sm:$0xff] %vm2382, %v2331
        %2385 = vst.msk [vmem:[#allocation2 + $0x10] sm:$0xff] %vm2382, %v2333
        %2386 = vst.msk [vmem:[#allocation2 + $0x18] sm:$0xff] %vm2382, %v2335
        %2387 = vst.msk [vmem:[#allocation2 + $0x20] sm:$0xff] %vm2382, %v2337
        %2388 = vst.msk [vmem:[#allocation2 + $0x28] sm:$0xff] %vm2382, %v2339
        %2389 = vst.msk [vmem:[#allocation2 + $0x30] sm:$0xff] %vm2382, %v2341
        %2390 = vst.msk [vmem:[#allocation2 + $0x38] sm:$0xff] %vm2382, %v2343
        %2391 = vst.msk [vmem:[#allocation2 + $0x40] sm:$0xff] %vm2382, %v2345
        %2392 = vst.msk [vmem:[#allocation2 + $0x48] sm:$0xff] %vm2382, %v2347
        %2393 = vst.msk [vmem:[#allocation2 + $0x50] sm:$0xff] %vm2382, %v2349
        %2394 = vst.msk [vmem:[#allocation2 + $0x58] sm:$0xff] %vm2382, %v2351
        %2395 = vst.msk [vmem:[#allocation2 + $0x60] sm:$0xff] %vm2382, %v2353
        %2396 = vst.msk [vmem:[#allocation2 + $0x68] sm:$0xff] %vm2382, %v2355
        %2397 = vst.msk [vmem:[#allocation2 + $0x70] sm:$0xff] %vm2382, %v2357
        %2398 = vst.msk [vmem:[#allocation2 + $0x78] sm:$0xff] %vm2382, %v2359
        %2399 = vst.msk [vmem:[#allocation2 + $0x80] sm:$0xff] %vm2382, %v2361
        %2400 = vst.msk [vmem:[#allocation2 + $0x88] sm:$0xff] %vm2382, %v2363
        %v2401 = vld [vmem:[%s172 + $0x10] sm:$0x8]
        %v2402 = vld [vmem:[%s172 + $0x14] sm:$0xf]
        %v2403 = vld [vmem:[%s172 + $0x18] sm:$0xf]
        %v2404 = vld [vmem:[%s172 + $0x1c] sm:$0xf]
        %v2405 = vld [vmem:[%s172 + $0x20] sm:$0xf]
        %v2406 = vld [vmem:[%s172 + $0x24] sm:$0xf]
        %v2407 = vld [vmem:[%s172 + $0x28] sm:$0xf]
        %v2408 = vld [vmem:[%s172 + $0x2c] sm:$0xf]
        %v2409 = vld [vmem:[%s172 + $0x30] sm:$0xf]
        %v2410 = vld [vmem:[%s172 + $0x34] sm:$0xf]
        %v2411 = vld [vmem:[%s172 + $0x38] sm:$0xf]
        %v2412 = vld [vmem:[%s172 + $0x3c] sm:$0xf]
        %v2413 = vld [vmem:[%s172 + $0x40] sm:$0xf]
        %v2414 = vld [vmem:[%s172 + $0x44] sm:$0xf]
        %v2415 = vld [vmem:[%s172 + $0x48] sm:$0xf]
        %v2416 = vld [vmem:[%s172 + $0x4c] sm:$0xf]
        %v2417 = vld [vmem:[%s172 + $0x50] sm:$0xf]
        %v2418 = vld [vmem:[%s172 + $0x54] sm:$0xf]
        %v2419 = vld [vmem:[%s172 + $0x58] sm:$0xf]
        %v2420 = vld [vmem:[%s172 + $0x5c] sm:$0xf]
        %v2421 = vld [vmem:[%s172 + $0x60] sm:$0xf]
        %v2422 = vld [vmem:[%s172 + $0x64] sm:$0xf]
        %v2423 = vld [vmem:[%s172 + $0x68] sm:$0xf]
        %v2424 = vld [vmem:[%s172 + $0x6c] sm:$0xf]
        %v2425 = vld [vmem:[%s172 + $0x70] sm:$0xf]
        %v2426 = vld [vmem:[%s172 + $0x74] sm:$0xf]
        %v2427 = vld [vmem:[%s172 + $0x78] sm:$0xf]
        %v2428 = vld [vmem:[%s172 + $0x7c] sm:$0xf]
        %v2429 = vld [vmem:[%s172 + $0x80] sm:$0xf]
        %v2430 = vld [vmem:[%s172 + $0x84] sm:$0xf]
        %v2431 = vld [vmem:[%s172 + $0x88] sm:$0xf]
        %v2432 = vld [vmem:[%s172 + $0x8c] sm:$0xf]
        %v2433 = vld [vmem:[%s172 + $0x90] sm:$0xf]
        %v2434 = vld [vmem:[%s172 + $0x94] sm:$0xf]
        %v2435 = vld [vmem:[%s172 + $0x98] sm:$0xf]
        %v2436 = vld [vmem:[%s172 + $0x9c] sm:$0xf]
        %v2437 = vld [vmem:[%s172 + $0xa0] sm:$0x7]
        %v2475 = vunpack.c.l.b16 %v2401
        %v2476 = vunpack.c.l.b16 %v2402
        %v2477 = vunpack.c.l.b16 %v2403
        %v2478 = vunpack.c.l.b16 %v2404
        %v2479 = vunpack.c.l.b16 %v2405
        %v2480 = vunpack.c.l.b16 %v2406
        %v2481 = vunpack.c.l.b16 %v2407
        %v2482 = vunpack.c.l.b16 %v2408
        %v2483 = vunpack.c.l.b16 %v2409
        %v2484 = vunpack.c.l.b16 %v2410
        %v2485 = vunpack.c.l.b16 %v2411
        %v2486 = vunpack.c.l.b16 %v2412
        %v2487 = vunpack.c.l.b16 %v2413
        %v2488 = vunpack.c.l.b16 %v2414
        %v2489 = vunpack.c.l.b16 %v2415
        %v2490 = vunpack.c.l.b16 %v2416
        %v2491 = vunpack.c.l.b16 %v2417
        %v2492 = vunpack.c.l.b16 %v2418
        %v2493 = vunpack.c.l.b16 %v2419
        %v2494 = vunpack.c.l.b16 %v2420
        %v2495 = vunpack.c.l.b16 %v2421
        %v2496 = vunpack.c.l.b16 %v2422
        %v2497 = vunpack.c.l.b16 %v2423
        %v2498 = vunpack.c.l.b16 %v2424
        %v2499 = vunpack.c.l.b16 %v2425
        %v2500 = vunpack.c.l.b16 %v2426
        %v2501 = vunpack.c.l.b16 %v2427
        %v2502 = vunpack.c.l.b16 %v2428
        %v2503 = vunpack.c.l.b16 %v2429
        %v2504 = vunpack.c.l.b16 %v2430
        %v2505 = vunpack.c.l.b16 %v2431
        %v2506 = vunpack.c.l.b16 %v2432
        %v2507 = vunpack.c.l.b16 %v2433
        %v2508 = vunpack.c.l.b16 %v2434
        %v2509 = vunpack.c.l.b16 %v2435
        %v2510 = vunpack.c.l.b16 %v2436
        %v2511 = vunpack.c.l.b16 %v2437
        %v2512 = vpack.c.b16 %v2476, %v2475
        %v2513 = vpack.c.b16 %v2478, %v2477
        %v2514 = vpack.c.b16 %v2480, %v2479
        %v2515 = vpack.c.b16 %v2482, %v2481
        %v2516 = vpack.c.b16 %v2484, %v2483
        %v2517 = vpack.c.b16 %v2486, %v2485
        %v2518 = vpack.c.b16 %v2488, %v2487
        %v2519 = vpack.c.b16 %v2490, %v2489
        %v2520 = vpack.c.b16 %v2492, %v2491
        %v2521 = vpack.c.b16 %v2494, %v2493
        %v2522 = vpack.c.b16 %v2496, %v2495
        %v2523 = vpack.c.b16 %v2498, %v2497
        %v2524 = vpack.c.b16 %v2500, %v2499
        %v2525 = vpack.c.b16 %v2502, %v2501
        %v2526 = vpack.c.b16 %v2504, %v2503
        %v2527 = vpack.c.b16 %v2506, %v2505
        %v2528 = vpack.c.b16 %v2508, %v2507
        %v2529 = vpack.c.b16 %v2510, %v2509
        %v2530 = vpack.c.b16 %v2511, %v2511
        %vm2531 = vcmask 1044480
        %v2532 = vrot.slane %v2512, 3
        %v2533 = vrot.slane %v2513, 3
        %v2534 = vsel %vm2531, %v2532, %v2533
        %v2535 = vrot.slane %v2514, 3
        %v2536 = vsel %vm2531, %v2533, %v2535
        %v2537 = vrot.slane %v2515, 3
        %v2538 = vsel %vm2531, %v2535, %v2537
        %v2539 = vrot.slane %v2516, 3
        %v2540 = vsel %vm2531, %v2537, %v2539
        %v2541 = vrot.slane %v2517, 3
        %v2542 = vsel %vm2531, %v2539, %v2541
        %v2543 = vrot.slane %v2518, 3
        %v2544 = vsel %vm2531, %v2541, %v2543
        %v2545 = vrot.slane %v2519, 3
        %v2546 = vsel %vm2531, %v2543, %v2545
        %v2547 = vrot.slane %v2520, 3
        %v2548 = vsel %vm2531, %v2545, %v2547
        %v2549 = vrot.slane %v2521, 3
        %v2550 = vsel %vm2531, %v2547, %v2549
        %v2551 = vrot.slane %v2522, 3
        %v2552 = vsel %vm2531, %v2549, %v2551
        %v2553 = vrot.slane %v2523, 3
        %v2554 = vsel %vm2531, %v2551, %v2553
        %v2555 = vrot.slane %v2524, 3
        %v2556 = vsel %vm2531, %v2553, %v2555
        %v2557 = vrot.slane %v2525, 3
        %v2558 = vsel %vm2531, %v2555, %v2557
        %v2559 = vrot.slane %v2526, 3
        %v2560 = vsel %vm2531, %v2557, %v2559
        %v2561 = vrot.slane %v2527, 3
        %v2562 = vsel %vm2531, %v2559, %v2561
        %v2563 = vrot.slane %v2528, 3
        %v2564 = vsel %vm2531, %v2561, %v2563
        %v2565 = vrot.slane %v2529, 3
        %v2566 = vsel %vm2531, %v2563, %v2565
        %v2567 = vrot.slane %v2530, 3
        %v2568 = vsel %vm2531, %v2565, %v2567
        %2569 = vrot.lane.b32.xlu0 %v2534, 32
        %v2570 = vpop.permute.xlu0 %2569
        %2571 = vrot.lane.b32.xlu0 %v2536, 32
        %v2572 = vpop.permute.xlu0 %2571
        %2573 = vrot.lane.b32.xlu0 %v2538, 32
        %v2574 = vpop.permute.xlu0 %2573
        %2575 = vrot.lane.b32.xlu0 %v2540, 32
        %v2576 = vpop.permute.xlu0 %2575
        %2577 = vrot.lane.b32.xlu0 %v2542, 32
        %v2578 = vpop.permute.xlu0 %2577
        %2579 = vrot.lane.b32.xlu0 %v2544, 32
        %v2580 = vpop.permute.xlu0 %2579
        %2581 = vrot.lane.b32.xlu0 %v2546, 32
        %v2582 = vpop.permute.xlu0 %2581
        %2583 = vrot.lane.b32.xlu0 %v2548, 32
        %v2584 = vpop.permute.xlu0 %2583
        %2585 = vrot.lane.b32.xlu0 %v2550, 32
        %v2586 = vpop.permute.xlu0 %2585
        %2587 = vrot.lane.b32.xlu0 %v2552, 32
        %v2588 = vpop.permute.xlu0 %2587
        %2589 = vrot.lane.b32.xlu0 %v2554, 32
        %v2590 = vpop.permute.xlu0 %2589
        %2591 = vrot.lane.b32.xlu0 %v2556, 32
        %v2592 = vpop.permute.xlu0 %2591
        %2593 = vrot.lane.b32.xlu0 %v2558, 32
        %v2594 = vpop.permute.xlu0 %2593
        %2595 = vrot.lane.b32.xlu0 %v2560, 32
        %v2596 = vpop.permute.xlu0 %2595
        %2597 = vrot.lane.b32.xlu0 %v2562, 32
        %v2598 = vpop.permute.xlu0 %2597
        %2599 = vrot.lane.b32.xlu0 %v2564, 32
        %v2600 = vpop.permute.xlu0 %2599
        %2601 = vrot.lane.b32.xlu0 %v2566, 32
        %v2602 = vpop.permute.xlu0 %2601
        %2603 = vrot.lane.b32.xlu0 %v2568, 32
        %v2604 = vpop.permute.xlu0 %2603
        %vm2623 = vcmask 294144
        %2624 = vst.msk [vmem:[#allocation2] sm:$0xff] %vm2623, %v2570
        %2625 = vst.msk [vmem:[#allocation2 + $0x8] sm:$0xff] %vm2623, %v2572
        %2626 = vst.msk [vmem:[#allocation2 + $0x10] sm:$0xff] %vm2623, %v2574
        %2627 = vst.msk [vmem:[#allocation2 + $0x18] sm:$0xff] %vm2623, %v2576
        %2628 = vst.msk [vmem:[#allocation2 + $0x20] sm:$0xff] %vm2623, %v2578
        %2629 = vst.msk [vmem:[#allocation2 + $0x28] sm:$0xff] %vm2623, %v2580
        %2630 = vst.msk [vmem:[#allocation2 + $0x30] sm:$0xff] %vm2623, %v2582
        %2631 = vst.msk [vmem:[#allocation2 + $0x38] sm:$0xff] %vm2623, %v2584
        %2632 = vst.msk [vmem:[#allocation2 + $0x40] sm:$0xff] %vm2623, %v2586
        %2633 = vst.msk [vmem:[#allocation2 + $0x48] sm:$0xff] %vm2623, %v2588
        %2634 = vst.msk [vmem:[#allocation2 + $0x50] sm:$0xff] %vm2623, %v2590
        %2635 = vst.msk [vmem:[#allocation2 + $0x58] sm:$0xff] %vm2623, %v2592
        %2636 = vst.msk [vmem:[#allocation2 + $0x60] sm:$0xff] %vm2623, %v2594
        %2637 = vst.msk [vmem:[#allocation2 + $0x68] sm:$0xff] %vm2623, %v2596
        %2638 = vst.msk [vmem:[#allocation2 + $0x70] sm:$0xff] %vm2623, %v2598
        %2639 = vst.msk [vmem:[#allocation2 + $0x78] sm:$0xff] %vm2623, %v2600
        %2640 = vst.msk [vmem:[#allocation2 + $0x80] sm:$0xff] %vm2623, %v2602
        %2641 = vst.msk [vmem:[#allocation2 + $0x88] sm:$0xff] %vm2623, %v2604
        %s2642 = scalar_lea.vmem %s172, 164
        %v2643 = vld [vmem:[%s2642] sm:$0xf]
        %v2644 = vld [vmem:[%s2642 + $0x4] sm:$0xf]
        %v2645 = vld [vmem:[%s2642 + $0x8] sm:$0xf]
        %v2646 = vld [vmem:[%s2642 + $0xc] sm:$0xf]
        %v2647 = vld [vmem:[%s2642 + $0x10] sm:$0xf]
        %v2648 = vld [vmem:[%s2642 + $0x14] sm:$0xf]
        %v2649 = vld [vmem:[%s2642 + $0x18] sm:$0xf]
        %v2650 = vld [vmem:[%s2642 + $0x1c] sm:$0xf]
        %v2651 = vld [vmem:[%s2642 + $0x20] sm:$0xf]
        %v2652 = vld [vmem:[%s2642 + $0x24] sm:$0xf]
        %v2653 = vld [vmem:[%s2642 + $0x28] sm:$0xf]
        %v2654 = vld [vmem:[%s2642 + $0x2c] sm:$0xf]
        %v2655 = vld [vmem:[%s2642 + $0x30] sm:$0xf]
        %v2656 = vld [vmem:[%s2642 + $0x34] sm:$0xf]
        %v2657 = vld [vmem:[%s2642 + $0x38] sm:$0xf]
        %v2658 = vld [vmem:[%s2642 + $0x3c] sm:$0xf]
        %v2659 = vld [vmem:[%s2642 + $0x40] sm:$0xf]
        %v2660 = vld [vmem:[%s2642 + $0x44] sm:$0xf]
        %v2661 = vld [vmem:[%s2642 + $0x48] sm:$0xf]
        %v2662 = vld [vmem:[%s2642 + $0x4c] sm:$0xf]
        %v2663 = vld [vmem:[%s2642 + $0x50] sm:$0xf]
        %v2664 = vld [vmem:[%s2642 + $0x54] sm:$0xf]
        %v2665 = vld [vmem:[%s2642 + $0x58] sm:$0xf]
        %v2666 = vld [vmem:[%s2642 + $0x5c] sm:$0xf]
        %v2667 = vld [vmem:[%s2642 + $0x60] sm:$0xf]
        %v2668 = vld [vmem:[%s2642 + $0x64] sm:$0xf]
        %v2669 = vld [vmem:[%s2642 + $0x68] sm:$0xf]
        %v2670 = vld [vmem:[%s2642 + $0x6c] sm:$0xf]
        %v2671 = vld [vmem:[%s2642 + $0x70] sm:$0xf]
        %v2672 = vld [vmem:[%s2642 + $0x74] sm:$0xf]
        %v2673 = vld [vmem:[%s2642 + $0x78] sm:$0xf]
        %v2674 = vld [vmem:[%s2642 + $0x7c] sm:$0xf]
        %v2675 = vld [vmem:[%s2642 + $0x80] sm:$0xf]
        %v2676 = vld [vmem:[%s2642 + $0x84] sm:$0xf]
        %v2677 = vld [vmem:[%s2642 + $0x88] sm:$0xf]
        %v2678 = vld [vmem:[%s2642 + $0x8c] sm:$0xf]
        %v2715 = vunpack.c.l.b16 %v2643
        %v2716 = vunpack.c.l.b16 %v2644
        %v2717 = vunpack.c.l.b16 %v2645
        %v2718 = vunpack.c.l.b16 %v2646
        %v2719 = vunpack.c.l.b16 %v2647
        %v2720 = vunpack.c.l.b16 %v2648
        %v2721 = vunpack.c.l.b16 %v2649
        %v2722 = vunpack.c.l.b16 %v2650
        %v2723 = vunpack.c.l.b16 %v2651
        %v2724 = vunpack.c.l.b16 %v2652
        %v2725 = vunpack.c.l.b16 %v2653
        %v2726 = vunpack.c.l.b16 %v2654
        %v2727 = vunpack.c.l.b16 %v2655
        %v2728 = vunpack.c.l.b16 %v2656
        %v2729 = vunpack.c.l.b16 %v2657
        %v2730 = vunpack.c.l.b16 %v2658
        %v2731 = vunpack.c.l.b16 %v2659
        %v2732 = vunpack.c.l.b16 %v2660
        %v2733 = vunpack.c.l.b16 %v2661
        %v2734 = vunpack.c.l.b16 %v2662
        %v2735 = vunpack.c.l.b16 %v2663
        %v2736 = vunpack.c.l.b16 %v2664
        %v2737 = vunpack.c.l.b16 %v2665
        %v2738 = vunpack.c.l.b16 %v2666
        %v2739 = vunpack.c.l.b16 %v2667
        %v2740 = vunpack.c.l.b16 %v2668
        %v2741 = vunpack.c.l.b16 %v2669
        %v2742 = vunpack.c.l.b16 %v2670
        %v2743 = vunpack.c.l.b16 %v2671
        %v2744 = vunpack.c.l.b16 %v2672
        %v2745 = vunpack.c.l.b16 %v2673
        %v2746 = vunpack.c.l.b16 %v2674
        %v2747 = vunpack.c.l.b16 %v2675
        %v2748 = vunpack.c.l.b16 %v2676
        %v2749 = vunpack.c.l.b16 %v2677
        %v2750 = vunpack.c.l.b16 %v2678
        %v2751 = vpack.c.b16 %v2716, %v2715
        %v2752 = vpack.c.b16 %v2718, %v2717
        %v2753 = vpack.c.b16 %v2720, %v2719
        %v2754 = vpack.c.b16 %v2722, %v2721
        %v2755 = vpack.c.b16 %v2724, %v2723
        %v2756 = vpack.c.b16 %v2726, %v2725
        %v2757 = vpack.c.b16 %v2728, %v2727
        %v2758 = vpack.c.b16 %v2730, %v2729
        %v2759 = vpack.c.b16 %v2732, %v2731
        %v2760 = vpack.c.b16 %v2734, %v2733
        %v2761 = vpack.c.b16 %v2736, %v2735
        %v2762 = vpack.c.b16 %v2738, %v2737
        %v2763 = vpack.c.b16 %v2740, %v2739
        %v2764 = vpack.c.b16 %v2742, %v2741
        %v2765 = vpack.c.b16 %v2744, %v2743
        %v2766 = vpack.c.b16 %v2746, %v2745
        %v2767 = vpack.c.b16 %v2748, %v2747
        %v2768 = vpack.c.b16 %v2750, %v2749
        %2787 = vst.msk [vmem:[#allocation2 + $0x90] sm:$0xff] %vm320, %v2751
        %2788 = vst.msk [vmem:[#allocation2 + $0x98] sm:$0xff] %vm320, %v2752
        %2789 = vst.msk [vmem:[#allocation2 + $0xa0] sm:$0xff] %vm320, %v2753
        %2790 = vst.msk [vmem:[#allocation2 + $0xa8] sm:$0xff] %vm320, %v2754
        %2791 = vst.msk [vmem:[#allocation2 + $0xb0] sm:$0xff] %vm320, %v2755
        %2792 = vst.msk [vmem:[#allocation2 + $0xb8] sm:$0xff] %vm320, %v2756
        %2793 = vst.msk [vmem:[#allocation2 + $0xc0] sm:$0xff] %vm320, %v2757
        %2794 = vst.msk [vmem:[#allocation2 + $0xc8] sm:$0xff] %vm320, %v2758
        %2795 = vst.msk [vmem:[#allocation2 + $0xd0] sm:$0xff] %vm320, %v2759
        %2796 = vst.msk [vmem:[#allocation2 + $0xd8] sm:$0xff] %vm320, %v2760
        %2797 = vst.msk [vmem:[#allocation2 + $0xe0] sm:$0xff] %vm320, %v2761
        %2798 = vst.msk [vmem:[#allocation2 + $0xe8] sm:$0xff] %vm320, %v2762
        %2799 = vst.msk [vmem:[#allocation2 + $0xf0] sm:$0xff] %vm320, %v2763
        %2800 = vst.msk [vmem:[#allocation2 + $0xf8] sm:$0xff] %vm320, %v2764
        %2801 = vst.msk [vmem:[#allocation2 + $0x100] sm:$0xff] %vm320, %v2765
        %2802 = vst.msk [vmem:[#allocation2 + $0x108] sm:$0xff] %vm320, %v2766
        %2803 = vst.msk [vmem:[#allocation2 + $0x110] sm:$0xff] %vm320, %v2767
        %2804 = vst.msk [vmem:[#allocation2 + $0x118] sm:$0xff] %vm320, %v2768
        %v2805 = vld [vmem:[%s2642] sm:$0xf]
        %v2806 = vld [vmem:[%s2642 + $0x4] sm:$0xf]
        %v2807 = vld [vmem:[%s2642 + $0x8] sm:$0xf]
        %v2808 = vld [vmem:[%s2642 + $0xc] sm:$0xf]
        %v2809 = vld [vmem:[%s2642 + $0x10] sm:$0xf]
        %v2810 = vld [vmem:[%s2642 + $0x14] sm:$0xf]
        %v2811 = vld [vmem:[%s2642 + $0x18] sm:$0xf]
        %v2812 = vld [vmem:[%s2642 + $0x1c] sm:$0xf]
        %v2813 = vld [vmem:[%s2642 + $0x20] sm:$0xf]
        %v2814 = vld [vmem:[%s2642 + $0x24] sm:$0xf]
        %v2815 = vld [vmem:[%s2642 + $0x28] sm:$0xf]
        %v2816 = vld [vmem:[%s2642 + $0x2c] sm:$0xf]
        %v2817 = vld [vmem:[%s2642 + $0x30] sm:$0xf]
        %v2818 = vld [vmem:[%s2642 + $0x34] sm:$0xf]
        %v2819 = vld [vmem:[%s2642 + $0x38] sm:$0xf]
        %v2820 = vld [vmem:[%s2642 + $0x3c] sm:$0xf]
        %v2821 = vld [vmem:[%s2642 + $0x40] sm:$0xf]
        %v2822 = vld [vmem:[%s2642 + $0x44] sm:$0xf]
        %v2823 = vld [vmem:[%s2642 + $0x48] sm:$0xf]
        %v2824 = vld [vmem:[%s2642 + $0x4c] sm:$0xf]
        %v2825 = vld [vmem:[%s2642 + $0x50] sm:$0xf]
        %v2826 = vld [vmem:[%s2642 + $0x54] sm:$0xf]
        %v2827 = vld [vmem:[%s2642 + $0x58] sm:$0xf]
        %v2828 = vld [vmem:[%s2642 + $0x5c] sm:$0xf]
        %v2829 = vld [vmem:[%s2642 + $0x60] sm:$0xf]
        %v2830 = vld [vmem:[%s2642 + $0x64] sm:$0xf]
        %v2831 = vld [vmem:[%s2642 + $0x68] sm:$0xf]
        %v2832 = vld [vmem:[%s2642 + $0x6c] sm:$0xf]
        %v2833 = vld [vmem:[%s2642 + $0x70] sm:$0xf]
        %v2834 = vld [vmem:[%s2642 + $0x74] sm:$0xf]
        %v2835 = vld [vmem:[%s2642 + $0x78] sm:$0xf]
        %v2836 = vld [vmem:[%s2642 + $0x7c] sm:$0xf]
        %v2837 = vld [vmem:[%s2642 + $0x80] sm:$0xf]
        %v2838 = vld [vmem:[%s2642 + $0x84] sm:$0xf]
        %v2839 = vld [vmem:[%s2642 + $0x88] sm:$0xf]
        %v2840 = vld [vmem:[%s2642 + $0x8c] sm:$0xf]
        %v2841 = vld [vmem:[%s2642 + $0x90] sm:$0x1]
        %v2879 = vunpack.c.l.b16 %v2805
        %v2880 = vunpack.c.l.b16 %v2806
        %v2881 = vunpack.c.l.b16 %v2807
        %v2882 = vunpack.c.l.b16 %v2808
        %v2883 = vunpack.c.l.b16 %v2809
        %v2884 = vunpack.c.l.b16 %v2810
        %v2885 = vunpack.c.l.b16 %v2811
        %v2886 = vunpack.c.l.b16 %v2812
        %v2887 = vunpack.c.l.b16 %v2813
        %v2888 = vunpack.c.l.b16 %v2814
        %v2889 = vunpack.c.l.b16 %v2815
        %v2890 = vunpack.c.l.b16 %v2816
        %v2891 = vunpack.c.l.b16 %v2817
        %v2892 = vunpack.c.l.b16 %v2818
        %v2893 = vunpack.c.l.b16 %v2819
        %v2894 = vunpack.c.l.b16 %v2820
        %v2895 = vunpack.c.l.b16 %v2821
        %v2896 = vunpack.c.l.b16 %v2822
        %v2897 = vunpack.c.l.b16 %v2823
        %v2898 = vunpack.c.l.b16 %v2824
        %v2899 = vunpack.c.l.b16 %v2825
        %v2900 = vunpack.c.l.b16 %v2826
        %v2901 = vunpack.c.l.b16 %v2827
        %v2902 = vunpack.c.l.b16 %v2828
        %v2903 = vunpack.c.l.b16 %v2829
        %v2904 = vunpack.c.l.b16 %v2830
        %v2905 = vunpack.c.l.b16 %v2831
        %v2906 = vunpack.c.l.b16 %v2832
        %v2907 = vunpack.c.l.b16 %v2833
        %v2908 = vunpack.c.l.b16 %v2834
        %v2909 = vunpack.c.l.b16 %v2835
        %v2910 = vunpack.c.l.b16 %v2836
        %v2911 = vunpack.c.l.b16 %v2837
        %v2912 = vunpack.c.l.b16 %v2838
        %v2913 = vunpack.c.l.b16 %v2839
        %v2914 = vunpack.c.l.b16 %v2840
        %v2915 = vunpack.c.l.b16 %v2841
        %v2916 = vpack.c.b16 %v2880, %v2879
        %v2917 = vpack.c.b16 %v2882, %v2881
        %v2918 = vpack.c.b16 %v2884, %v2883
        %v2919 = vpack.c.b16 %v2886, %v2885
        %v2920 = vpack.c.b16 %v2888, %v2887
        %v2921 = vpack.c.b16 %v2890, %v2889
        %v2922 = vpack.c.b16 %v2892, %v2891
        %v2923 = vpack.c.b16 %v2894, %v2893
        %v2924 = vpack.c.b16 %v2896, %v2895
        %v2925 = vpack.c.b16 %v2898, %v2897
        %v2926 = vpack.c.b16 %v2900, %v2899
        %v2927 = vpack.c.b16 %v2902, %v2901
        %v2928 = vpack.c.b16 %v2904, %v2903
        %v2929 = vpack.c.b16 %v2906, %v2905
        %v2930 = vpack.c.b16 %v2908, %v2907
        %v2931 = vpack.c.b16 %v2910, %v2909
        %v2932 = vpack.c.b16 %v2912, %v2911
        %v2933 = vpack.c.b16 %v2914, %v2913
        %v2934 = vpack.c.b16 %v2915, %v2915
        %v2936 = vshrl.u32 %v2916, 16
        %v2938 = vshll.u32 %v2916, 16
        %v2940 = vrot.slane %v2938, 1
        %v2941 = vor.u32 %v2936, %v2940
        %v2943 = vshll.u32 %v2917, 16
        %v2945 = vrot.slane %v2943, 1
        %v2946 = vsel %vm469, %v2941, %v2945
        %v2947 = vshrl.u32 %v2917, 16
        %v2949 = vor.u32 %v2947, %v2945
        %v2951 = vshll.u32 %v2918, 16
        %v2953 = vrot.slane %v2951, 1
        %v2954 = vsel %vm469, %v2949, %v2953
        %v2955 = vshrl.u32 %v2918, 16
        %v2957 = vor.u32 %v2955, %v2953
        %v2959 = vshll.u32 %v2919, 16
        %v2961 = vrot.slane %v2959, 1
        %v2962 = vsel %vm469, %v2957, %v2961
        %v2963 = vshrl.u32 %v2919, 16
        %v2965 = vor.u32 %v2963, %v2961
        %v2967 = vshll.u32 %v2920, 16
        %v2969 = vrot.slane %v2967, 1
        %v2970 = vsel %vm469, %v2965, %v2969
        %v2971 = vshrl.u32 %v2920, 16
        %v2973 = vor.u32 %v2971, %v2969
        %v2975 = vshll.u32 %v2921, 16
        %v2977 = vrot.slane %v2975, 1
        %v2978 = vsel %vm469, %v2973, %v2977
        %v2979 = vshrl.u32 %v2921, 16
        %v2981 = vor.u32 %v2979, %v2977
        %v2983 = vshll.u32 %v2922, 16
        %v2985 = vrot.slane %v2983, 1
        %v2986 = vsel %vm469, %v2981, %v2985
        %v2987 = vshrl.u32 %v2922, 16
        %v2989 = vor.u32 %v2987, %v2985
        %v2991 = vshll.u32 %v2923, 16
        %v2993 = vrot.slane %v2991, 1
        %v2994 = vsel %vm469, %v2989, %v2993
        %v2995 = vshrl.u32 %v2923, 16
        %v2997 = vor.u32 %v2995, %v2993
        %v2999 = vshll.u32 %v2924, 16
        %v3001 = vrot.slane %v2999, 1
        %v3002 = vsel %vm469, %v2997, %v3001
        %v3003 = vshrl.u32 %v2924, 16
        %v3005 = vor.u32 %v3003, %v3001
        %v3007 = vshll.u32 %v2925, 16
        %v3009 = vrot.slane %v3007, 1
        %v3010 = vsel %vm469, %v3005, %v3009
        %v3011 = vshrl.u32 %v2925, 16
        %v3013 = vor.u32 %v3011, %v3009
        %v3015 = vshll.u32 %v2926, 16
        %v3017 = vrot.slane %v3015, 1
        %v3018 = vsel %vm469, %v3013, %v3017
        %v3019 = vshrl.u32 %v2926, 16
        %v3021 = vor.u32 %v3019, %v3017
        %v3023 = vshll.u32 %v2927, 16
        %v3025 = vrot.slane %v3023, 1
        %v3026 = vsel %vm469, %v3021, %v3025
        %v3027 = vshrl.u32 %v2927, 16
        %v3029 = vor.u32 %v3027, %v3025
        %v3031 = vshll.u32 %v2928, 16
        %v3033 = vrot.slane %v3031, 1
        %v3034 = vsel %vm469, %v3029, %v3033
        %v3035 = vshrl.u32 %v2928, 16
        %v3037 = vor.u32 %v3035, %v3033
        %v3039 = vshll.u32 %v2929, 16
        %v3041 = vrot.slane %v3039, 1
        %v3042 = vsel %vm469, %v3037, %v3041
        %v3043 = vshrl.u32 %v2929, 16
        %v3045 = vor.u32 %v3043, %v3041
        %v3047 = vshll.u32 %v2930, 16
        %v3049 = vrot.slane %v3047, 1
        %v3050 = vsel %vm469, %v3045, %v3049
        %v3051 = vshrl.u32 %v2930, 16
        %v3053 = vor.u32 %v3051, %v3049
        %v3055 = vshll.u32 %v2931, 16
        %v3057 = vrot.slane %v3055, 1
        %v3058 = vsel %vm469, %v3053, %v3057
        %v3059 = vshrl.u32 %v2931, 16
        %v3061 = vor.u32 %v3059, %v3057
        %v3063 = vshll.u32 %v2932, 16
        %v3065 = vrot.slane %v3063, 1
        %v3066 = vsel %vm469, %v3061, %v3065
        %v3067 = vshrl.u32 %v2932, 16
        %v3069 = vor.u32 %v3067, %v3065
        %v3071 = vshll.u32 %v2933, 16
        %v3073 = vrot.slane %v3071, 1
        %v3074 = vsel %vm469, %v3069, %v3073
        %v3075 = vshrl.u32 %v2933, 16
        %v3077 = vor.u32 %v3075, %v3073
        %v3079 = vshll.u32 %v2934, 16
        %v3081 = vrot.slane %v3079, 1
        %v3082 = vsel %vm469, %v3077, %v3081
        %3083 = vrot.lane.b32.xlu0 %v2946, 4
        %v3084 = vpop.permute.xlu0 %3083
        %3085 = vrot.lane.b32.xlu0 %v2954, 4
        %v3086 = vpop.permute.xlu0 %3085
        %3087 = vrot.lane.b32.xlu0 %v2962, 4
        %v3088 = vpop.permute.xlu0 %3087
        %3089 = vrot.lane.b32.xlu0 %v2970, 4
        %v3090 = vpop.permute.xlu0 %3089
        %3091 = vrot.lane.b32.xlu0 %v2978, 4
        %v3092 = vpop.permute.xlu0 %3091
        %3093 = vrot.lane.b32.xlu0 %v2986, 4
        %v3094 = vpop.permute.xlu0 %3093
        %3095 = vrot.lane.b32.xlu0 %v2994, 4
        %v3096 = vpop.permute.xlu0 %3095
        %3097 = vrot.lane.b32.xlu0 %v3002, 4
        %v3098 = vpop.permute.xlu0 %3097
        %3099 = vrot.lane.b32.xlu0 %v3010, 4
        %v3100 = vpop.permute.xlu0 %3099
        %3101 = vrot.lane.b32.xlu0 %v3018, 4
        %v3102 = vpop.permute.xlu0 %3101
        %3103 = vrot.lane.b32.xlu0 %v3026, 4
        %v3104 = vpop.permute.xlu0 %3103
        %3105 = vrot.lane.b32.xlu0 %v3034, 4
        %v3106 = vpop.permute.xlu0 %3105
        %3107 = vrot.lane.b32.xlu0 %v3042, 4
        %v3108 = vpop.permute.xlu0 %3107
        %3109 = vrot.lane.b32.xlu0 %v3050, 4
        %v3110 = vpop.permute.xlu0 %3109
        %3111 = vrot.lane.b32.xlu0 %v3058, 4
        %v3112 = vpop.permute.xlu0 %3111
        %3113 = vrot.lane.b32.xlu0 %v3066, 4
        %v3114 = vpop.permute.xlu0 %3113
        %3115 = vrot.lane.b32.xlu0 %v3074, 4
        %v3116 = vpop.permute.xlu0 %3115
        %3117 = vrot.lane.b32.xlu0 %v3082, 4
        %v3118 = vpop.permute.xlu0 %3117
        %3137 = vst.msk [vmem:[#allocation2 + $0x90] sm:$0xff] %vm672, %v3084
        %3138 = vst.msk [vmem:[#allocation2 + $0x98] sm:$0xff] %vm672, %v3086
        %3139 = vst.msk [vmem:[#allocation2 + $0xa0] sm:$0xff] %vm672, %v3088
        %3140 = vst.msk [vmem:[#allocation2 + $0xa8] sm:$0xff] %vm672, %v3090
        %3141 = vst.msk [vmem:[#allocation2 + $0xb0] sm:$0xff] %vm672, %v3092
        %3142 = vst.msk [vmem:[#allocation2 + $0xb8] sm:$0xff] %vm672, %v3094
        %3143 = vst.msk [vmem:[#allocation2 + $0xc0] sm:$0xff] %vm672, %v3096
        %3144 = vst.msk [vmem:[#allocation2 + $0xc8] sm:$0xff] %vm672, %v3098
        %3145 = vst.msk [vmem:[#allocation2 + $0xd0] sm:$0xff] %vm672, %v3100
        %3146 = vst.msk [vmem:[#allocation2 + $0xd8] sm:$0xff] %vm672, %v3102
        %3147 = vst.msk [vmem:[#allocation2 + $0xe0] sm:$0xff] %vm672, %v3104
        %3148 = vst.msk [vmem:[#allocation2 + $0xe8] sm:$0xff] %vm672, %v3106
        %3149 = vst.msk [vmem:[#allocation2 + $0xf0] sm:$0xff] %vm672, %v3108
        %3150 = vst.msk [vmem:[#allocation2 + $0xf8] sm:$0xff] %vm672, %v3110
        %3151 = vst.msk [vmem:[#allocation2 + $0x100] sm:$0xff] %vm672, %v3112
        %3152 = vst.msk [vmem:[#allocation2 + $0x108] sm:$0xff] %vm672, %v3114
        %3153 = vst.msk [vmem:[#allocation2 + $0x110] sm:$0xff] %vm672, %v3116
        %3154 = vst.msk [vmem:[#allocation2 + $0x118] sm:$0xff] %vm672, %v3118
        %v3155 = vld [vmem:[%s2642] sm:$0xe]
        %v3156 = vld [vmem:[%s2642 + $0x4] sm:$0xf]
        %v3157 = vld [vmem:[%s2642 + $0x8] sm:$0xf]
        %v3158 = vld [vmem:[%s2642 + $0xc] sm:$0xf]
        %v3159 = vld [vmem:[%s2642 + $0x10] sm:$0xf]
        %v3160 = vld [vmem:[%s2642 + $0x14] sm:$0xf]
        %v3161 = vld [vmem:[%s2642 + $0x18] sm:$0xf]
        %v3162 = vld [vmem:[%s2642 + $0x1c] sm:$0xf]
        %v3163 = vld [vmem:[%s2642 + $0x20] sm:$0xf]
        %v3164 = vld [vmem:[%s2642 + $0x24] sm:$0xf]
        %v3165 = vld [vmem:[%s2642 + $0x28] sm:$0xf]
        %v3166 = vld [vmem:[%s2642 + $0x2c] sm:$0xf]
        %v3167 = vld [vmem:[%s2642 + $0x30] sm:$0xf]
        %v3168 = vld [vmem:[%s2642 + $0x34] sm:$0xf]
        %v3169 = vld [vmem:[%s2642 + $0x38] sm:$0xf]
        %v3170 = vld [vmem:[%s2642 + $0x3c] sm:$0xf]
        %v3171 = vld [vmem:[%s2642 + $0x40] sm:$0xf]
        %v3172 = vld [vmem:[%s2642 + $0x44] sm:$0xf]
        %v3173 = vld [vmem:[%s2642 + $0x48] sm:$0xf]
        %v3174 = vld [vmem:[%s2642 + $0x4c] sm:$0xf]
        %v3175 = vld [vmem:[%s2642 + $0x50] sm:$0xf]
        %v3176 = vld [vmem:[%s2642 + $0x54] sm:$0xf]
        %v3177 = vld [vmem:[%s2642 + $0x58] sm:$0xf]
        %v3178 = vld [vmem:[%s2642 + $0x5c] sm:$0xf]
        %v3179 = vld [vmem:[%s2642 + $0x60] sm:$0xf]
        %v3180 = vld [vmem:[%s2642 + $0x64] sm:$0xf]
        %v3181 = vld [vmem:[%s2642 + $0x68] sm:$0xf]
        %v3182 = vld [vmem:[%s2642 + $0x6c] sm:$0xf]
        %v3183 = vld [vmem:[%s2642 + $0x70] sm:$0xf]
        %v3184 = vld [vmem:[%s2642 + $0x74] sm:$0xf]
        %v3185 = vld [vmem:[%s2642 + $0x78] sm:$0xf]
        %v3186 = vld [vmem:[%s2642 + $0x7c] sm:$0xf]
        %v3187 = vld [vmem:[%s2642 + $0x80] sm:$0xf]
        %v3188 = vld [vmem:[%s2642 + $0x84] sm:$0xf]
        %v3189 = vld [vmem:[%s2642 + $0x88] sm:$0xf]
        %v3190 = vld [vmem:[%s2642 + $0x8c] sm:$0xf]
        %v3191 = vld [vmem:[%s2642 + $0x90] sm:$0x1]
        %v3229 = vunpack.c.l.b16 %v3155
        %v3230 = vunpack.c.l.b16 %v3156
        %v3231 = vunpack.c.l.b16 %v3157
        %v3232 = vunpack.c.l.b16 %v3158
        %v3233 = vunpack.c.l.b16 %v3159
        %v3234 = vunpack.c.l.b16 %v3160
        %v3235 = vunpack.c.l.b16 %v3161
        %v3236 = vunpack.c.l.b16 %v3162
        %v3237 = vunpack.c.l.b16 %v3163
        %v3238 = vunpack.c.l.b16 %v3164
        %v3239 = vunpack.c.l.b16 %v3165
        %v3240 = vunpack.c.l.b16 %v3166
        %v3241 = vunpack.c.l.b16 %v3167
        %v3242 = vunpack.c.l.b16 %v3168
        %v3243 = vunpack.c.l.b16 %v3169
        %v3244 = vunpack.c.l.b16 %v3170
        %v3245 = vunpack.c.l.b16 %v3171
        %v3246 = vunpack.c.l.b16 %v3172
        %v3247 = vunpack.c.l.b16 %v3173
        %v3248 = vunpack.c.l.b16 %v3174
        %v3249 = vunpack.c.l.b16 %v3175
        %v3250 = vunpack.c.l.b16 %v3176
        %v3251 = vunpack.c.l.b16 %v3177
        %v3252 = vunpack.c.l.b16 %v3178
        %v3253 = vunpack.c.l.b16 %v3179
        %v3254 = vunpack.c.l.b16 %v3180
        %v3255 = vunpack.c.l.b16 %v3181
        %v3256 = vunpack.c.l.b16 %v3182
        %v3257 = vunpack.c.l.b16 %v3183
        %v3258 = vunpack.c.l.b16 %v3184
        %v3259 = vunpack.c.l.b16 %v3185
        %v3260 = vunpack.c.l.b16 %v3186
        %v3261 = vunpack.c.l.b16 %v3187
        %v3262 = vunpack.c.l.b16 %v3188
        %v3263 = vunpack.c.l.b16 %v3189
        %v3264 = vunpack.c.l.b16 %v3190
        %v3265 = vunpack.c.l.b16 %v3191
        %v3266 = vpack.c.b16 %v3230, %v3229
        %v3267 = vpack.c.b16 %v3232, %v3231
        %v3268 = vpack.c.b16 %v3234, %v3233
        %v3269 = vpack.c.b16 %v3236, %v3235
        %v3270 = vpack.c.b16 %v3238, %v3237
        %v3271 = vpack.c.b16 %v3240, %v3239
        %v3272 = vpack.c.b16 %v3242, %v3241
        %v3273 = vpack.c.b16 %v3244, %v3243
        %v3274 = vpack.c.b16 %v3246, %v3245
        %v3275 = vpack.c.b16 %v3248, %v3247
        %v3276 = vpack.c.b16 %v3250, %v3249
        %v3277 = vpack.c.b16 %v3252, %v3251
        %v3278 = vpack.c.b16 %v3254, %v3253
        %v3279 = vpack.c.b16 %v3256, %v3255
        %v3280 = vpack.c.b16 %v3258, %v3257
        %v3281 = vpack.c.b16 %v3260, %v3259
        %v3282 = vpack.c.b16 %v3262, %v3261
        %v3283 = vpack.c.b16 %v3264, %v3263
        %v3284 = vpack.c.b16 %v3265, %v3265
        %v3285 = vrot.slane %v3266, 1
        %v3286 = vrot.slane %v3267, 1
        %v3287 = vsel %vm821, %v3285, %v3286
        %v3288 = vrot.slane %v3268, 1
        %v3289 = vsel %vm821, %v3286, %v3288
        %v3290 = vrot.slane %v3269, 1
        %v3291 = vsel %vm821, %v3288, %v3290
        %v3292 = vrot.slane %v3270, 1
        %v3293 = vsel %vm821, %v3290, %v3292
        %v3294 = vrot.slane %v3271, 1
        %v3295 = vsel %vm821, %v3292, %v3294
        %v3296 = vrot.slane %v3272, 1
        %v3297 = vsel %vm821, %v3294, %v3296
        %v3298 = vrot.slane %v3273, 1
        %v3299 = vsel %vm821, %v3296, %v3298
        %v3300 = vrot.slane %v3274, 1
        %v3301 = vsel %vm821, %v3298, %v3300
        %v3302 = vrot.slane %v3275, 1
        %v3303 = vsel %vm821, %v3300, %v3302
        %v3304 = vrot.slane %v3276, 1
        %v3305 = vsel %vm821, %v3302, %v3304
        %v3306 = vrot.slane %v3277, 1
        %v3307 = vsel %vm821, %v3304, %v3306
        %v3308 = vrot.slane %v3278, 1
        %v3309 = vsel %vm821, %v3306, %v3308
        %v3310 = vrot.slane %v3279, 1
        %v3311 = vsel %vm821, %v3308, %v3310
        %v3312 = vrot.slane %v3280, 1
        %v3313 = vsel %vm821, %v3310, %v3312
        %v3314 = vrot.slane %v3281, 1
        %v3315 = vsel %vm821, %v3312, %v3314
        %v3316 = vrot.slane %v3282, 1
        %v3317 = vsel %vm821, %v3314, %v3316
        %v3318 = vrot.slane %v3283, 1
        %v3319 = vsel %vm821, %v3316, %v3318
        %v3320 = vrot.slane %v3284, 1
        %v3321 = vsel %vm821, %v3318, %v3320
        %3322 = vrot.lane.b32.xlu0 %v3287, 8
        %v3323 = vpop.permute.xlu0 %3322
        %3324 = vrot.lane.b32.xlu0 %v3289, 8
        %v3325 = vpop.permute.xlu0 %3324
        %3326 = vrot.lane.b32.xlu0 %v3291, 8
        %v3327 = vpop.permute.xlu0 %3326
        %3328 = vrot.lane.b32.xlu0 %v3293, 8
        %v3329 = vpop.permute.xlu0 %3328
        %3330 = vrot.lane.b32.xlu0 %v3295, 8
        %v3331 = vpop.permute.xlu0 %3330
        %3332 = vrot.lane.b32.xlu0 %v3297, 8
        %v3333 = vpop.permute.xlu0 %3332
        %3334 = vrot.lane.b32.xlu0 %v3299, 8
        %v3335 = vpop.permute.xlu0 %3334
        %3336 = vrot.lane.b32.xlu0 %v3301, 8
        %v3337 = vpop.permute.xlu0 %3336
        %3338 = vrot.lane.b32.xlu0 %v3303, 8
        %v3339 = vpop.permute.xlu0 %3338
        %3340 = vrot.lane.b32.xlu0 %v3305, 8
        %v3341 = vpop.permute.xlu0 %3340
        %3342 = vrot.lane.b32.xlu0 %v3307, 8
        %v3343 = vpop.permute.xlu0 %3342
        %3344 = vrot.lane.b32.xlu0 %v3309, 8
        %v3345 = vpop.permute.xlu0 %3344
        %3346 = vrot.lane.b32.xlu0 %v3311, 8
        %v3347 = vpop.permute.xlu0 %3346
        %3348 = vrot.lane.b32.xlu0 %v3313, 8
        %v3349 = vpop.permute.xlu0 %3348
        %3350 = vrot.lane.b32.xlu0 %v3315, 8
        %v3351 = vpop.permute.xlu0 %3350
        %3352 = vrot.lane.b32.xlu0 %v3317, 8
        %v3353 = vpop.permute.xlu0 %3352
        %3354 = vrot.lane.b32.xlu0 %v3319, 8
        %v3355 = vpop.permute.xlu0 %3354
        %3356 = vrot.lane.b32.xlu0 %v3321, 8
        %v3357 = vpop.permute.xlu0 %3356
        %3376 = vst.msk [vmem:[#allocation2 + $0x90] sm:$0xff] %vm913, %v3323
        %3377 = vst.msk [vmem:[#allocation2 + $0x98] sm:$0xff] %vm913, %v3325
        %3378 = vst.msk [vmem:[#allocation2 + $0xa0] sm:$0xff] %vm913, %v3327
        %3379 = vst.msk [vmem:[#allocation2 + $0xa8] sm:$0xff] %vm913, %v3329
        %3380 = vst.msk [vmem:[#allocation2 + $0xb0] sm:$0xff] %vm913, %v3331
        %3381 = vst.msk [vmem:[#allocation2 + $0xb8] sm:$0xff] %vm913, %v3333
        %3382 = vst.msk [vmem:[#allocation2 + $0xc0] sm:$0xff] %vm913, %v3335
        %3383 = vst.msk [vmem:[#allocation2 + $0xc8] sm:$0xff] %vm913, %v3337
        %3384 = vst.msk [vmem:[#allocation2 + $0xd0] sm:$0xff] %vm913, %v3339
        %3385 = vst.msk [vmem:[#allocation2 + $0xd8] sm:$0xff] %vm913, %v3341
        %3386 = vst.msk [vmem:[#allocation2 + $0xe0] sm:$0xff] %vm913, %v3343
        %3387 = vst.msk [vmem:[#allocation2 + $0xe8] sm:$0xff] %vm913, %v3345
        %3388 = vst.msk [vmem:[#allocation2 + $0xf0] sm:$0xff] %vm913, %v3347
        %3389 = vst.msk [vmem:[#allocation2 + $0xf8] sm:$0xff] %vm913, %v3349
        %3390 = vst.msk [vmem:[#allocation2 + $0x100] sm:$0xff] %vm913, %v3351
        %3391 = vst.msk [vmem:[#allocation2 + $0x108] sm:$0xff] %vm913, %v3353
        %3392 = vst.msk [vmem:[#allocation2 + $0x110] sm:$0xff] %vm913, %v3355
        %3393 = vst.msk [vmem:[#allocation2 + $0x118] sm:$0xff] %vm913, %v3357
        %v3394 = vld [vmem:[%s2642 + $0x8] sm:$0xe]
        %v3395 = vld [vmem:[%s2642 + $0xc] sm:$0xf]
        %v3396 = vld [vmem:[%s2642 + $0x10] sm:$0xf]
        %v3397 = vld [vmem:[%s2642 + $0x14] sm:$0xf]
        %v3398 = vld [vmem:[%s2642 + $0x18] sm:$0xf]
        %v3399 = vld [vmem:[%s2642 + $0x1c] sm:$0xf]
        %v3400 = vld [vmem:[%s2642 + $0x20] sm:$0xf]
        %v3401 = vld [vmem:[%s2642 + $0x24] sm:$0xf]
        %v3402 = vld [vmem:[%s2642 + $0x28] sm:$0xf]
        %v3403 = vld [vmem:[%s2642 + $0x2c] sm:$0xf]
        %v3404 = vld [vmem:[%s2642 + $0x30] sm:$0xf]
        %v3405 = vld [vmem:[%s2642 + $0x34] sm:$0xf]
        %v3406 = vld [vmem:[%s2642 + $0x38] sm:$0xf]
        %v3407 = vld [vmem:[%s2642 + $0x3c] sm:$0xf]
        %v3408 = vld [vmem:[%s2642 + $0x40] sm:$0xf]
        %v3409 = vld [vmem:[%s2642 + $0x44] sm:$0xf]
        %v3410 = vld [vmem:[%s2642 + $0x48] sm:$0xf]
        %v3411 = vld [vmem:[%s2642 + $0x4c] sm:$0xf]
        %v3412 = vld [vmem:[%s2642 + $0x50] sm:$0xf]
        %v3413 = vld [vmem:[%s2642 + $0x54] sm:$0xf]
        %v3414 = vld [vmem:[%s2642 + $0x58] sm:$0xf]
        %v3415 = vld [vmem:[%s2642 + $0x5c] sm:$0xf]
        %v3416 = vld [vmem:[%s2642 + $0x60] sm:$0xf]
        %v3417 = vld [vmem:[%s2642 + $0x64] sm:$0xf]
        %v3418 = vld [vmem:[%s2642 + $0x68] sm:$0xf]
        %v3419 = vld [vmem:[%s2642 + $0x6c] sm:$0xf]
        %v3420 = vld [vmem:[%s2642 + $0x70] sm:$0xf]
        %v3421 = vld [vmem:[%s2642 + $0x74] sm:$0xf]
        %v3422 = vld [vmem:[%s2642 + $0x78] sm:$0xf]
        %v3423 = vld [vmem:[%s2642 + $0x7c] sm:$0xf]
        %v3424 = vld [vmem:[%s2642 + $0x80] sm:$0xf]
        %v3425 = vld [vmem:[%s2642 + $0x84] sm:$0xf]
        %v3426 = vld [vmem:[%s2642 + $0x88] sm:$0xf]
        %v3427 = vld [vmem:[%s2642 + $0x8c] sm:$0xf]
        %v3428 = vld [vmem:[%s2642 + $0x90] sm:$0xf]
        %v3429 = vld [vmem:[%s2642 + $0x94] sm:$0xf]
        %v3430 = vld [vmem:[%s2642 + $0x98] sm:$0x1]
        %v3468 = vunpack.c.l.b16 %v3394
        %v3469 = vunpack.c.l.b16 %v3395
        %v3470 = vunpack.c.l.b16 %v3396
        %v3471 = vunpack.c.l.b16 %v3397
        %v3472 = vunpack.c.l.b16 %v3398
        %v3473 = vunpack.c.l.b16 %v3399
        %v3474 = vunpack.c.l.b16 %v3400
        %v3475 = vunpack.c.l.b16 %v3401
        %v3476 = vunpack.c.l.b16 %v3402
        %v3477 = vunpack.c.l.b16 %v3403
        %v3478 = vunpack.c.l.b16 %v3404
        %v3479 = vunpack.c.l.b16 %v3405
        %v3480 = vunpack.c.l.b16 %v3406
        %v3481 = vunpack.c.l.b16 %v3407
        %v3482 = vunpack.c.l.b16 %v3408
        %v3483 = vunpack.c.l.b16 %v3409
        %v3484 = vunpack.c.l.b16 %v3410
        %v3485 = vunpack.c.l.b16 %v3411
        %v3486 = vunpack.c.l.b16 %v3412
        %v3487 = vunpack.c.l.b16 %v3413
        %v3488 = vunpack.c.l.b16 %v3414
        %v3489 = vunpack.c.l.b16 %v3415
        %v3490 = vunpack.c.l.b16 %v3416
        %v3491 = vunpack.c.l.b16 %v3417
        %v3492 = vunpack.c.l.b16 %v3418
        %v3493 = vunpack.c.l.b16 %v3419
        %v3494 = vunpack.c.l.b16 %v3420
        %v3495 = vunpack.c.l.b16 %v3421
        %v3496 = vunpack.c.l.b16 %v3422
        %v3497 = vunpack.c.l.b16 %v3423
        %v3498 = vunpack.c.l.b16 %v3424
        %v3499 = vunpack.c.l.b16 %v3425
        %v3500 = vunpack.c.l.b16 %v3426
        %v3501 = vunpack.c.l.b16 %v3427
        %v3502 = vunpack.c.l.b16 %v3428
        %v3503 = vunpack.c.l.b16 %v3429
        %v3504 = vunpack.c.l.b16 %v3430
        %v3505 = vpack.c.b16 %v3469, %v3468
        %v3506 = vpack.c.b16 %v3471, %v3470
        %v3507 = vpack.c.b16 %v3473, %v3472
        %v3508 = vpack.c.b16 %v3475, %v3474
        %v3509 = vpack.c.b16 %v3477, %v3476
        %v3510 = vpack.c.b16 %v3479, %v3478
        %v3511 = vpack.c.b16 %v3481, %v3480
        %v3512 = vpack.c.b16 %v3483, %v3482
        %v3513 = vpack.c.b16 %v3485, %v3484
        %v3514 = vpack.c.b16 %v3487, %v3486
        %v3515 = vpack.c.b16 %v3489, %v3488
        %v3516 = vpack.c.b16 %v3491, %v3490
        %v3517 = vpack.c.b16 %v3493, %v3492
        %v3518 = vpack.c.b16 %v3495, %v3494
        %v3519 = vpack.c.b16 %v3497, %v3496
        %v3520 = vpack.c.b16 %v3499, %v3498
        %v3521 = vpack.c.b16 %v3501, %v3500
        %v3522 = vpack.c.b16 %v3503, %v3502
        %v3523 = vpack.c.b16 %v3504, %v3504
        %v3524 = vrot.slane %v3505, 1
        %v3525 = vrot.slane %v3506, 1
        %v3526 = vsel %vm821, %v3524, %v3525
        %v3527 = vrot.slane %v3507, 1
        %v3528 = vsel %vm821, %v3525, %v3527
        %v3529 = vrot.slane %v3508, 1
        %v3530 = vsel %vm821, %v3527, %v3529
        %v3531 = vrot.slane %v3509, 1
        %v3532 = vsel %vm821, %v3529, %v3531
        %v3533 = vrot.slane %v3510, 1
        %v3534 = vsel %vm821, %v3531, %v3533
        %v3535 = vrot.slane %v3511, 1
        %v3536 = vsel %vm821, %v3533, %v3535
        %v3537 = vrot.slane %v3512, 1
        %v3538 = vsel %vm821, %v3535, %v3537
        %v3539 = vrot.slane %v3513, 1
        %v3540 = vsel %vm821, %v3537, %v3539
        %v3541 = vrot.slane %v3514, 1
        %v3542 = vsel %vm821, %v3539, %v3541
        %v3543 = vrot.slane %v3515, 1
        %v3544 = vsel %vm821, %v3541, %v3543
        %v3545 = vrot.slane %v3516, 1
        %v3546 = vsel %vm821, %v3543, %v3545
        %v3547 = vrot.slane %v3517, 1
        %v3548 = vsel %vm821, %v3545, %v3547
        %v3549 = vrot.slane %v3518, 1
        %v3550 = vsel %vm821, %v3547, %v3549
        %v3551 = vrot.slane %v3519, 1
        %v3552 = vsel %vm821, %v3549, %v3551
        %v3553 = vrot.slane %v3520, 1
        %v3554 = vsel %vm821, %v3551, %v3553
        %v3555 = vrot.slane %v3521, 1
        %v3556 = vsel %vm821, %v3553, %v3555
        %v3557 = vrot.slane %v3522, 1
        %v3558 = vsel %vm821, %v3555, %v3557
        %v3559 = vrot.slane %v3523, 1
        %v3560 = vsel %vm821, %v3557, %v3559
        %3561 = vrot.lane.b32.xlu0 %v3526, 12
        %v3562 = vpop.permute.xlu0 %3561
        %3563 = vrot.lane.b32.xlu0 %v3528, 12
        %v3564 = vpop.permute.xlu0 %3563
        %3565 = vrot.lane.b32.xlu0 %v3530, 12
        %v3566 = vpop.permute.xlu0 %3565
        %3567 = vrot.lane.b32.xlu0 %v3532, 12
        %v3568 = vpop.permute.xlu0 %3567
        %3569 = vrot.lane.b32.xlu0 %v3534, 12
        %v3570 = vpop.permute.xlu0 %3569
        %3571 = vrot.lane.b32.xlu0 %v3536, 12
        %v3572 = vpop.permute.xlu0 %3571
        %3573 = vrot.lane.b32.xlu0 %v3538, 12
        %v3574 = vpop.permute.xlu0 %3573
        %3575 = vrot.lane.b32.xlu0 %v3540, 12
        %v3576 = vpop.permute.xlu0 %3575
        %3577 = vrot.lane.b32.xlu0 %v3542, 12
        %v3578 = vpop.permute.xlu0 %3577
        %3579 = vrot.lane.b32.xlu0 %v3544, 12
        %v3580 = vpop.permute.xlu0 %3579
        %3581 = vrot.lane.b32.xlu0 %v3546, 12
        %v3582 = vpop.permute.xlu0 %3581
        %3583 = vrot.lane.b32.xlu0 %v3548, 12
        %v3584 = vpop.permute.xlu0 %3583
        %3585 = vrot.lane.b32.xlu0 %v3550, 12
        %v3586 = vpop.permute.xlu0 %3585
        %3587 = vrot.lane.b32.xlu0 %v3552, 12
        %v3588 = vpop.permute.xlu0 %3587
        %3589 = vrot.lane.b32.xlu0 %v3554, 12
        %v3590 = vpop.permute.xlu0 %3589
        %3591 = vrot.lane.b32.xlu0 %v3556, 12
        %v3592 = vpop.permute.xlu0 %3591
        %3593 = vrot.lane.b32.xlu0 %v3558, 12
        %v3594 = vpop.permute.xlu0 %3593
        %3595 = vrot.lane.b32.xlu0 %v3560, 12
        %v3596 = vpop.permute.xlu0 %3595
        %3615 = vst.msk [vmem:[#allocation2 + $0x90] sm:$0xff] %vm1153, %v3562
        %3616 = vst.msk [vmem:[#allocation2 + $0x98] sm:$0xff] %vm1153, %v3564
        %3617 = vst.msk [vmem:[#allocation2 + $0xa0] sm:$0xff] %vm1153, %v3566
        %3618 = vst.msk [vmem:[#allocation2 + $0xa8] sm:$0xff] %vm1153, %v3568
        %3619 = vst.msk [vmem:[#allocation2 + $0xb0] sm:$0xff] %vm1153, %v3570
        %3620 = vst.msk [vmem:[#allocation2 + $0xb8] sm:$0xff] %vm1153, %v3572
        %3621 = vst.msk [vmem:[#allocation2 + $0xc0] sm:$0xff] %vm1153, %v3574
        %3622 = vst.msk [vmem:[#allocation2 + $0xc8] sm:$0xff] %vm1153, %v3576
        %3623 = vst.msk [vmem:[#allocation2 + $0xd0] sm:$0xff] %vm1153, %v3578
        %3624 = vst.msk [vmem:[#allocation2 + $0xd8] sm:$0xff] %vm1153, %v3580
        %3625 = vst.msk [vmem:[#allocation2 + $0xe0] sm:$0xff] %vm1153, %v3582
        %3626 = vst.msk [vmem:[#allocation2 + $0xe8] sm:$0xff] %vm1153, %v3584
        %3627 = vst.msk [vmem:[#allocation2 + $0xf0] sm:$0xff] %vm1153, %v3586
        %3628 = vst.msk [vmem:[#allocation2 + $0xf8] sm:$0xff] %vm1153, %v3588
        %3629 = vst.msk [vmem:[#allocation2 + $0x100] sm:$0xff] %vm1153, %v3590
        %3630 = vst.msk [vmem:[#allocation2 + $0x108] sm:$0xff] %vm1153, %v3592
        %3631 = vst.msk [vmem:[#allocation2 + $0x110] sm:$0xff] %vm1153, %v3594
        %3632 = vst.msk [vmem:[#allocation2 + $0x118] sm:$0xff] %vm1153, %v3596
        %v3633 = vld [vmem:[%s2642 + $0x8] sm:$0xe]
        %v3634 = vld [vmem:[%s2642 + $0xc] sm:$0xf]
        %v3635 = vld [vmem:[%s2642 + $0x10] sm:$0xf]
        %v3636 = vld [vmem:[%s2642 + $0x14] sm:$0xf]
        %v3637 = vld [vmem:[%s2642 + $0x18] sm:$0xf]
        %v3638 = vld [vmem:[%s2642 + $0x1c] sm:$0xf]
        %v3639 = vld [vmem:[%s2642 + $0x20] sm:$0xf]
        %v3640 = vld [vmem:[%s2642 + $0x24] sm:$0xf]
        %v3641 = vld [vmem:[%s2642 + $0x28] sm:$0xf]
        %v3642 = vld [vmem:[%s2642 + $0x2c] sm:$0xf]
        %v3643 = vld [vmem:[%s2642 + $0x30] sm:$0xf]
        %v3644 = vld [vmem:[%s2642 + $0x34] sm:$0xf]
        %v3645 = vld [vmem:[%s2642 + $0x38] sm:$0xf]
        %v3646 = vld [vmem:[%s2642 + $0x3c] sm:$0xf]
        %v3647 = vld [vmem:[%s2642 + $0x40] sm:$0xf]
        %v3648 = vld [vmem:[%s2642 + $0x44] sm:$0xf]
        %v3649 = vld [vmem:[%s2642 + $0x48] sm:$0xf]
        %v3650 = vld [vmem:[%s2642 + $0x4c] sm:$0xf]
        %v3651 = vld [vmem:[%s2642 + $0x50] sm:$0xf]
        %v3652 = vld [vmem:[%s2642 + $0x54] sm:$0xf]
        %v3653 = vld [vmem:[%s2642 + $0x58] sm:$0xf]
        %v3654 = vld [vmem:[%s2642 + $0x5c] sm:$0xf]
        %v3655 = vld [vmem:[%s2642 + $0x60] sm:$0xf]
        %v3656 = vld [vmem:[%s2642 + $0x64] sm:$0xf]
        %v3657 = vld [vmem:[%s2642 + $0x68] sm:$0xf]
        %v3658 = vld [vmem:[%s2642 + $0x6c] sm:$0xf]
        %v3659 = vld [vmem:[%s2642 + $0x70] sm:$0xf]
        %v3660 = vld [vmem:[%s2642 + $0x74] sm:$0xf]
        %v3661 = vld [vmem:[%s2642 + $0x78] sm:$0xf]
        %v3662 = vld [vmem:[%s2642 + $0x7c] sm:$0xf]
        %v3663 = vld [vmem:[%s2642 + $0x80] sm:$0xf]
        %v3664 = vld [vmem:[%s2642 + $0x84] sm:$0xf]
        %v3665 = vld [vmem:[%s2642 + $0x88] sm:$0xf]
        %v3666 = vld [vmem:[%s2642 + $0x8c] sm:$0xf]
        %v3667 = vld [vmem:[%s2642 + $0x90] sm:$0xf]
        %v3668 = vld [vmem:[%s2642 + $0x94] sm:$0xf]
        %v3669 = vld [vmem:[%s2642 + $0x98] sm:$0x3]
        %v3707 = vunpack.c.l.b16 %v3633
        %v3708 = vunpack.c.l.b16 %v3634
        %v3709 = vunpack.c.l.b16 %v3635
        %v3710 = vunpack.c.l.b16 %v3636
        %v3711 = vunpack.c.l.b16 %v3637
        %v3712 = vunpack.c.l.b16 %v3638
        %v3713 = vunpack.c.l.b16 %v3639
        %v3714 = vunpack.c.l.b16 %v3640
        %v3715 = vunpack.c.l.b16 %v3641
        %v3716 = vunpack.c.l.b16 %v3642
        %v3717 = vunpack.c.l.b16 %v3643
        %v3718 = vunpack.c.l.b16 %v3644
        %v3719 = vunpack.c.l.b16 %v3645
        %v3720 = vunpack.c.l.b16 %v3646
        %v3721 = vunpack.c.l.b16 %v3647
        %v3722 = vunpack.c.l.b16 %v3648
        %v3723 = vunpack.c.l.b16 %v3649
        %v3724 = vunpack.c.l.b16 %v3650
        %v3725 = vunpack.c.l.b16 %v3651
        %v3726 = vunpack.c.l.b16 %v3652
        %v3727 = vunpack.c.l.b16 %v3653
        %v3728 = vunpack.c.l.b16 %v3654
        %v3729 = vunpack.c.l.b16 %v3655
        %v3730 = vunpack.c.l.b16 %v3656
        %v3731 = vunpack.c.l.b16 %v3657
        %v3732 = vunpack.c.l.b16 %v3658
        %v3733 = vunpack.c.l.b16 %v3659
        %v3734 = vunpack.c.l.b16 %v3660
        %v3735 = vunpack.c.l.b16 %v3661
        %v3736 = vunpack.c.l.b16 %v3662
        %v3737 = vunpack.c.l.b16 %v3663
        %v3738 = vunpack.c.l.b16 %v3664
        %v3739 = vunpack.c.l.b16 %v3665
        %v3740 = vunpack.c.l.b16 %v3666
        %v3741 = vunpack.c.l.b16 %v3667
        %v3742 = vunpack.c.l.b16 %v3668
        %v3743 = vunpack.c.l.b16 %v3669
        %v3744 = vpack.c.b16 %v3708, %v3707
        %v3745 = vpack.c.b16 %v3710, %v3709
        %v3746 = vpack.c.b16 %v3712, %v3711
        %v3747 = vpack.c.b16 %v3714, %v3713
        %v3748 = vpack.c.b16 %v3716, %v3715
        %v3749 = vpack.c.b16 %v3718, %v3717
        %v3750 = vpack.c.b16 %v3720, %v3719
        %v3751 = vpack.c.b16 %v3722, %v3721
        %v3752 = vpack.c.b16 %v3724, %v3723
        %v3753 = vpack.c.b16 %v3726, %v3725
        %v3754 = vpack.c.b16 %v3728, %v3727
        %v3755 = vpack.c.b16 %v3730, %v3729
        %v3756 = vpack.c.b16 %v3732, %v3731
        %v3757 = vpack.c.b16 %v3734, %v3733
        %v3758 = vpack.c.b16 %v3736, %v3735
        %v3759 = vpack.c.b16 %v3738, %v3737
        %v3760 = vpack.c.b16 %v3740, %v3739
        %v3761 = vpack.c.b16 %v3742, %v3741
        %v3762 = vpack.c.b16 %v3743, %v3743
        %v3764 = vshrl.u32 %v3744, 16
        %v3766 = vrot.slane %v3764, 1
        %v3767 = vshll.u32 %v3744, 16
        %v3769 = vrot.slane %v3767, 2
        %v3770 = vor.u32 %v3766, %v3769
        %v3772 = vshrl.u32 %v3745, 16
        %v3774 = vrot.slane %v3772, 1
        %v3775 = vshll.u32 %v3745, 16
        %v3777 = vrot.slane %v3775, 2
        %v3778 = vor.u32 %v3774, %v3777
        %v3779 = vsel %vm1302, %v3770, %v3778
        %v3781 = vshrl.u32 %v3746, 16
        %v3783 = vrot.slane %v3781, 1
        %v3784 = vshll.u32 %v3746, 16
        %v3786 = vrot.slane %v3784, 2
        %v3787 = vor.u32 %v3783, %v3786
        %v3788 = vsel %vm1302, %v3778, %v3787
        %v3790 = vshrl.u32 %v3747, 16
        %v3792 = vrot.slane %v3790, 1
        %v3793 = vshll.u32 %v3747, 16
        %v3795 = vrot.slane %v3793, 2
        %v3796 = vor.u32 %v3792, %v3795
        %v3797 = vsel %vm1302, %v3787, %v3796
        %v3799 = vshrl.u32 %v3748, 16
        %v3801 = vrot.slane %v3799, 1
        %v3802 = vshll.u32 %v3748, 16
        %v3804 = vrot.slane %v3802, 2
        %v3805 = vor.u32 %v3801, %v3804
        %v3806 = vsel %vm1302, %v3796, %v3805
        %v3808 = vshrl.u32 %v3749, 16
        %v3810 = vrot.slane %v3808, 1
        %v3811 = vshll.u32 %v3749, 16
        %v3813 = vrot.slane %v3811, 2
        %v3814 = vor.u32 %v3810, %v3813
        %v3815 = vsel %vm1302, %v3805, %v3814
        %v3817 = vshrl.u32 %v3750, 16
        %v3819 = vrot.slane %v3817, 1
        %v3820 = vshll.u32 %v3750, 16
        %v3822 = vrot.slane %v3820, 2
        %v3823 = vor.u32 %v3819, %v3822
        %v3824 = vsel %vm1302, %v3814, %v3823
        %v3826 = vshrl.u32 %v3751, 16
        %v3828 = vrot.slane %v3826, 1
        %v3829 = vshll.u32 %v3751, 16
        %v3831 = vrot.slane %v3829, 2
        %v3832 = vor.u32 %v3828, %v3831
        %v3833 = vsel %vm1302, %v3823, %v3832
        %v3835 = vshrl.u32 %v3752, 16
        %v3837 = vrot.slane %v3835, 1
        %v3838 = vshll.u32 %v3752, 16
        %v3840 = vrot.slane %v3838, 2
        %v3841 = vor.u32 %v3837, %v3840
        %v3842 = vsel %vm1302, %v3832, %v3841
        %v3844 = vshrl.u32 %v3753, 16
        %v3846 = vrot.slane %v3844, 1
        %v3847 = vshll.u32 %v3753, 16
        %v3849 = vrot.slane %v3847, 2
        %v3850 = vor.u32 %v3846, %v3849
        %v3851 = vsel %vm1302, %v3841, %v3850
        %v3853 = vshrl.u32 %v3754, 16
        %v3855 = vrot.slane %v3853, 1
        %v3856 = vshll.u32 %v3754, 16
        %v3858 = vrot.slane %v3856, 2
        %v3859 = vor.u32 %v3855, %v3858
        %v3860 = vsel %vm1302, %v3850, %v3859
        %v3862 = vshrl.u32 %v3755, 16
        %v3864 = vrot.slane %v3862, 1
        %v3865 = vshll.u32 %v3755, 16
        %v3867 = vrot.slane %v3865, 2
        %v3868 = vor.u32 %v3864, %v3867
        %v3869 = vsel %vm1302, %v3859, %v3868
        %v3871 = vshrl.u32 %v3756, 16
        %v3873 = vrot.slane %v3871, 1
        %v3874 = vshll.u32 %v3756, 16
        %v3876 = vrot.slane %v3874, 2
        %v3877 = vor.u32 %v3873, %v3876
        %v3878 = vsel %vm1302, %v3868, %v3877
        %v3880 = vshrl.u32 %v3757, 16
        %v3882 = vrot.slane %v3880, 1
        %v3883 = vshll.u32 %v3757, 16
        %v3885 = vrot.slane %v3883, 2
        %v3886 = vor.u32 %v3882, %v3885
        %v3887 = vsel %vm1302, %v3877, %v3886
        %v3889 = vshrl.u32 %v3758, 16
        %v3891 = vrot.slane %v3889, 1
        %v3892 = vshll.u32 %v3758, 16
        %v3894 = vrot.slane %v3892, 2
        %v3895 = vor.u32 %v3891, %v3894
        %v3896 = vsel %vm1302, %v3886, %v3895
        %v3898 = vshrl.u32 %v3759, 16
        %v3900 = vrot.slane %v3898, 1
        %v3901 = vshll.u32 %v3759, 16
        %v3903 = vrot.slane %v3901, 2
        %v3904 = vor.u32 %v3900, %v3903
        %v3905 = vsel %vm1302, %v3895, %v3904
        %v3907 = vshrl.u32 %v3760, 16
        %v3909 = vrot.slane %v3907, 1
        %v3910 = vshll.u32 %v3760, 16
        %v3912 = vrot.slane %v3910, 2
        %v3913 = vor.u32 %v3909, %v3912
        %v3914 = vsel %vm1302, %v3904, %v3913
        %v3916 = vshrl.u32 %v3761, 16
        %v3918 = vrot.slane %v3916, 1
        %v3919 = vshll.u32 %v3761, 16
        %v3921 = vrot.slane %v3919, 2
        %v3922 = vor.u32 %v3918, %v3921
        %v3923 = vsel %vm1302, %v3913, %v3922
        %v3925 = vshrl.u32 %v3762, 16
        %v3927 = vrot.slane %v3925, 1
        %v3928 = vshll.u32 %v3762, 16
        %v3930 = vrot.slane %v3928, 2
        %v3931 = vor.u32 %v3927, %v3930
        %v3932 = vsel %vm1302, %v3922, %v3931
        %3933 = vrot.lane.b32.xlu0 %v3779, 16
        %v3934 = vpop.permute.xlu0 %3933
        %3935 = vrot.lane.b32.xlu0 %v3788, 16
        %v3936 = vpop.permute.xlu0 %3935
        %3937 = vrot.lane.b32.xlu0 %v3797, 16
        %v3938 = vpop.permute.xlu0 %3937
        %3939 = vrot.lane.b32.xlu0 %v3806, 16
        %v3940 = vpop.permute.xlu0 %3939
        %3941 = vrot.lane.b32.xlu0 %v3815, 16
        %v3942 = vpop.permute.xlu0 %3941
        %3943 = vrot.lane.b32.xlu0 %v3824, 16
        %v3944 = vpop.permute.xlu0 %3943
        %3945 = vrot.lane.b32.xlu0 %v3833, 16
        %v3946 = vpop.permute.xlu0 %3945
        %3947 = vrot.lane.b32.xlu0 %v3842, 16
        %v3948 = vpop.permute.xlu0 %3947
        %3949 = vrot.lane.b32.xlu0 %v3851, 16
        %v3950 = vpop.permute.xlu0 %3949
        %3951 = vrot.lane.b32.xlu0 %v3860, 16
        %v3952 = vpop.permute.xlu0 %3951
        %3953 = vrot.lane.b32.xlu0 %v3869, 16
        %v3954 = vpop.permute.xlu0 %3953
        %3955 = vrot.lane.b32.xlu0 %v3878, 16
        %v3956 = vpop.permute.xlu0 %3955
        %3957 = vrot.lane.b32.xlu0 %v3887, 16
        %v3958 = vpop.permute.xlu0 %3957
        %3959 = vrot.lane.b32.xlu0 %v3896, 16
        %v3960 = vpop.permute.xlu0 %3959
        %3961 = vrot.lane.b32.xlu0 %v3905, 16
        %v3962 = vpop.permute.xlu0 %3961
        %3963 = vrot.lane.b32.xlu0 %v3914, 16
        %v3964 = vpop.permute.xlu0 %3963
        %3965 = vrot.lane.b32.xlu0 %v3923, 16
        %v3966 = vpop.permute.xlu0 %3965
        %3967 = vrot.lane.b32.xlu0 %v3932, 16
        %v3968 = vpop.permute.xlu0 %3967
        %3987 = vst.msk [vmem:[#allocation2 + $0x90] sm:$0xff] %vm1527, %v3934
        %3988 = vst.msk [vmem:[#allocation2 + $0x98] sm:$0xff] %vm1527, %v3936
        %3989 = vst.msk [vmem:[#allocation2 + $0xa0] sm:$0xff] %vm1527, %v3938
        %3990 = vst.msk [vmem:[#allocation2 + $0xa8] sm:$0xff] %vm1527, %v3940
        %3991 = vst.msk [vmem:[#allocation2 + $0xb0] sm:$0xff] %vm1527, %v3942
        %3992 = vst.msk [vmem:[#allocation2 + $0xb8] sm:$0xff] %vm1527, %v3944
        %3993 = vst.msk [vmem:[#allocation2 + $0xc0] sm:$0xff] %vm1527, %v3946
        %3994 = vst.msk [vmem:[#allocation2 + $0xc8] sm:$0xff] %vm1527, %v3948
        %3995 = vst.msk [vmem:[#allocation2 + $0xd0] sm:$0xff] %vm1527, %v3950
        %3996 = vst.msk [vmem:[#allocation2 + $0xd8] sm:$0xff] %vm1527, %v3952
        %3997 = vst.msk [vmem:[#allocation2 + $0xe0] sm:$0xff] %vm1527, %v3954
        %3998 = vst.msk [vmem:[#allocation2 + $0xe8] sm:$0xff] %vm1527, %v3956
        %3999 = vst.msk [vmem:[#allocation2 + $0xf0] sm:$0xff] %vm1527, %v3958
        %4000 = vst.msk [vmem:[#allocation2 + $0xf8] sm:$0xff] %vm1527, %v3960
        %4001 = vst.msk [vmem:[#allocation2 + $0x100] sm:$0xff] %vm1527, %v3962
        %4002 = vst.msk [vmem:[#allocation2 + $0x108] sm:$0xff] %vm1527, %v3964
        %4003 = vst.msk [vmem:[#allocation2 + $0x110] sm:$0xff] %vm1527, %v3966
        %4004 = vst.msk [vmem:[#allocation2 + $0x118] sm:$0xff] %vm1527, %v3968
        %v4005 = vld [vmem:[%s2642 + $0x8] sm:$0xc]
        %v4006 = vld [vmem:[%s2642 + $0xc] sm:$0xf]
        %v4007 = vld [vmem:[%s2642 + $0x10] sm:$0xf]
        %v4008 = vld [vmem:[%s2642 + $0x14] sm:$0xf]
        %v4009 = vld [vmem:[%s2642 + $0x18] sm:$0xf]
        %v4010 = vld [vmem:[%s2642 + $0x1c] sm:$0xf]
        %v4011 = vld [vmem:[%s2642 + $0x20] sm:$0xf]
        %v4012 = vld [vmem:[%s2642 + $0x24] sm:$0xf]
        %v4013 = vld [vmem:[%s2642 + $0x28] sm:$0xf]
        %v4014 = vld [vmem:[%s2642 + $0x2c] sm:$0xf]
        %v4015 = vld [vmem:[%s2642 + $0x30] sm:$0xf]
        %v4016 = vld [vmem:[%s2642 + $0x34] sm:$0xf]
        %v4017 = vld [vmem:[%s2642 + $0x38] sm:$0xf]
        %v4018 = vld [vmem:[%s2642 + $0x3c] sm:$0xf]
        %v4019 = vld [vmem:[%s2642 + $0x40] sm:$0xf]
        %v4020 = vld [vmem:[%s2642 + $0x44] sm:$0xf]
        %v4021 = vld [vmem:[%s2642 + $0x48] sm:$0xf]
        %v4022 = vld [vmem:[%s2642 + $0x4c] sm:$0xf]
        %v4023 = vld [vmem:[%s2642 + $0x50] sm:$0xf]
        %v4024 = vld [vmem:[%s2642 + $0x54] sm:$0xf]
        %v4025 = vld [vmem:[%s2642 + $0x58] sm:$0xf]
        %v4026 = vld [vmem:[%s2642 + $0x5c] sm:$0xf]
        %v4027 = vld [vmem:[%s2642 + $0x60] sm:$0xf]
        %v4028 = vld [vmem:[%s2642 + $0x64] sm:$0xf]
        %v4029 = vld [vmem:[%s2642 + $0x68] sm:$0xf]
        %v4030 = vld [vmem:[%s2642 + $0x6c] sm:$0xf]
        %v4031 = vld [vmem:[%s2642 + $0x70] sm:$0xf]
        %v4032 = vld [vmem:[%s2642 + $0x74] sm:$0xf]
        %v4033 = vld [vmem:[%s2642 + $0x78] sm:$0xf]
        %v4034 = vld [vmem:[%s2642 + $0x7c] sm:$0xf]
        %v4035 = vld [vmem:[%s2642 + $0x80] sm:$0xf]
        %v4036 = vld [vmem:[%s2642 + $0x84] sm:$0xf]
        %v4037 = vld [vmem:[%s2642 + $0x88] sm:$0xf]
        %v4038 = vld [vmem:[%s2642 + $0x8c] sm:$0xf]
        %v4039 = vld [vmem:[%s2642 + $0x90] sm:$0xf]
        %v4040 = vld [vmem:[%s2642 + $0x94] sm:$0xf]
        %v4041 = vld [vmem:[%s2642 + $0x98] sm:$0x3]
        %v4079 = vunpack.c.l.b16 %v4005
        %v4080 = vunpack.c.l.b16 %v4006
        %v4081 = vunpack.c.l.b16 %v4007
        %v4082 = vunpack.c.l.b16 %v4008
        %v4083 = vunpack.c.l.b16 %v4009
        %v4084 = vunpack.c.l.b16 %v4010
        %v4085 = vunpack.c.l.b16 %v4011
        %v4086 = vunpack.c.l.b16 %v4012
        %v4087 = vunpack.c.l.b16 %v4013
        %v4088 = vunpack.c.l.b16 %v4014
        %v4089 = vunpack.c.l.b16 %v4015
        %v4090 = vunpack.c.l.b16 %v4016
        %v4091 = vunpack.c.l.b16 %v4017
        %v4092 = vunpack.c.l.b16 %v4018
        %v4093 = vunpack.c.l.b16 %v4019
        %v4094 = vunpack.c.l.b16 %v4020
        %v4095 = vunpack.c.l.b16 %v4021
        %v4096 = vunpack.c.l.b16 %v4022
        %v4097 = vunpack.c.l.b16 %v4023
        %v4098 = vunpack.c.l.b16 %v4024
        %v4099 = vunpack.c.l.b16 %v4025
        %v4100 = vunpack.c.l.b16 %v4026
        %v4101 = vunpack.c.l.b16 %v4027
        %v4102 = vunpack.c.l.b16 %v4028
        %v4103 = vunpack.c.l.b16 %v4029
        %v4104 = vunpack.c.l.b16 %v4030
        %v4105 = vunpack.c.l.b16 %v4031
        %v4106 = vunpack.c.l.b16 %v4032
        %v4107 = vunpack.c.l.b16 %v4033
        %v4108 = vunpack.c.l.b16 %v4034
        %v4109 = vunpack.c.l.b16 %v4035
        %v4110 = vunpack.c.l.b16 %v4036
        %v4111 = vunpack.c.l.b16 %v4037
        %v4112 = vunpack.c.l.b16 %v4038
        %v4113 = vunpack.c.l.b16 %v4039
        %v4114 = vunpack.c.l.b16 %v4040
        %v4115 = vunpack.c.l.b16 %v4041
        %v4116 = vpack.c.b16 %v4080, %v4079
        %v4117 = vpack.c.b16 %v4082, %v4081
        %v4118 = vpack.c.b16 %v4084, %v4083
        %v4119 = vpack.c.b16 %v4086, %v4085
        %v4120 = vpack.c.b16 %v4088, %v4087
        %v4121 = vpack.c.b16 %v4090, %v4089
        %v4122 = vpack.c.b16 %v4092, %v4091
        %v4123 = vpack.c.b16 %v4094, %v4093
        %v4124 = vpack.c.b16 %v4096, %v4095
        %v4125 = vpack.c.b16 %v4098, %v4097
        %v4126 = vpack.c.b16 %v4100, %v4099
        %v4127 = vpack.c.b16 %v4102, %v4101
        %v4128 = vpack.c.b16 %v4104, %v4103
        %v4129 = vpack.c.b16 %v4106, %v4105
        %v4130 = vpack.c.b16 %v4108, %v4107
        %v4131 = vpack.c.b16 %v4110, %v4109
        %v4132 = vpack.c.b16 %v4112, %v4111
        %v4133 = vpack.c.b16 %v4114, %v4113
        %v4134 = vpack.c.b16 %v4115, %v4115
        %v4135 = vrot.slane %v4116, 2
        %v4136 = vrot.slane %v4117, 2
        %v4137 = vsel %vm1676, %v4135, %v4136
        %v4138 = vrot.slane %v4118, 2
        %v4139 = vsel %vm1676, %v4136, %v4138
        %v4140 = vrot.slane %v4119, 2
        %v4141 = vsel %vm1676, %v4138, %v4140
        %v4142 = vrot.slane %v4120, 2
        %v4143 = vsel %vm1676, %v4140, %v4142
        %v4144 = vrot.slane %v4121, 2
        %v4145 = vsel %vm1676, %v4142, %v4144
        %v4146 = vrot.slane %v4122, 2
        %v4147 = vsel %vm1676, %v4144, %v4146
        %v4148 = vrot.slane %v4123, 2
        %v4149 = vsel %vm1676, %v4146, %v4148
        %v4150 = vrot.slane %v4124, 2
        %v4151 = vsel %vm1676, %v4148, %v4150
        %v4152 = vrot.slane %v4125, 2
        %v4153 = vsel %vm1676, %v4150, %v4152
        %v4154 = vrot.slane %v4126, 2
        %v4155 = vsel %vm1676, %v4152, %v4154
        %v4156 = vrot.slane %v4127, 2
        %v4157 = vsel %vm1676, %v4154, %v4156
        %v4158 = vrot.slane %v4128, 2
        %v4159 = vsel %vm1676, %v4156, %v4158
        %v4160 = vrot.slane %v4129, 2
        %v4161 = vsel %vm1676, %v4158, %v4160
        %v4162 = vrot.slane %v4130, 2
        %v4163 = vsel %vm1676, %v4160, %v4162
        %v4164 = vrot.slane %v4131, 2
        %v4165 = vsel %vm1676, %v4162, %v4164
        %v4166 = vrot.slane %v4132, 2
        %v4167 = vsel %vm1676, %v4164, %v4166
        %v4168 = vrot.slane %v4133, 2
        %v4169 = vsel %vm1676, %v4166, %v4168
        %v4170 = vrot.slane %v4134, 2
        %v4171 = vsel %vm1676, %v4168, %v4170
        %4172 = vrot.lane.b32.xlu0 %v4137, 20
        %v4173 = vpop.permute.xlu0 %4172
        %4174 = vrot.lane.b32.xlu0 %v4139, 20
        %v4175 = vpop.permute.xlu0 %4174
        %4176 = vrot.lane.b32.xlu0 %v4141, 20
        %v4177 = vpop.permute.xlu0 %4176
        %4178 = vrot.lane.b32.xlu0 %v4143, 20
        %v4179 = vpop.permute.xlu0 %4178
        %4180 = vrot.lane.b32.xlu0 %v4145, 20
        %v4181 = vpop.permute.xlu0 %4180
        %4182 = vrot.lane.b32.xlu0 %v4147, 20
        %v4183 = vpop.permute.xlu0 %4182
        %4184 = vrot.lane.b32.xlu0 %v4149, 20
        %v4185 = vpop.permute.xlu0 %4184
        %4186 = vrot.lane.b32.xlu0 %v4151, 20
        %v4187 = vpop.permute.xlu0 %4186
        %4188 = vrot.lane.b32.xlu0 %v4153, 20
        %v4189 = vpop.permute.xlu0 %4188
        %4190 = vrot.lane.b32.xlu0 %v4155, 20
        %v4191 = vpop.permute.xlu0 %4190
        %4192 = vrot.lane.b32.xlu0 %v4157, 20
        %v4193 = vpop.permute.xlu0 %4192
        %4194 = vrot.lane.b32.xlu0 %v4159, 20
        %v4195 = vpop.permute.xlu0 %4194
        %4196 = vrot.lane.b32.xlu0 %v4161, 20
        %v4197 = vpop.permute.xlu0 %4196
        %4198 = vrot.lane.b32.xlu0 %v4163, 20
        %v4199 = vpop.permute.xlu0 %4198
        %4200 = vrot.lane.b32.xlu0 %v4165, 20
        %v4201 = vpop.permute.xlu0 %4200
        %4202 = vrot.lane.b32.xlu0 %v4167, 20
        %v4203 = vpop.permute.xlu0 %4202
        %4204 = vrot.lane.b32.xlu0 %v4169, 20
        %v4205 = vpop.permute.xlu0 %4204
        %4206 = vrot.lane.b32.xlu0 %v4171, 20
        %v4207 = vpop.permute.xlu0 %4206
        %4226 = vst.msk [vmem:[#allocation2 + $0x90] sm:$0xff] %vm1768, %v4173
        %4227 = vst.msk [vmem:[#allocation2 + $0x98] sm:$0xff] %vm1768, %v4175
        %4228 = vst.msk [vmem:[#allocation2 + $0xa0] sm:$0xff] %vm1768, %v4177
        %4229 = vst.msk [vmem:[#allocation2 + $0xa8] sm:$0xff] %vm1768, %v4179
        %4230 = vst.msk [vmem:[#allocation2 + $0xb0] sm:$0xff] %vm1768, %v4181
        %4231 = vst.msk [vmem:[#allocation2 + $0xb8] sm:$0xff] %vm1768, %v4183
        %4232 = vst.msk [vmem:[#allocation2 + $0xc0] sm:$0xff] %vm1768, %v4185
        %4233 = vst.msk [vmem:[#allocation2 + $0xc8] sm:$0xff] %vm1768, %v4187
        %4234 = vst.msk [vmem:[#allocation2 + $0xd0] sm:$0xff] %vm1768, %v4189
        %4235 = vst.msk [vmem:[#allocation2 + $0xd8] sm:$0xff] %vm1768, %v4191
        %4236 = vst.msk [vmem:[#allocation2 + $0xe0] sm:$0xff] %vm1768, %v4193
        %4237 = vst.msk [vmem:[#allocation2 + $0xe8] sm:$0xff] %vm1768, %v4195
        %4238 = vst.msk [vmem:[#allocation2 + $0xf0] sm:$0xff] %vm1768, %v4197
        %4239 = vst.msk [vmem:[#allocation2 + $0xf8] sm:$0xff] %vm1768, %v4199
        %4240 = vst.msk [vmem:[#allocation2 + $0x100] sm:$0xff] %vm1768, %v4201
        %4241 = vst.msk [vmem:[#allocation2 + $0x108] sm:$0xff] %vm1768, %v4203
        %4242 = vst.msk [vmem:[#allocation2 + $0x110] sm:$0xff] %vm1768, %v4205
        %4243 = vst.msk [vmem:[#allocation2 + $0x118] sm:$0xff] %vm1768, %v4207
        %v4244 = vld [vmem:[%s2642 + $0x10] sm:$0xc]
        %v4245 = vld [vmem:[%s2642 + $0x14] sm:$0xf]
        %v4246 = vld [vmem:[%s2642 + $0x18] sm:$0xf]
        %v4247 = vld [vmem:[%s2642 + $0x1c] sm:$0xf]
        %v4248 = vld [vmem:[%s2642 + $0x20] sm:$0xf]
        %v4249 = vld [vmem:[%s2642 + $0x24] sm:$0xf]
        %v4250 = vld [vmem:[%s2642 + $0x28] sm:$0xf]
        %v4251 = vld [vmem:[%s2642 + $0x2c] sm:$0xf]
        %v4252 = vld [vmem:[%s2642 + $0x30] sm:$0xf]
        %v4253 = vld [vmem:[%s2642 + $0x34] sm:$0xf]
        %v4254 = vld [vmem:[%s2642 + $0x38] sm:$0xf]
        %v4255 = vld [vmem:[%s2642 + $0x3c] sm:$0xf]
        %v4256 = vld [vmem:[%s2642 + $0x40] sm:$0xf]
        %v4257 = vld [vmem:[%s2642 + $0x44] sm:$0xf]
        %v4258 = vld [vmem:[%s2642 + $0x48] sm:$0xf]
        %v4259 = vld [vmem:[%s2642 + $0x4c] sm:$0xf]
        %v4260 = vld [vmem:[%s2642 + $0x50] sm:$0xf]
        %v4261 = vld [vmem:[%s2642 + $0x54] sm:$0xf]
        %v4262 = vld [vmem:[%s2642 + $0x58] sm:$0xf]
        %v4263 = vld [vmem:[%s2642 + $0x5c] sm:$0xf]
        %v4264 = vld [vmem:[%s2642 + $0x60] sm:$0xf]
        %v4265 = vld [vmem:[%s2642 + $0x64] sm:$0xf]
        %v4266 = vld [vmem:[%s2642 + $0x68] sm:$0xf]
        %v4267 = vld [vmem:[%s2642 + $0x6c] sm:$0xf]
        %v4268 = vld [vmem:[%s2642 + $0x70] sm:$0xf]
        %v4269 = vld [vmem:[%s2642 + $0x74] sm:$0xf]
        %v4270 = vld [vmem:[%s2642 + $0x78] sm:$0xf]
        %v4271 = vld [vmem:[%s2642 + $0x7c] sm:$0xf]
        %v4272 = vld [vmem:[%s2642 + $0x80] sm:$0xf]
        %v4273 = vld [vmem:[%s2642 + $0x84] sm:$0xf]
        %v4274 = vld [vmem:[%s2642 + $0x88] sm:$0xf]
        %v4275 = vld [vmem:[%s2642 + $0x8c] sm:$0xf]
        %v4276 = vld [vmem:[%s2642 + $0x90] sm:$0xf]
        %v4277 = vld [vmem:[%s2642 + $0x94] sm:$0xf]
        %v4278 = vld [vmem:[%s2642 + $0x98] sm:$0xf]
        %v4279 = vld [vmem:[%s2642 + $0x9c] sm:$0xf]
        %v4280 = vld [vmem:[%s2642 + $0xa0] sm:$0x3]
        %v4318 = vunpack.c.l.b16 %v4244
        %v4319 = vunpack.c.l.b16 %v4245
        %v4320 = vunpack.c.l.b16 %v4246
        %v4321 = vunpack.c.l.b16 %v4247
        %v4322 = vunpack.c.l.b16 %v4248
        %v4323 = vunpack.c.l.b16 %v4249
        %v4324 = vunpack.c.l.b16 %v4250
        %v4325 = vunpack.c.l.b16 %v4251
        %v4326 = vunpack.c.l.b16 %v4252
        %v4327 = vunpack.c.l.b16 %v4253
        %v4328 = vunpack.c.l.b16 %v4254
        %v4329 = vunpack.c.l.b16 %v4255
        %v4330 = vunpack.c.l.b16 %v4256
        %v4331 = vunpack.c.l.b16 %v4257
        %v4332 = vunpack.c.l.b16 %v4258
        %v4333 = vunpack.c.l.b16 %v4259
        %v4334 = vunpack.c.l.b16 %v4260
        %v4335 = vunpack.c.l.b16 %v4261
        %v4336 = vunpack.c.l.b16 %v4262
        %v4337 = vunpack.c.l.b16 %v4263
        %v4338 = vunpack.c.l.b16 %v4264
        %v4339 = vunpack.c.l.b16 %v4265
        %v4340 = vunpack.c.l.b16 %v4266
        %v4341 = vunpack.c.l.b16 %v4267
        %v4342 = vunpack.c.l.b16 %v4268
        %v4343 = vunpack.c.l.b16 %v4269
        %v4344 = vunpack.c.l.b16 %v4270
        %v4345 = vunpack.c.l.b16 %v4271
        %v4346 = vunpack.c.l.b16 %v4272
        %v4347 = vunpack.c.l.b16 %v4273
        %v4348 = vunpack.c.l.b16 %v4274
        %v4349 = vunpack.c.l.b16 %v4275
        %v4350 = vunpack.c.l.b16 %v4276
        %v4351 = vunpack.c.l.b16 %v4277
        %v4352 = vunpack.c.l.b16 %v4278
        %v4353 = vunpack.c.l.b16 %v4279
        %v4354 = vunpack.c.l.b16 %v4280
        %v4355 = vpack.c.b16 %v4319, %v4318
        %v4356 = vpack.c.b16 %v4321, %v4320
        %v4357 = vpack.c.b16 %v4323, %v4322
        %v4358 = vpack.c.b16 %v4325, %v4324
        %v4359 = vpack.c.b16 %v4327, %v4326
        %v4360 = vpack.c.b16 %v4329, %v4328
        %v4361 = vpack.c.b16 %v4331, %v4330
        %v4362 = vpack.c.b16 %v4333, %v4332
        %v4363 = vpack.c.b16 %v4335, %v4334
        %v4364 = vpack.c.b16 %v4337, %v4336
        %v4365 = vpack.c.b16 %v4339, %v4338
        %v4366 = vpack.c.b16 %v4341, %v4340
        %v4367 = vpack.c.b16 %v4343, %v4342
        %v4368 = vpack.c.b16 %v4345, %v4344
        %v4369 = vpack.c.b16 %v4347, %v4346
        %v4370 = vpack.c.b16 %v4349, %v4348
        %v4371 = vpack.c.b16 %v4351, %v4350
        %v4372 = vpack.c.b16 %v4353, %v4352
        %v4373 = vpack.c.b16 %v4354, %v4354
        %v4374 = vrot.slane %v4355, 2
        %v4375 = vrot.slane %v4356, 2
        %v4376 = vsel %vm1676, %v4374, %v4375
        %v4377 = vrot.slane %v4357, 2
        %v4378 = vsel %vm1676, %v4375, %v4377
        %v4379 = vrot.slane %v4358, 2
        %v4380 = vsel %vm1676, %v4377, %v4379
        %v4381 = vrot.slane %v4359, 2
        %v4382 = vsel %vm1676, %v4379, %v4381
        %v4383 = vrot.slane %v4360, 2
        %v4384 = vsel %vm1676, %v4381, %v4383
        %v4385 = vrot.slane %v4361, 2
        %v4386 = vsel %vm1676, %v4383, %v4385
        %v4387 = vrot.slane %v4362, 2
        %v4388 = vsel %vm1676, %v4385, %v4387
        %v4389 = vrot.slane %v4363, 2
        %v4390 = vsel %vm1676, %v4387, %v4389
        %v4391 = vrot.slane %v4364, 2
        %v4392 = vsel %vm1676, %v4389, %v4391
        %v4393 = vrot.slane %v4365, 2
        %v4394 = vsel %vm1676, %v4391, %v4393
        %v4395 = vrot.slane %v4366, 2
        %v4396 = vsel %vm1676, %v4393, %v4395
        %v4397 = vrot.slane %v4367, 2
        %v4398 = vsel %vm1676, %v4395, %v4397
        %v4399 = vrot.slane %v4368, 2
        %v4400 = vsel %vm1676, %v4397, %v4399
        %v4401 = vrot.slane %v4369, 2
        %v4402 = vsel %vm1676, %v4399, %v4401
        %v4403 = vrot.slane %v4370, 2
        %v4404 = vsel %vm1676, %v4401, %v4403
        %v4405 = vrot.slane %v4371, 2
        %v4406 = vsel %vm1676, %v4403, %v4405
        %v4407 = vrot.slane %v4372, 2
        %v4408 = vsel %vm1676, %v4405, %v4407
        %v4409 = vrot.slane %v4373, 2
        %v4410 = vsel %vm1676, %v4407, %v4409
        %4411 = vrot.lane.b32.xlu0 %v4376, 24
        %v4412 = vpop.permute.xlu0 %4411
        %4413 = vrot.lane.b32.xlu0 %v4378, 24
        %v4414 = vpop.permute.xlu0 %4413
        %4415 = vrot.lane.b32.xlu0 %v4380, 24
        %v4416 = vpop.permute.xlu0 %4415
        %4417 = vrot.lane.b32.xlu0 %v4382, 24
        %v4418 = vpop.permute.xlu0 %4417
        %4419 = vrot.lane.b32.xlu0 %v4384, 24
        %v4420 = vpop.permute.xlu0 %4419
        %4421 = vrot.lane.b32.xlu0 %v4386, 24
        %v4422 = vpop.permute.xlu0 %4421
        %4423 = vrot.lane.b32.xlu0 %v4388, 24
        %v4424 = vpop.permute.xlu0 %4423
        %4425 = vrot.lane.b32.xlu0 %v4390, 24
        %v4426 = vpop.permute.xlu0 %4425
        %4427 = vrot.lane.b32.xlu0 %v4392, 24
        %v4428 = vpop.permute.xlu0 %4427
        %4429 = vrot.lane.b32.xlu0 %v4394, 24
        %v4430 = vpop.permute.xlu0 %4429
        %4431 = vrot.lane.b32.xlu0 %v4396, 24
        %v4432 = vpop.permute.xlu0 %4431
        %4433 = vrot.lane.b32.xlu0 %v4398, 24
        %v4434 = vpop.permute.xlu0 %4433
        %4435 = vrot.lane.b32.xlu0 %v4400, 24
        %v4436 = vpop.permute.xlu0 %4435
        %4437 = vrot.lane.b32.xlu0 %v4402, 24
        %v4438 = vpop.permute.xlu0 %4437
        %4439 = vrot.lane.b32.xlu0 %v4404, 24
        %v4440 = vpop.permute.xlu0 %4439
        %4441 = vrot.lane.b32.xlu0 %v4406, 24
        %v4442 = vpop.permute.xlu0 %4441
        %4443 = vrot.lane.b32.xlu0 %v4408, 24
        %v4444 = vpop.permute.xlu0 %4443
        %4445 = vrot.lane.b32.xlu0 %v4410, 24
        %v4446 = vpop.permute.xlu0 %4445
        %4465 = vst.msk [vmem:[#allocation2 + $0x90] sm:$0xff] %vm2008, %v4412
        %4466 = vst.msk [vmem:[#allocation2 + $0x98] sm:$0xff] %vm2008, %v4414
        %4467 = vst.msk [vmem:[#allocation2 + $0xa0] sm:$0xff] %vm2008, %v4416
        %4468 = vst.msk [vmem:[#allocation2 + $0xa8] sm:$0xff] %vm2008, %v4418
        %4469 = vst.msk [vmem:[#allocation2 + $0xb0] sm:$0xff] %vm2008, %v4420
        %4470 = vst.msk [vmem:[#allocation2 + $0xb8] sm:$0xff] %vm2008, %v4422
        %4471 = vst.msk [vmem:[#allocation2 + $0xc0] sm:$0xff] %vm2008, %v4424
        %4472 = vst.msk [vmem:[#allocation2 + $0xc8] sm:$0xff] %vm2008, %v4426
        %4473 = vst.msk [vmem:[#allocation2 + $0xd0] sm:$0xff] %vm2008, %v4428
        %4474 = vst.msk [vmem:[#allocation2 + $0xd8] sm:$0xff] %vm2008, %v4430
        %4475 = vst.msk [vmem:[#allocation2 + $0xe0] sm:$0xff] %vm2008, %v4432
        %4476 = vst.msk [vmem:[#allocation2 + $0xe8] sm:$0xff] %vm2008, %v4434
        %4477 = vst.msk [vmem:[#allocation2 + $0xf0] sm:$0xff] %vm2008, %v4436
        %4478 = vst.msk [vmem:[#allocation2 + $0xf8] sm:$0xff] %vm2008, %v4438
        %4479 = vst.msk [vmem:[#allocation2 + $0x100] sm:$0xff] %vm2008, %v4440
        %4480 = vst.msk [vmem:[#allocation2 + $0x108] sm:$0xff] %vm2008, %v4442
        %4481 = vst.msk [vmem:[#allocation2 + $0x110] sm:$0xff] %vm2008, %v4444
        %4482 = vst.msk [vmem:[#allocation2 + $0x118] sm:$0xff] %vm2008, %v4446
        %v4483 = vld [vmem:[%s2642 + $0x10] sm:$0xc]
        %v4484 = vld [vmem:[%s2642 + $0x14] sm:$0xf]
        %v4485 = vld [vmem:[%s2642 + $0x18] sm:$0xf]
        %v4486 = vld [vmem:[%s2642 + $0x1c] sm:$0xf]
        %v4487 = vld [vmem:[%s2642 + $0x20] sm:$0xf]
        %v4488 = vld [vmem:[%s2642 + $0x24] sm:$0xf]
        %v4489 = vld [vmem:[%s2642 + $0x28] sm:$0xf]
        %v4490 = vld [vmem:[%s2642 + $0x2c] sm:$0xf]
        %v4491 = vld [vmem:[%s2642 + $0x30] sm:$0xf]
        %v4492 = vld [vmem:[%s2642 + $0x34] sm:$0xf]
        %v4493 = vld [vmem:[%s2642 + $0x38] sm:$0xf]
        %v4494 = vld [vmem:[%s2642 + $0x3c] sm:$0xf]
        %v4495 = vld [vmem:[%s2642 + $0x40] sm:$0xf]
        %v4496 = vld [vmem:[%s2642 + $0x44] sm:$0xf]
        %v4497 = vld [vmem:[%s2642 + $0x48] sm:$0xf]
        %v4498 = vld [vmem:[%s2642 + $0x4c] sm:$0xf]
        %v4499 = vld [vmem:[%s2642 + $0x50] sm:$0xf]
        %v4500 = vld [vmem:[%s2642 + $0x54] sm:$0xf]
        %v4501 = vld [vmem:[%s2642 + $0x58] sm:$0xf]
        %v4502 = vld [vmem:[%s2642 + $0x5c] sm:$0xf]
        %v4503 = vld [vmem:[%s2642 + $0x60] sm:$0xf]
        %v4504 = vld [vmem:[%s2642 + $0x64] sm:$0xf]
        %v4505 = vld [vmem:[%s2642 + $0x68] sm:$0xf]
        %v4506 = vld [vmem:[%s2642 + $0x6c] sm:$0xf]
        %v4507 = vld [vmem:[%s2642 + $0x70] sm:$0xf]
        %v4508 = vld [vmem:[%s2642 + $0x74] sm:$0xf]
        %v4509 = vld [vmem:[%s2642 + $0x78] sm:$0xf]
        %v4510 = vld [vmem:[%s2642 + $0x7c] sm:$0xf]
        %v4511 = vld [vmem:[%s2642 + $0x80] sm:$0xf]
        %v4512 = vld [vmem:[%s2642 + $0x84] sm:$0xf]
        %v4513 = vld [vmem:[%s2642 + $0x88] sm:$0xf]
        %v4514 = vld [vmem:[%s2642 + $0x8c] sm:$0xf]
        %v4515 = vld [vmem:[%s2642 + $0x90] sm:$0xf]
        %v4516 = vld [vmem:[%s2642 + $0x94] sm:$0xf]
        %v4517 = vld [vmem:[%s2642 + $0x98] sm:$0xf]
        %v4518 = vld [vmem:[%s2642 + $0x9c] sm:$0xf]
        %v4519 = vld [vmem:[%s2642 + $0xa0] sm:$0x7]
        %v4557 = vunpack.c.l.b16 %v4483
        %v4558 = vunpack.c.l.b16 %v4484
        %v4559 = vunpack.c.l.b16 %v4485
        %v4560 = vunpack.c.l.b16 %v4486
        %v4561 = vunpack.c.l.b16 %v4487
        %v4562 = vunpack.c.l.b16 %v4488
        %v4563 = vunpack.c.l.b16 %v4489
        %v4564 = vunpack.c.l.b16 %v4490
        %v4565 = vunpack.c.l.b16 %v4491
        %v4566 = vunpack.c.l.b16 %v4492
        %v4567 = vunpack.c.l.b16 %v4493
        %v4568 = vunpack.c.l.b16 %v4494
        %v4569 = vunpack.c.l.b16 %v4495
        %v4570 = vunpack.c.l.b16 %v4496
        %v4571 = vunpack.c.l.b16 %v4497
        %v4572 = vunpack.c.l.b16 %v4498
        %v4573 = vunpack.c.l.b16 %v4499
        %v4574 = vunpack.c.l.b16 %v4500
        %v4575 = vunpack.c.l.b16 %v4501
        %v4576 = vunpack.c.l.b16 %v4502
        %v4577 = vunpack.c.l.b16 %v4503
        %v4578 = vunpack.c.l.b16 %v4504
        %v4579 = vunpack.c.l.b16 %v4505
        %v4580 = vunpack.c.l.b16 %v4506
        %v4581 = vunpack.c.l.b16 %v4507
        %v4582 = vunpack.c.l.b16 %v4508
        %v4583 = vunpack.c.l.b16 %v4509
        %v4584 = vunpack.c.l.b16 %v4510
        %v4585 = vunpack.c.l.b16 %v4511
        %v4586 = vunpack.c.l.b16 %v4512
        %v4587 = vunpack.c.l.b16 %v4513
        %v4588 = vunpack.c.l.b16 %v4514
        %v4589 = vunpack.c.l.b16 %v4515
        %v4590 = vunpack.c.l.b16 %v4516
        %v4591 = vunpack.c.l.b16 %v4517
        %v4592 = vunpack.c.l.b16 %v4518
        %v4593 = vunpack.c.l.b16 %v4519
        %v4594 = vpack.c.b16 %v4558, %v4557
        %v4595 = vpack.c.b16 %v4560, %v4559
        %v4596 = vpack.c.b16 %v4562, %v4561
        %v4597 = vpack.c.b16 %v4564, %v4563
        %v4598 = vpack.c.b16 %v4566, %v4565
        %v4599 = vpack.c.b16 %v4568, %v4567
        %v4600 = vpack.c.b16 %v4570, %v4569
        %v4601 = vpack.c.b16 %v4572, %v4571
        %v4602 = vpack.c.b16 %v4574, %v4573
        %v4603 = vpack.c.b16 %v4576, %v4575
        %v4604 = vpack.c.b16 %v4578, %v4577
        %v4605 = vpack.c.b16 %v4580, %v4579
        %v4606 = vpack.c.b16 %v4582, %v4581
        %v4607 = vpack.c.b16 %v4584, %v4583
        %v4608 = vpack.c.b16 %v4586, %v4585
        %v4609 = vpack.c.b16 %v4588, %v4587
        %v4610 = vpack.c.b16 %v4590, %v4589
        %v4611 = vpack.c.b16 %v4592, %v4591
        %v4612 = vpack.c.b16 %v4593, %v4593
        %v4614 = vshrl.u32 %v4594, 16
        %v4616 = vrot.slane %v4614, 2
        %v4617 = vshll.u32 %v4594, 16
        %v4619 = vrot.slane %v4617, 3
        %v4620 = vor.u32 %v4616, %v4619
        %v4622 = vshrl.u32 %v4595, 16
        %v4624 = vrot.slane %v4622, 2
        %v4625 = vshll.u32 %v4595, 16
        %v4627 = vrot.slane %v4625, 3
        %v4628 = vor.u32 %v4624, %v4627
        %v4629 = vsel %vm2157, %v4620, %v4628
        %v4631 = vshrl.u32 %v4596, 16
        %v4633 = vrot.slane %v4631, 2
        %v4634 = vshll.u32 %v4596, 16
        %v4636 = vrot.slane %v4634, 3
        %v4637 = vor.u32 %v4633, %v4636
        %v4638 = vsel %vm2157, %v4628, %v4637
        %v4640 = vshrl.u32 %v4597, 16
        %v4642 = vrot.slane %v4640, 2
        %v4643 = vshll.u32 %v4597, 16
        %v4645 = vrot.slane %v4643, 3
        %v4646 = vor.u32 %v4642, %v4645
        %v4647 = vsel %vm2157, %v4637, %v4646
        %v4649 = vshrl.u32 %v4598, 16
        %v4651 = vrot.slane %v4649, 2
        %v4652 = vshll.u32 %v4598, 16
        %v4654 = vrot.slane %v4652, 3
        %v4655 = vor.u32 %v4651, %v4654
        %v4656 = vsel %vm2157, %v4646, %v4655
        %v4658 = vshrl.u32 %v4599, 16
        %v4660 = vrot.slane %v4658, 2
        %v4661 = vshll.u32 %v4599, 16
        %v4663 = vrot.slane %v4661, 3
        %v4664 = vor.u32 %v4660, %v4663
        %v4665 = vsel %vm2157, %v4655, %v4664
        %v4667 = vshrl.u32 %v4600, 16
        %v4669 = vrot.slane %v4667, 2
        %v4670 = vshll.u32 %v4600, 16
        %v4672 = vrot.slane %v4670, 3
        %v4673 = vor.u32 %v4669, %v4672
        %v4674 = vsel %vm2157, %v4664, %v4673
        %v4676 = vshrl.u32 %v4601, 16
        %v4678 = vrot.slane %v4676, 2
        %v4679 = vshll.u32 %v4601, 16
        %v4681 = vrot.slane %v4679, 3
        %v4682 = vor.u32 %v4678, %v4681
        %v4683 = vsel %vm2157, %v4673, %v4682
        %v4685 = vshrl.u32 %v4602, 16
        %v4687 = vrot.slane %v4685, 2
        %v4688 = vshll.u32 %v4602, 16
        %v4690 = vrot.slane %v4688, 3
        %v4691 = vor.u32 %v4687, %v4690
        %v4692 = vsel %vm2157, %v4682, %v4691
        %v4694 = vshrl.u32 %v4603, 16
        %v4696 = vrot.slane %v4694, 2
        %v4697 = vshll.u32 %v4603, 16
        %v4699 = vrot.slane %v4697, 3
        %v4700 = vor.u32 %v4696, %v4699
        %v4701 = vsel %vm2157, %v4691, %v4700
        %v4703 = vshrl.u32 %v4604, 16
        %v4705 = vrot.slane %v4703, 2
        %v4706 = vshll.u32 %v4604, 16
        %v4708 = vrot.slane %v4706, 3
        %v4709 = vor.u32 %v4705, %v4708
        %v4710 = vsel %vm2157, %v4700, %v4709
        %v4712 = vshrl.u32 %v4605, 16
        %v4714 = vrot.slane %v4712, 2
        %v4715 = vshll.u32 %v4605, 16
        %v4717 = vrot.slane %v4715, 3
        %v4718 = vor.u32 %v4714, %v4717
        %v4719 = vsel %vm2157, %v4709, %v4718
        %v4721 = vshrl.u32 %v4606, 16
        %v4723 = vrot.slane %v4721, 2
        %v4724 = vshll.u32 %v4606, 16
        %v4726 = vrot.slane %v4724, 3
        %v4727 = vor.u32 %v4723, %v4726
        %v4728 = vsel %vm2157, %v4718, %v4727
        %v4730 = vshrl.u32 %v4607, 16
        %v4732 = vrot.slane %v4730, 2
        %v4733 = vshll.u32 %v4607, 16
        %v4735 = vrot.slane %v4733, 3
        %v4736 = vor.u32 %v4732, %v4735
        %v4737 = vsel %vm2157, %v4727, %v4736
        %v4739 = vshrl.u32 %v4608, 16
        %v4741 = vrot.slane %v4739, 2
        %v4742 = vshll.u32 %v4608, 16
        %v4744 = vrot.slane %v4742, 3
        %v4745 = vor.u32 %v4741, %v4744
        %v4746 = vsel %vm2157, %v4736, %v4745
        %v4748 = vshrl.u32 %v4609, 16
        %v4750 = vrot.slane %v4748, 2
        %v4751 = vshll.u32 %v4609, 16
        %v4753 = vrot.slane %v4751, 3
        %v4754 = vor.u32 %v4750, %v4753
        %v4755 = vsel %vm2157, %v4745, %v4754
        %v4757 = vshrl.u32 %v4610, 16
        %v4759 = vrot.slane %v4757, 2
        %v4760 = vshll.u32 %v4610, 16
        %v4762 = vrot.slane %v4760, 3
        %v4763 = vor.u32 %v4759, %v4762
        %v4764 = vsel %vm2157, %v4754, %v4763
        %v4766 = vshrl.u32 %v4611, 16
        %v4768 = vrot.slane %v4766, 2
        %v4769 = vshll.u32 %v4611, 16
        %v4771 = vrot.slane %v4769, 3
        %v4772 = vor.u32 %v4768, %v4771
        %v4773 = vsel %vm2157, %v4763, %v4772
        %v4775 = vshrl.u32 %v4612, 16
        %v4777 = vrot.slane %v4775, 2
        %v4778 = vshll.u32 %v4612, 16
        %v4780 = vrot.slane %v4778, 3
        %v4781 = vor.u32 %v4777, %v4780
        %v4782 = vsel %vm2157, %v4772, %v4781
        %4783 = vrot.lane.b32.xlu0 %v4629, 28
        %v4784 = vpop.permute.xlu0 %4783
        %4785 = vrot.lane.b32.xlu0 %v4638, 28
        %v4786 = vpop.permute.xlu0 %4785
        %4787 = vrot.lane.b32.xlu0 %v4647, 28
        %v4788 = vpop.permute.xlu0 %4787
        %4789 = vrot.lane.b32.xlu0 %v4656, 28
        %v4790 = vpop.permute.xlu0 %4789
        %4791 = vrot.lane.b32.xlu0 %v4665, 28
        %v4792 = vpop.permute.xlu0 %4791
        %4793 = vrot.lane.b32.xlu0 %v4674, 28
        %v4794 = vpop.permute.xlu0 %4793
        %4795 = vrot.lane.b32.xlu0 %v4683, 28
        %v4796 = vpop.permute.xlu0 %4795
        %4797 = vrot.lane.b32.xlu0 %v4692, 28
        %v4798 = vpop.permute.xlu0 %4797
        %4799 = vrot.lane.b32.xlu0 %v4701, 28
        %v4800 = vpop.permute.xlu0 %4799
        %4801 = vrot.lane.b32.xlu0 %v4710, 28
        %v4802 = vpop.permute.xlu0 %4801
        %4803 = vrot.lane.b32.xlu0 %v4719, 28
        %v4804 = vpop.permute.xlu0 %4803
        %4805 = vrot.lane.b32.xlu0 %v4728, 28
        %v4806 = vpop.permute.xlu0 %4805
        %4807 = vrot.lane.b32.xlu0 %v4737, 28
        %v4808 = vpop.permute.xlu0 %4807
        %4809 = vrot.lane.b32.xlu0 %v4746, 28
        %v4810 = vpop.permute.xlu0 %4809
        %4811 = vrot.lane.b32.xlu0 %v4755, 28
        %v4812 = vpop.permute.xlu0 %4811
        %4813 = vrot.lane.b32.xlu0 %v4764, 28
        %v4814 = vpop.permute.xlu0 %4813
        %4815 = vrot.lane.b32.xlu0 %v4773, 28
        %v4816 = vpop.permute.xlu0 %4815
        %4817 = vrot.lane.b32.xlu0 %v4782, 28
        %v4818 = vpop.permute.xlu0 %4817
        %4837 = vst.msk [vmem:[#allocation2 + $0x90] sm:$0xff] %vm2382, %v4784
        %4838 = vst.msk [vmem:[#allocation2 + $0x98] sm:$0xff] %vm2382, %v4786
        %4839 = vst.msk [vmem:[#allocation2 + $0xa0] sm:$0xff] %vm2382, %v4788
        %4840 = vst.msk [vmem:[#allocation2 + $0xa8] sm:$0xff] %vm2382, %v4790
        %4841 = vst.msk [vmem:[#allocation2 + $0xb0] sm:$0xff] %vm2382, %v4792
        %4842 = vst.msk [vmem:[#allocation2 + $0xb8] sm:$0xff] %vm2382, %v4794
        %4843 = vst.msk [vmem:[#allocation2 + $0xc0] sm:$0xff] %vm2382, %v4796
        %4844 = vst.msk [vmem:[#allocation2 + $0xc8] sm:$0xff] %vm2382, %v4798
        %4845 = vst.msk [vmem:[#allocation2 + $0xd0] sm:$0xff] %vm2382, %v4800
        %4846 = vst.msk [vmem:[#allocation2 + $0xd8] sm:$0xff] %vm2382, %v4802
        %4847 = vst.msk [vmem:[#allocation2 + $0xe0] sm:$0xff] %vm2382, %v4804
        %4848 = vst.msk [vmem:[#allocation2 + $0xe8] sm:$0xff] %vm2382, %v4806
        %4849 = vst.msk [vmem:[#allocation2 + $0xf0] sm:$0xff] %vm2382, %v4808
        %4850 = vst.msk [vmem:[#allocation2 + $0xf8] sm:$0xff] %vm2382, %v4810
        %4851 = vst.msk [vmem:[#allocation2 + $0x100] sm:$0xff] %vm2382, %v4812
        %4852 = vst.msk [vmem:[#allocation2 + $0x108] sm:$0xff] %vm2382, %v4814
        %4853 = vst.msk [vmem:[#allocation2 + $0x110] sm:$0xff] %vm2382, %v4816
        %4854 = vst.msk [vmem:[#allocation2 + $0x118] sm:$0xff] %vm2382, %v4818
        %v4855 = vld [vmem:[%s2642 + $0x10] sm:$0x8]
        %v4856 = vld [vmem:[%s2642 + $0x14] sm:$0xf]
        %v4857 = vld [vmem:[%s2642 + $0x18] sm:$0xf]
        %v4858 = vld [vmem:[%s2642 + $0x1c] sm:$0xf]
        %v4859 = vld [vmem:[%s2642 + $0x20] sm:$0xf]
        %v4860 = vld [vmem:[%s2642 + $0x24] sm:$0xf]
        %v4861 = vld [vmem:[%s2642 + $0x28] sm:$0xf]
        %v4862 = vld [vmem:[%s2642 + $0x2c] sm:$0xf]
        %v4863 = vld [vmem:[%s2642 + $0x30] sm:$0xf]
        %v4864 = vld [vmem:[%s2642 + $0x34] sm:$0xf]
        %v4865 = vld [vmem:[%s2642 + $0x38] sm:$0xf]
        %v4866 = vld [vmem:[%s2642 + $0x3c] sm:$0xf]
        %v4867 = vld [vmem:[%s2642 + $0x40] sm:$0xf]
        %v4868 = vld [vmem:[%s2642 + $0x44] sm:$0xf]
        %v4869 = vld [vmem:[%s2642 + $0x48] sm:$0xf]
        %v4870 = vld [vmem:[%s2642 + $0x4c] sm:$0xf]
        %v4871 = vld [vmem:[%s2642 + $0x50] sm:$0xf]
        %v4872 = vld [vmem:[%s2642 + $0x54] sm:$0xf]
        %v4873 = vld [vmem:[%s2642 + $0x58] sm:$0xf]
        %v4874 = vld [vmem:[%s2642 + $0x5c] sm:$0xf]
        %v4875 = vld [vmem:[%s2642 + $0x60] sm:$0xf]
        %v4876 = vld [vmem:[%s2642 + $0x64] sm:$0xf]
        %v4877 = vld [vmem:[%s2642 + $0x68] sm:$0xf]
        %v4878 = vld [vmem:[%s2642 + $0x6c] sm:$0xf]
        %v4879 = vld [vmem:[%s2642 + $0x70] sm:$0xf]
        %v4880 = vld [vmem:[%s2642 + $0x74] sm:$0xf]
        %v4881 = vld [vmem:[%s2642 + $0x78] sm:$0xf]
        %v4882 = vld [vmem:[%s2642 + $0x7c] sm:$0xf]
        %v4883 = vld [vmem:[%s2642 + $0x80] sm:$0xf]
        %v4884 = vld [vmem:[%s2642 + $0x84] sm:$0xf]
        %v4885 = vld [vmem:[%s2642 + $0x88] sm:$0xf]
        %v4886 = vld [vmem:[%s2642 + $0x8c] sm:$0xf]
        %v4887 = vld [vmem:[%s2642 + $0x90] sm:$0xf]
        %v4888 = vld [vmem:[%s2642 + $0x94] sm:$0xf]
        %v4889 = vld [vmem:[%s2642 + $0x98] sm:$0xf]
        %v4890 = vld [vmem:[%s2642 + $0x9c] sm:$0xf]
        %v4891 = vld [vmem:[%s2642 + $0xa0] sm:$0x7]
        %v4929 = vunpack.c.l.b16 %v4855
        %v4930 = vunpack.c.l.b16 %v4856
        %v4931 = vunpack.c.l.b16 %v4857
        %v4932 = vunpack.c.l.b16 %v4858
        %v4933 = vunpack.c.l.b16 %v4859
        %v4934 = vunpack.c.l.b16 %v4860
        %v4935 = vunpack.c.l.b16 %v4861
        %v4936 = vunpack.c.l.b16 %v4862
        %v4937 = vunpack.c.l.b16 %v4863
        %v4938 = vunpack.c.l.b16 %v4864
        %v4939 = vunpack.c.l.b16 %v4865
        %v4940 = vunpack.c.l.b16 %v4866
        %v4941 = vunpack.c.l.b16 %v4867
        %v4942 = vunpack.c.l.b16 %v4868
        %v4943 = vunpack.c.l.b16 %v4869
        %v4944 = vunpack.c.l.b16 %v4870
        %v4945 = vunpack.c.l.b16 %v4871
        %v4946 = vunpack.c.l.b16 %v4872
        %v4947 = vunpack.c.l.b16 %v4873
        %v4948 = vunpack.c.l.b16 %v4874
        %v4949 = vunpack.c.l.b16 %v4875
        %v4950 = vunpack.c.l.b16 %v4876
        %v4951 = vunpack.c.l.b16 %v4877
        %v4952 = vunpack.c.l.b16 %v4878
        %v4953 = vunpack.c.l.b16 %v4879
        %v4954 = vunpack.c.l.b16 %v4880
        %v4955 = vunpack.c.l.b16 %v4881
        %v4956 = vunpack.c.l.b16 %v4882
        %v4957 = vunpack.c.l.b16 %v4883
        %v4958 = vunpack.c.l.b16 %v4884
        %v4959 = vunpack.c.l.b16 %v4885
        %v4960 = vunpack.c.l.b16 %v4886
        %v4961 = vunpack.c.l.b16 %v4887
        %v4962 = vunpack.c.l.b16 %v4888
        %v4963 = vunpack.c.l.b16 %v4889
        %v4964 = vunpack.c.l.b16 %v4890
        %v4965 = vunpack.c.l.b16 %v4891
        %v4966 = vpack.c.b16 %v4930, %v4929
        %v4967 = vpack.c.b16 %v4932, %v4931
        %v4968 = vpack.c.b16 %v4934, %v4933
        %v4969 = vpack.c.b16 %v4936, %v4935
        %v4970 = vpack.c.b16 %v4938, %v4937
        %v4971 = vpack.c.b16 %v4940, %v4939
        %v4972 = vpack.c.b16 %v4942, %v4941
        %v4973 = vpack.c.b16 %v4944, %v4943
        %v4974 = vpack.c.b16 %v4946, %v4945
        %v4975 = vpack.c.b16 %v4948, %v4947
        %v4976 = vpack.c.b16 %v4950, %v4949
        %v4977 = vpack.c.b16 %v4952, %v4951
        %v4978 = vpack.c.b16 %v4954, %v4953
        %v4979 = vpack.c.b16 %v4956, %v4955
        %v4980 = vpack.c.b16 %v4958, %v4957
        %v4981 = vpack.c.b16 %v4960, %v4959
        %v4982 = vpack.c.b16 %v4962, %v4961
        %v4983 = vpack.c.b16 %v4964, %v4963
        %v4984 = vpack.c.b16 %v4965, %v4965
        %v4985 = vrot.slane %v4966, 3
        %v4986 = vrot.slane %v4967, 3
        %v4987 = vsel %vm2531, %v4985, %v4986
        %v4988 = vrot.slane %v4968, 3
        %v4989 = vsel %vm2531, %v4986, %v4988
        %v4990 = vrot.slane %v4969, 3
        %v4991 = vsel %vm2531, %v4988, %v4990
        %v4992 = vrot.slane %v4970, 3
        %v4993 = vsel %vm2531, %v4990, %v4992
        %v4994 = vrot.slane %v4971, 3
        %v4995 = vsel %vm2531, %v4992, %v4994
        %v4996 = vrot.slane %v4972, 3
        %v4997 = vsel %vm2531, %v4994, %v4996
        %v4998 = vrot.slane %v4973, 3
        %v4999 = vsel %vm2531, %v4996, %v4998
        %v5000 = vrot.slane %v4974, 3
        %v5001 = vsel %vm2531, %v4998, %v5000
        %v5002 = vrot.slane %v4975, 3
        %v5003 = vsel %vm2531, %v5000, %v5002
        %v5004 = vrot.slane %v4976, 3
        %v5005 = vsel %vm2531, %v5002, %v5004
        %v5006 = vrot.slane %v4977, 3
        %v5007 = vsel %vm2531, %v5004, %v5006
        %v5008 = vrot.slane %v4978, 3
        %v5009 = vsel %vm2531, %v5006, %v5008
        %v5010 = vrot.slane %v4979, 3
        %v5011 = vsel %vm2531, %v5008, %v5010
        %v5012 = vrot.slane %v4980, 3
        %v5013 = vsel %vm2531, %v5010, %v5012
        %v5014 = vrot.slane %v4981, 3
        %v5015 = vsel %vm2531, %v5012, %v5014
        %v5016 = vrot.slane %v4982, 3
        %v5017 = vsel %vm2531, %v5014, %v5016
        %v5018 = vrot.slane %v4983, 3
        %v5019 = vsel %vm2531, %v5016, %v5018
        %v5020 = vrot.slane %v4984, 3
        %v5021 = vsel %vm2531, %v5018, %v5020
        %5022 = vrot.lane.b32.xlu0 %v4987, 32
        %v5023 = vpop.permute.xlu0 %5022
        %5024 = vrot.lane.b32.xlu0 %v4989, 32
        %v5025 = vpop.permute.xlu0 %5024
        %5026 = vrot.lane.b32.xlu0 %v4991, 32
        %v5027 = vpop.permute.xlu0 %5026
        %5028 = vrot.lane.b32.xlu0 %v4993, 32
        %v5029 = vpop.permute.xlu0 %5028
        %5030 = vrot.lane.b32.xlu0 %v4995, 32
        %v5031 = vpop.permute.xlu0 %5030
        %5032 = vrot.lane.b32.xlu0 %v4997, 32
        %v5033 = vpop.permute.xlu0 %5032
        %5034 = vrot.lane.b32.xlu0 %v4999, 32
        %v5035 = vpop.permute.xlu0 %5034
        %5036 = vrot.lane.b32.xlu0 %v5001, 32
        %v5037 = vpop.permute.xlu0 %5036
        %5038 = vrot.lane.b32.xlu0 %v5003, 32
        %v5039 = vpop.permute.xlu0 %5038
        %5040 = vrot.lane.b32.xlu0 %v5005, 32
        %v5041 = vpop.permute.xlu0 %5040
        %5042 = vrot.lane.b32.xlu0 %v5007, 32
        %v5043 = vpop.permute.xlu0 %5042
        %5044 = vrot.lane.b32.xlu0 %v5009, 32
        %v5045 = vpop.permute.xlu0 %5044
        %5046 = vrot.lane.b32.xlu0 %v5011, 32
        %v5047 = vpop.permute.xlu0 %5046
        %5048 = vrot.lane.b32.xlu0 %v5013, 32
        %v5049 = vpop.permute.xlu0 %5048
        %5050 = vrot.lane.b32.xlu0 %v5015, 32
        %v5051 = vpop.permute.xlu0 %5050
        %5052 = vrot.lane.b32.xlu0 %v5017, 32
        %v5053 = vpop.permute.xlu0 %5052
        %5054 = vrot.lane.b32.xlu0 %v5019, 32
        %v5055 = vpop.permute.xlu0 %5054
        %5056 = vrot.lane.b32.xlu0 %v5021, 32
        %v5057 = vpop.permute.xlu0 %5056
        %5076 = vst.msk [vmem:[#allocation2 + $0x90] sm:$0xff] %vm2623, %v5023
        %5077 = vst.msk [vmem:[#allocation2 + $0x98] sm:$0xff] %vm2623, %v5025
        %5078 = vst.msk [vmem:[#allocation2 + $0xa0] sm:$0xff] %vm2623, %v5027
        %5079 = vst.msk [vmem:[#allocation2 + $0xa8] sm:$0xff] %vm2623, %v5029
        %5080 = vst.msk [vmem:[#allocation2 + $0xb0] sm:$0xff] %vm2623, %v5031
        %5081 = vst.msk [vmem:[#allocation2 + $0xb8] sm:$0xff] %vm2623, %v5033
        %5082 = vst.msk [vmem:[#allocation2 + $0xc0] sm:$0xff] %vm2623, %v5035
        %5083 = vst.msk [vmem:[#allocation2 + $0xc8] sm:$0xff] %vm2623, %v5037
        %5084 = vst.msk [vmem:[#allocation2 + $0xd0] sm:$0xff] %vm2623, %v5039
        %5085 = vst.msk [vmem:[#allocation2 + $0xd8] sm:$0xff] %vm2623, %v5041
        %5086 = vst.msk [vmem:[#allocation2 + $0xe0] sm:$0xff] %vm2623, %v5043
        %5087 = vst.msk [vmem:[#allocation2 + $0xe8] sm:$0xff] %vm2623, %v5045
        %5088 = vst.msk [vmem:[#allocation2 + $0xf0] sm:$0xff] %vm2623, %v5047
        %5089 = vst.msk [vmem:[#allocation2 + $0xf8] sm:$0xff] %vm2623, %v5049
        %5090 = vst.msk [vmem:[#allocation2 + $0x100] sm:$0xff] %vm2623, %v5051
        %5091 = vst.msk [vmem:[#allocation2 + $0x108] sm:$0xff] %vm2623, %v5053
        %5092 = vst.msk [vmem:[#allocation2 + $0x110] sm:$0xff] %vm2623, %v5055
        %5093 = vst.msk [vmem:[#allocation2 + $0x118] sm:$0xff] %vm2623, %v5057
        %v5094 = vld [vmem:[#allocation2] sm:$0xff]
        %v5095 = vld [vmem:[#allocation2 + $0x8] sm:$0xff]
        %v5096 = vld [vmem:[#allocation2 + $0x10] sm:$0xff]
        %v5097 = vld [vmem:[#allocation2 + $0x18] sm:$0xff]
        %v5098 = vld [vmem:[#allocation2 + $0x20] sm:$0xff]
        %v5099 = vld [vmem:[#allocation2 + $0x28] sm:$0xff]
        %v5100 = vld [vmem:[#allocation2 + $0x30] sm:$0xff]
        %v5101 = vld [vmem:[#allocation2 + $0x38] sm:$0xff]
        %v5102 = vld [vmem:[#allocation2 + $0x40] sm:$0xff]
        %v5103 = vld [vmem:[#allocation2 + $0x48] sm:$0xff]
        %v5104 = vld [vmem:[#allocation2 + $0x50] sm:$0xff]
        %v5105 = vld [vmem:[#allocation2 + $0x58] sm:$0xff]
        %v5106 = vld [vmem:[#allocation2 + $0x60] sm:$0xff]
        %v5107 = vld [vmem:[#allocation2 + $0x68] sm:$0xff]
        %v5108 = vld [vmem:[#allocation2 + $0x70] sm:$0xff]
        %v5109 = vld [vmem:[#allocation2 + $0x78] sm:$0xff]
        %v5110 = vld [vmem:[#allocation2 + $0x80] sm:$0xff]
        %v5111 = vld [vmem:[#allocation2 + $0x88] sm:$0xff]
        %v5112 = vld [vmem:[#allocation2 + $0x90] sm:$0xff]
        %v5113 = vld [vmem:[#allocation2 + $0x98] sm:$0xff]
        %v5114 = vld [vmem:[#allocation2 + $0xa0] sm:$0xff]
        %v5115 = vld [vmem:[#allocation2 + $0xa8] sm:$0xff]
        %v5116 = vld [vmem:[#allocation2 + $0xb0] sm:$0xff]
        %v5117 = vld [vmem:[#allocation2 + $0xb8] sm:$0xff]
        %v5118 = vld [vmem:[#allocation2 + $0xc0] sm:$0xff]
        %v5119 = vld [vmem:[#allocation2 + $0xc8] sm:$0xff]
        %v5120 = vld [vmem:[#allocation2 + $0xd0] sm:$0xff]
        %v5121 = vld [vmem:[#allocation2 + $0xd8] sm:$0xff]
        %v5122 = vld [vmem:[#allocation2 + $0xe0] sm:$0xff]
        %v5123 = vld [vmem:[#allocation2 + $0xe8] sm:$0xff]
        %v5124 = vld [vmem:[#allocation2 + $0xf0] sm:$0xff]
        %v5125 = vld [vmem:[#allocation2 + $0xf8] sm:$0xff]
        %v5126 = vld [vmem:[#allocation2 + $0x100] sm:$0xff]
        %v5127 = vld [vmem:[#allocation2 + $0x108] sm:$0xff]
        %v5128 = vld [vmem:[#allocation2 + $0x110] sm:$0xff]
        %v5129 = vld [vmem:[#allocation2 + $0x118] sm:$0xff]
        %v5130 = vld [vmem:[%s1] sm:$0xf]
        %v5131 = vld [vmem:[%s1 + $0x4] sm:$0xf]
        %v5132 = vld [vmem:[%s1 + $0x8] sm:$0xf]
        %v5133 = vld [vmem:[%s1 + $0xc] sm:$0xf]
        %v5134 = vld [vmem:[%s1 + $0x10] sm:$0x3]
        %v5140 = vunpack.c.l.b16 %v5130
        %v5141 = vunpack.c.l.b16 %v5131
        %v5142 = vunpack.c.l.b16 %v5132
        %v5143 = vunpack.c.l.b16 %v5133
        %v5144 = vunpack.c.l.b16 %v5134
        %v5145 = vpack.c.b16 %v5141, %v5140
        %v5146 = vpack.c.b16 %v5143, %v5142
        %v5147 = vpack.c.b16 %v5144, %v5144
        %vm5150 = vcmask 293888
        %v5152 = vsel %vm5150, %v5094, 0
        %v5155 = vsel %vm5150, %v5095, 0
        %v5158 = vsel %vm5150, %v5096, 0
        %v5161 = vsel %vm5150, %v5097, 0
        %v5164 = vsel %vm5150, %v5098, 0
        %v5167 = vsel %vm5150, %v5099, 0
        %v5170 = vsel %vm5150, %v5100, 0
        %v5173 = vsel %vm5150, %v5101, 0
        %v5176 = vsel %vm5150, %v5102, 0
        %v5179 = vsel %vm5150, %v5103, 0
        %v5182 = vsel %vm5150, %v5104, 0
        %v5185 = vsel %vm5150, %v5105, 0
        %v5188 = vsel %vm5150, %v5106, 0
        %v5191 = vsel %vm5150, %v5107, 0
        %v5194 = vsel %vm5150, %v5108, 0
        %v5197 = vsel %vm5150, %v5109, 0
        %v5200 = vsel %vm5150, %v5110, 0
        %v5203 = vsel %vm5150, %v5111, 0
        %v5206 = vsel %vm5150, %v5112, 0
        %v5209 = vsel %vm5150, %v5113, 0
        %v5212 = vsel %vm5150, %v5114, 0
        %v5215 = vsel %vm5150, %v5115, 0
        %v5218 = vsel %vm5150, %v5116, 0
        %v5221 = vsel %vm5150, %v5117, 0
        %v5224 = vsel %vm5150, %v5118, 0
        %v5227 = vsel %vm5150, %v5119, 0
        %v5230 = vsel %vm5150, %v5120, 0
        %v5233 = vsel %vm5150, %v5121, 0
        %v5236 = vsel %vm5150, %v5122, 0
        %v5239 = vsel %vm5150, %v5123, 0
        %v5242 = vsel %vm5150, %v5124, 0
        %v5245 = vsel %vm5150, %v5125, 0
        %v5248 = vsel %vm5150, %v5126, 0
        %v5251 = vsel %vm5150, %v5127, 0
        %v5254 = vsel %vm5150, %v5128, 0
        %v5257 = vsel %vm5150, %v5129, 0
        %vm5259 = vcmask 1041408
        %v5261 = vsel %vm5259, %v5147, 0
        %5263 = vmatprep.subr.bf16.mxu0 0
        %5264 = vmatpush1.bf16.msra.mxu0 %v5145
        %5265 = vmatprep.subr.bf16.mxu0 0
        %5266 = vmatpush1.bf16.msra.mxu0 %v5146
        %5267 = vmatprep.subr.bf16.mxu0 0
        %5268 = vmatpush1.bf16.msra.mxu0 %v5261
        %5269 = vmatprep.subr.bf16.mxu0 0
        %5270 = vmatpush1.bf16.msra.mxu0 0
        %5271 = vmatprep.subr.bf16.mxu0 0
        %5272 = vmatpush1.bf16.msra.mxu0 0
        %5273 = vmatprep.subr.bf16.mxu0 0
        %5274 = vmatpush1.bf16.msra.mxu0 0
        %5275 = vmatprep.subr.bf16.mxu0 0
        %5276 = vmatpush1.bf16.msra.mxu0 0
        %5277 = vmatprep.subr.bf16.mxu0 0
        %5278 = vmatpush1.bf16.msra.mxu0 0
        %5279 = vmatprep.subr.bf16.mxu0 0
        %5280 = vmatpush1.bf16.msra.mxu0 0
        %5281 = vmatprep.subr.bf16.mxu0 0
        %5282 = vmatpush1.bf16.msra.mxu0 0
        %5283 = vmatprep.subr.bf16.mxu0 0
        %5284 = vmatpush1.bf16.msra.mxu0 0
        %5285 = vmatprep.subr.bf16.mxu0 0
        %5286 = vmatpush1.bf16.msra.mxu0 0
        %5287 = vmatprep.subr.bf16.mxu0 0
        %5288 = vmatpush1.bf16.msra.mxu0 0
        %5289 = vmatprep.subr.bf16.mxu0 0
        %5290 = vmatpush1.bf16.msra.mxu0 0
        %5291 = vmatprep.subr.bf16.mxu0 0
        %5292 = vmatpush1.bf16.msra.mxu0 0
        %5293 = vmatprep.subr.bf16.mxu0 0
        %5294 = vmatpush1.bf16.msra.mxu0 0
        %5295 = vmatprep.mubr.bf16.mxu0 0
        %5296 = vmatmul.mubr.bf16.gmra.mrb[0].mxu0 %v5152
        %v5297 = vpop.f32.mrb[0].mxu0
        %v5298 = vadd.f32 0.0, %v5297
        %v5299 = vpop.f32.mrb[0].mxu0
        %v5300 = vpop.f32.mrb[0].mxu0
        %v5301 = vadd.f32 0.0, %v5300
        %v5302 = vpop.f32.mrb[0].mxu0
        %5303 = vmatprep.mubr.bf16.mxu0 0
        %5304 = vmatmul.mubr.bf16.gmra.mrb[0].mxu0 %v5155
        %v5305 = vpop.f32.mrb[0].mxu0
        %v5306 = vadd.f32 0.0, %v5305
        %v5307 = vpop.f32.mrb[0].mxu0
        %v5308 = vpop.f32.mrb[0].mxu0
        %v5309 = vadd.f32 0.0, %v5308
        %v5310 = vpop.f32.mrb[0].mxu0
        %5311 = vmatprep.mubr.bf16.mxu0 0
        %5312 = vmatmul.mubr.bf16.gmra.mrb[0].mxu0 %v5158
        %v5313 = vpop.f32.mrb[0].mxu0
        %v5314 = vadd.f32 0.0, %v5313
        %v5315 = vpop.f32.mrb[0].mxu0
        %v5316 = vpop.f32.mrb[0].mxu0
        %v5317 = vadd.f32 0.0, %v5316
        %v5318 = vpop.f32.mrb[0].mxu0
        %5319 = vmatprep.mubr.bf16.mxu0 0
        %5320 = vmatmul.mubr.bf16.gmra.mrb[0].mxu0 %v5161
        %v5321 = vpop.f32.mrb[0].mxu0
        %v5322 = vadd.f32 0.0, %v5321
        %v5323 = vpop.f32.mrb[0].mxu0
        %v5324 = vpop.f32.mrb[0].mxu0
        %v5325 = vadd.f32 0.0, %v5324
        %v5326 = vpop.f32.mrb[0].mxu0
        %5327 = vmatprep.mubr.bf16.mxu0 0
        %5328 = vmatmul.mubr.bf16.gmra.mrb[0].mxu0 %v5164
        %v5329 = vpop.f32.mrb[0].mxu0
        %v5330 = vadd.f32 0.0, %v5329
        %v5331 = vpop.f32.mrb[0].mxu0
        %v5332 = vpop.f32.mrb[0].mxu0
        %v5333 = vadd.f32 0.0, %v5332
        %v5334 = vpop.f32.mrb[0].mxu0
        %5335 = vmatprep.mubr.bf16.mxu0 0
        %5336 = vmatmul.mubr.bf16.gmra.mrb[0].mxu0 %v5167
        %v5337 = vpop.f32.mrb[0].mxu0
        %v5338 = vadd.f32 0.0, %v5337
        %v5339 = vpop.f32.mrb[0].mxu0
        %v5340 = vpop.f32.mrb[0].mxu0
        %v5341 = vadd.f32 0.0, %v5340
        %v5342 = vpop.f32.mrb[0].mxu0
        %5343 = vmatprep.mubr.bf16.mxu0 0
        %5344 = vmatmul.mubr.bf16.gmra.mrb[0].mxu0 %v5170
        %v5345 = vpop.f32.mrb[0].mxu0
        %v5346 = vadd.f32 0.0, %v5345
        %v5347 = vpop.f32.mrb[0].mxu0
        %v5348 = vpop.f32.mrb[0].mxu0
        %v5349 = vadd.f32 0.0, %v5348
        %v5350 = vpop.f32.mrb[0].mxu0
        %5351 = vmatprep.mubr.bf16.mxu0 0
        %5352 = vmatmul.mubr.bf16.gmra.mrb[0].mxu0 %v5173
        %v5353 = vpop.f32.mrb[0].mxu0
        %v5354 = vadd.f32 0.0, %v5353
        %v5355 = vpop.f32.mrb[0].mxu0
        %v5356 = vpop.f32.mrb[0].mxu0
        %v5357 = vadd.f32 0.0, %v5356
        %v5358 = vpop.f32.mrb[0].mxu0
        %5359 = vmatprep.mubr.bf16.mxu0 0
        %5360 = vmatmul.mubr.bf16.gmra.mrb[0].mxu0 %v5176
        %v5361 = vpop.f32.mrb[0].mxu0
        %v5362 = vadd.f32 0.0, %v5361
        %v5363 = vpop.f32.mrb[0].mxu0
        %v5364 = vpop.f32.mrb[0].mxu0
        %v5365 = vadd.f32 0.0, %v5364
        %v5366 = vpop.f32.mrb[0].mxu0
        %5367 = vmatprep.mubr.bf16.mxu0 0
        %5368 = vmatmul.mubr.bf16.gmra.mrb[0].mxu0 %v5179
        %v5369 = vpop.f32.mrb[0].mxu0
        %v5370 = vadd.f32 0.0, %v5369
        %v5371 = vpop.f32.mrb[0].mxu0
        %v5372 = vpop.f32.mrb[0].mxu0
        %v5373 = vadd.f32 0.0, %v5372
        %v5374 = vpop.f32.mrb[0].mxu0
        %5375 = vmatprep.mubr.bf16.mxu0 0
        %5376 = vmatmul.mubr.bf16.gmra.mrb[0].mxu0 %v5182
        %v5377 = vpop.f32.mrb[0].mxu0
        %v5378 = vadd.f32 0.0, %v5377
        %v5379 = vpop.f32.mrb[0].mxu0
        %v5380 = vpop.f32.mrb[0].mxu0
        %v5381 = vadd.f32 0.0, %v5380
        %v5382 = vpop.f32.mrb[0].mxu0
        %5383 = vmatprep.mubr.bf16.mxu0 0
        %5384 = vmatmul.mubr.bf16.gmra.mrb[0].mxu0 %v5185
        %v5385 = vpop.f32.mrb[0].mxu0
        %v5386 = vadd.f32 0.0, %v5385
        %v5387 = vpop.f32.mrb[0].mxu0
        %v5388 = vpop.f32.mrb[0].mxu0
        %v5389 = vadd.f32 0.0, %v5388
        %v5390 = vpop.f32.mrb[0].mxu0
        %5391 = vmatprep.mubr.bf16.mxu0 0
        %5392 = vmatmul.mubr.bf16.gmra.mrb[0].mxu0 %v5188
        %v5393 = vpop.f32.mrb[0].mxu0
        %v5394 = vadd.f32 0.0, %v5393
        %v5395 = vpop.f32.mrb[0].mxu0
        %v5396 = vpop.f32.mrb[0].mxu0
        %v5397 = vadd.f32 0.0, %v5396
        %v5398 = vpop.f32.mrb[0].mxu0
        %5399 = vmatprep.mubr.bf16.mxu0 0
        %5400 = vmatmul.mubr.bf16.gmra.mrb[0].mxu0 %v5191
        %v5401 = vpop.f32.mrb[0].mxu0
        %v5402 = vadd.f32 0.0, %v5401
        %v5403 = vpop.f32.mrb[0].mxu0
        %v5404 = vpop.f32.mrb[0].mxu0
        %v5405 = vadd.f32 0.0, %v5404
        %v5406 = vpop.f32.mrb[0].mxu0
        %5407 = vmatprep.mubr.bf16.mxu0 0
        %5408 = vmatmul.mubr.bf16.gmra.mrb[0].mxu0 %v5194
        %v5409 = vpop.f32.mrb[0].mxu0
        %v5410 = vadd.f32 0.0, %v5409
        %v5411 = vpop.f32.mrb[0].mxu0
        %v5412 = vpop.f32.mrb[0].mxu0
        %v5413 = vadd.f32 0.0, %v5412
        %v5414 = vpop.f32.mrb[0].mxu0
        %5415 = vmatprep.mubr.bf16.mxu0 0
        %5416 = vmatmul.mubr.bf16.gmra.mrb[0].mxu0 %v5197
        %v5417 = vpop.f32.mrb[0].mxu0
        %v5418 = vadd.f32 0.0, %v5417
        %v5419 = vpop.f32.mrb[0].mxu0
        %v5420 = vpop.f32.mrb[0].mxu0
        %v5421 = vadd.f32 0.0, %v5420
        %v5422 = vpop.f32.mrb[0].mxu0
        %5423 = vmatprep.mubr.bf16.mxu0 0
        %5424 = vmatmul.mubr.bf16.gmra.mrb[0].mxu0 %v5200
        %v5425 = vpop.f32.mrb[0].mxu0
        %v5426 = vadd.f32 0.0, %v5425
        %v5427 = vpop.f32.mrb[0].mxu0
        %v5428 = vpop.f32.mrb[0].mxu0
        %v5429 = vadd.f32 0.0, %v5428
        %v5430 = vpop.f32.mrb[0].mxu0
        %5431 = vmatprep.mubr.bf16.mxu0 0
        %5432 = vmatmul.mubr.bf16.gmra.mrb[0].mxu0 %v5203
        %v5433 = vpop.f32.mrb[0].mxu0
        %v5434 = vadd.f32 0.0, %v5433
        %v5435 = vpop.f32.mrb[0].mxu0
        %v5436 = vpop.f32.mrb[0].mxu0
        %v5437 = vadd.f32 0.0, %v5436
        %v5438 = vpop.f32.mrb[0].mxu0
        %5439 = vmatprep.mubr.bf16.mxu0 0
        %5440 = vmatmul.mubr.bf16.gmra.mrb[0].mxu0 %v5206
        %v5441 = vpop.f32.mrb[0].mxu0
        %v5442 = vadd.f32 0.0, %v5441
        %v5443 = vpop.f32.mrb[0].mxu0
        %v5444 = vpop.f32.mrb[0].mxu0
        %v5445 = vadd.f32 0.0, %v5444
        %v5446 = vpop.f32.mrb[0].mxu0
        %5447 = vmatprep.mubr.bf16.mxu0 0
        %5448 = vmatmul.mubr.bf16.gmra.mrb[0].mxu0 %v5209
        %v5449 = vpop.f32.mrb[0].mxu0
        %v5450 = vadd.f32 0.0, %v5449
        %v5451 = vpop.f32.mrb[0].mxu0
        %v5452 = vpop.f32.mrb[0].mxu0
        %v5453 = vadd.f32 0.0, %v5452
        %v5454 = vpop.f32.mrb[0].mxu0
        %5455 = vmatprep.mubr.bf16.mxu0 0
        %5456 = vmatmul.mubr.bf16.gmra.mrb[0].mxu0 %v5212
        %v5457 = vpop.f32.mrb[0].mxu0
        %v5458 = vadd.f32 0.0, %v5457
        %v5459 = vpop.f32.mrb[0].mxu0
        %v5460 = vpop.f32.mrb[0].mxu0
        %v5461 = vadd.f32 0.0, %v5460
        %v5462 = vpop.f32.mrb[0].mxu0
        %5463 = vmatprep.mubr.bf16.mxu0 0
        %5464 = vmatmul.mubr.bf16.gmra.mrb[0].mxu0 %v5215
        %v5465 = vpop.f32.mrb[0].mxu0
        %v5466 = vadd.f32 0.0, %v5465
        %v5467 = vpop.f32.mrb[0].mxu0
        %v5468 = vpop.f32.mrb[0].mxu0
        %v5469 = vadd.f32 0.0, %v5468
        %v5470 = vpop.f32.mrb[0].mxu0
        %5471 = vmatprep.mubr.bf16.mxu0 0
        %5472 = vmatmul.mubr.bf16.gmra.mrb[0].mxu0 %v5218
        %v5473 = vpop.f32.mrb[0].mxu0
        %v5474 = vadd.f32 0.0, %v5473
        %v5475 = vpop.f32.mrb[0].mxu0
        %v5476 = vpop.f32.mrb[0].mxu0
        %v5477 = vadd.f32 0.0, %v5476
        %v5478 = vpop.f32.mrb[0].mxu0
        %5479 = vmatprep.mubr.bf16.mxu0 0
        %5480 = vmatmul.mubr.bf16.gmra.mrb[0].mxu0 %v5221
        %v5481 = vpop.f32.mrb[0].mxu0
        %v5482 = vadd.f32 0.0, %v5481
        %v5483 = vpop.f32.mrb[0].mxu0
        %v5484 = vpop.f32.mrb[0].mxu0
        %v5485 = vadd.f32 0.0, %v5484
        %v5486 = vpop.f32.mrb[0].mxu0
        %5487 = vmatprep.mubr.bf16.mxu0 0
        %5488 = vmatmul.mubr.bf16.gmra.mrb[0].mxu0 %v5224
        %v5489 = vpop.f32.mrb[0].mxu0
        %v5490 = vadd.f32 0.0, %v5489
        %v5491 = vpop.f32.mrb[0].mxu0
        %v5492 = vpop.f32.mrb[0].mxu0
        %v5493 = vadd.f32 0.0, %v5492
        %v5494 = vpop.f32.mrb[0].mxu0
        %5495 = vmatprep.mubr.bf16.mxu0 0
        %5496 = vmatmul.mubr.bf16.gmra.mrb[0].mxu0 %v5227
        %v5497 = vpop.f32.mrb[0].mxu0
        %v5498 = vadd.f32 0.0, %v5497
        %v5499 = vpop.f32.mrb[0].mxu0
        %v5500 = vpop.f32.mrb[0].mxu0
        %v5501 = vadd.f32 0.0, %v5500
        %v5502 = vpop.f32.mrb[0].mxu0
        %5503 = vmatprep.mubr.bf16.mxu0 0
        %5504 = vmatmul.mubr.bf16.gmra.mrb[0].mxu0 %v5230
        %v5505 = vpop.f32.mrb[0].mxu0
        %v5506 = vadd.f32 0.0, %v5505
        %v5507 = vpop.f32.mrb[0].mxu0
        %v5508 = vpop.f32.mrb[0].mxu0
        %v5509 = vadd.f32 0.0, %v5508
        %v5510 = vpop.f32.mrb[0].mxu0
        %5511 = vmatprep.mubr.bf16.mxu0 0
        %5512 = vmatmul.mubr.bf16.gmra.mrb[0].mxu0 %v5233
        %v5513 = vpop.f32.mrb[0].mxu0
        %v5514 = vadd.f32 0.0, %v5513
        %v5515 = vpop.f32.mrb[0].mxu0
        %v5516 = vpop.f32.mrb[0].mxu0
        %v5517 = vadd.f32 0.0, %v5516
        %v5518 = vpop.f32.mrb[0].mxu0
        %5519 = vmatprep.mubr.bf16.mxu0 0
        %5520 = vmatmul.mubr.bf16.gmra.mrb[0].mxu0 %v5236
        %v5521 = vpop.f32.mrb[0].mxu0
        %v5522 = vadd.f32 0.0, %v5521
        %v5523 = vpop.f32.mrb[0].mxu0
        %v5524 = vpop.f32.mrb[0].mxu0
        %v5525 = vadd.f32 0.0, %v5524
        %v5526 = vpop.f32.mrb[0].mxu0
        %5527 = vmatprep.mubr.bf16.mxu0 0
        %5528 = vmatmul.mubr.bf16.gmra.mrb[0].mxu0 %v5239
        %v5529 = vpop.f32.mrb[0].mxu0
        %v5530 = vadd.f32 0.0, %v5529
        %v5531 = vpop.f32.mrb[0].mxu0
        %v5532 = vpop.f32.mrb[0].mxu0
        %v5533 = vadd.f32 0.0, %v5532
        %v5534 = vpop.f32.mrb[0].mxu0
        %5535 = vmatprep.mubr.bf16.mxu0 0
        %5536 = vmatmul.mubr.bf16.gmra.mrb[0].mxu0 %v5242
        %v5537 = vpop.f32.mrb[0].mxu0
        %v5538 = vadd.f32 0.0, %v5537
        %v5539 = vpop.f32.mrb[0].mxu0
        %v5540 = vpop.f32.mrb[0].mxu0
        %v5541 = vadd.f32 0.0, %v5540
        %v5542 = vpop.f32.mrb[0].mxu0
        %5543 = vmatprep.mubr.bf16.mxu0 0
        %5544 = vmatmul.mubr.bf16.gmra.mrb[0].mxu0 %v5245
        %v5545 = vpop.f32.mrb[0].mxu0
        %v5546 = vadd.f32 0.0, %v5545
        %v5547 = vpop.f32.mrb[0].mxu0
        %v5548 = vpop.f32.mrb[0].mxu0
        %v5549 = vadd.f32 0.0, %v5548
        %v5550 = vpop.f32.mrb[0].mxu0
        %5551 = vmatprep.mubr.bf16.mxu0 0
        %5552 = vmatmul.mubr.bf16.gmra.mrb[0].mxu0 %v5248
        %v5553 = vpop.f32.mrb[0].mxu0
        %v5554 = vadd.f32 0.0, %v5553
        %v5555 = vpop.f32.mrb[0].mxu0
        %v5556 = vpop.f32.mrb[0].mxu0
        %v5557 = vadd.f32 0.0, %v5556
        %v5558 = vpop.f32.mrb[0].mxu0
        %5559 = vmatprep.mubr.bf16.mxu0 0
        %5560 = vmatmul.mubr.bf16.gmra.mrb[0].mxu0 %v5251
        %v5561 = vpop.f32.mrb[0].mxu0
        %v5562 = vadd.f32 0.0, %v5561
        %v5563 = vpop.f32.mrb[0].mxu0
        %v5564 = vpop.f32.mrb[0].mxu0
        %v5565 = vadd.f32 0.0, %v5564
        %v5566 = vpop.f32.mrb[0].mxu0
        %5567 = vmatprep.mubr.bf16.mxu0 0
        %5568 = vmatmul.mubr.bf16.gmra.mrb[0].mxu0 %v5254
        %v5569 = vpop.f32.mrb[0].mxu0
        %v5570 = vadd.f32 0.0, %v5569
        %v5571 = vpop.f32.mrb[0].mxu0
        %v5572 = vpop.f32.mrb[0].mxu0
        %v5573 = vadd.f32 0.0, %v5572
        %v5574 = vpop.f32.mrb[0].mxu0
        %5575 = vmatprep.mubr.bf16.mxu0 0
        %5576 = vmatmul.mubr.bf16.gmra.mrb[0].mxu0 %v5257
        %v5577 = vpop.f32.mrb[0].mxu0
        %v5578 = vadd.f32 0.0, %v5577
        %v5579 = vpop.f32.mrb[0].mxu0
        %v5580 = vpop.f32.mrb[0].mxu0
        %v5581 = vadd.f32 0.0, %v5580
        %v5582 = vpop.f32.mrb[0].mxu0
        %5583 = vdwg.mxu0
        %v5584 = vlaneseq
        %v5585 = vshrl.u32 %v5584, 7
        %v5586 = vadd.s32 %v5585, 8
        %v5587 = vadd.s32 %v5585, 16
        %v5588 = vadd.s32 %v5585, 24
        %v5589 = vadd.s32 %v5585, 32
        %v5590 = vadd.s32 %v5585, 40
        %v5591 = vadd.s32 %v5585, 48
        %v5592 = vadd.s32 %v5585, 56
        %v5593 = vadd.s32 %v5585, 64
        %v5594 = vadd.s32 %v5585, 72
        %v5595 = vadd.s32 %v5585, 80
        %v5596 = vadd.s32 %v5585, 88
        %v5597 = vadd.s32 %v5585, 96
        %v5598 = vadd.s32 %v5585, 104
        %v5599 = vadd.s32 %v5585, 112
        %v5600 = vadd.s32 %v5585, 120
        %v5601 = vadd.s32 %v5585, 128
        %v5602 = vadd.s32 %v5585, 136
        %v5603 = vadd.s32 %v5585, 144
        %v5604 = vadd.s32 %v5585, 152
        %v5605 = vadd.s32 %v5585, 160
        %v5606 = vadd.s32 %v5585, 168
        %v5607 = vadd.s32 %v5585, 176
        %v5608 = vadd.s32 %v5585, 184
        %v5609 = vadd.s32 %v5585, 192
        %v5610 = vadd.s32 %v5585, 200
        %v5611 = vadd.s32 %v5585, 208
        %v5612 = vadd.s32 %v5585, 216
        %v5613 = vadd.s32 %v5585, 224
        %v5614 = vadd.s32 %v5585, 232
        %v5615 = vadd.s32 %v5585, 240
        %v5616 = vadd.s32 %v5585, 248
        %v5617 = vadd.s32 %v5585, 256
        %v5618 = vadd.s32 %v5585, 264
        %v5619 = vadd.s32 %v5585, 272
        %v5620 = vadd.s32 %v5585, 280
        %v5621 = vadd.s32 %v5585, 288
        %v5622 = vadd.s32 %v5585, 296
        %v5623 = vadd.s32 %v5585, 304
        %v5624 = vadd.s32 %v5585, 312
        %v5625 = vadd.s32 %v5585, 320
        %v5626 = vadd.s32 %v5585, 328
        %v5627 = vadd.s32 %v5585, 336
        %v5628 = vadd.s32 %v5585, 344
        %v5629 = vadd.s32 %v5585, 352
        %v5630 = vadd.s32 %v5585, 360
        %v5631 = vadd.s32 %v5585, 368
        %v5632 = vadd.s32 %v5585, 376
        %v5633 = vadd.s32 %v5585, 384
        %v5634 = vadd.s32 %v5585, 392
        %v5635 = vadd.s32 %v5585, 400
        %v5636 = vadd.s32 %v5585, 408
        %v5637 = vadd.s32 %v5585, 416
        %v5638 = vadd.s32 %v5585, 424
        %v5639 = vadd.s32 %v5585, 432
        %v5640 = vadd.s32 %v5585, 440
        %v5641 = vadd.s32 %v5585, 448
        %v5642 = vadd.s32 %v5585, 456
        %v5643 = vadd.s32 %v5585, 464
        %v5644 = vadd.s32 %v5585, 472
        %v5645 = vadd.s32 %v5585, 480
        %v5646 = vadd.s32 %v5585, 488
        %v5647 = vadd.s32 %v5585, 496
        %v5648 = vadd.s32 %v5585, 504
        %v5649 = vadd.s32 %v5585, 512
        %v5650 = vadd.s32 %v5585, 520
        %v5651 = vadd.s32 %v5585, 528
        %v5652 = vadd.s32 %v5585, 536
        %v5653 = vadd.s32 %v5585, 544
        %v5654 = vadd.s32 %v5585, 552
        %v5655 = vadd.s32 %v5585, 560
        %v5656 = vadd.s32 %v5585, 568
        %vm5657 = vcmp.lt.s32.totalorder %v5585, 0
        %v5658 = vsub.s32 0, %v5585
        %v5659 = vsel %vm5657, %v5658, %v5585
        %v5660 = vmul.u32.u64.compose %v5659, 3817748708
        %v5661 = vextract.low.u32 %v5660
        %v5662 = vextract.high.u32 %v5660
        %v5663 = vshrl.u32 %v5662, 4
        %v5664 = vmul.u32 %v5663, 18
        %v5665 = vsub.s32 %v5659, %v5664
        %v5666 = vsub.s32 0, %v5665
        %v5667 = vsel %vm5657, %v5666, %v5665
        %vm5668 = vcmp.lt.s32.totalorder %v5586, 0
        %v5669 = vsub.s32 0, %v5586
        %v5670 = vsel %vm5668, %v5669, %v5586
        %v5671 = vmul.u32.u64.compose %v5670, 3817748708
        %v5672 = vextract.low.u32 %v5671
        %v5673 = vextract.high.u32 %v5671
        %v5674 = vshrl.u32 %v5673, 4
        %v5675 = vmul.u32 %v5674, 18
        %v5676 = vsub.s32 %v5670, %v5675
        %v5677 = vsub.s32 0, %v5676
        %v5678 = vsel %vm5668, %v5677, %v5676
        %vm5679 = vcmp.lt.s32.totalorder %v5587, 0
        %v5680 = vsub.s32 0, %v5587
        %v5681 = vsel %vm5679, %v5680, %v5587
        %v5682 = vmul.u32.u64.compose %v5681, 3817748708
        %v5683 = vextract.low.u32 %v5682
        %v5684 = vextract.high.u32 %v5682
        %v5685 = vshrl.u32 %v5684, 4
        %v5686 = vmul.u32 %v5685, 18
        %v5687 = vsub.s32 %v5681, %v5686
        %v5688 = vsub.s32 0, %v5687
        %v5689 = vsel %vm5679, %v5688, %v5687
        %vm5690 = vcmp.lt.s32.totalorder %v5588, 0
        %v5691 = vsub.s32 0, %v5588
        %v5692 = vsel %vm5690, %v5691, %v5588
        %v5693 = vmul.u32.u64.compose %v5692, 3817748708
        %v5694 = vextract.low.u32 %v5693
        %v5695 = vextract.high.u32 %v5693
        %v5696 = vshrl.u32 %v5695, 4
        %v5697 = vmul.u32 %v5696, 18
        %v5698 = vsub.s32 %v5692, %v5697
        %v5699 = vsub.s32 0, %v5698
        %v5700 = vsel %vm5690, %v5699, %v5698
        %vm5701 = vcmp.lt.s32.totalorder %v5589, 0
        %v5702 = vsub.s32 0, %v5589
        %v5703 = vsel %vm5701, %v5702, %v5589
        %v5704 = vmul.u32.u64.compose %v5703, 3817748708
        %v5705 = vextract.low.u32 %v5704
        %v5706 = vextract.high.u32 %v5704
        %v5707 = vshrl.u32 %v5706, 4
        %v5708 = vmul.u32 %v5707, 18
        %v5709 = vsub.s32 %v5703, %v5708
        %v5710 = vsub.s32 0, %v5709
        %v5711 = vsel %vm5701, %v5710, %v5709
        %vm5712 = vcmp.lt.s32.totalorder %v5590, 0
        %v5713 = vsub.s32 0, %v5590
        %v5714 = vsel %vm5712, %v5713, %v5590
        %v5715 = vmul.u32.u64.compose %v5714, 3817748708
        %v5716 = vextract.low.u32 %v5715
        %v5717 = vextract.high.u32 %v5715
        %v5718 = vshrl.u32 %v5717, 4
        %v5719 = vmul.u32 %v5718, 18
        %v5720 = vsub.s32 %v5714, %v5719
        %v5721 = vsub.s32 0, %v5720
        %v5722 = vsel %vm5712, %v5721, %v5720
        %vm5723 = vcmp.lt.s32.totalorder %v5591, 0
        %v5724 = vsub.s32 0, %v5591
        %v5725 = vsel %vm5723, %v5724, %v5591
        %v5726 = vmul.u32.u64.compose %v5725, 3817748708
        %v5727 = vextract.low.u32 %v5726
        %v5728 = vextract.high.u32 %v5726
        %v5729 = vshrl.u32 %v5728, 4
        %v5730 = vmul.u32 %v5729, 18
        %v5731 = vsub.s32 %v5725, %v5730
        %v5732 = vsub.s32 0, %v5731
        %v5733 = vsel %vm5723, %v5732, %v5731
        %vm5734 = vcmp.lt.s32.totalorder %v5592, 0
        %v5735 = vsub.s32 0, %v5592
        %v5736 = vsel %vm5734, %v5735, %v5592
        %v5737 = vmul.u32.u64.compose %v5736, 3817748708
        %v5738 = vextract.low.u32 %v5737
        %v5739 = vextract.high.u32 %v5737
        %v5740 = vshrl.u32 %v5739, 4
        %v5741 = vmul.u32 %v5740, 18
        %v5742 = vsub.s32 %v5736, %v5741
        %v5743 = vsub.s32 0, %v5742
        %v5744 = vsel %vm5734, %v5743, %v5742
        %vm5745 = vcmp.lt.s32.totalorder %v5593, 0
        %v5746 = vsub.s32 0, %v5593
        %v5747 = vsel %vm5745, %v5746, %v5593
        %v5748 = vmul.u32.u64.compose %v5747, 3817748708
        %v5749 = vextract.low.u32 %v5748
        %v5750 = vextract.high.u32 %v5748
        %v5751 = vshrl.u32 %v5750, 4
        %v5752 = vmul.u32 %v5751, 18
        %v5753 = vsub.s32 %v5747, %v5752
        %v5754 = vsub.s32 0, %v5753
        %v5755 = vsel %vm5745, %v5754, %v5753
        %vm5756 = vcmp.lt.s32.totalorder %v5594, 0
        %v5757 = vsub.s32 0, %v5594
        %v5758 = vsel %vm5756, %v5757, %v5594
        %v5759 = vmul.u32.u64.compose %v5758, 3817748708
        %v5760 = vextract.low.u32 %v5759
        %v5761 = vextract.high.u32 %v5759
        %v5762 = vshrl.u32 %v5761, 4
        %v5763 = vmul.u32 %v5762, 18
        %v5764 = vsub.s32 %v5758, %v5763
        %v5765 = vsub.s32 0, %v5764
        %v5766 = vsel %vm5756, %v5765, %v5764
        %vm5767 = vcmp.lt.s32.totalorder %v5595, 0
        %v5768 = vsub.s32 0, %v5595
        %v5769 = vsel %vm5767, %v5768, %v5595
        %v5770 = vmul.u32.u64.compose %v5769, 3817748708
        %v5771 = vextract.low.u32 %v5770
        %v5772 = vextract.high.u32 %v5770
        %v5773 = vshrl.u32 %v5772, 4
        %v5774 = vmul.u32 %v5773, 18
        %v5775 = vsub.s32 %v5769, %v5774
        %v5776 = vsub.s32 0, %v5775
        %v5777 = vsel %vm5767, %v5776, %v5775
        %vm5778 = vcmp.lt.s32.totalorder %v5596, 0
        %v5779 = vsub.s32 0, %v5596
        %v5780 = vsel %vm5778, %v5779, %v5596
        %v5781 = vmul.u32.u64.compose %v5780, 3817748708
        %v5782 = vextract.low.u32 %v5781
        %v5783 = vextract.high.u32 %v5781
        %v5784 = vshrl.u32 %v5783, 4
        %v5785 = vmul.u32 %v5784, 18
        %v5786 = vsub.s32 %v5780, %v5785
        %v5787 = vsub.s32 0, %v5786
        %v5788 = vsel %vm5778, %v5787, %v5786
        %vm5789 = vcmp.lt.s32.totalorder %v5597, 0
        %v5790 = vsub.s32 0, %v5597
        %v5791 = vsel %vm5789, %v5790, %v5597
        %v5792 = vmul.u32.u64.compose %v5791, 3817748708
        %v5793 = vextract.low.u32 %v5792
        %v5794 = vextract.high.u32 %v5792
        %v5795 = vshrl.u32 %v5794, 4
        %v5796 = vmul.u32 %v5795, 18
        %v5797 = vsub.s32 %v5791, %v5796
        %v5798 = vsub.s32 0, %v5797
        %v5799 = vsel %vm5789, %v5798, %v5797
        %vm5800 = vcmp.lt.s32.totalorder %v5598, 0
        %v5801 = vsub.s32 0, %v5598
        %v5802 = vsel %vm5800, %v5801, %v5598
        %v5803 = vmul.u32.u64.compose %v5802, 3817748708
        %v5804 = vextract.low.u32 %v5803
        %v5805 = vextract.high.u32 %v5803
        %v5806 = vshrl.u32 %v5805, 4
        %v5807 = vmul.u32 %v5806, 18
        %v5808 = vsub.s32 %v5802, %v5807
        %v5809 = vsub.s32 0, %v5808
        %v5810 = vsel %vm5800, %v5809, %v5808
        %vm5811 = vcmp.lt.s32.totalorder %v5599, 0
        %v5812 = vsub.s32 0, %v5599
        %v5813 = vsel %vm5811, %v5812, %v5599
        %v5814 = vmul.u32.u64.compose %v5813, 3817748708
        %v5815 = vextract.low.u32 %v5814
        %v5816 = vextract.high.u32 %v5814
        %v5817 = vshrl.u32 %v5816, 4
        %v5818 = vmul.u32 %v5817, 18
        %v5819 = vsub.s32 %v5813, %v5818
        %v5820 = vsub.s32 0, %v5819
        %v5821 = vsel %vm5811, %v5820, %v5819
        %vm5822 = vcmp.lt.s32.totalorder %v5600, 0
        %v5823 = vsub.s32 0, %v5600
        %v5824 = vsel %vm5822, %v5823, %v5600
        %v5825 = vmul.u32.u64.compose %v5824, 3817748708
        %v5826 = vextract.low.u32 %v5825
        %v5827 = vextract.high.u32 %v5825
        %v5828 = vshrl.u32 %v5827, 4
        %v5829 = vmul.u32 %v5828, 18
        %v5830 = vsub.s32 %v5824, %v5829
        %v5831 = vsub.s32 0, %v5830
        %v5832 = vsel %vm5822, %v5831, %v5830
        %vm5833 = vcmp.lt.s32.totalorder %v5601, 0
        %v5834 = vsub.s32 0, %v5601
        %v5835 = vsel %vm5833, %v5834, %v5601
        %v5836 = vmul.u32.u64.compose %v5835, 3817748708
        %v5837 = vextract.low.u32 %v5836
        %v5838 = vextract.high.u32 %v5836
        %v5839 = vshrl.u32 %v5838, 4
        %v5840 = vmul.u32 %v5839, 18
        %v5841 = vsub.s32 %v5835, %v5840
        %v5842 = vsub.s32 0, %v5841
        %v5843 = vsel %vm5833, %v5842, %v5841
        %vm5844 = vcmp.lt.s32.totalorder %v5602, 0
        %v5845 = vsub.s32 0, %v5602
        %v5846 = vsel %vm5844, %v5845, %v5602
        %v5847 = vmul.u32.u64.compose %v5846, 3817748708
        %v5848 = vextract.low.u32 %v5847
        %v5849 = vextract.high.u32 %v5847
        %v5850 = vshrl.u32 %v5849, 4
        %v5851 = vmul.u32 %v5850, 18
        %v5852 = vsub.s32 %v5846, %v5851
        %v5853 = vsub.s32 0, %v5852
        %v5854 = vsel %vm5844, %v5853, %v5852
        %vm5855 = vcmp.lt.s32.totalorder %v5603, 0
        %v5856 = vsub.s32 0, %v5603
        %v5857 = vsel %vm5855, %v5856, %v5603
        %v5858 = vmul.u32.u64.compose %v5857, 3817748708
        %v5859 = vextract.low.u32 %v5858
        %v5860 = vextract.high.u32 %v5858
        %v5861 = vshrl.u32 %v5860, 4
        %v5862 = vmul.u32 %v5861, 18
        %v5863 = vsub.s32 %v5857, %v5862
        %v5864 = vsub.s32 0, %v5863
        %v5865 = vsel %vm5855, %v5864, %v5863
        %vm5866 = vcmp.lt.s32.totalorder %v5604, 0
        %v5867 = vsub.s32 0, %v5604
        %v5868 = vsel %vm5866, %v5867, %v5604
        %v5869 = vmul.u32.u64.compose %v5868, 3817748708
        %v5870 = vextract.low.u32 %v5869
        %v5871 = vextract.high.u32 %v5869
        %v5872 = vshrl.u32 %v5871, 4
        %v5873 = vmul.u32 %v5872, 18
        %v5874 = vsub.s32 %v5868, %v5873
        %v5875 = vsub.s32 0, %v5874
        %v5876 = vsel %vm5866, %v5875, %v5874
        %vm5877 = vcmp.lt.s32.totalorder %v5605, 0
        %v5878 = vsub.s32 0, %v5605
        %v5879 = vsel %vm5877, %v5878, %v5605
        %v5880 = vmul.u32.u64.compose %v5879, 3817748708
        %v5881 = vextract.low.u32 %v5880
        %v5882 = vextract.high.u32 %v5880
        %v5883 = vshrl.u32 %v5882, 4
        %v5884 = vmul.u32 %v5883, 18
        %v5885 = vsub.s32 %v5879, %v5884
        %v5886 = vsub.s32 0, %v5885
        %v5887 = vsel %vm5877, %v5886, %v5885
        %vm5888 = vcmp.lt.s32.totalorder %v5606, 0
        %v5889 = vsub.s32 0, %v5606
        %v5890 = vsel %vm5888, %v5889, %v5606
        %v5891 = vmul.u32.u64.compose %v5890, 3817748708
        %v5892 = vextract.low.u32 %v5891
        %v5893 = vextract.high.u32 %v5891
        %v5894 = vshrl.u32 %v5893, 4
        %v5895 = vmul.u32 %v5894, 18
        %v5896 = vsub.s32 %v5890, %v5895
        %v5897 = vsub.s32 0, %v5896
        %v5898 = vsel %vm5888, %v5897, %v5896
        %vm5899 = vcmp.lt.s32.totalorder %v5607, 0
        %v5900 = vsub.s32 0, %v5607
        %v5901 = vsel %vm5899, %v5900, %v5607
        %v5902 = vmul.u32.u64.compose %v5901, 3817748708
        %v5903 = vextract.low.u32 %v5902
        %v5904 = vextract.high.u32 %v5902
        %v5905 = vshrl.u32 %v5904, 4
        %v5906 = vmul.u32 %v5905, 18
        %v5907 = vsub.s32 %v5901, %v5906
        %v5908 = vsub.s32 0, %v5907
        %v5909 = vsel %vm5899, %v5908, %v5907
        %vm5910 = vcmp.lt.s32.totalorder %v5608, 0
        %v5911 = vsub.s32 0, %v5608
        %v5912 = vsel %vm5910, %v5911, %v5608
        %v5913 = vmul.u32.u64.compose %v5912, 3817748708
        %v5914 = vextract.low.u32 %v5913
        %v5915 = vextract.high.u32 %v5913
        %v5916 = vshrl.u32 %v5915, 4
        %v5917 = vmul.u32 %v5916, 18
        %v5918 = vsub.s32 %v5912, %v5917
        %v5919 = vsub.s32 0, %v5918
        %v5920 = vsel %vm5910, %v5919, %v5918
        %vm5921 = vcmp.lt.s32.totalorder %v5609, 0
        %v5922 = vsub.s32 0, %v5609
        %v5923 = vsel %vm5921, %v5922, %v5609
        %v5924 = vmul.u32.u64.compose %v5923, 3817748708
        %v5925 = vextract.low.u32 %v5924
        %v5926 = vextract.high.u32 %v5924
        %v5927 = vshrl.u32 %v5926, 4
        %v5928 = vmul.u32 %v5927, 18
        %v5929 = vsub.s32 %v5923, %v5928
        %v5930 = vsub.s32 0, %v5929
        %v5931 = vsel %vm5921, %v5930, %v5929
        %vm5932 = vcmp.lt.s32.totalorder %v5610, 0
        %v5933 = vsub.s32 0, %v5610
        %v5934 = vsel %vm5932, %v5933, %v5610
        %v5935 = vmul.u32.u64.compose %v5934, 3817748708
        %v5936 = vextract.low.u32 %v5935
        %v5937 = vextract.high.u32 %v5935
        %v5938 = vshrl.u32 %v5937, 4
        %v5939 = vmul.u32 %v5938, 18
        %v5940 = vsub.s32 %v5934, %v5939
        %v5941 = vsub.s32 0, %v5940
        %v5942 = vsel %vm5932, %v5941, %v5940
        %vm5943 = vcmp.lt.s32.totalorder %v5611, 0
        %v5944 = vsub.s32 0, %v5611
        %v5945 = vsel %vm5943, %v5944, %v5611
        %v5946 = vmul.u32.u64.compose %v5945, 3817748708
        %v5947 = vextract.low.u32 %v5946
        %v5948 = vextract.high.u32 %v5946
        %v5949 = vshrl.u32 %v5948, 4
        %v5950 = vmul.u32 %v5949, 18
        %v5951 = vsub.s32 %v5945, %v5950
        %v5952 = vsub.s32 0, %v5951
        %v5953 = vsel %vm5943, %v5952, %v5951
        %vm5954 = vcmp.lt.s32.totalorder %v5612, 0
        %v5955 = vsub.s32 0, %v5612
        %v5956 = vsel %vm5954, %v5955, %v5612
        %v5957 = vmul.u32.u64.compose %v5956, 3817748708
        %v5958 = vextract.low.u32 %v5957
        %v5959 = vextract.high.u32 %v5957
        %v5960 = vshrl.u32 %v5959, 4
        %v5961 = vmul.u32 %v5960, 18
        %v5962 = vsub.s32 %v5956, %v5961
        %v5963 = vsub.s32 0, %v5962
        %v5964 = vsel %vm5954, %v5963, %v5962
        %vm5965 = vcmp.lt.s32.totalorder %v5613, 0
        %v5966 = vsub.s32 0, %v5613
        %v5967 = vsel %vm5965, %v5966, %v5613
        %v5968 = vmul.u32.u64.compose %v5967, 3817748708
        %v5969 = vextract.low.u32 %v5968
        %v5970 = vextract.high.u32 %v5968
        %v5971 = vshrl.u32 %v5970, 4
        %v5972 = vmul.u32 %v5971, 18
        %v5973 = vsub.s32 %v5967, %v5972
        %v5974 = vsub.s32 0, %v5973
        %v5975 = vsel %vm5965, %v5974, %v5973
        %vm5976 = vcmp.lt.s32.totalorder %v5614, 0
        %v5977 = vsub.s32 0, %v5614
        %v5978 = vsel %vm5976, %v5977, %v5614
        %v5979 = vmul.u32.u64.compose %v5978, 3817748708
        %v5980 = vextract.low.u32 %v5979
        %v5981 = vextract.high.u32 %v5979
        %v5982 = vshrl.u32 %v5981, 4
        %v5983 = vmul.u32 %v5982, 18
        %v5984 = vsub.s32 %v5978, %v5983
        %v5985 = vsub.s32 0, %v5984
        %v5986 = vsel %vm5976, %v5985, %v5984
        %vm5987 = vcmp.lt.s32.totalorder %v5615, 0
        %v5988 = vsub.s32 0, %v5615
        %v5989 = vsel %vm5987, %v5988, %v5615
        %v5990 = vmul.u32.u64.compose %v5989, 3817748708
        %v5991 = vextract.low.u32 %v5990
        %v5992 = vextract.high.u32 %v5990
        %v5993 = vshrl.u32 %v5992, 4
        %v5994 = vmul.u32 %v5993, 18
        %v5995 = vsub.s32 %v5989, %v5994
        %v5996 = vsub.s32 0, %v5995
        %v5997 = vsel %vm5987, %v5996, %v5995
        %vm5998 = vcmp.lt.s32.totalorder %v5616, 0
        %v5999 = vsub.s32 0, %v5616
        %v6000 = vsel %vm5998, %v5999, %v5616
        %v6001 = vmul.u32.u64.compose %v6000, 3817748708
        %v6002 = vextract.low.u32 %v6001
        %v6003 = vextract.high.u32 %v6001
        %v6004 = vshrl.u32 %v6003, 4
        %v6005 = vmul.u32 %v6004, 18
        %v6006 = vsub.s32 %v6000, %v6005
        %v6007 = vsub.s32 0, %v6006
        %v6008 = vsel %vm5998, %v6007, %v6006
        %vm6009 = vcmp.lt.s32.totalorder %v5617, 0
        %v6010 = vsub.s32 0, %v5617
        %v6011 = vsel %vm6009, %v6010, %v5617
        %v6012 = vmul.u32.u64.compose %v6011, 3817748708
        %v6013 = vextract.low.u32 %v6012
        %v6014 = vextract.high.u32 %v6012
        %v6015 = vshrl.u32 %v6014, 4
        %v6016 = vmul.u32 %v6015, 18
        %v6017 = vsub.s32 %v6011, %v6016
        %v6018 = vsub.s32 0, %v6017
        %v6019 = vsel %vm6009, %v6018, %v6017
        %vm6020 = vcmp.lt.s32.totalorder %v5618, 0
        %v6021 = vsub.s32 0, %v5618
        %v6022 = vsel %vm6020, %v6021, %v5618
        %v6023 = vmul.u32.u64.compose %v6022, 3817748708
        %v6024 = vextract.low.u32 %v6023
        %v6025 = vextract.high.u32 %v6023
        %v6026 = vshrl.u32 %v6025, 4
        %v6027 = vmul.u32 %v6026, 18
        %v6028 = vsub.s32 %v6022, %v6027
        %v6029 = vsub.s32 0, %v6028
        %v6030 = vsel %vm6020, %v6029, %v6028
        %vm6031 = vcmp.lt.s32.totalorder %v5619, 0
        %v6032 = vsub.s32 0, %v5619
        %v6033 = vsel %vm6031, %v6032, %v5619
        %v6034 = vmul.u32.u64.compose %v6033, 3817748708
        %v6035 = vextract.low.u32 %v6034
        %v6036 = vextract.high.u32 %v6034
        %v6037 = vshrl.u32 %v6036, 4
        %v6038 = vmul.u32 %v6037, 18
        %v6039 = vsub.s32 %v6033, %v6038
        %v6040 = vsub.s32 0, %v6039
        %v6041 = vsel %vm6031, %v6040, %v6039
        %vm6042 = vcmp.lt.s32.totalorder %v5620, 0
        %v6043 = vsub.s32 0, %v5620
        %v6044 = vsel %vm6042, %v6043, %v5620
        %v6045 = vmul.u32.u64.compose %v6044, 3817748708
        %v6046 = vextract.low.u32 %v6045
        %v6047 = vextract.high.u32 %v6045
        %v6048 = vshrl.u32 %v6047, 4
        %v6049 = vmul.u32 %v6048, 18
        %v6050 = vsub.s32 %v6044, %v6049
        %v6051 = vsub.s32 0, %v6050
        %v6052 = vsel %vm6042, %v6051, %v6050
        %vm6053 = vcmp.lt.s32.totalorder %v5621, 0
        %v6054 = vsub.s32 0, %v5621
        %v6055 = vsel %vm6053, %v6054, %v5621
        %v6056 = vmul.u32.u64.compose %v6055, 3817748708
        %v6057 = vextract.low.u32 %v6056
        %v6058 = vextract.high.u32 %v6056
        %v6059 = vshrl.u32 %v6058, 4
        %v6060 = vmul.u32 %v6059, 18
        %v6061 = vsub.s32 %v6055, %v6060
        %v6062 = vsub.s32 0, %v6061
        %v6063 = vsel %vm6053, %v6062, %v6061
        %vm6064 = vcmp.lt.s32.totalorder %v5622, 0
        %v6065 = vsub.s32 0, %v5622
        %v6066 = vsel %vm6064, %v6065, %v5622
        %v6067 = vmul.u32.u64.compose %v6066, 3817748708
        %v6068 = vextract.low.u32 %v6067
        %v6069 = vextract.high.u32 %v6067
        %v6070 = vshrl.u32 %v6069, 4
        %v6071 = vmul.u32 %v6070, 18
        %v6072 = vsub.s32 %v6066, %v6071
        %v6073 = vsub.s32 0, %v6072
        %v6074 = vsel %vm6064, %v6073, %v6072
        %vm6075 = vcmp.lt.s32.totalorder %v5623, 0
        %v6076 = vsub.s32 0, %v5623
        %v6077 = vsel %vm6075, %v6076, %v5623
        %v6078 = vmul.u32.u64.compose %v6077, 3817748708
        %v6079 = vextract.low.u32 %v6078
        %v6080 = vextract.high.u32 %v6078
        %v6081 = vshrl.u32 %v6080, 4
        %v6082 = vmul.u32 %v6081, 18
        %v6083 = vsub.s32 %v6077, %v6082
        %v6084 = vsub.s32 0, %v6083
        %v6085 = vsel %vm6075, %v6084, %v6083
        %vm6086 = vcmp.lt.s32.totalorder %v5624, 0
        %v6087 = vsub.s32 0, %v5624
        %v6088 = vsel %vm6086, %v6087, %v5624
        %v6089 = vmul.u32.u64.compose %v6088, 3817748708
        %v6090 = vextract.low.u32 %v6089
        %v6091 = vextract.high.u32 %v6089
        %v6092 = vshrl.u32 %v6091, 4
        %v6093 = vmul.u32 %v6092, 18
        %v6094 = vsub.s32 %v6088, %v6093
        %v6095 = vsub.s32 0, %v6094
        %v6096 = vsel %vm6086, %v6095, %v6094
        %vm6097 = vcmp.lt.s32.totalorder %v5625, 0
        %v6098 = vsub.s32 0, %v5625
        %v6099 = vsel %vm6097, %v6098, %v5625
        %v6100 = vmul.u32.u64.compose %v6099, 3817748708
        %v6101 = vextract.low.u32 %v6100
        %v6102 = vextract.high.u32 %v6100
        %v6103 = vshrl.u32 %v6102, 4
        %v6104 = vmul.u32 %v6103, 18
        %v6105 = vsub.s32 %v6099, %v6104
        %v6106 = vsub.s32 0, %v6105
        %v6107 = vsel %vm6097, %v6106, %v6105
        %vm6108 = vcmp.lt.s32.totalorder %v5626, 0
        %v6109 = vsub.s32 0, %v5626
        %v6110 = vsel %vm6108, %v6109, %v5626
        %v6111 = vmul.u32.u64.compose %v6110, 3817748708
        %v6112 = vextract.low.u32 %v6111
        %v6113 = vextract.high.u32 %v6111
        %v6114 = vshrl.u32 %v6113, 4
        %v6115 = vmul.u32 %v6114, 18
        %v6116 = vsub.s32 %v6110, %v6115
        %v6117 = vsub.s32 0, %v6116
        %v6118 = vsel %vm6108, %v6117, %v6116
        %vm6119 = vcmp.lt.s32.totalorder %v5627, 0
        %v6120 = vsub.s32 0, %v5627
        %v6121 = vsel %vm6119, %v6120, %v5627
        %v6122 = vmul.u32.u64.compose %v6121, 3817748708
        %v6123 = vextract.low.u32 %v6122
        %v6124 = vextract.high.u32 %v6122
        %v6125 = vshrl.u32 %v6124, 4
        %v6126 = vmul.u32 %v6125, 18
        %v6127 = vsub.s32 %v6121, %v6126
        %v6128 = vsub.s32 0, %v6127
        %v6129 = vsel %vm6119, %v6128, %v6127
        %vm6130 = vcmp.lt.s32.totalorder %v5628, 0
        %v6131 = vsub.s32 0, %v5628
        %v6132 = vsel %vm6130, %v6131, %v5628
        %v6133 = vmul.u32.u64.compose %v6132, 3817748708
        %v6134 = vextract.low.u32 %v6133
        %v6135 = vextract.high.u32 %v6133
        %v6136 = vshrl.u32 %v6135, 4
        %v6137 = vmul.u32 %v6136, 18
        %v6138 = vsub.s32 %v6132, %v6137
        %v6139 = vsub.s32 0, %v6138
        %v6140 = vsel %vm6130, %v6139, %v6138
        %vm6141 = vcmp.lt.s32.totalorder %v5629, 0
        %v6142 = vsub.s32 0, %v5629
        %v6143 = vsel %vm6141, %v6142, %v5629
        %v6144 = vmul.u32.u64.compose %v6143, 3817748708
        %v6145 = vextract.low.u32 %v6144
        %v6146 = vextract.high.u32 %v6144
        %v6147 = vshrl.u32 %v6146, 4
        %v6148 = vmul.u32 %v6147, 18
        %v6149 = vsub.s32 %v6143, %v6148
        %v6150 = vsub.s32 0, %v6149
        %v6151 = vsel %vm6141, %v6150, %v6149
        %vm6152 = vcmp.lt.s32.totalorder %v5630, 0
        %v6153 = vsub.s32 0, %v5630
        %v6154 = vsel %vm6152, %v6153, %v5630
        %v6155 = vmul.u32.u64.compose %v6154, 3817748708
        %v6156 = vextract.low.u32 %v6155
        %v6157 = vextract.high.u32 %v6155
        %v6158 = vshrl.u32 %v6157, 4
        %v6159 = vmul.u32 %v6158, 18
        %v6160 = vsub.s32 %v6154, %v6159
        %v6161 = vsub.s32 0, %v6160
        %v6162 = vsel %vm6152, %v6161, %v6160
        %vm6163 = vcmp.lt.s32.totalorder %v5631, 0
        %v6164 = vsub.s32 0, %v5631
        %v6165 = vsel %vm6163, %v6164, %v5631
        %v6166 = vmul.u32.u64.compose %v6165, 3817748708
        %v6167 = vextract.low.u32 %v6166
        %v6168 = vextract.high.u32 %v6166
        %v6169 = vshrl.u32 %v6168, 4
        %v6170 = vmul.u32 %v6169, 18
        %v6171 = vsub.s32 %v6165, %v6170
        %v6172 = vsub.s32 0, %v6171
        %v6173 = vsel %vm6163, %v6172, %v6171
        %vm6174 = vcmp.lt.s32.totalorder %v5632, 0
        %v6175 = vsub.s32 0, %v5632
        %v6176 = vsel %vm6174, %v6175, %v5632
        %v6177 = vmul.u32.u64.compose %v6176, 3817748708
        %v6178 = vextract.low.u32 %v6177
        %v6179 = vextract.high.u32 %v6177
        %v6180 = vshrl.u32 %v6179, 4
        %v6181 = vmul.u32 %v6180, 18
        %v6182 = vsub.s32 %v6176, %v6181
        %v6183 = vsub.s32 0, %v6182
        %v6184 = vsel %vm6174, %v6183, %v6182
        %vm6185 = vcmp.lt.s32.totalorder %v5633, 0
        %v6186 = vsub.s32 0, %v5633
        %v6187 = vsel %vm6185, %v6186, %v5633
        %v6188 = vmul.u32.u64.compose %v6187, 3817748708
        %v6189 = vextract.low.u32 %v6188
        %v6190 = vextract.high.u32 %v6188
        %v6191 = vshrl.u32 %v6190, 4
        %v6192 = vmul.u32 %v6191, 18
        %v6193 = vsub.s32 %v6187, %v6192
        %v6194 = vsub.s32 0, %v6193
        %v6195 = vsel %vm6185, %v6194, %v6193
        %vm6196 = vcmp.lt.s32.totalorder %v5634, 0
        %v6197 = vsub.s32 0, %v5634
        %v6198 = vsel %vm6196, %v6197, %v5634
        %v6199 = vmul.u32.u64.compose %v6198, 3817748708
        %v6200 = vextract.low.u32 %v6199
        %v6201 = vextract.high.u32 %v6199
        %v6202 = vshrl.u32 %v6201, 4
        %v6203 = vmul.u32 %v6202, 18
        %v6204 = vsub.s32 %v6198, %v6203
        %v6205 = vsub.s32 0, %v6204
        %v6206 = vsel %vm6196, %v6205, %v6204
        %vm6207 = vcmp.lt.s32.totalorder %v5635, 0
        %v6208 = vsub.s32 0, %v5635
        %v6209 = vsel %vm6207, %v6208, %v5635
        %v6210 = vmul.u32.u64.compose %v6209, 3817748708
        %v6211 = vextract.low.u32 %v6210
        %v6212 = vextract.high.u32 %v6210
        %v6213 = vshrl.u32 %v6212, 4
        %v6214 = vmul.u32 %v6213, 18
        %v6215 = vsub.s32 %v6209, %v6214
        %v6216 = vsub.s32 0, %v6215
        %v6217 = vsel %vm6207, %v6216, %v6215
        %vm6218 = vcmp.lt.s32.totalorder %v5636, 0
        %v6219 = vsub.s32 0, %v5636
        %v6220 = vsel %vm6218, %v6219, %v5636
        %v6221 = vmul.u32.u64.compose %v6220, 3817748708
        %v6222 = vextract.low.u32 %v6221
        %v6223 = vextract.high.u32 %v6221
        %v6224 = vshrl.u32 %v6223, 4
        %v6225 = vmul.u32 %v6224, 18
        %v6226 = vsub.s32 %v6220, %v6225
        %v6227 = vsub.s32 0, %v6226
        %v6228 = vsel %vm6218, %v6227, %v6226
        %vm6229 = vcmp.lt.s32.totalorder %v5637, 0
        %v6230 = vsub.s32 0, %v5637
        %v6231 = vsel %vm6229, %v6230, %v5637
        %v6232 = vmul.u32.u64.compose %v6231, 3817748708
        %v6233 = vextract.low.u32 %v6232
        %v6234 = vextract.high.u32 %v6232
        %v6235 = vshrl.u32 %v6234, 4
        %v6236 = vmul.u32 %v6235, 18
        %v6237 = vsub.s32 %v6231, %v6236
        %v6238 = vsub.s32 0, %v6237
        %v6239 = vsel %vm6229, %v6238, %v6237
        %vm6240 = vcmp.lt.s32.totalorder %v5638, 0
        %v6241 = vsub.s32 0, %v5638
        %v6242 = vsel %vm6240, %v6241, %v5638
        %v6243 = vmul.u32.u64.compose %v6242, 3817748708
        %v6244 = vextract.low.u32 %v6243
        %v6245 = vextract.high.u32 %v6243
        %v6246 = vshrl.u32 %v6245, 4
        %v6247 = vmul.u32 %v6246, 18
        %v6248 = vsub.s32 %v6242, %v6247
        %v6249 = vsub.s32 0, %v6248
        %v6250 = vsel %vm6240, %v6249, %v6248
        %vm6251 = vcmp.lt.s32.totalorder %v5639, 0
        %v6252 = vsub.s32 0, %v5639
        %v6253 = vsel %vm6251, %v6252, %v5639
        %v6254 = vmul.u32.u64.compose %v6253, 3817748708
        %v6255 = vextract.low.u32 %v6254
        %v6256 = vextract.high.u32 %v6254
        %v6257 = vshrl.u32 %v6256, 4
        %v6258 = vmul.u32 %v6257, 18
        %v6259 = vsub.s32 %v6253, %v6258
        %v6260 = vsub.s32 0, %v6259
        %v6261 = vsel %vm6251, %v6260, %v6259
        %vm6262 = vcmp.lt.s32.totalorder %v5640, 0
        %v6263 = vsub.s32 0, %v5640
        %v6264 = vsel %vm6262, %v6263, %v5640
        %v6265 = vmul.u32.u64.compose %v6264, 3817748708
        %v6266 = vextract.low.u32 %v6265
        %v6267 = vextract.high.u32 %v6265
        %v6268 = vshrl.u32 %v6267, 4
        %v6269 = vmul.u32 %v6268, 18
        %v6270 = vsub.s32 %v6264, %v6269
        %v6271 = vsub.s32 0, %v6270
        %v6272 = vsel %vm6262, %v6271, %v6270
        %vm6273 = vcmp.lt.s32.totalorder %v5641, 0
        %v6274 = vsub.s32 0, %v5641
        %v6275 = vsel %vm6273, %v6274, %v5641
        %v6276 = vmul.u32.u64.compose %v6275, 3817748708
        %v6277 = vextract.low.u32 %v6276
        %v6278 = vextract.high.u32 %v6276
        %v6279 = vshrl.u32 %v6278, 4
        %v6280 = vmul.u32 %v6279, 18
        %v6281 = vsub.s32 %v6275, %v6280
        %v6282 = vsub.s32 0, %v6281
        %v6283 = vsel %vm6273, %v6282, %v6281
        %vm6284 = vcmp.lt.s32.totalorder %v5642, 0
        %v6285 = vsub.s32 0, %v5642
        %v6286 = vsel %vm6284, %v6285, %v5642
        %v6287 = vmul.u32.u64.compose %v6286, 3817748708
        %v6288 = vextract.low.u32 %v6287
        %v6289 = vextract.high.u32 %v6287
        %v6290 = vshrl.u32 %v6289, 4
        %v6291 = vmul.u32 %v6290, 18
        %v6292 = vsub.s32 %v6286, %v6291
        %v6293 = vsub.s32 0, %v6292
        %v6294 = vsel %vm6284, %v6293, %v6292
        %vm6295 = vcmp.lt.s32.totalorder %v5643, 0
        %v6296 = vsub.s32 0, %v5643
        %v6297 = vsel %vm6295, %v6296, %v5643
        %v6298 = vmul.u32.u64.compose %v6297, 3817748708
        %v6299 = vextract.low.u32 %v6298
        %v6300 = vextract.high.u32 %v6298
        %v6301 = vshrl.u32 %v6300, 4
        %v6302 = vmul.u32 %v6301, 18
        %v6303 = vsub.s32 %v6297, %v6302
        %v6304 = vsub.s32 0, %v6303
        %v6305 = vsel %vm6295, %v6304, %v6303
        %vm6306 = vcmp.lt.s32.totalorder %v5644, 0
        %v6307 = vsub.s32 0, %v5644
        %v6308 = vsel %vm6306, %v6307, %v5644
        %v6309 = vmul.u32.u64.compose %v6308, 3817748708
        %v6310 = vextract.low.u32 %v6309
        %v6311 = vextract.high.u32 %v6309
        %v6312 = vshrl.u32 %v6311, 4
        %v6313 = vmul.u32 %v6312, 18
        %v6314 = vsub.s32 %v6308, %v6313
        %v6315 = vsub.s32 0, %v6314
        %v6316 = vsel %vm6306, %v6315, %v6314
        %vm6317 = vcmp.lt.s32.totalorder %v5645, 0
        %v6318 = vsub.s32 0, %v5645
        %v6319 = vsel %vm6317, %v6318, %v5645
        %v6320 = vmul.u32.u64.compose %v6319, 3817748708
        %v6321 = vextract.low.u32 %v6320
        %v6322 = vextract.high.u32 %v6320
        %v6323 = vshrl.u32 %v6322, 4
        %v6324 = vmul.u32 %v6323, 18
        %v6325 = vsub.s32 %v6319, %v6324
        %v6326 = vsub.s32 0, %v6325
        %v6327 = vsel %vm6317, %v6326, %v6325
        %vm6328 = vcmp.lt.s32.totalorder %v5646, 0
        %v6329 = vsub.s32 0, %v5646
        %v6330 = vsel %vm6328, %v6329, %v5646
        %v6331 = vmul.u32.u64.compose %v6330, 3817748708
        %v6332 = vextract.low.u32 %v6331
        %v6333 = vextract.high.u32 %v6331
        %v6334 = vshrl.u32 %v6333, 4
        %v6335 = vmul.u32 %v6334, 18
        %v6336 = vsub.s32 %v6330, %v6335
        %v6337 = vsub.s32 0, %v6336
        %v6338 = vsel %vm6328, %v6337, %v6336
        %vm6339 = vcmp.lt.s32.totalorder %v5647, 0
        %v6340 = vsub.s32 0, %v5647
        %v6341 = vsel %vm6339, %v6340, %v5647
        %v6342 = vmul.u32.u64.compose %v6341, 3817748708
        %v6343 = vextract.low.u32 %v6342
        %v6344 = vextract.high.u32 %v6342
        %v6345 = vshrl.u32 %v6344, 4
        %v6346 = vmul.u32 %v6345, 18
        %v6347 = vsub.s32 %v6341, %v6346
        %v6348 = vsub.s32 0, %v6347
        %v6349 = vsel %vm6339, %v6348, %v6347
        %vm6350 = vcmp.lt.s32.totalorder %v5648, 0
        %v6351 = vsub.s32 0, %v5648
        %v6352 = vsel %vm6350, %v6351, %v5648
        %v6353 = vmul.u32.u64.compose %v6352, 3817748708
        %v6354 = vextract.low.u32 %v6353
        %v6355 = vextract.high.u32 %v6353
        %v6356 = vshrl.u32 %v6355, 4
        %v6357 = vmul.u32 %v6356, 18
        %v6358 = vsub.s32 %v6352, %v6357
        %v6359 = vsub.s32 0, %v6358
        %v6360 = vsel %vm6350, %v6359, %v6358
        %vm6361 = vcmp.lt.s32.totalorder %v5649, 0
        %v6362 = vsub.s32 0, %v5649
        %v6363 = vsel %vm6361, %v6362, %v5649
        %v6364 = vmul.u32.u64.compose %v6363, 3817748708
        %v6365 = vextract.low.u32 %v6364
        %v6366 = vextract.high.u32 %v6364
        %v6367 = vshrl.u32 %v6366, 4
        %v6368 = vmul.u32 %v6367, 18
        %v6369 = vsub.s32 %v6363, %v6368
        %v6370 = vsub.s32 0, %v6369
        %v6371 = vsel %vm6361, %v6370, %v6369
        %vm6372 = vcmp.lt.s32.totalorder %v5650, 0
        %v6373 = vsub.s32 0, %v5650
        %v6374 = vsel %vm6372, %v6373, %v5650
        %v6375 = vmul.u32.u64.compose %v6374, 3817748708
        %v6376 = vextract.low.u32 %v6375
        %v6377 = vextract.high.u32 %v6375
        %v6378 = vshrl.u32 %v6377, 4
        %v6379 = vmul.u32 %v6378, 18
        %v6380 = vsub.s32 %v6374, %v6379
        %v6381 = vsub.s32 0, %v6380
        %v6382 = vsel %vm6372, %v6381, %v6380
        %vm6383 = vcmp.lt.s32.totalorder %v5651, 0
        %v6384 = vsub.s32 0, %v5651
        %v6385 = vsel %vm6383, %v6384, %v5651
        %v6386 = vmul.u32.u64.compose %v6385, 3817748708
        %v6387 = vextract.low.u32 %v6386
        %v6388 = vextract.high.u32 %v6386
        %v6389 = vshrl.u32 %v6388, 4
        %v6390 = vmul.u32 %v6389, 18
        %v6391 = vsub.s32 %v6385, %v6390
        %v6392 = vsub.s32 0, %v6391
        %v6393 = vsel %vm6383, %v6392, %v6391
        %vm6394 = vcmp.lt.s32.totalorder %v5652, 0
        %v6395 = vsub.s32 0, %v5652
        %v6396 = vsel %vm6394, %v6395, %v5652
        %v6397 = vmul.u32.u64.compose %v6396, 3817748708
        %v6398 = vextract.low.u32 %v6397
        %v6399 = vextract.high.u32 %v6397
        %v6400 = vshrl.u32 %v6399, 4
        %v6401 = vmul.u32 %v6400, 18
        %v6402 = vsub.s32 %v6396, %v6401
        %v6403 = vsub.s32 0, %v6402
        %v6404 = vsel %vm6394, %v6403, %v6402
        %vm6405 = vcmp.lt.s32.totalorder %v5653, 0
        %v6406 = vsub.s32 0, %v5653
        %v6407 = vsel %vm6405, %v6406, %v5653
        %v6408 = vmul.u32.u64.compose %v6407, 3817748708
        %v6409 = vextract.low.u32 %v6408
        %v6410 = vextract.high.u32 %v6408
        %v6411 = vshrl.u32 %v6410, 4
        %v6412 = vmul.u32 %v6411, 18
        %v6413 = vsub.s32 %v6407, %v6412
        %v6414 = vsub.s32 0, %v6413
        %v6415 = vsel %vm6405, %v6414, %v6413
        %vm6416 = vcmp.lt.s32.totalorder %v5654, 0
        %v6417 = vsub.s32 0, %v5654
        %v6418 = vsel %vm6416, %v6417, %v5654
        %v6419 = vmul.u32.u64.compose %v6418, 3817748708
        %v6420 = vextract.low.u32 %v6419
        %v6421 = vextract.high.u32 %v6419
        %v6422 = vshrl.u32 %v6421, 4
        %v6423 = vmul.u32 %v6422, 18
        %v6424 = vsub.s32 %v6418, %v6423
        %v6425 = vsub.s32 0, %v6424
        %v6426 = vsel %vm6416, %v6425, %v6424
        %vm6427 = vcmp.lt.s32.totalorder %v5655, 0
        %v6428 = vsub.s32 0, %v5655
        %v6429 = vsel %vm6427, %v6428, %v5655
        %v6430 = vmul.u32.u64.compose %v6429, 3817748708
        %v6431 = vextract.low.u32 %v6430
        %v6432 = vextract.high.u32 %v6430
        %v6433 = vshrl.u32 %v6432, 4
        %v6434 = vmul.u32 %v6433, 18
        %v6435 = vsub.s32 %v6429, %v6434
        %v6436 = vsub.s32 0, %v6435
        %v6437 = vsel %vm6427, %v6436, %v6435
        %vm6438 = vcmp.lt.s32.totalorder %v5656, 0
        %v6439 = vsub.s32 0, %v5656
        %v6440 = vsel %vm6438, %v6439, %v5656
        %v6441 = vmul.u32.u64.compose %v6440, 3817748708
        %v6442 = vextract.low.u32 %v6441
        %v6443 = vextract.high.u32 %v6441
        %v6444 = vshrl.u32 %v6443, 4
        %v6445 = vmul.u32 %v6444, 18
        %v6446 = vsub.s32 %v6440, %v6445
        %v6447 = vsub.s32 0, %v6446
        %v6448 = vsel %vm6438, %v6447, %v6446
        %vm6449 = vcmp.ne.s32.totalorder %v5667, 0
        %vm6450 = vcmp.ne.s32.totalorder %v5678, 0
        %vm6451 = vcmp.ne.s32.totalorder %v5689, 0
        %vm6452 = vcmp.ne.s32.totalorder %v5700, 0
        %vm6453 = vcmp.ne.s32.totalorder %v5711, 0
        %vm6454 = vcmp.ne.s32.totalorder %v5722, 0
        %vm6455 = vcmp.ne.s32.totalorder %v5733, 0
        %vm6456 = vcmp.ne.s32.totalorder %v5744, 0
        %vm6457 = vcmp.ne.s32.totalorder %v5755, 0
        %vm6458 = vcmp.ne.s32.totalorder %v5766, 0
        %vm6459 = vcmp.ne.s32.totalorder %v5777, 0
        %vm6460 = vcmp.ne.s32.totalorder %v5788, 0
        %vm6461 = vcmp.ne.s32.totalorder %v5799, 0
        %vm6462 = vcmp.ne.s32.totalorder %v5810, 0
        %vm6463 = vcmp.ne.s32.totalorder %v5821, 0
        %vm6464 = vcmp.ne.s32.totalorder %v5832, 0
        %vm6465 = vcmp.ne.s32.totalorder %v5843, 0
        %vm6466 = vcmp.ne.s32.totalorder %v5854, 0
        %vm6467 = vcmp.ne.s32.totalorder %v5865, 0
        %vm6468 = vcmp.ne.s32.totalorder %v5876, 0
        %vm6469 = vcmp.ne.s32.totalorder %v5887, 0
        %vm6470 = vcmp.ne.s32.totalorder %v5898, 0
        %vm6471 = vcmp.ne.s32.totalorder %v5909, 0
        %vm6472 = vcmp.ne.s32.totalorder %v5920, 0
        %vm6473 = vcmp.ne.s32.totalorder %v5931, 0
        %vm6474 = vcmp.ne.s32.totalorder %v5942, 0
        %vm6475 = vcmp.ne.s32.totalorder %v5953, 0
        %vm6476 = vcmp.ne.s32.totalorder %v5964, 0
        %vm6477 = vcmp.ne.s32.totalorder %v5975, 0
        %vm6478 = vcmp.ne.s32.totalorder %v5986, 0
        %vm6479 = vcmp.ne.s32.totalorder %v5997, 0
        %vm6480 = vcmp.ne.s32.totalorder %v6008, 0
        %vm6481 = vcmp.ne.s32.totalorder %v6019, 0
        %vm6482 = vcmp.ne.s32.totalorder %v6030, 0
        %vm6483 = vcmp.ne.s32.totalorder %v6041, 0
        %vm6484 = vcmp.ne.s32.totalorder %v6052, 0
        %vm6485 = vcmp.ne.s32.totalorder %v6063, 0
        %vm6486 = vcmp.ne.s32.totalorder %v6074, 0
        %vm6487 = vcmp.ne.s32.totalorder %v6085, 0
        %vm6488 = vcmp.ne.s32.totalorder %v6096, 0
        %vm6489 = vcmp.ne.s32.totalorder %v6107, 0
        %vm6490 = vcmp.ne.s32.totalorder %v6118, 0
        %vm6491 = vcmp.ne.s32.totalorder %v6129, 0
        %vm6492 = vcmp.ne.s32.totalorder %v6140, 0
        %vm6493 = vcmp.ne.s32.totalorder %v6151, 0
        %vm6494 = vcmp.ne.s32.totalorder %v6162, 0
        %vm6495 = vcmp.ne.s32.totalorder %v6173, 0
        %vm6496 = vcmp.ne.s32.totalorder %v6184, 0
        %vm6497 = vcmp.ne.s32.totalorder %v6195, 0
        %vm6498 = vcmp.ne.s32.totalorder %v6206, 0
        %vm6499 = vcmp.ne.s32.totalorder %v6217, 0
        %vm6500 = vcmp.ne.s32.totalorder %v6228, 0
        %vm6501 = vcmp.ne.s32.totalorder %v6239, 0
        %vm6502 = vcmp.ne.s32.totalorder %v6250, 0
        %vm6503 = vcmp.ne.s32.totalorder %v6261, 0
        %vm6504 = vcmp.ne.s32.totalorder %v6272, 0
        %vm6505 = vcmp.ne.s32.totalorder %v6283, 0
        %vm6506 = vcmp.ne.s32.totalorder %v6294, 0
        %vm6507 = vcmp.ne.s32.totalorder %v6305, 0
        %vm6508 = vcmp.ne.s32.totalorder %v6316, 0
        %vm6509 = vcmp.ne.s32.totalorder %v6327, 0
        %vm6510 = vcmp.ne.s32.totalorder %v6338, 0
        %vm6511 = vcmp.ne.s32.totalorder %v6349, 0
        %vm6512 = vcmp.ne.s32.totalorder %v6360, 0
        %vm6513 = vcmp.ne.s32.totalorder %v6371, 0
        %vm6514 = vcmp.ne.s32.totalorder %v6382, 0
        %vm6515 = vcmp.ne.s32.totalorder %v6393, 0
        %vm6516 = vcmp.ne.s32.totalorder %v6404, 0
        %vm6517 = vcmp.ne.s32.totalorder %v6415, 0
        %vm6518 = vcmp.ne.s32.totalorder %v6426, 0
        %vm6519 = vcmp.ne.s32.totalorder %v6437, 0
        %vm6520 = vcmp.ne.s32.totalorder %v6448, 0
        %vm6521 = vcmp.lt.s32.totalorder %v5667, 0
        %vm6522 = vcmp.lt.s32.totalorder %v5678, 0
        %vm6523 = vcmp.lt.s32.totalorder %v5689, 0
        %vm6524 = vcmp.lt.s32.totalorder %v5700, 0
        %vm6525 = vcmp.lt.s32.totalorder %v5711, 0
        %vm6526 = vcmp.lt.s32.totalorder %v5722, 0
        %vm6527 = vcmp.lt.s32.totalorder %v5733, 0
        %vm6528 = vcmp.lt.s32.totalorder %v5744, 0
        %vm6529 = vcmp.lt.s32.totalorder %v5755, 0
        %vm6530 = vcmp.lt.s32.totalorder %v5766, 0
        %vm6531 = vcmp.lt.s32.totalorder %v5777, 0
        %vm6532 = vcmp.lt.s32.totalorder %v5788, 0
        %vm6533 = vcmp.lt.s32.totalorder %v5799, 0
        %vm6534 = vcmp.lt.s32.totalorder %v5810, 0
        %vm6535 = vcmp.lt.s32.totalorder %v5821, 0
        %vm6536 = vcmp.lt.s32.totalorder %v5832, 0
        %vm6537 = vcmp.lt.s32.totalorder %v5843, 0
        %vm6538 = vcmp.lt.s32.totalorder %v5854, 0
        %vm6539 = vcmp.lt.s32.totalorder %v5865, 0
        %vm6540 = vcmp.lt.s32.totalorder %v5876, 0
        %vm6541 = vcmp.lt.s32.totalorder %v5887, 0
        %vm6542 = vcmp.lt.s32.totalorder %v5898, 0
        %vm6543 = vcmp.lt.s32.totalorder %v5909, 0
        %vm6544 = vcmp.lt.s32.totalorder %v5920, 0
        %vm6545 = vcmp.lt.s32.totalorder %v5931, 0
        %vm6546 = vcmp.lt.s32.totalorder %v5942, 0
        %vm6547 = vcmp.lt.s32.totalorder %v5953, 0
        %vm6548 = vcmp.lt.s32.totalorder %v5964, 0
        %vm6549 = vcmp.lt.s32.totalorder %v5975, 0
        %vm6550 = vcmp.lt.s32.totalorder %v5986, 0
        %vm6551 = vcmp.lt.s32.totalorder %v5997, 0
        %vm6552 = vcmp.lt.s32.totalorder %v6008, 0
        %vm6553 = vcmp.lt.s32.totalorder %v6019, 0
        %vm6554 = vcmp.lt.s32.totalorder %v6030, 0
        %vm6555 = vcmp.lt.s32.totalorder %v6041, 0
        %vm6556 = vcmp.lt.s32.totalorder %v6052, 0
        %vm6557 = vcmp.lt.s32.totalorder %v6063, 0
        %vm6558 = vcmp.lt.s32.totalorder %v6074, 0
        %vm6559 = vcmp.lt.s32.totalorder %v6085, 0
        %vm6560 = vcmp.lt.s32.totalorder %v6096, 0
        %vm6561 = vcmp.lt.s32.totalorder %v6107, 0
        %vm6562 = vcmp.lt.s32.totalorder %v6118, 0
        %vm6563 = vcmp.lt.s32.totalorder %v6129, 0
        %vm6564 = vcmp.lt.s32.totalorder %v6140, 0
        %vm6565 = vcmp.lt.s32.totalorder %v6151, 0
        %vm6566 = vcmp.lt.s32.totalorder %v6162, 0
        %vm6567 = vcmp.lt.s32.totalorder %v6173, 0
        %vm6568 = vcmp.lt.s32.totalorder %v6184, 0
        %vm6569 = vcmp.lt.s32.totalorder %v6195, 0
        %vm6570 = vcmp.lt.s32.totalorder %v6206, 0
        %vm6571 = vcmp.lt.s32.totalorder %v6217, 0
        %vm6572 = vcmp.lt.s32.totalorder %v6228, 0
        %vm6573 = vcmp.lt.s32.totalorder %v6239, 0
        %vm6574 = vcmp.lt.s32.totalorder %v6250, 0
        %vm6575 = vcmp.lt.s32.totalorder %v6261, 0
        %vm6576 = vcmp.lt.s32.totalorder %v6272, 0
        %vm6577 = vcmp.lt.s32.totalorder %v6283, 0
        %vm6578 = vcmp.lt.s32.totalorder %v6294, 0
        %vm6579 = vcmp.lt.s32.totalorder %v6305, 0
        %vm6580 = vcmp.lt.s32.totalorder %v6316, 0
        %vm6581 = vcmp.lt.s32.totalorder %v6327, 0
        %vm6582 = vcmp.lt.s32.totalorder %v6338, 0
        %vm6583 = vcmp.lt.s32.totalorder %v6349, 0
        %vm6584 = vcmp.lt.s32.totalorder %v6360, 0
        %vm6585 = vcmp.lt.s32.totalorder %v6371, 0
        %vm6586 = vcmp.lt.s32.totalorder %v6382, 0
        %vm6587 = vcmp.lt.s32.totalorder %v6393, 0
        %vm6588 = vcmp.lt.s32.totalorder %v6404, 0
        %vm6589 = vcmp.lt.s32.totalorder %v6415, 0
        %vm6590 = vcmp.lt.s32.totalorder %v6426, 0
        %vm6591 = vcmp.lt.s32.totalorder %v6437, 0
        %vm6592 = vcmp.lt.s32.totalorder %v6448, 0
        %vm6593 = vmand %vm6521, %vm6449
        %vm6594 = vmand %vm6522, %vm6450
        %vm6595 = vmand %vm6523, %vm6451
        %vm6596 = vmand %vm6524, %vm6452
        %vm6597 = vmand %vm6525, %vm6453
        %vm6598 = vmand %vm6526, %vm6454
        %vm6599 = vmand %vm6527, %vm6455
        %vm6600 = vmand %vm6528, %vm6456
        %vm6601 = vmand %vm6529, %vm6457
        %vm6602 = vmand %vm6530, %vm6458
        %vm6603 = vmand %vm6531, %vm6459
        %vm6604 = vmand %vm6532, %vm6460
        %vm6605 = vmand %vm6533, %vm6461
        %vm6606 = vmand %vm6534, %vm6462
        %vm6607 = vmand %vm6535, %vm6463
        %vm6608 = vmand %vm6536, %vm6464
        %vm6609 = vmand %vm6537, %vm6465
        %vm6610 = vmand %vm6538, %vm6466
        %vm6611 = vmand %vm6539, %vm6467
        %vm6612 = vmand %vm6540, %vm6468
        %vm6613 = vmand %vm6541, %vm6469
        %vm6614 = vmand %vm6542, %vm6470
        %vm6615 = vmand %vm6543, %vm6471
        %vm6616 = vmand %vm6544, %vm6472
        %vm6617 = vmand %vm6545, %vm6473
        %vm6618 = vmand %vm6546, %vm6474
        %vm6619 = vmand %vm6547, %vm6475
        %vm6620 = vmand %vm6548, %vm6476
        %vm6621 = vmand %vm6549, %vm6477
        %vm6622 = vmand %vm6550, %vm6478
        %vm6623 = vmand %vm6551, %vm6479
        %vm6624 = vmand %vm6552, %vm6480
        %vm6625 = vmand %vm6553, %vm6481
        %vm6626 = vmand %vm6554, %vm6482
        %vm6627 = vmand %vm6555, %vm6483
        %vm6628 = vmand %vm6556, %vm6484
        %vm6629 = vmand %vm6557, %vm6485
        %vm6630 = vmand %vm6558, %vm6486
        %vm6631 = vmand %vm6559, %vm6487
        %vm6632 = vmand %vm6560, %vm6488
        %vm6633 = vmand %vm6561, %vm6489
        %vm6634 = vmand %vm6562, %vm6490
        %vm6635 = vmand %vm6563, %vm6491
        %vm6636 = vmand %vm6564, %vm6492
        %vm6637 = vmand %vm6565, %vm6493
        %vm6638 = vmand %vm6566, %vm6494
        %vm6639 = vmand %vm6567, %vm6495
        %vm6640 = vmand %vm6568, %vm6496
        %vm6641 = vmand %vm6569, %vm6497
        %vm6642 = vmand %vm6570, %vm6498
        %vm6643 = vmand %vm6571, %vm6499
        %vm6644 = vmand %vm6572, %vm6500
        %vm6645 = vmand %vm6573, %vm6501
        %vm6646 = vmand %vm6574, %vm6502
        %vm6647 = vmand %vm6575, %vm6503
        %vm6648 = vmand %vm6576, %vm6504
        %vm6649 = vmand %vm6577, %vm6505
        %vm6650 = vmand %vm6578, %vm6506
        %vm6651 = vmand %vm6579, %vm6507
        %vm6652 = vmand %vm6580, %vm6508
        %vm6653 = vmand %vm6581, %vm6509
        %vm6654 = vmand %vm6582, %vm6510
        %vm6655 = vmand %vm6583, %vm6511
        %vm6656 = vmand %vm6584, %vm6512
        %vm6657 = vmand %vm6585, %vm6513
        %vm6658 = vmand %vm6586, %vm6514
        %vm6659 = vmand %vm6587, %vm6515
        %vm6660 = vmand %vm6588, %vm6516
        %vm6661 = vmand %vm6589, %vm6517
        %vm6662 = vmand %vm6590, %vm6518
        %vm6663 = vmand %vm6591, %vm6519
        %vm6664 = vmand %vm6592, %vm6520
        %v6665 = vadd.s32 %v5667, 18
        %v6666 = vadd.s32 %v5678, 18
        %v6667 = vadd.s32 %v5689, 18
        %v6668 = vadd.s32 %v5700, 18
        %v6669 = vadd.s32 %v5711, 18
        %v6670 = vadd.s32 %v5722, 18
        %v6671 = vadd.s32 %v5733, 18
        %v6672 = vadd.s32 %v5744, 18
        %v6673 = vadd.s32 %v5755, 18
        %v6674 = vadd.s32 %v5766, 18
        %v6675 = vadd.s32 %v5777, 18
        %v6676 = vadd.s32 %v5788, 18
        %v6677 = vadd.s32 %v5799, 18
        %v6678 = vadd.s32 %v5810, 18
        %v6679 = vadd.s32 %v5821, 18
        %v6680 = vadd.s32 %v5832, 18
        %v6681 = vadd.s32 %v5843, 18
        %v6682 = vadd.s32 %v5854, 18
        %v6683 = vadd.s32 %v5865, 18
        %v6684 = vadd.s32 %v5876, 18
        %v6685 = vadd.s32 %v5887, 18
        %v6686 = vadd.s32 %v5898, 18
        %v6687 = vadd.s32 %v5909, 18
        %v6688 = vadd.s32 %v5920, 18
        %v6689 = vadd.s32 %v5931, 18
        %v6690 = vadd.s32 %v5942, 18
        %v6691 = vadd.s32 %v5953, 18
        %v6692 = vadd.s32 %v5964, 18
        %v6693 = vadd.s32 %v5975, 18
        %v6694 = vadd.s32 %v5986, 18
        %v6695 = vadd.s32 %v5997, 18
        %v6696 = vadd.s32 %v6008, 18
        %v6697 = vadd.s32 %v6019, 18
        %v6698 = vadd.s32 %v6030, 18
        %v6699 = vadd.s32 %v6041, 18
        %v6700 = vadd.s32 %v6052, 18
        %v6701 = vadd.s32 %v6063, 18
        %v6702 = vadd.s32 %v6074, 18
        %v6703 = vadd.s32 %v6085, 18
        %v6704 = vadd.s32 %v6096, 18
        %v6705 = vadd.s32 %v6107, 18
        %v6706 = vadd.s32 %v6118, 18
        %v6707 = vadd.s32 %v6129, 18
        %v6708 = vadd.s32 %v6140, 18
        %v6709 = vadd.s32 %v6151, 18
        %v6710 = vadd.s32 %v6162, 18
        %v6711 = vadd.s32 %v6173, 18
        %v6712 = vadd.s32 %v6184, 18
        %v6713 = vadd.s32 %v6195, 18
        %v6714 = vadd.s32 %v6206, 18
        %v6715 = vadd.s32 %v6217, 18
        %v6716 = vadd.s32 %v6228, 18
        %v6717 = vadd.s32 %v6239, 18
        %v6718 = vadd.s32 %v6250, 18
        %v6719 = vadd.s32 %v6261, 18
        %v6720 = vadd.s32 %v6272, 18
        %v6721 = vadd.s32 %v6283, 18
        %v6722 = vadd.s32 %v6294, 18
        %v6723 = vadd.s32 %v6305, 18
        %v6724 = vadd.s32 %v6316, 18
        %v6725 = vadd.s32 %v6327, 18
        %v6726 = vadd.s32 %v6338, 18
        %v6727 = vadd.s32 %v6349, 18
        %v6728 = vadd.s32 %v6360, 18
        %v6729 = vadd.s32 %v6371, 18
        %v6730 = vadd.s32 %v6382, 18
        %v6731 = vadd.s32 %v6393, 18
        %v6732 = vadd.s32 %v6404, 18
        %v6733 = vadd.s32 %v6415, 18
        %v6734 = vadd.s32 %v6426, 18
        %v6735 = vadd.s32 %v6437, 18
        %v6736 = vadd.s32 %v6448, 18
        %v6737 = vsel %vm6593, %v6665, %v5667
        %v6738 = vsel %vm6594, %v6666, %v5678
        %v6739 = vsel %vm6595, %v6667, %v5689
        %v6740 = vsel %vm6596, %v6668, %v5700
        %v6741 = vsel %vm6597, %v6669, %v5711
        %v6742 = vsel %vm6598, %v6670, %v5722
        %v6743 = vsel %vm6599, %v6671, %v5733
        %v6744 = vsel %vm6600, %v6672, %v5744
        %v6745 = vsel %vm6601, %v6673, %v5755
        %v6746 = vsel %vm6602, %v6674, %v5766
        %v6747 = vsel %vm6603, %v6675, %v5777
        %v6748 = vsel %vm6604, %v6676, %v5788
        %v6749 = vsel %vm6605, %v6677, %v5799
        %v6750 = vsel %vm6606, %v6678, %v5810
        %v6751 = vsel %vm6607, %v6679, %v5821
        %v6752 = vsel %vm6608, %v6680, %v5832
        %v6753 = vsel %vm6609, %v6681, %v5843
        %v6754 = vsel %vm6610, %v6682, %v5854
        %v6755 = vsel %vm6611, %v6683, %v5865
        %v6756 = vsel %vm6612, %v6684, %v5876
        %v6757 = vsel %vm6613, %v6685, %v5887
        %v6758 = vsel %vm6614, %v6686, %v5898
        %v6759 = vsel %vm6615, %v6687, %v5909
        %v6760 = vsel %vm6616, %v6688, %v5920
        %v6761 = vsel %vm6617, %v6689, %v5931
        %v6762 = vsel %vm6618, %v6690, %v5942
        %v6763 = vsel %vm6619, %v6691, %v5953
        %v6764 = vsel %vm6620, %v6692, %v5964
        %v6765 = vsel %vm6621, %v6693, %v5975
        %v6766 = vsel %vm6622, %v6694, %v5986
        %v6767 = vsel %vm6623, %v6695, %v5997
        %v6768 = vsel %vm6624, %v6696, %v6008
        %v6769 = vsel %vm6625, %v6697, %v6019
        %v6770 = vsel %vm6626, %v6698, %v6030
        %v6771 = vsel %vm6627, %v6699, %v6041
        %v6772 = vsel %vm6628, %v6700, %v6052
        %v6773 = vsel %vm6629, %v6701, %v6063
        %v6774 = vsel %vm6630, %v6702, %v6074
        %v6775 = vsel %vm6631, %v6703, %v6085
        %v6776 = vsel %vm6632, %v6704, %v6096
        %v6777 = vsel %vm6633, %v6705, %v6107
        %v6778 = vsel %vm6634, %v6706, %v6118
        %v6779 = vsel %vm6635, %v6707, %v6129
        %v6780 = vsel %vm6636, %v6708, %v6140
        %v6781 = vsel %vm6637, %v6709, %v6151
        %v6782 = vsel %vm6638, %v6710, %v6162
        %v6783 = vsel %vm6639, %v6711, %v6173
        %v6784 = vsel %vm6640, %v6712, %v6184
        %v6785 = vsel %vm6641, %v6713, %v6195
        %v6786 = vsel %vm6642, %v6714, %v6206
        %v6787 = vsel %vm6643, %v6715, %v6217
        %v6788 = vsel %vm6644, %v6716, %v6228
        %v6789 = vsel %vm6645, %v6717, %v6239
        %v6790 = vsel %vm6646, %v6718, %v6250
        %v6791 = vsel %vm6647, %v6719, %v6261
        %v6792 = vsel %vm6648, %v6720, %v6272
        %v6793 = vsel %vm6649, %v6721, %v6283
        %v6794 = vsel %vm6650, %v6722, %v6294
        %v6795 = vsel %vm6651, %v6723, %v6305
        %v6796 = vsel %vm6652, %v6724, %v6316
        %v6797 = vsel %vm6653, %v6725, %v6327
        %v6798 = vsel %vm6654, %v6726, %v6338
        %v6799 = vsel %vm6655, %v6727, %v6349
        %v6800 = vsel %vm6656, %v6728, %v6360
        %v6801 = vsel %vm6657, %v6729, %v6371
        %v6802 = vsel %vm6658, %v6730, %v6382
        %v6803 = vsel %vm6659, %v6731, %v6393
        %v6804 = vsel %vm6660, %v6732, %v6404
        %v6805 = vsel %vm6661, %v6733, %v6415
        %v6806 = vsel %vm6662, %v6734, %v6426
        %v6807 = vsel %vm6663, %v6735, %v6437
        %v6808 = vsel %vm6664, %v6736, %v6448
        %vm6809 = vcmp.lt.s32.totalorder %v6737, 16
        %vm6810 = vcmp.lt.s32.totalorder %v6738, 16
        %vm6811 = vcmp.lt.s32.totalorder %v6739, 16
        %vm6812 = vcmp.lt.s32.totalorder %v6740, 16
        %vm6813 = vcmp.lt.s32.totalorder %v6741, 16
        %vm6814 = vcmp.lt.s32.totalorder %v6742, 16
        %vm6815 = vcmp.lt.s32.totalorder %v6743, 16
        %vm6816 = vcmp.lt.s32.totalorder %v6744, 16
        %vm6817 = vcmp.lt.s32.totalorder %v6745, 16
        %vm6818 = vcmp.lt.s32.totalorder %v6746, 16
        %vm6819 = vcmp.lt.s32.totalorder %v6747, 16
        %vm6820 = vcmp.lt.s32.totalorder %v6748, 16
        %vm6821 = vcmp.lt.s32.totalorder %v6749, 16
        %vm6822 = vcmp.lt.s32.totalorder %v6750, 16
        %vm6823 = vcmp.lt.s32.totalorder %v6751, 16
        %vm6824 = vcmp.lt.s32.totalorder %v6752, 16
        %vm6825 = vcmp.lt.s32.totalorder %v6753, 16
        %vm6826 = vcmp.lt.s32.totalorder %v6754, 16
        %vm6827 = vcmp.lt.s32.totalorder %v6755, 16
        %vm6828 = vcmp.lt.s32.totalorder %v6756, 16
        %vm6829 = vcmp.lt.s32.totalorder %v6757, 16
        %vm6830 = vcmp.lt.s32.totalorder %v6758, 16
        %vm6831 = vcmp.lt.s32.totalorder %v6759, 16
        %vm6832 = vcmp.lt.s32.totalorder %v6760, 16
        %vm6833 = vcmp.lt.s32.totalorder %v6761, 16
        %vm6834 = vcmp.lt.s32.totalorder %v6762, 16
        %vm6835 = vcmp.lt.s32.totalorder %v6763, 16
        %vm6836 = vcmp.lt.s32.totalorder %v6764, 16
        %vm6837 = vcmp.lt.s32.totalorder %v6765, 16
        %vm6838 = vcmp.lt.s32.totalorder %v6766, 16
        %vm6839 = vcmp.lt.s32.totalorder %v6767, 16
        %vm6840 = vcmp.lt.s32.totalorder %v6768, 16
        %vm6841 = vcmp.lt.s32.totalorder %v6769, 16
        %vm6842 = vcmp.lt.s32.totalorder %v6770, 16
        %vm6843 = vcmp.lt.s32.totalorder %v6771, 16
        %vm6844 = vcmp.lt.s32.totalorder %v6772, 16
        %vm6845 = vcmp.lt.s32.totalorder %v6773, 16
        %vm6846 = vcmp.lt.s32.totalorder %v6774, 16
        %vm6847 = vcmp.lt.s32.totalorder %v6775, 16
        %vm6848 = vcmp.lt.s32.totalorder %v6776, 16
        %vm6849 = vcmp.lt.s32.totalorder %v6777, 16
        %vm6850 = vcmp.lt.s32.totalorder %v6778, 16
        %vm6851 = vcmp.lt.s32.totalorder %v6779, 16
        %vm6852 = vcmp.lt.s32.totalorder %v6780, 16
        %vm6853 = vcmp.lt.s32.totalorder %v6781, 16
        %vm6854 = vcmp.lt.s32.totalorder %v6782, 16
        %vm6855 = vcmp.lt.s32.totalorder %v6783, 16
        %vm6856 = vcmp.lt.s32.totalorder %v6784, 16
        %vm6857 = vcmp.lt.s32.totalorder %v6785, 16
        %vm6858 = vcmp.lt.s32.totalorder %v6786, 16
        %vm6859 = vcmp.lt.s32.totalorder %v6787, 16
        %vm6860 = vcmp.lt.s32.totalorder %v6788, 16
        %vm6861 = vcmp.lt.s32.totalorder %v6789, 16
        %vm6862 = vcmp.lt.s32.totalorder %v6790, 16
        %vm6863 = vcmp.lt.s32.totalorder %v6791, 16
        %vm6864 = vcmp.lt.s32.totalorder %v6792, 16
        %vm6865 = vcmp.lt.s32.totalorder %v6793, 16
        %vm6866 = vcmp.lt.s32.totalorder %v6794, 16
        %vm6867 = vcmp.lt.s32.totalorder %v6795, 16
        %vm6868 = vcmp.lt.s32.totalorder %v6796, 16
        %vm6869 = vcmp.lt.s32.totalorder %v6797, 16
        %vm6870 = vcmp.lt.s32.totalorder %v6798, 16
        %vm6871 = vcmp.lt.s32.totalorder %v6799, 16
        %vm6872 = vcmp.lt.s32.totalorder %v6800, 16
        %vm6873 = vcmp.lt.s32.totalorder %v6801, 16
        %vm6874 = vcmp.lt.s32.totalorder %v6802, 16
        %vm6875 = vcmp.lt.s32.totalorder %v6803, 16
        %vm6876 = vcmp.lt.s32.totalorder %v6804, 16
        %vm6877 = vcmp.lt.s32.totalorder %v6805, 16
        %vm6878 = vcmp.lt.s32.totalorder %v6806, 16
        %vm6879 = vcmp.lt.s32.totalorder %v6807, 16
        %vm6880 = vcmp.lt.s32.totalorder %v6808, 16
        %v6881 = vmax.f32 %v5298, 0.0
        %v6882 = vmax.f32 %v5301, 0.0
        %v6883 = vmax.f32 %v5306, 0.0
        %v6884 = vmax.f32 %v5309, 0.0
        %v6885 = vmax.f32 %v5314, 0.0
        %v6886 = vmax.f32 %v5317, 0.0
        %v6887 = vmax.f32 %v5322, 0.0
        %v6888 = vmax.f32 %v5325, 0.0
        %v6889 = vmax.f32 %v5330, 0.0
        %v6890 = vmax.f32 %v5333, 0.0
        %v6891 = vmax.f32 %v5338, 0.0
        %v6892 = vmax.f32 %v5341, 0.0
        %v6893 = vmax.f32 %v5346, 0.0
        %v6894 = vmax.f32 %v5349, 0.0
        %v6895 = vmax.f32 %v5354, 0.0
        %v6896 = vmax.f32 %v5357, 0.0
        %v6897 = vmax.f32 %v5362, 0.0
        %v6898 = vmax.f32 %v5365, 0.0
        %v6899 = vmax.f32 %v5370, 0.0
        %v6900 = vmax.f32 %v5373, 0.0
        %v6901 = vmax.f32 %v5378, 0.0
        %v6902 = vmax.f32 %v5381, 0.0
        %v6903 = vmax.f32 %v5386, 0.0
        %v6904 = vmax.f32 %v5389, 0.0
        %v6905 = vmax.f32 %v5394, 0.0
        %v6906 = vmax.f32 %v5397, 0.0
        %v6907 = vmax.f32 %v5402, 0.0
        %v6908 = vmax.f32 %v5405, 0.0
        %v6909 = vmax.f32 %v5410, 0.0
        %v6910 = vmax.f32 %v5413, 0.0
        %v6911 = vmax.f32 %v5418, 0.0
        %v6912 = vmax.f32 %v5421, 0.0
        %v6913 = vmax.f32 %v5426, 0.0
        %v6914 = vmax.f32 %v5429, 0.0
        %v6915 = vmax.f32 %v5434, 0.0
        %v6916 = vmax.f32 %v5437, 0.0
        %v6917 = vmax.f32 %v5442, 0.0
        %v6918 = vmax.f32 %v5445, 0.0
        %v6919 = vmax.f32 %v5450, 0.0
        %v6920 = vmax.f32 %v5453, 0.0
        %v6921 = vmax.f32 %v5458, 0.0
        %v6922 = vmax.f32 %v5461, 0.0
        %v6923 = vmax.f32 %v5466, 0.0
        %v6924 = vmax.f32 %v5469, 0.0
        %v6925 = vmax.f32 %v5474, 0.0
        %v6926 = vmax.f32 %v5477, 0.0
        %v6927 = vmax.f32 %v5482, 0.0
        %v6928 = vmax.f32 %v5485, 0.0
        %v6929 = vmax.f32 %v5490, 0.0
        %v6930 = vmax.f32 %v5493, 0.0
        %v6931 = vmax.f32 %v5498, 0.0
        %v6932 = vmax.f32 %v5501, 0.0
        %v6933 = vmax.f32 %v5506, 0.0
        %v6934 = vmax.f32 %v5509, 0.0
        %v6935 = vmax.f32 %v5514, 0.0
        %v6936 = vmax.f32 %v5517, 0.0
        %v6937 = vmax.f32 %v5522, 0.0
        %v6938 = vmax.f32 %v5525, 0.0
        %v6939 = vmax.f32 %v5530, 0.0
        %v6940 = vmax.f32 %v5533, 0.0
        %v6941 = vmax.f32 %v5538, 0.0
        %v6942 = vmax.f32 %v5541, 0.0
        %v6943 = vmax.f32 %v5546, 0.0
        %v6944 = vmax.f32 %v5549, 0.0
        %v6945 = vmax.f32 %v5554, 0.0
        %v6946 = vmax.f32 %v5557, 0.0
        %v6947 = vmax.f32 %v5562, 0.0
        %v6948 = vmax.f32 %v5565, 0.0
        %v6949 = vmax.f32 %v5570, 0.0
        %v6950 = vmax.f32 %v5573, 0.0
        %v6951 = vmax.f32 %v5578, 0.0
        %v6952 = vmax.f32 %v5581, 0.0
        %v6953 = vsel %vm6809, 1, 0
        %v6954 = vsel %vm6810, 1, 0
        %v6955 = vsel %vm6811, 1, 0
        %v6956 = vsel %vm6812, 1, 0
        %v6957 = vsel %vm6813, 1, 0
        %v6958 = vsel %vm6814, 1, 0
        %v6959 = vsel %vm6815, 1, 0
        %v6960 = vsel %vm6816, 1, 0
        %v6961 = vsel %vm6817, 1, 0
        %v6962 = vsel %vm6818, 1, 0
        %v6963 = vsel %vm6819, 1, 0
        %v6964 = vsel %vm6820, 1, 0
        %v6965 = vsel %vm6821, 1, 0
        %v6966 = vsel %vm6822, 1, 0
        %v6967 = vsel %vm6823, 1, 0
        %v6968 = vsel %vm6824, 1, 0
        %v6969 = vsel %vm6825, 1, 0
        %v6970 = vsel %vm6826, 1, 0
        %v6971 = vsel %vm6827, 1, 0
        %v6972 = vsel %vm6828, 1, 0
        %v6973 = vsel %vm6829, 1, 0
        %v6974 = vsel %vm6830, 1, 0
        %v6975 = vsel %vm6831, 1, 0
        %v6976 = vsel %vm6832, 1, 0
        %v6977 = vsel %vm6833, 1, 0
        %v6978 = vsel %vm6834, 1, 0
        %v6979 = vsel %vm6835, 1, 0
        %v6980 = vsel %vm6836, 1, 0
        %v6981 = vsel %vm6837, 1, 0
        %v6982 = vsel %vm6838, 1, 0
        %v6983 = vsel %vm6839, 1, 0
        %v6984 = vsel %vm6840, 1, 0
        %v6985 = vsel %vm6841, 1, 0
        %v6986 = vsel %vm6842, 1, 0
        %v6987 = vsel %vm6843, 1, 0
        %v6988 = vsel %vm6844, 1, 0
        %v6989 = vsel %vm6845, 1, 0
        %v6990 = vsel %vm6846, 1, 0
        %v6991 = vsel %vm6847, 1, 0
        %v6992 = vsel %vm6848, 1, 0
        %v6993 = vsel %vm6849, 1, 0
        %v6994 = vsel %vm6850, 1, 0
        %v6995 = vsel %vm6851, 1, 0
        %v6996 = vsel %vm6852, 1, 0
        %v6997 = vsel %vm6853, 1, 0
        %v6998 = vsel %vm6854, 1, 0
        %v6999 = vsel %vm6855, 1, 0
        %v7000 = vsel %vm6856, 1, 0
        %v7001 = vsel %vm6857, 1, 0
        %v7002 = vsel %vm6858, 1, 0
        %v7003 = vsel %vm6859, 1, 0
        %v7004 = vsel %vm6860, 1, 0
        %v7005 = vsel %vm6861, 1, 0
        %v7006 = vsel %vm6862, 1, 0
        %v7007 = vsel %vm6863, 1, 0
        %v7008 = vsel %vm6864, 1, 0
        %v7009 = vsel %vm6865, 1, 0
        %v7010 = vsel %vm6866, 1, 0
        %v7011 = vsel %vm6867, 1, 0
        %v7012 = vsel %vm6868, 1, 0
        %v7013 = vsel %vm6869, 1, 0
        %v7014 = vsel %vm6870, 1, 0
        %v7015 = vsel %vm6871, 1, 0
        %v7016 = vsel %vm6872, 1, 0
        %v7017 = vsel %vm6873, 1, 0
        %v7018 = vsel %vm6874, 1, 0
        %v7019 = vsel %vm6875, 1, 0
        %v7020 = vsel %vm6876, 1, 0
        %v7021 = vsel %vm6877, 1, 0
        %v7022 = vsel %vm6878, 1, 0
        %v7023 = vsel %vm6879, 1, 0
        %v7024 = vsel %vm6880, 1, 0
        %vm7025 = vcmp.eq.s32.totalorder %v6953, 1
        %vm7026 = vcmp.eq.s32.totalorder %v6954, 1
        %vm7027 = vcmp.eq.s32.totalorder %v6955, 1
        %vm7028 = vcmp.eq.s32.totalorder %v6956, 1
        %vm7029 = vcmp.eq.s32.totalorder %v6957, 1
        %vm7030 = vcmp.eq.s32.totalorder %v6958, 1
        %vm7031 = vcmp.eq.s32.totalorder %v6959, 1
        %vm7032 = vcmp.eq.s32.totalorder %v6960, 1
        %vm7033 = vcmp.eq.s32.totalorder %v6961, 1
        %vm7034 = vcmp.eq.s32.totalorder %v6962, 1
        %vm7035 = vcmp.eq.s32.totalorder %v6963, 1
        %vm7036 = vcmp.eq.s32.totalorder %v6964, 1
        %vm7037 = vcmp.eq.s32.totalorder %v6965, 1
        %vm7038 = vcmp.eq.s32.totalorder %v6966, 1
        %vm7039 = vcmp.eq.s32.totalorder %v6967, 1
        %vm7040 = vcmp.eq.s32.totalorder %v6968, 1
        %vm7041 = vcmp.eq.s32.totalorder %v6969, 1
        %vm7042 = vcmp.eq.s32.totalorder %v6970, 1
        %vm7043 = vcmp.eq.s32.totalorder %v6971, 1
        %vm7044 = vcmp.eq.s32.totalorder %v6972, 1
        %vm7045 = vcmp.eq.s32.totalorder %v6973, 1
        %vm7046 = vcmp.eq.s32.totalorder %v6974, 1
        %vm7047 = vcmp.eq.s32.totalorder %v6975, 1
        %vm7048 = vcmp.eq.s32.totalorder %v6976, 1
        %vm7049 = vcmp.eq.s32.totalorder %v6977, 1
        %vm7050 = vcmp.eq.s32.totalorder %v6978, 1
        %vm7051 = vcmp.eq.s32.totalorder %v6979, 1
        %vm7052 = vcmp.eq.s32.totalorder %v6980, 1
        %vm7053 = vcmp.eq.s32.totalorder %v6981, 1
        %vm7054 = vcmp.eq.s32.totalorder %v6982, 1
        %vm7055 = vcmp.eq.s32.totalorder %v6983, 1
        %vm7056 = vcmp.eq.s32.totalorder %v6984, 1
        %vm7057 = vcmp.eq.s32.totalorder %v6985, 1
        %vm7058 = vcmp.eq.s32.totalorder %v6986, 1
        %vm7059 = vcmp.eq.s32.totalorder %v6987, 1
        %vm7060 = vcmp.eq.s32.totalorder %v6988, 1
        %vm7061 = vcmp.eq.s32.totalorder %v6989, 1
        %vm7062 = vcmp.eq.s32.totalorder %v6990, 1
        %vm7063 = vcmp.eq.s32.totalorder %v6991, 1
        %vm7064 = vcmp.eq.s32.totalorder %v6992, 1
        %vm7065 = vcmp.eq.s32.totalorder %v6993, 1
        %vm7066 = vcmp.eq.s32.totalorder %v6994, 1
        %vm7067 = vcmp.eq.s32.totalorder %v6995, 1
        %vm7068 = vcmp.eq.s32.totalorder %v6996, 1
        %vm7069 = vcmp.eq.s32.totalorder %v6997, 1
        %vm7070 = vcmp.eq.s32.totalorder %v6998, 1
        %vm7071 = vcmp.eq.s32.totalorder %v6999, 1
        %vm7072 = vcmp.eq.s32.totalorder %v7000, 1
        %vm7073 = vcmp.eq.s32.totalorder %v7001, 1
        %vm7074 = vcmp.eq.s32.totalorder %v7002, 1
        %vm7075 = vcmp.eq.s32.totalorder %v7003, 1
        %vm7076 = vcmp.eq.s32.totalorder %v7004, 1
        %vm7077 = vcmp.eq.s32.totalorder %v7005, 1
        %vm7078 = vcmp.eq.s32.totalorder %v7006, 1
        %vm7079 = vcmp.eq.s32.totalorder %v7007, 1
        %vm7080 = vcmp.eq.s32.totalorder %v7008, 1
        %vm7081 = vcmp.eq.s32.totalorder %v7009, 1
        %vm7082 = vcmp.eq.s32.totalorder %v7010, 1
        %vm7083 = vcmp.eq.s32.totalorder %v7011, 1
        %vm7084 = vcmp.eq.s32.totalorder %v7012, 1
        %vm7085 = vcmp.eq.s32.totalorder %v7013, 1
        %vm7086 = vcmp.eq.s32.totalorder %v7014, 1
        %vm7087 = vcmp.eq.s32.totalorder %v7015, 1
        %vm7088 = vcmp.eq.s32.totalorder %v7016, 1
        %vm7089 = vcmp.eq.s32.totalorder %v7017, 1
        %vm7090 = vcmp.eq.s32.totalorder %v7018, 1
        %vm7091 = vcmp.eq.s32.totalorder %v7019, 1
        %vm7092 = vcmp.eq.s32.totalorder %v7020, 1
        %vm7093 = vcmp.eq.s32.totalorder %v7021, 1
        %vm7094 = vcmp.eq.s32.totalorder %v7022, 1
        %vm7095 = vcmp.eq.s32.totalorder %v7023, 1
        %vm7096 = vcmp.eq.s32.totalorder %v7024, 1
        %v7097 = vsel %vm7025, %v6881, 0.0
        %v7098 = vsel %vm7026, %v6882, 0.0
        %v7099 = vsel %vm7027, %v6883, 0.0
        %v7100 = vsel %vm7028, %v6884, 0.0
        %v7101 = vsel %vm7029, %v6885, 0.0
        %v7102 = vsel %vm7030, %v6886, 0.0
        %v7103 = vsel %vm7031, %v6887, 0.0
        %v7104 = vsel %vm7032, %v6888, 0.0
        %v7105 = vsel %vm7033, %v6889, 0.0
        %v7106 = vsel %vm7034, %v6890, 0.0
        %v7107 = vsel %vm7035, %v6891, 0.0
        %v7108 = vsel %vm7036, %v6892, 0.0
        %v7109 = vsel %vm7037, %v6893, 0.0
        %v7110 = vsel %vm7038, %v6894, 0.0
        %v7111 = vsel %vm7039, %v6895, 0.0
        %v7112 = vsel %vm7040, %v6896, 0.0
        %v7113 = vsel %vm7041, %v6897, 0.0
        %v7114 = vsel %vm7042, %v6898, 0.0
        %v7115 = vsel %vm7043, %v6899, 0.0
        %v7116 = vsel %vm7044, %v6900, 0.0
        %v7117 = vsel %vm7045, %v6901, 0.0
        %v7118 = vsel %vm7046, %v6902, 0.0
        %v7119 = vsel %vm7047, %v6903, 0.0
        %v7120 = vsel %vm7048, %v6904, 0.0
        %v7121 = vsel %vm7049, %v6905, 0.0
        %v7122 = vsel %vm7050, %v6906, 0.0
        %v7123 = vsel %vm7051, %v6907, 0.0
        %v7124 = vsel %vm7052, %v6908, 0.0
        %v7125 = vsel %vm7053, %v6909, 0.0
        %v7126 = vsel %vm7054, %v6910, 0.0
        %v7127 = vsel %vm7055, %v6911, 0.0
        %v7128 = vsel %vm7056, %v6912, 0.0
        %v7129 = vsel %vm7057, %v6913, 0.0
        %v7130 = vsel %vm7058, %v6914, 0.0
        %v7131 = vsel %vm7059, %v6915, 0.0
        %v7132 = vsel %vm7060, %v6916, 0.0
        %v7133 = vsel %vm7061, %v6917, 0.0
        %v7134 = vsel %vm7062, %v6918, 0.0
        %v7135 = vsel %vm7063, %v6919, 0.0
        %v7136 = vsel %vm7064, %v6920, 0.0
        %v7137 = vsel %vm7065, %v6921, 0.0
        %v7138 = vsel %vm7066, %v6922, 0.0
        %v7139 = vsel %vm7067, %v6923, 0.0
        %v7140 = vsel %vm7068, %v6924, 0.0
        %v7141 = vsel %vm7069, %v6925, 0.0
        %v7142 = vsel %vm7070, %v6926, 0.0
        %v7143 = vsel %vm7071, %v6927, 0.0
        %v7144 = vsel %vm7072, %v6928, 0.0
        %v7145 = vsel %vm7073, %v6929, 0.0
        %v7146 = vsel %vm7074, %v6930, 0.0
        %v7147 = vsel %vm7075, %v6931, 0.0
        %v7148 = vsel %vm7076, %v6932, 0.0
        %v7149 = vsel %vm7077, %v6933, 0.0
        %v7150 = vsel %vm7078, %v6934, 0.0
        %v7151 = vsel %vm7079, %v6935, 0.0
        %v7152 = vsel %vm7080, %v6936, 0.0
        %v7153 = vsel %vm7081, %v6937, 0.0
        %v7154 = vsel %vm7082, %v6938, 0.0
        %v7155 = vsel %vm7083, %v6939, 0.0
        %v7156 = vsel %vm7084, %v6940, 0.0
        %v7157 = vsel %vm7085, %v6941, 0.0
        %v7158 = vsel %vm7086, %v6942, 0.0
        %v7159 = vsel %vm7087, %v6943, 0.0
        %v7160 = vsel %vm7088, %v6944, 0.0
        %v7161 = vsel %vm7089, %v6945, 0.0
        %v7162 = vsel %vm7090, %v6946, 0.0
        %v7163 = vsel %vm7091, %v6947, 0.0
        %v7164 = vsel %vm7092, %v6948, 0.0
        %v7165 = vsel %vm7093, %v6949, 0.0
        %v7166 = vsel %vm7094, %v6950, 0.0
        %v7167 = vsel %vm7095, %v6951, 0.0
        %v7168 = vsel %vm7096, %v6952, 0.0
        %v7169 = vpack.c.bf16 %v7098, %v7097
        %v7170 = vpack.c.bf16 %v7100, %v7099
        %v7171 = vpack.c.bf16 %v7102, %v7101
        %v7172 = vpack.c.bf16 %v7104, %v7103
        %v7173 = vpack.c.bf16 %v7106, %v7105
        %v7174 = vpack.c.bf16 %v7108, %v7107
        %v7175 = vpack.c.bf16 %v7110, %v7109
        %v7176 = vpack.c.bf16 %v7112, %v7111
        %v7177 = vpack.c.bf16 %v7114, %v7113
        %v7178 = vpack.c.bf16 %v7116, %v7115
        %v7179 = vpack.c.bf16 %v7118, %v7117
        %v7180 = vpack.c.bf16 %v7120, %v7119
        %v7181 = vpack.c.bf16 %v7122, %v7121
        %v7182 = vpack.c.bf16 %v7124, %v7123
        %v7183 = vpack.c.bf16 %v7126, %v7125
        %v7184 = vpack.c.bf16 %v7128, %v7127
        %v7185 = vpack.c.bf16 %v7130, %v7129
        %v7186 = vpack.c.bf16 %v7132, %v7131
        %v7187 = vpack.c.bf16 %v7134, %v7133
        %v7188 = vpack.c.bf16 %v7136, %v7135
        %v7189 = vpack.c.bf16 %v7138, %v7137
        %v7190 = vpack.c.bf16 %v7140, %v7139
        %v7191 = vpack.c.bf16 %v7142, %v7141
        %v7192 = vpack.c.bf16 %v7144, %v7143
        %v7193 = vpack.c.bf16 %v7146, %v7145
        %v7194 = vpack.c.bf16 %v7148, %v7147
        %v7195 = vpack.c.bf16 %v7150, %v7149
        %v7196 = vpack.c.bf16 %v7152, %v7151
        %v7197 = vpack.c.bf16 %v7154, %v7153
        %v7198 = vpack.c.bf16 %v7156, %v7155
        %v7199 = vpack.c.bf16 %v7158, %v7157
        %v7200 = vpack.c.bf16 %v7160, %v7159
        %v7201 = vpack.c.bf16 %v7162, %v7161
        %v7202 = vpack.c.bf16 %v7164, %v7163
        %v7203 = vpack.c.bf16 %v7166, %v7165
        %v7204 = vpack.c.bf16 %v7168, %v7167
        %vm7205 = vcmask 261120
        %7206 = vst.msk [vmem:[#allocation3] sm:$0xff] %vm7205, 0
        %vm7207 = vcmask 254976
        %vm7208 = vsmask.f32 1280
        %vm7209 = vmand %vm7207, %vm7208
        %v7210 = vld [vmem:[#allocation3 + $0x18] sm:$0x3]
        %v7211 = vsel %vm7209, 0, %v7210
        %7212 = vst [vmem:[#allocation3 + $0x18] sm:$0x3] %v7211
        %v7214 = vshrl.u32 %v7169, 16
        %v7216 = vrot.slane %v7214, 6
        %v7217 = vshll.u32 %v7169, 16
        %v7219 = vrot.slane %v7217, 7
        %v7220 = vor.u32 %v7216, %v7219
        %v7222 = vshrl.u32 %v7170, 16
        %v7224 = vrot.slane %v7222, 6
        %v7225 = vshll.u32 %v7170, 16
        %v7227 = vrot.slane %v7225, 7
        %v7228 = vor.u32 %v7224, %v7227
        %v7229 = vsel %vm7208, %v7220, %v7228
        %v7231 = vshrl.u32 %v7171, 16
        %v7233 = vrot.slane %v7231, 6
        %v7234 = vshll.u32 %v7171, 16
        %v7236 = vrot.slane %v7234, 7
        %v7237 = vor.u32 %v7233, %v7236
        %v7238 = vsel %vm7208, %v7228, %v7237
        %v7240 = vshrl.u32 %v7172, 16
        %v7242 = vrot.slane %v7240, 6
        %v7243 = vshll.u32 %v7172, 16
        %v7245 = vrot.slane %v7243, 7
        %v7246 = vor.u32 %v7242, %v7245
        %v7247 = vsel %vm7208, %v7237, %v7246
        %v7249 = vshrl.u32 %v7173, 16
        %v7251 = vrot.slane %v7249, 6
        %v7252 = vshll.u32 %v7173, 16
        %v7254 = vrot.slane %v7252, 7
        %v7255 = vor.u32 %v7251, %v7254
        %v7256 = vsel %vm7208, %v7246, %v7255
        %v7258 = vshrl.u32 %v7174, 16
        %v7260 = vrot.slane %v7258, 6
        %v7261 = vshll.u32 %v7174, 16
        %v7263 = vrot.slane %v7261, 7
        %v7264 = vor.u32 %v7260, %v7263
        %v7265 = vsel %vm7208, %v7255, %v7264
        %v7267 = vshrl.u32 %v7175, 16
        %v7269 = vrot.slane %v7267, 6
        %v7270 = vshll.u32 %v7175, 16
        %v7272 = vrot.slane %v7270, 7
        %v7273 = vor.u32 %v7269, %v7272
        %v7274 = vsel %vm7208, %v7264, %v7273
        %v7276 = vshrl.u32 %v7176, 16
        %v7278 = vrot.slane %v7276, 6
        %v7279 = vshll.u32 %v7176, 16
        %v7281 = vrot.slane %v7279, 7
        %v7282 = vor.u32 %v7278, %v7281
        %v7283 = vsel %vm7208, %v7273, %v7282
        %v7285 = vshrl.u32 %v7177, 16
        %v7287 = vrot.slane %v7285, 6
        %v7288 = vshll.u32 %v7177, 16
        %v7290 = vrot.slane %v7288, 7
        %v7291 = vor.u32 %v7287, %v7290
        %v7292 = vsel %vm7208, %v7282, %v7291
        %v7294 = vshrl.u32 %v7178, 16
        %v7296 = vrot.slane %v7294, 6
        %v7297 = vshll.u32 %v7178, 16
        %v7299 = vrot.slane %v7297, 7
        %v7300 = vor.u32 %v7296, %v7299
        %v7301 = vsel %vm7208, %v7291, %v7300
        %v7303 = vshrl.u32 %v7179, 16
        %v7305 = vrot.slane %v7303, 6
        %v7306 = vshll.u32 %v7179, 16
        %v7308 = vrot.slane %v7306, 7
        %v7309 = vor.u32 %v7305, %v7308
        %v7310 = vsel %vm7208, %v7300, %v7309
        %v7312 = vshrl.u32 %v7180, 16
        %v7314 = vrot.slane %v7312, 6
        %v7315 = vshll.u32 %v7180, 16
        %v7317 = vrot.slane %v7315, 7
        %v7318 = vor.u32 %v7314, %v7317
        %v7319 = vsel %vm7208, %v7309, %v7318
        %v7321 = vshrl.u32 %v7181, 16
        %v7323 = vrot.slane %v7321, 6
        %v7324 = vshll.u32 %v7181, 16
        %v7326 = vrot.slane %v7324, 7
        %v7327 = vor.u32 %v7323, %v7326
        %v7328 = vsel %vm7208, %v7318, %v7327
        %v7330 = vshrl.u32 %v7182, 16
        %v7332 = vrot.slane %v7330, 6
        %v7333 = vshll.u32 %v7182, 16
        %v7335 = vrot.slane %v7333, 7
        %v7336 = vor.u32 %v7332, %v7335
        %v7337 = vsel %vm7208, %v7327, %v7336
        %v7339 = vshrl.u32 %v7183, 16
        %v7341 = vrot.slane %v7339, 6
        %v7342 = vshll.u32 %v7183, 16
        %v7344 = vrot.slane %v7342, 7
        %v7345 = vor.u32 %v7341, %v7344
        %v7346 = vsel %vm7208, %v7336, %v7345
        %v7348 = vshrl.u32 %v7184, 16
        %v7350 = vrot.slane %v7348, 6
        %v7351 = vshll.u32 %v7184, 16
        %v7353 = vrot.slane %v7351, 7
        %v7354 = vor.u32 %v7350, %v7353
        %v7355 = vsel %vm7208, %v7345, %v7354
        %v7357 = vshrl.u32 %v7185, 16
        %v7359 = vrot.slane %v7357, 6
        %v7360 = vshll.u32 %v7185, 16
        %v7362 = vrot.slane %v7360, 7
        %v7363 = vor.u32 %v7359, %v7362
        %v7364 = vsel %vm7208, %v7354, %v7363
        %vm7382 = vcmask 261121
        %vm7383 = vsmask.f32 7942
        %vm7384 = vmand %vm7382, %vm7383
        %v7385 = vld [vmem:[#allocation3 + $0x18] sm:$0xfe]
        %v7386 = vsel %vm7384, %v7220, %v7385
        %7387 = vst [vmem:[#allocation3 + $0x18] sm:$0xfe] %v7386
        %7388 = vst.msk [vmem:[#allocation3 + $0x30] sm:$0xff] %vm7205, %v7229
        %7389 = vst.msk [vmem:[#allocation3 + $0x48] sm:$0xff] %vm7205, %v7238
        %7390 = vst.msk [vmem:[#allocation3 + $0x60] sm:$0xff] %vm7205, %v7247
        %7391 = vst.msk [vmem:[#allocation3 + $0x78] sm:$0xff] %vm7205, %v7256
        %7392 = vst.msk [vmem:[#allocation3 + $0x90] sm:$0xff] %vm7205, %v7265
        %7393 = vst.msk [vmem:[#allocation3 + $0xa8] sm:$0xff] %vm7205, %v7274
        %7394 = vst.msk [vmem:[#allocation3 + $0xc0] sm:$0xff] %vm7205, %v7283
        %7395 = vst.msk [vmem:[#allocation3 + $0xd8] sm:$0xff] %vm7205, %v7292
        %7396 = vst.msk [vmem:[#allocation3 + $0xf0] sm:$0xff] %vm7205, %v7301
        %7397 = vst.msk [vmem:[#allocation3 + $0x108] sm:$0xff] %vm7205, %v7310
        %7398 = vst.msk [vmem:[#allocation3 + $0x120] sm:$0xff] %vm7205, %v7319
        %7399 = vst.msk [vmem:[#allocation3 + $0x138] sm:$0xff] %vm7205, %v7328
        %7400 = vst.msk [vmem:[#allocation3 + $0x150] sm:$0xff] %vm7205, %v7337
        %7401 = vst.msk [vmem:[#allocation3 + $0x168] sm:$0xff] %vm7205, %v7346
        %7402 = vst.msk [vmem:[#allocation3 + $0x180] sm:$0xff] %vm7205, %v7355
        %7403 = vst.msk [vmem:[#allocation3 + $0x198] sm:$0xff] %vm7205, %v7364
        %vm7404 = vcmask 523520
        %7405 = vst.msk [vmem:[#allocation3] sm:$0xff] %vm7404, 0
        %vm7406 = vcmask 516352
        %7407 = vst.msk [vmem:[#allocation3 + $0x18] sm:$0x1] %vm7406, 0
        %vm7425 = vcmask 1040384
        %v7426 = vrot.slane %v7169, 7
        %v7427 = vrot.slane %v7170, 7
        %v7428 = vsel %vm7425, %v7426, %v7427
        %v7429 = vrot.slane %v7171, 7
        %v7430 = vsel %vm7425, %v7427, %v7429
        %v7431 = vrot.slane %v7172, 7
        %v7432 = vsel %vm7425, %v7429, %v7431
        %v7433 = vrot.slane %v7173, 7
        %v7434 = vsel %vm7425, %v7431, %v7433
        %v7435 = vrot.slane %v7174, 7
        %v7436 = vsel %vm7425, %v7433, %v7435
        %v7437 = vrot.slane %v7175, 7
        %v7438 = vsel %vm7425, %v7435, %v7437
        %v7439 = vrot.slane %v7176, 7
        %v7440 = vsel %vm7425, %v7437, %v7439
        %v7441 = vrot.slane %v7177, 7
        %v7442 = vsel %vm7425, %v7439, %v7441
        %v7443 = vrot.slane %v7178, 7
        %v7444 = vsel %vm7425, %v7441, %v7443
        %v7445 = vrot.slane %v7179, 7
        %v7446 = vsel %vm7425, %v7443, %v7445
        %v7447 = vrot.slane %v7180, 7
        %v7448 = vsel %vm7425, %v7445, %v7447
        %v7449 = vrot.slane %v7181, 7
        %v7450 = vsel %vm7425, %v7447, %v7449
        %v7451 = vrot.slane %v7182, 7
        %v7452 = vsel %vm7425, %v7449, %v7451
        %v7453 = vrot.slane %v7183, 7
        %v7454 = vsel %vm7425, %v7451, %v7453
        %v7455 = vrot.slane %v7184, 7
        %v7456 = vsel %vm7425, %v7453, %v7455
        %v7457 = vrot.slane %v7185, 7
        %v7458 = vsel %vm7425, %v7455, %v7457
        %7459 = vrot.lane.b32.xlu0 %v7426, 32
        %v7460 = vpop.permute.xlu0 %7459
        %7461 = vrot.lane.b32.xlu0 %v7428, 32
        %v7462 = vpop.permute.xlu0 %7461
        %7463 = vrot.lane.b32.xlu0 %v7430, 32
        %v7464 = vpop.permute.xlu0 %7463
        %7465 = vrot.lane.b32.xlu0 %v7432, 32
        %v7466 = vpop.permute.xlu0 %7465
        %7467 = vrot.lane.b32.xlu0 %v7434, 32
        %v7468 = vpop.permute.xlu0 %7467
        %7469 = vrot.lane.b32.xlu0 %v7436, 32
        %v7470 = vpop.permute.xlu0 %7469
        %7471 = vrot.lane.b32.xlu0 %v7438, 32
        %v7472 = vpop.permute.xlu0 %7471
        %7473 = vrot.lane.b32.xlu0 %v7440, 32
        %v7474 = vpop.permute.xlu0 %7473
        %7475 = vrot.lane.b32.xlu0 %v7442, 32
        %v7476 = vpop.permute.xlu0 %7475
        %7477 = vrot.lane.b32.xlu0 %v7444, 32
        %v7478 = vpop.permute.xlu0 %7477
        %7479 = vrot.lane.b32.xlu0 %v7446, 32
        %v7480 = vpop.permute.xlu0 %7479
        %7481 = vrot.lane.b32.xlu0 %v7448, 32
        %v7482 = vpop.permute.xlu0 %7481
        %7483 = vrot.lane.b32.xlu0 %v7450, 32
        %v7484 = vpop.permute.xlu0 %7483
        %7485 = vrot.lane.b32.xlu0 %v7452, 32
        %v7486 = vpop.permute.xlu0 %7485
        %7487 = vrot.lane.b32.xlu0 %v7454, 32
        %v7488 = vpop.permute.xlu0 %7487
        %7489 = vrot.lane.b32.xlu0 %v7456, 32
        %v7490 = vpop.permute.xlu0 %7489
        %7491 = vrot.lane.b32.xlu0 %v7458, 32
        %v7492 = vpop.permute.xlu0 %7491
        %vm7510 = vcmask 523521
        %7511 = vst.msk [vmem:[#allocation3 + $0x18] sm:$0xfe] %vm7510, %v7460
        %7512 = vst.msk [vmem:[#allocation3 + $0x30] sm:$0xff] %vm7404, %v7462
        %7513 = vst.msk [vmem:[#allocation3 + $0x48] sm:$0xff] %vm7404, %v7464
        %7514 = vst.msk [vmem:[#allocation3 + $0x60] sm:$0xff] %vm7404, %v7466
        %7515 = vst.msk [vmem:[#allocation3 + $0x78] sm:$0xff] %vm7404, %v7468
        %7516 = vst.msk [vmem:[#allocation3 + $0x90] sm:$0xff] %vm7404, %v7470
        %7517 = vst.msk [vmem:[#allocation3 + $0xa8] sm:$0xff] %vm7404, %v7472
        %7518 = vst.msk [vmem:[#allocation3 + $0xc0] sm:$0xff] %vm7404, %v7474
        %7519 = vst.msk [vmem:[#allocation3 + $0xd8] sm:$0xff] %vm7404, %v7476
        %7520 = vst.msk [vmem:[#allocation3 + $0xf0] sm:$0xff] %vm7404, %v7478
        %7521 = vst.msk [vmem:[#allocation3 + $0x108] sm:$0xff] %vm7404, %v7480
        %7522 = vst.msk [vmem:[#allocation3 + $0x120] sm:$0xff] %vm7404, %v7482
        %7523 = vst.msk [vmem:[#allocation3 + $0x138] sm:$0xff] %vm7404, %v7484
        %7524 = vst.msk [vmem:[#allocation3 + $0x150] sm:$0xff] %vm7404, %v7486
        %7525 = vst.msk [vmem:[#allocation3 + $0x168] sm:$0xff] %vm7404, %v7488
        %7526 = vst.msk [vmem:[#allocation3 + $0x180] sm:$0xff] %vm7404, %v7490
        %7527 = vst.msk [vmem:[#allocation3 + $0x198] sm:$0xff] %vm7404, %v7492
        %vm7528 = vcmask 785920
        %7529 = vst.msk [vmem:[#allocation3] sm:$0xff] %vm7528, 0
        %vm7530 = vcmask 778752
        %vm7531 = vsmask.f32 256
        %vm7532 = vmand %vm7530, %vm7531
        %v7533 = vld [vmem:[#allocation3 + $0x18] sm:$0x1]
        %v7534 = vsel %vm7532, 0, %v7533
        %7535 = vst [vmem:[#allocation3 + $0x18] sm:$0x1] %v7534
        %v7536 = vrot.slane %v7214, 7
        %v7537 = vor.u32 %v7536, %v7217
        %v7538 = vrot.slane %v7222, 7
        %v7539 = vor.u32 %v7538, %v7225
        %v7540 = vsel %vm7531, %v7536, %v7539
        %v7541 = vrot.slane %v7231, 7
        %v7542 = vor.u32 %v7541, %v7234
        %v7543 = vsel %vm7531, %v7538, %v7542
        %v7544 = vrot.slane %v7240, 7
        %v7545 = vor.u32 %v7544, %v7243
        %v7546 = vsel %vm7531, %v7541, %v7545
        %v7547 = vrot.slane %v7249, 7
        %v7548 = vor.u32 %v7547, %v7252
        %v7549 = vsel %vm7531, %v7544, %v7548
        %v7550 = vrot.slane %v7258, 7
        %v7551 = vor.u32 %v7550, %v7261
        %v7552 = vsel %vm7531, %v7547, %v7551
        %v7553 = vrot.slane %v7267, 7
        %v7554 = vor.u32 %v7553, %v7270
        %v7555 = vsel %vm7531, %v7550, %v7554
        %v7556 = vrot.slane %v7276, 7
        %v7557 = vor.u32 %v7556, %v7279
        %v7558 = vsel %vm7531, %v7553, %v7557
        %v7559 = vrot.slane %v7285, 7
        %v7560 = vor.u32 %v7559, %v7288
        %v7561 = vsel %vm7531, %v7556, %v7560
        %v7562 = vrot.slane %v7294, 7
        %v7563 = vor.u32 %v7562, %v7297
        %v7564 = vsel %vm7531, %v7559, %v7563
        %v7565 = vrot.slane %v7303, 7
        %v7566 = vor.u32 %v7565, %v7306
        %v7567 = vsel %vm7531, %v7562, %v7566
        %v7568 = vrot.slane %v7312, 7
        %v7569 = vor.u32 %v7568, %v7315
        %v7570 = vsel %vm7531, %v7565, %v7569
        %v7571 = vrot.slane %v7321, 7
        %v7572 = vor.u32 %v7571, %v7324
        %v7573 = vsel %vm7531, %v7568, %v7572
        %v7574 = vrot.slane %v7330, 7
        %v7575 = vor.u32 %v7574, %v7333
        %v7576 = vsel %vm7531, %v7571, %v7575
        %v7577 = vrot.slane %v7339, 7
        %v7578 = vor.u32 %v7577, %v7342
        %v7579 = vsel %vm7531, %v7574, %v7578
        %v7580 = vrot.slane %v7348, 7
        %v7581 = vor.u32 %v7580, %v7351
        %v7582 = vsel %vm7531, %v7577, %v7581
        %v7583 = vrot.slane %v7357, 7
        %v7584 = vor.u32 %v7583, %v7360
        %v7585 = vsel %vm7531, %v7580, %v7584
        %7586 = vrot.lane.b32.xlu0 %v7537, 64
        %v7587 = vpop.permute.xlu0 %7586
        %7588 = vrot.lane.b32.xlu0 %v7540, 64
        %v7589 = vpop.permute.xlu0 %7588
        %7590 = vrot.lane.b32.xlu0 %v7543, 64
        %v7591 = vpop.permute.xlu0 %7590
        %7592 = vrot.lane.b32.xlu0 %v7546, 64
        %v7593 = vpop.permute.xlu0 %7592
        %7594 = vrot.lane.b32.xlu0 %v7549, 64
        %v7595 = vpop.permute.xlu0 %7594
        %7596 = vrot.lane.b32.xlu0 %v7552, 64
        %v7597 = vpop.permute.xlu0 %7596
        %7598 = vrot.lane.b32.xlu0 %v7555, 64
        %v7599 = vpop.permute.xlu0 %7598
        %7600 = vrot.lane.b32.xlu0 %v7558, 64
        %v7601 = vpop.permute.xlu0 %7600
        %7602 = vrot.lane.b32.xlu0 %v7561, 64
        %v7603 = vpop.permute.xlu0 %7602
        %7604 = vrot.lane.b32.xlu0 %v7564, 64
        %v7605 = vpop.permute.xlu0 %7604
        %7606 = vrot.lane.b32.xlu0 %v7567, 64
        %v7607 = vpop.permute.xlu0 %7606
        %7608 = vrot.lane.b32.xlu0 %v7570, 64
        %v7609 = vpop.permute.xlu0 %7608
        %7610 = vrot.lane.b32.xlu0 %v7573, 64
        %v7611 = vpop.permute.xlu0 %7610
        %7612 = vrot.lane.b32.xlu0 %v7576, 64
        %v7613 = vpop.permute.xlu0 %7612
        %7614 = vrot.lane.b32.xlu0 %v7579, 64
        %v7615 = vpop.permute.xlu0 %7614
        %7616 = vrot.lane.b32.xlu0 %v7582, 64
        %v7617 = vpop.permute.xlu0 %7616
        %7618 = vrot.lane.b32.xlu0 %v7585, 64
        %v7619 = vpop.permute.xlu0 %7618
        %vm7637 = vcmask 785920
        %vm7638 = vsmask.f32 7938
        %vm7639 = vmand %vm7637, %vm7638
        %v7640 = vld [vmem:[#allocation3 + $0x18] sm:$0xff]
        %v7641 = vsel %vm7639, %v7587, %v7640
        %7642 = vst [vmem:[#allocation3 + $0x18] sm:$0xff] %v7641
        %7643 = vst.msk [vmem:[#allocation3 + $0x30] sm:$0xff] %vm7528, %v7589
        %7644 = vst.msk [vmem:[#allocation3 + $0x48] sm:$0xff] %vm7528, %v7591
        %7645 = vst.msk [vmem:[#allocation3 + $0x60] sm:$0xff] %vm7528, %v7593
        %7646 = vst.msk [vmem:[#allocation3 + $0x78] sm:$0xff] %vm7528, %v7595
        %7647 = vst.msk [vmem:[#allocation3 + $0x90] sm:$0xff] %vm7528, %v7597
        %7648 = vst.msk [vmem:[#allocation3 + $0xa8] sm:$0xff] %vm7528, %v7599
        %7649 = vst.msk [vmem:[#allocation3 + $0xc0] sm:$0xff] %vm7528, %v7601
        %7650 = vst.msk [vmem:[#allocation3 + $0xd8] sm:$0xff] %vm7528, %v7603
        %7651 = vst.msk [vmem:[#allocation3 + $0xf0] sm:$0xff] %vm7528, %v7605
        %7652 = vst.msk [vmem:[#allocation3 + $0x108] sm:$0xff] %vm7528, %v7607
        %7653 = vst.msk [vmem:[#allocation3 + $0x120] sm:$0xff] %vm7528, %v7609
        %7654 = vst.msk [vmem:[#allocation3 + $0x138] sm:$0xff] %vm7528, %v7611
        %7655 = vst.msk [vmem:[#allocation3 + $0x150] sm:$0xff] %vm7528, %v7613
        %7656 = vst.msk [vmem:[#allocation3 + $0x168] sm:$0xff] %vm7528, %v7615
        %7657 = vst.msk [vmem:[#allocation3 + $0x180] sm:$0xff] %vm7528, %v7617
        %7658 = vst.msk [vmem:[#allocation3 + $0x198] sm:$0xff] %vm7528, %v7619
        %vm7659 = vcmask 1041152
        %vm7660 = vmand %vm7659, %vm7531
        %v7661 = vld [vmem:[#allocation3] sm:$0x1]
        %v7662 = vsel %vm7660, 0, %v7661
        %7663 = vst [vmem:[#allocation3] sm:$0x1] %v7662
        %v7665 = vshrl.u32 %v7186, 16
        %v7667 = vrot.slane %v7665, 7
        %v7668 = vshll.u32 %v7186, 16
        %v7670 = vor.u32 %v7667, %v7668
        %v7671 = vsel %vm7531, %v7583, %v7670
        %7672 = vrot.lane.b32.xlu0 %v7537, 96
        %v7673 = vpop.permute.xlu0 %7672
        %7674 = vrot.lane.b32.xlu0 %v7540, 96
        %v7675 = vpop.permute.xlu0 %7674
        %7676 = vrot.lane.b32.xlu0 %v7543, 96
        %v7677 = vpop.permute.xlu0 %7676
        %7678 = vrot.lane.b32.xlu0 %v7546, 96
        %v7679 = vpop.permute.xlu0 %7678
        %7680 = vrot.lane.b32.xlu0 %v7549, 96
        %v7681 = vpop.permute.xlu0 %7680
        %7682 = vrot.lane.b32.xlu0 %v7552, 96
        %v7683 = vpop.permute.xlu0 %7682
        %7684 = vrot.lane.b32.xlu0 %v7555, 96
        %v7685 = vpop.permute.xlu0 %7684
        %7686 = vrot.lane.b32.xlu0 %v7558, 96
        %v7687 = vpop.permute.xlu0 %7686
        %7688 = vrot.lane.b32.xlu0 %v7561, 96
        %v7689 = vpop.permute.xlu0 %7688
        %7690 = vrot.lane.b32.xlu0 %v7564, 96
        %v7691 = vpop.permute.xlu0 %7690
        %7692 = vrot.lane.b32.xlu0 %v7567, 96
        %v7693 = vpop.permute.xlu0 %7692
        %7694 = vrot.lane.b32.xlu0 %v7570, 96
        %v7695 = vpop.permute.xlu0 %7694
        %7696 = vrot.lane.b32.xlu0 %v7573, 96
        %v7697 = vpop.permute.xlu0 %7696
        %7698 = vrot.lane.b32.xlu0 %v7576, 96
        %v7699 = vpop.permute.xlu0 %7698
        %7700 = vrot.lane.b32.xlu0 %v7579, 96
        %v7701 = vpop.permute.xlu0 %7700
        %7702 = vrot.lane.b32.xlu0 %v7582, 96
        %v7703 = vpop.permute.xlu0 %7702
        %7704 = vrot.lane.b32.xlu0 %v7585, 96
        %v7705 = vpop.permute.xlu0 %7704
        %7706 = vrot.lane.b32.xlu0 %v7671, 96
        %v7707 = vpop.permute.xlu0 %7706
        %vm7726 = vcmask 1048320
        %vm7727 = vmand %vm7726, %vm7638
        %v7728 = vld [vmem:[#allocation3] sm:$0xff]
        %v7729 = vsel %vm7727, %v7673, %v7728
        %7730 = vst [vmem:[#allocation3] sm:$0xff] %v7729
        %vm7731 = vcmask 1048320
        %7732 = vst.msk [vmem:[#allocation3 + $0x18] sm:$0xff] %vm7731, %v7675
        %7733 = vst.msk [vmem:[#allocation3 + $0x30] sm:$0xff] %vm7731, %v7677
        %7734 = vst.msk [vmem:[#allocation3 + $0x48] sm:$0xff] %vm7731, %v7679
        %7735 = vst.msk [vmem:[#allocation3 + $0x60] sm:$0xff] %vm7731, %v7681
        %7736 = vst.msk [vmem:[#allocation3 + $0x78] sm:$0xff] %vm7731, %v7683
        %7737 = vst.msk [vmem:[#allocation3 + $0x90] sm:$0xff] %vm7731, %v7685
        %7738 = vst.msk [vmem:[#allocation3 + $0xa8] sm:$0xff] %vm7731, %v7687
        %7739 = vst.msk [vmem:[#allocation3 + $0xc0] sm:$0xff] %vm7731, %v7689
        %7740 = vst.msk [vmem:[#allocation3 + $0xd8] sm:$0xff] %vm7731, %v7691
        %7741 = vst.msk [vmem:[#allocation3 + $0xf0] sm:$0xff] %vm7731, %v7693
        %7742 = vst.msk [vmem:[#allocation3 + $0x108] sm:$0xff] %vm7731, %v7695
        %7743 = vst.msk [vmem:[#allocation3 + $0x120] sm:$0xff] %vm7731, %v7697
        %7744 = vst.msk [vmem:[#allocation3 + $0x138] sm:$0xff] %vm7731, %v7699
        %7745 = vst.msk [vmem:[#allocation3 + $0x150] sm:$0xff] %vm7731, %v7701
        %7746 = vst.msk [vmem:[#allocation3 + $0x168] sm:$0xff] %vm7731, %v7703
        %7747 = vst.msk [vmem:[#allocation3 + $0x180] sm:$0xff] %vm7731, %v7705
        %7748 = vst.msk [vmem:[#allocation3 + $0x198] sm:$0xff] %vm7731, %v7707
        %7749 = vst.msk [vmem:[#allocation3 + $0x8] sm:$0xff] %vm7205, %v7169
        %7750 = vst.msk [vmem:[#allocation3 + $0x20] sm:$0xff] %vm7205, %v7170
        %7751 = vst.msk [vmem:[#allocation3 + $0x38] sm:$0xff] %vm7205, %v7171
        %7752 = vst.msk [vmem:[#allocation3 + $0x50] sm:$0xff] %vm7205, %v7172
        %7753 = vst.msk [vmem:[#allocation3 + $0x68] sm:$0xff] %vm7205, %v7173
        %7754 = vst.msk [vmem:[#allocation3 + $0x80] sm:$0xff] %vm7205, %v7174
        %7755 = vst.msk [vmem:[#allocation3 + $0x98] sm:$0xff] %vm7205, %v7175
        %7756 = vst.msk [vmem:[#allocation3 + $0xb0] sm:$0xff] %vm7205, %v7176
        %7757 = vst.msk [vmem:[#allocation3 + $0xc8] sm:$0xff] %vm7205, %v7177
        %7758 = vst.msk [vmem:[#allocation3 + $0xe0] sm:$0xff] %vm7205, %v7178
        %7759 = vst.msk [vmem:[#allocation3 + $0xf8] sm:$0xff] %vm7205, %v7179
        %7760 = vst.msk [vmem:[#allocation3 + $0x110] sm:$0xff] %vm7205, %v7180
        %7761 = vst.msk [vmem:[#allocation3 + $0x128] sm:$0xff] %vm7205, %v7181
        %7762 = vst.msk [vmem:[#allocation3 + $0x140] sm:$0xff] %vm7205, %v7182
        %7763 = vst.msk [vmem:[#allocation3 + $0x158] sm:$0xff] %vm7205, %v7183
        %7764 = vst.msk [vmem:[#allocation3 + $0x170] sm:$0xff] %vm7205, %v7184
        %7765 = vst.msk [vmem:[#allocation3 + $0x188] sm:$0xff] %vm7205, %v7185
        %7766 = vst.msk [vmem:[#allocation3 + $0x1a0] sm:$0xff] %vm7205, %v7186
        %vm7767 = vcmask 523527
        %vm7768 = vsmask.f32 7966
        %vm7769 = vmand %vm7767, %vm7768
        %v7770 = vld [vmem:[#allocation3 + $0x1a0] sm:$0x80]
        %v7771 = vsel %vm7769, 0, %v7770
        %7772 = vst [vmem:[#allocation3 + $0x1a0] sm:$0x80] %v7771
        %v7773 = vrot.slane %v7217, 1
        %v7774 = vor.u32 %v7214, %v7773
        %v7775 = vrot.slane %v7225, 1
        %v7776 = vsel %vm469, %v7774, %v7775
        %v7777 = vor.u32 %v7222, %v7775
        %v7778 = vrot.slane %v7234, 1
        %v7779 = vsel %vm469, %v7777, %v7778
        %v7780 = vor.u32 %v7231, %v7778
        %v7781 = vrot.slane %v7243, 1
        %v7782 = vsel %vm469, %v7780, %v7781
        %v7783 = vor.u32 %v7240, %v7781
        %v7784 = vrot.slane %v7252, 1
        %v7785 = vsel %vm469, %v7783, %v7784
        %v7786 = vor.u32 %v7249, %v7784
        %v7787 = vrot.slane %v7261, 1
        %v7788 = vsel %vm469, %v7786, %v7787
        %v7789 = vor.u32 %v7258, %v7787
        %v7790 = vrot.slane %v7270, 1
        %v7791 = vsel %vm469, %v7789, %v7790
        %v7792 = vor.u32 %v7267, %v7790
        %v7793 = vrot.slane %v7279, 1
        %v7794 = vsel %vm469, %v7792, %v7793
        %v7795 = vor.u32 %v7276, %v7793
        %v7796 = vrot.slane %v7288, 1
        %v7797 = vsel %vm469, %v7795, %v7796
        %v7798 = vor.u32 %v7285, %v7796
        %v7799 = vrot.slane %v7297, 1
        %v7800 = vsel %vm469, %v7798, %v7799
        %v7801 = vor.u32 %v7294, %v7799
        %v7802 = vrot.slane %v7306, 1
        %v7803 = vsel %vm469, %v7801, %v7802
        %v7804 = vor.u32 %v7303, %v7802
        %v7805 = vrot.slane %v7315, 1
        %v7806 = vsel %vm469, %v7804, %v7805
        %v7807 = vor.u32 %v7312, %v7805
        %v7808 = vrot.slane %v7324, 1
        %v7809 = vsel %vm469, %v7807, %v7808
        %v7810 = vor.u32 %v7321, %v7808
        %v7811 = vrot.slane %v7333, 1
        %v7812 = vsel %vm469, %v7810, %v7811
        %v7813 = vor.u32 %v7330, %v7811
        %v7814 = vrot.slane %v7342, 1
        %v7815 = vsel %vm469, %v7813, %v7814
        %v7816 = vor.u32 %v7339, %v7814
        %v7817 = vrot.slane %v7351, 1
        %v7818 = vsel %vm469, %v7816, %v7817
        %v7819 = vor.u32 %v7348, %v7817
        %v7820 = vrot.slane %v7360, 1
        %v7821 = vsel %vm469, %v7819, %v7820
        %v7822 = vor.u32 %v7357, %v7820
        %v7823 = vrot.slane %v7668, 1
        %v7824 = vsel %vm469, %v7822, %v7823
        %v7825 = vor.u32 %v7665, %v7823
        %7826 = vrot.lane.b32.xlu0 %v7776, 32
        %v7827 = vpop.permute.xlu0 %7826
        %7828 = vrot.lane.b32.xlu0 %v7779, 32
        %v7829 = vpop.permute.xlu0 %7828
        %7830 = vrot.lane.b32.xlu0 %v7782, 32
        %v7831 = vpop.permute.xlu0 %7830
        %7832 = vrot.lane.b32.xlu0 %v7785, 32
        %v7833 = vpop.permute.xlu0 %7832
        %7834 = vrot.lane.b32.xlu0 %v7788, 32
        %v7835 = vpop.permute.xlu0 %7834
        %7836 = vrot.lane.b32.xlu0 %v7791, 32
        %v7837 = vpop.permute.xlu0 %7836
        %7838 = vrot.lane.b32.xlu0 %v7794, 32
        %v7839 = vpop.permute.xlu0 %7838
        %7840 = vrot.lane.b32.xlu0 %v7797, 32
        %v7841 = vpop.permute.xlu0 %7840
        %7842 = vrot.lane.b32.xlu0 %v7800, 32
        %v7843 = vpop.permute.xlu0 %7842
        %7844 = vrot.lane.b32.xlu0 %v7803, 32
        %v7845 = vpop.permute.xlu0 %7844
        %7846 = vrot.lane.b32.xlu0 %v7806, 32
        %v7847 = vpop.permute.xlu0 %7846
        %7848 = vrot.lane.b32.xlu0 %v7809, 32
        %v7849 = vpop.permute.xlu0 %7848
        %7850 = vrot.lane.b32.xlu0 %v7812, 32
        %v7851 = vpop.permute.xlu0 %7850
        %7852 = vrot.lane.b32.xlu0 %v7815, 32
        %v7853 = vpop.permute.xlu0 %7852
        %7854 = vrot.lane.b32.xlu0 %v7818, 32
        %v7855 = vpop.permute.xlu0 %7854
        %7856 = vrot.lane.b32.xlu0 %v7821, 32
        %v7857 = vpop.permute.xlu0 %7856
        %7858 = vrot.lane.b32.xlu0 %v7824, 32
        %v7859 = vpop.permute.xlu0 %7858
        %7860 = vrot.lane.b32.xlu0 %v7825, 32
        %v7861 = vpop.permute.xlu0 %7860
        %7880 = vst.msk [vmem:[#allocation3 + $0x8] sm:$0xff] %vm7404, %v7827
        %7881 = vst.msk [vmem:[#allocation3 + $0x20] sm:$0xff] %vm7404, %v7829
        %7882 = vst.msk [vmem:[#allocation3 + $0x38] sm:$0xff] %vm7404, %v7831
        %7883 = vst.msk [vmem:[#allocation3 + $0x50] sm:$0xff] %vm7404, %v7833
        %7884 = vst.msk [vmem:[#allocation3 + $0x68] sm:$0xff] %vm7404, %v7835
        %7885 = vst.msk [vmem:[#allocation3 + $0x80] sm:$0xff] %vm7404, %v7837
        %7886 = vst.msk [vmem:[#allocation3 + $0x98] sm:$0xff] %vm7404, %v7839
        %7887 = vst.msk [vmem:[#allocation3 + $0xb0] sm:$0xff] %vm7404, %v7841
        %7888 = vst.msk [vmem:[#allocation3 + $0xc8] sm:$0xff] %vm7404, %v7843
        %7889 = vst.msk [vmem:[#allocation3 + $0xe0] sm:$0xff] %vm7404, %v7845
        %7890 = vst.msk [vmem:[#allocation3 + $0xf8] sm:$0xff] %vm7404, %v7847
        %7891 = vst.msk [vmem:[#allocation3 + $0x110] sm:$0xff] %vm7404, %v7849
        %7892 = vst.msk [vmem:[#allocation3 + $0x128] sm:$0xff] %vm7404, %v7851
        %7893 = vst.msk [vmem:[#allocation3 + $0x140] sm:$0xff] %vm7404, %v7853
        %7894 = vst.msk [vmem:[#allocation3 + $0x158] sm:$0xff] %vm7404, %v7855
        %7895 = vst.msk [vmem:[#allocation3 + $0x170] sm:$0xff] %vm7404, %v7857
        %7896 = vst.msk [vmem:[#allocation3 + $0x188] sm:$0xff] %vm7404, %v7859
        %vm7897 = vcmask 523520
        %vm7898 = vmand %vm7897, %vm469
        %v7899 = vld [vmem:[#allocation3 + $0x1a0] sm:$0xff]
        %v7900 = vsel %vm7898, %v7861, %v7899
        %7901 = vst [vmem:[#allocation3 + $0x1a0] sm:$0xff] %v7900
        %vm7902 = vcmask 785927
        %vm7903 = vmand %vm7902, %vm7768
        %v7904 = vld [vmem:[#allocation3 + $0x188] sm:$0x80]
        %v7905 = vsel %vm7903, 0, %v7904
        %7906 = vst [vmem:[#allocation3 + $0x188] sm:$0x80] %v7905
        %7907 = vst.msk [vmem:[#allocation3 + $0x1a0] sm:$0xff] %vm7528, 0
        %7908 = vrot.lane.b32.xlu0 %v7779, 64
        %v7909 = vpop.permute.xlu0 %7908
        %7910 = vrot.lane.b32.xlu0 %v7782, 64
        %v7911 = vpop.permute.xlu0 %7910
        %7912 = vrot.lane.b32.xlu0 %v7785, 64
        %v7913 = vpop.permute.xlu0 %7912
        %7914 = vrot.lane.b32.xlu0 %v7788, 64
        %v7915 = vpop.permute.xlu0 %7914
        %7916 = vrot.lane.b32.xlu0 %v7791, 64
        %v7917 = vpop.permute.xlu0 %7916
        %7918 = vrot.lane.b32.xlu0 %v7794, 64
        %v7919 = vpop.permute.xlu0 %7918
        %7920 = vrot.lane.b32.xlu0 %v7797, 64
        %v7921 = vpop.permute.xlu0 %7920
        %7922 = vrot.lane.b32.xlu0 %v7800, 64
        %v7923 = vpop.permute.xlu0 %7922
        %7924 = vrot.lane.b32.xlu0 %v7803, 64
        %v7925 = vpop.permute.xlu0 %7924
        %7926 = vrot.lane.b32.xlu0 %v7806, 64
        %v7927 = vpop.permute.xlu0 %7926
        %7928 = vrot.lane.b32.xlu0 %v7809, 64
        %v7929 = vpop.permute.xlu0 %7928
        %7930 = vrot.lane.b32.xlu0 %v7812, 64
        %v7931 = vpop.permute.xlu0 %7930
        %7932 = vrot.lane.b32.xlu0 %v7815, 64
        %v7933 = vpop.permute.xlu0 %7932
        %7934 = vrot.lane.b32.xlu0 %v7818, 64
        %v7935 = vpop.permute.xlu0 %7934
        %7936 = vrot.lane.b32.xlu0 %v7821, 64
        %v7937 = vpop.permute.xlu0 %7936
        %7938 = vrot.lane.b32.xlu0 %v7824, 64
        %v7939 = vpop.permute.xlu0 %7938
        %7940 = vrot.lane.b32.xlu0 %v7825, 64
        %v7941 = vpop.permute.xlu0 %7940
        %7959 = vst.msk [vmem:[#allocation3 + $0x8] sm:$0xff] %vm7528, %v7909
        %7960 = vst.msk [vmem:[#allocation3 + $0x20] sm:$0xff] %vm7528, %v7911
        %7961 = vst.msk [vmem:[#allocation3 + $0x38] sm:$0xff] %vm7528, %v7913
        %7962 = vst.msk [vmem:[#allocation3 + $0x50] sm:$0xff] %vm7528, %v7915
        %7963 = vst.msk [vmem:[#allocation3 + $0x68] sm:$0xff] %vm7528, %v7917
        %7964 = vst.msk [vmem:[#allocation3 + $0x80] sm:$0xff] %vm7528, %v7919
        %7965 = vst.msk [vmem:[#allocation3 + $0x98] sm:$0xff] %vm7528, %v7921
        %7966 = vst.msk [vmem:[#allocation3 + $0xb0] sm:$0xff] %vm7528, %v7923
        %7967 = vst.msk [vmem:[#allocation3 + $0xc8] sm:$0xff] %vm7528, %v7925
        %7968 = vst.msk [vmem:[#allocation3 + $0xe0] sm:$0xff] %vm7528, %v7927
        %7969 = vst.msk [vmem:[#allocation3 + $0xf8] sm:$0xff] %vm7528, %v7929
        %7970 = vst.msk [vmem:[#allocation3 + $0x110] sm:$0xff] %vm7528, %v7931
        %7971 = vst.msk [vmem:[#allocation3 + $0x128] sm:$0xff] %vm7528, %v7933
        %7972 = vst.msk [vmem:[#allocation3 + $0x140] sm:$0xff] %vm7528, %v7935
        %7973 = vst.msk [vmem:[#allocation3 + $0x158] sm:$0xff] %vm7528, %v7937
        %7974 = vst.msk [vmem:[#allocation3 + $0x170] sm:$0xff] %vm7528, %v7939
        %vm7975 = vmand %vm7637, %vm469
        %v7976 = vld [vmem:[#allocation3 + $0x188] sm:$0xff]
        %v7977 = vsel %vm7975, %v7941, %v7976
        %7978 = vst [vmem:[#allocation3 + $0x188] sm:$0xff] %v7977
        %vm7979 = vcmask 1048327
        %7980 = vst.msk [vmem:[#allocation3 + $0x188] sm:$0x80] %vm7979, 0
        %7981 = vst.msk [vmem:[#allocation3 + $0x1a0] sm:$0xff] %vm7731, 0
        %v7983 = vrot.slane %v7170, 1
        %v7984 = vrot.slane %v7171, 1
        %v7985 = vsel %vm821, %v7983, %v7984
        %v7986 = vrot.slane %v7172, 1
        %v7987 = vsel %vm821, %v7984, %v7986
        %v7988 = vrot.slane %v7173, 1
        %v7989 = vsel %vm821, %v7986, %v7988
        %v7990 = vrot.slane %v7174, 1
        %v7991 = vsel %vm821, %v7988, %v7990
        %v7992 = vrot.slane %v7175, 1
        %v7993 = vsel %vm821, %v7990, %v7992
        %v7994 = vrot.slane %v7176, 1
        %v7995 = vsel %vm821, %v7992, %v7994
        %v7996 = vrot.slane %v7177, 1
        %v7997 = vsel %vm821, %v7994, %v7996
        %v7998 = vrot.slane %v7178, 1
        %v7999 = vsel %vm821, %v7996, %v7998
        %v8000 = vrot.slane %v7179, 1
        %v8001 = vsel %vm821, %v7998, %v8000
        %v8002 = vrot.slane %v7180, 1
        %v8003 = vsel %vm821, %v8000, %v8002
        %v8004 = vrot.slane %v7181, 1
        %v8005 = vsel %vm821, %v8002, %v8004
        %v8006 = vrot.slane %v7182, 1
        %v8007 = vsel %vm821, %v8004, %v8006
        %v8008 = vrot.slane %v7183, 1
        %v8009 = vsel %vm821, %v8006, %v8008
        %v8010 = vrot.slane %v7184, 1
        %v8011 = vsel %vm821, %v8008, %v8010
        %v8012 = vrot.slane %v7185, 1
        %v8013 = vsel %vm821, %v8010, %v8012
        %v8014 = vrot.slane %v7186, 1
        %v8015 = vsel %vm821, %v8012, %v8014
        %8016 = vrot.lane.b32.xlu0 %v7985, 96
        %v8017 = vpop.permute.xlu0 %8016
        %8018 = vrot.lane.b32.xlu0 %v7987, 96
        %v8019 = vpop.permute.xlu0 %8018
        %8020 = vrot.lane.b32.xlu0 %v7989, 96
        %v8021 = vpop.permute.xlu0 %8020
        %8022 = vrot.lane.b32.xlu0 %v7991, 96
        %v8023 = vpop.permute.xlu0 %8022
        %8024 = vrot.lane.b32.xlu0 %v7993, 96
        %v8025 = vpop.permute.xlu0 %8024
        %8026 = vrot.lane.b32.xlu0 %v7995, 96
        %v8027 = vpop.permute.xlu0 %8026
        %8028 = vrot.lane.b32.xlu0 %v7997, 96
        %v8029 = vpop.permute.xlu0 %8028
        %8030 = vrot.lane.b32.xlu0 %v7999, 96
        %v8031 = vpop.permute.xlu0 %8030
        %8032 = vrot.lane.b32.xlu0 %v8001, 96
        %v8033 = vpop.permute.xlu0 %8032
        %8034 = vrot.lane.b32.xlu0 %v8003, 96
        %v8035 = vpop.permute.xlu0 %8034
        %8036 = vrot.lane.b32.xlu0 %v8005, 96
        %v8037 = vpop.permute.xlu0 %8036
        %8038 = vrot.lane.b32.xlu0 %v8007, 96
        %v8039 = vpop.permute.xlu0 %8038
        %8040 = vrot.lane.b32.xlu0 %v8009, 96
        %v8041 = vpop.permute.xlu0 %8040
        %8042 = vrot.lane.b32.xlu0 %v8011, 96
        %v8043 = vpop.permute.xlu0 %8042
        %8044 = vrot.lane.b32.xlu0 %v8013, 96
        %v8045 = vpop.permute.xlu0 %8044
        %8046 = vrot.lane.b32.xlu0 %v8015, 96
        %v8047 = vpop.permute.xlu0 %8046
        %8048 = vrot.lane.b32.xlu0 %v8014, 96
        %v8049 = vpop.permute.xlu0 %8048
        %8067 = vst.msk [vmem:[#allocation3 + $0x8] sm:$0xff] %vm7731, %v8017
        %8068 = vst.msk [vmem:[#allocation3 + $0x20] sm:$0xff] %vm7731, %v8019
        %8069 = vst.msk [vmem:[#allocation3 + $0x38] sm:$0xff] %vm7731, %v8021
        %8070 = vst.msk [vmem:[#allocation3 + $0x50] sm:$0xff] %vm7731, %v8023
        %8071 = vst.msk [vmem:[#allocation3 + $0x68] sm:$0xff] %vm7731, %v8025
        %8072 = vst.msk [vmem:[#allocation3 + $0x80] sm:$0xff] %vm7731, %v8027
        %8073 = vst.msk [vmem:[#allocation3 + $0x98] sm:$0xff] %vm7731, %v8029
        %8074 = vst.msk [vmem:[#allocation3 + $0xb0] sm:$0xff] %vm7731, %v8031
        %8075 = vst.msk [vmem:[#allocation3 + $0xc8] sm:$0xff] %vm7731, %v8033
        %8076 = vst.msk [vmem:[#allocation3 + $0xe0] sm:$0xff] %vm7731, %v8035
        %8077 = vst.msk [vmem:[#allocation3 + $0xf8] sm:$0xff] %vm7731, %v8037
        %8078 = vst.msk [vmem:[#allocation3 + $0x110] sm:$0xff] %vm7731, %v8039
        %8079 = vst.msk [vmem:[#allocation3 + $0x128] sm:$0xff] %vm7731, %v8041
        %8080 = vst.msk [vmem:[#allocation3 + $0x140] sm:$0xff] %vm7731, %v8043
        %8081 = vst.msk [vmem:[#allocation3 + $0x158] sm:$0xff] %vm7731, %v8045
        %8082 = vst.msk [vmem:[#allocation3 + $0x170] sm:$0xff] %vm7731, %v8047
        %vm8083 = vcmask 1047296
        %8084 = vst.msk [vmem:[#allocation3 + $0x188] sm:$0x7f] %vm8083, %v8049
        %vm8085 = vcmask 261126
        %vm8086 = vsmask.f32 7962
        %vm8087 = vmand %vm8085, %vm8086
        %v8088 = vld [vmem:[#allocation3 + $0x190] sm:$0xc0]
        %v8089 = vsel %vm8087, 0, %v8088
        %8090 = vst [vmem:[#allocation3 + $0x190] sm:$0xc0] %v8089
        %8091 = vst.msk [vmem:[#allocation3 + $0x1a8] sm:$0xff] %vm7205, 0
        %v8092 = vrot.slane %v7222, 1
        %v8093 = vrot.slane %v7225, 2
        %v8094 = vor.u32 %v8092, %v8093
        %v8095 = vrot.slane %v7231, 1
        %v8096 = vrot.slane %v7234, 2
        %v8097 = vor.u32 %v8095, %v8096
        %v8098 = vsel %vm1302, %v8094, %v8097
        %v8099 = vrot.slane %v7240, 1
        %v8100 = vrot.slane %v7243, 2
        %v8101 = vor.u32 %v8099, %v8100
        %v8102 = vsel %vm1302, %v8097, %v8101
        %v8103 = vrot.slane %v7249, 1
        %v8104 = vrot.slane %v7252, 2
        %v8105 = vor.u32 %v8103, %v8104
        %v8106 = vsel %vm1302, %v8101, %v8105
        %v8107 = vrot.slane %v7258, 1
        %v8108 = vrot.slane %v7261, 2
        %v8109 = vor.u32 %v8107, %v8108
        %v8110 = vsel %vm1302, %v8105, %v8109
        %v8111 = vrot.slane %v7267, 1
        %v8112 = vrot.slane %v7270, 2
        %v8113 = vor.u32 %v8111, %v8112
        %v8114 = vsel %vm1302, %v8109, %v8113
        %v8115 = vrot.slane %v7276, 1
        %v8116 = vrot.slane %v7279, 2
        %v8117 = vor.u32 %v8115, %v8116
        %v8118 = vsel %vm1302, %v8113, %v8117
        %v8119 = vrot.slane %v7285, 1
        %v8120 = vrot.slane %v7288, 2
        %v8121 = vor.u32 %v8119, %v8120
        %v8122 = vsel %vm1302, %v8117, %v8121
        %v8123 = vrot.slane %v7294, 1
        %v8124 = vrot.slane %v7297, 2
        %v8125 = vor.u32 %v8123, %v8124
        %v8126 = vsel %vm1302, %v8121, %v8125
        %v8127 = vrot.slane %v7303, 1
        %v8128 = vrot.slane %v7306, 2
        %v8129 = vor.u32 %v8127, %v8128
        %v8130 = vsel %vm1302, %v8125, %v8129
        %v8131 = vrot.slane %v7312, 1
        %v8132 = vrot.slane %v7315, 2
        %v8133 = vor.u32 %v8131, %v8132
        %v8134 = vsel %vm1302, %v8129, %v8133
        %v8135 = vrot.slane %v7321, 1
        %v8136 = vrot.slane %v7324, 2
        %v8137 = vor.u32 %v8135, %v8136
        %v8138 = vsel %vm1302, %v8133, %v8137
        %v8139 = vrot.slane %v7330, 1
        %v8140 = vrot.slane %v7333, 2
        %v8141 = vor.u32 %v8139, %v8140
        %v8142 = vsel %vm1302, %v8137, %v8141
        %v8143 = vrot.slane %v7339, 1
        %v8144 = vrot.slane %v7342, 2
        %v8145 = vor.u32 %v8143, %v8144
        %v8146 = vsel %vm1302, %v8141, %v8145
        %v8147 = vrot.slane %v7348, 1
        %v8148 = vrot.slane %v7351, 2
        %v8149 = vor.u32 %v8147, %v8148
        %v8150 = vsel %vm1302, %v8145, %v8149
        %v8151 = vrot.slane %v7357, 1
        %v8152 = vrot.slane %v7360, 2
        %v8153 = vor.u32 %v8151, %v8152
        %v8154 = vsel %vm1302, %v8149, %v8153
        %v8155 = vrot.slane %v7665, 1
        %v8156 = vrot.slane %v7668, 2
        %v8157 = vor.u32 %v8155, %v8156
        %v8158 = vsel %vm1302, %v8153, %v8157
        %8176 = vst.msk [vmem:[#allocation3 + $0x10] sm:$0xff] %vm7205, %v8098
        %8177 = vst.msk [vmem:[#allocation3 + $0x28] sm:$0xff] %vm7205, %v8102
        %8178 = vst.msk [vmem:[#allocation3 + $0x40] sm:$0xff] %vm7205, %v8106
        %8179 = vst.msk [vmem:[#allocation3 + $0x58] sm:$0xff] %vm7205, %v8110
        %8180 = vst.msk [vmem:[#allocation3 + $0x70] sm:$0xff] %vm7205, %v8114
        %8181 = vst.msk [vmem:[#allocation3 + $0x88] sm:$0xff] %vm7205, %v8118
        %8182 = vst.msk [vmem:[#allocation3 + $0xa0] sm:$0xff] %vm7205, %v8122
        %8183 = vst.msk [vmem:[#allocation3 + $0xb8] sm:$0xff] %vm7205, %v8126
        %8184 = vst.msk [vmem:[#allocation3 + $0xd0] sm:$0xff] %vm7205, %v8130
        %8185 = vst.msk [vmem:[#allocation3 + $0xe8] sm:$0xff] %vm7205, %v8134
        %8186 = vst.msk [vmem:[#allocation3 + $0x100] sm:$0xff] %vm7205, %v8138
        %8187 = vst.msk [vmem:[#allocation3 + $0x118] sm:$0xff] %vm7205, %v8142
        %8188 = vst.msk [vmem:[#allocation3 + $0x130] sm:$0xff] %vm7205, %v8146
        %8189 = vst.msk [vmem:[#allocation3 + $0x148] sm:$0xff] %vm7205, %v8150
        %8190 = vst.msk [vmem:[#allocation3 + $0x160] sm:$0xff] %vm7205, %v8154
        %8191 = vst.msk [vmem:[#allocation3 + $0x178] sm:$0xff] %vm7205, %v8158
        %vm8192 = vcmask 260096
        %vm8193 = vmand %vm8192, %vm1302
        %v8194 = vld [vmem:[#allocation3 + $0x190] sm:$0x7f]
        %v8195 = vsel %vm8193, %v8157, %v8194
        %8196 = vst [vmem:[#allocation3 + $0x190] sm:$0x7f] %v8195
        %8197 = vst.msk [vmem:[#allocation3 + $0x1b0] sm:$0xff] %vm7205, 0
        %v8198 = vld [vmem:[#allocation3 + $0x1c8] sm:$0x3]
        %v8199 = vsel %vm7209, 0, %v8198
        %8200 = vst [vmem:[#allocation3 + $0x1c8] sm:$0x3] %v8199
        %v8202 = vshrl.u32 %v7187, 16
        %v8204 = vrot.slane %v8202, 6
        %v8205 = vshll.u32 %v7187, 16
        %v8207 = vrot.slane %v8205, 7
        %v8208 = vor.u32 %v8204, %v8207
        %v8210 = vshrl.u32 %v7188, 16
        %v8212 = vrot.slane %v8210, 6
        %v8213 = vshll.u32 %v7188, 16
        %v8215 = vrot.slane %v8213, 7
        %v8216 = vor.u32 %v8212, %v8215
        %v8217 = vsel %vm7208, %v8208, %v8216
        %v8219 = vshrl.u32 %v7189, 16
        %v8221 = vrot.slane %v8219, 6
        %v8222 = vshll.u32 %v7189, 16
        %v8224 = vrot.slane %v8222, 7
        %v8225 = vor.u32 %v8221, %v8224
        %v8226 = vsel %vm7208, %v8216, %v8225
        %v8228 = vshrl.u32 %v7190, 16
        %v8230 = vrot.slane %v8228, 6
        %v8231 = vshll.u32 %v7190, 16
        %v8233 = vrot.slane %v8231, 7
        %v8234 = vor.u32 %v8230, %v8233
        %v8235 = vsel %vm7208, %v8225, %v8234
        %v8237 = vshrl.u32 %v7191, 16
        %v8239 = vrot.slane %v8237, 6
        %v8240 = vshll.u32 %v7191, 16
        %v8242 = vrot.slane %v8240, 7
        %v8243 = vor.u32 %v8239, %v8242
        %v8244 = vsel %vm7208, %v8234, %v8243
        %v8246 = vshrl.u32 %v7192, 16
        %v8248 = vrot.slane %v8246, 6
        %v8249 = vshll.u32 %v7192, 16
        %v8251 = vrot.slane %v8249, 7
        %v8252 = vor.u32 %v8248, %v8251
        %v8253 = vsel %vm7208, %v8243, %v8252
        %v8255 = vshrl.u32 %v7193, 16
        %v8257 = vrot.slane %v8255, 6
        %v8258 = vshll.u32 %v7193, 16
        %v8260 = vrot.slane %v8258, 7
        %v8261 = vor.u32 %v8257, %v8260
        %v8262 = vsel %vm7208, %v8252, %v8261
        %v8264 = vshrl.u32 %v7194, 16
        %v8266 = vrot.slane %v8264, 6
        %v8267 = vshll.u32 %v7194, 16
        %v8269 = vrot.slane %v8267, 7
        %v8270 = vor.u32 %v8266, %v8269
        %v8271 = vsel %vm7208, %v8261, %v8270
        %v8273 = vshrl.u32 %v7195, 16
        %v8275 = vrot.slane %v8273, 6
        %v8276 = vshll.u32 %v7195, 16
        %v8278 = vrot.slane %v8276, 7
        %v8279 = vor.u32 %v8275, %v8278
        %v8280 = vsel %vm7208, %v8270, %v8279
        %v8282 = vshrl.u32 %v7196, 16
        %v8284 = vrot.slane %v8282, 6
        %v8285 = vshll.u32 %v7196, 16
        %v8287 = vrot.slane %v8285, 7
        %v8288 = vor.u32 %v8284, %v8287
        %v8289 = vsel %vm7208, %v8279, %v8288
        %v8291 = vshrl.u32 %v7197, 16
        %v8293 = vrot.slane %v8291, 6
        %v8294 = vshll.u32 %v7197, 16
        %v8296 = vrot.slane %v8294, 7
        %v8297 = vor.u32 %v8293, %v8296
        %v8298 = vsel %vm7208, %v8288, %v8297
        %v8300 = vshrl.u32 %v7198, 16
        %v8302 = vrot.slane %v8300, 6
        %v8303 = vshll.u32 %v7198, 16
        %v8305 = vrot.slane %v8303, 7
        %v8306 = vor.u32 %v8302, %v8305
        %v8307 = vsel %vm7208, %v8297, %v8306
        %v8309 = vshrl.u32 %v7199, 16
        %v8311 = vrot.slane %v8309, 6
        %v8312 = vshll.u32 %v7199, 16
        %v8314 = vrot.slane %v8312, 7
        %v8315 = vor.u32 %v8311, %v8314
        %v8316 = vsel %vm7208, %v8306, %v8315
        %v8318 = vshrl.u32 %v7200, 16
        %v8320 = vrot.slane %v8318, 6
        %v8321 = vshll.u32 %v7200, 16
        %v8323 = vrot.slane %v8321, 7
        %v8324 = vor.u32 %v8320, %v8323
        %v8325 = vsel %vm7208, %v8315, %v8324
        %v8327 = vshrl.u32 %v7201, 16
        %v8329 = vrot.slane %v8327, 6
        %v8330 = vshll.u32 %v7201, 16
        %v8332 = vrot.slane %v8330, 7
        %v8333 = vor.u32 %v8329, %v8332
        %v8334 = vsel %vm7208, %v8324, %v8333
        %v8336 = vshrl.u32 %v7202, 16
        %v8338 = vrot.slane %v8336, 6
        %v8339 = vshll.u32 %v7202, 16
        %v8341 = vrot.slane %v8339, 7
        %v8342 = vor.u32 %v8338, %v8341
        %v8343 = vsel %vm7208, %v8333, %v8342
        %v8345 = vshrl.u32 %v7203, 16
        %v8347 = vrot.slane %v8345, 6
        %v8348 = vshll.u32 %v7203, 16
        %v8350 = vrot.slane %v8348, 7
        %v8351 = vor.u32 %v8347, %v8350
        %v8352 = vsel %vm7208, %v8342, %v8351
        %v8370 = vld [vmem:[#allocation3 + $0x1c8] sm:$0xfe]
        %v8371 = vsel %vm7384, %v8208, %v8370
        %8372 = vst [vmem:[#allocation3 + $0x1c8] sm:$0xfe] %v8371
        %8373 = vst.msk [vmem:[#allocation3 + $0x1e0] sm:$0xff] %vm7205, %v8217
        %8374 = vst.msk [vmem:[#allocation3 + $0x1f8] sm:$0xff] %vm7205, %v8226
        %8375 = vst.msk [vmem:[#allocation3 + $0x210] sm:$0xff] %vm7205, %v8235
        %8376 = vst.msk [vmem:[#allocation3 + $0x228] sm:$0xff] %vm7205, %v8244
        %8377 = vst.msk [vmem:[#allocation3 + $0x240] sm:$0xff] %vm7205, %v8253
        %8378 = vst.msk [vmem:[#allocation3 + $0x258] sm:$0xff] %vm7205, %v8262
        %8379 = vst.msk [vmem:[#allocation3 + $0x270] sm:$0xff] %vm7205, %v8271
        %8380 = vst.msk [vmem:[#allocation3 + $0x288] sm:$0xff] %vm7205, %v8280
        %8381 = vst.msk [vmem:[#allocation3 + $0x2a0] sm:$0xff] %vm7205, %v8289
        %8382 = vst.msk [vmem:[#allocation3 + $0x2b8] sm:$0xff] %vm7205, %v8298
        %8383 = vst.msk [vmem:[#allocation3 + $0x2d0] sm:$0xff] %vm7205, %v8307
        %8384 = vst.msk [vmem:[#allocation3 + $0x2e8] sm:$0xff] %vm7205, %v8316
        %8385 = vst.msk [vmem:[#allocation3 + $0x300] sm:$0xff] %vm7205, %v8325
        %8386 = vst.msk [vmem:[#allocation3 + $0x318] sm:$0xff] %vm7205, %v8334
        %8387 = vst.msk [vmem:[#allocation3 + $0x330] sm:$0xff] %vm7205, %v8343
        %8388 = vst.msk [vmem:[#allocation3 + $0x348] sm:$0xff] %vm7205, %v8352
        %8389 = vst.msk [vmem:[#allocation3 + $0x1b0] sm:$0xff] %vm7404, 0
        %8390 = vst.msk [vmem:[#allocation3 + $0x1c8] sm:$0x1] %vm7406, 0
        %v8408 = vrot.slane %v7187, 7
        %v8409 = vrot.slane %v7188, 7
        %v8410 = vsel %vm7425, %v8408, %v8409
        %v8411 = vrot.slane %v7189, 7
        %v8412 = vsel %vm7425, %v8409, %v8411
        %v8413 = vrot.slane %v7190, 7
        %v8414 = vsel %vm7425, %v8411, %v8413
        %v8415 = vrot.slane %v7191, 7
        %v8416 = vsel %vm7425, %v8413, %v8415
        %v8417 = vrot.slane %v7192, 7
        %v8418 = vsel %vm7425, %v8415, %v8417
        %v8419 = vrot.slane %v7193, 7
        %v8420 = vsel %vm7425, %v8417, %v8419
        %v8421 = vrot.slane %v7194, 7
        %v8422 = vsel %vm7425, %v8419, %v8421
        %v8423 = vrot.slane %v7195, 7
        %v8424 = vsel %vm7425, %v8421, %v8423
        %v8425 = vrot.slane %v7196, 7
        %v8426 = vsel %vm7425, %v8423, %v8425
        %v8427 = vrot.slane %v7197, 7
        %v8428 = vsel %vm7425, %v8425, %v8427
        %v8429 = vrot.slane %v7198, 7
        %v8430 = vsel %vm7425, %v8427, %v8429
        %v8431 = vrot.slane %v7199, 7
        %v8432 = vsel %vm7425, %v8429, %v8431
        %v8433 = vrot.slane %v7200, 7
        %v8434 = vsel %vm7425, %v8431, %v8433
        %v8435 = vrot.slane %v7201, 7
        %v8436 = vsel %vm7425, %v8433, %v8435
        %v8437 = vrot.slane %v7202, 7
        %v8438 = vsel %vm7425, %v8435, %v8437
        %v8439 = vrot.slane %v7203, 7
        %v8440 = vsel %vm7425, %v8437, %v8439
        %8441 = vrot.lane.b32.xlu0 %v8408, 32
        %v8442 = vpop.permute.xlu0 %8441
        %8443 = vrot.lane.b32.xlu0 %v8410, 32
        %v8444 = vpop.permute.xlu0 %8443
        %8445 = vrot.lane.b32.xlu0 %v8412, 32
        %v8446 = vpop.permute.xlu0 %8445
        %8447 = vrot.lane.b32.xlu0 %v8414, 32
        %v8448 = vpop.permute.xlu0 %8447
        %8449 = vrot.lane.b32.xlu0 %v8416, 32
        %v8450 = vpop.permute.xlu0 %8449
        %8451 = vrot.lane.b32.xlu0 %v8418, 32
        %v8452 = vpop.permute.xlu0 %8451
        %8453 = vrot.lane.b32.xlu0 %v8420, 32
        %v8454 = vpop.permute.xlu0 %8453
        %8455 = vrot.lane.b32.xlu0 %v8422, 32
        %v8456 = vpop.permute.xlu0 %8455
        %8457 = vrot.lane.b32.xlu0 %v8424, 32
        %v8458 = vpop.permute.xlu0 %8457
        %8459 = vrot.lane.b32.xlu0 %v8426, 32
        %v8460 = vpop.permute.xlu0 %8459
        %8461 = vrot.lane.b32.xlu0 %v8428, 32
        %v8462 = vpop.permute.xlu0 %8461
        %8463 = vrot.lane.b32.xlu0 %v8430, 32
        %v8464 = vpop.permute.xlu0 %8463
        %8465 = vrot.lane.b32.xlu0 %v8432, 32
        %v8466 = vpop.permute.xlu0 %8465
        %8467 = vrot.lane.b32.xlu0 %v8434, 32
        %v8468 = vpop.permute.xlu0 %8467
        %8469 = vrot.lane.b32.xlu0 %v8436, 32
        %v8470 = vpop.permute.xlu0 %8469
        %8471 = vrot.lane.b32.xlu0 %v8438, 32
        %v8472 = vpop.permute.xlu0 %8471
        %8473 = vrot.lane.b32.xlu0 %v8440, 32
        %v8474 = vpop.permute.xlu0 %8473
        %8492 = vst.msk [vmem:[#allocation3 + $0x1c8] sm:$0xfe] %vm7510, %v8442
        %8493 = vst.msk [vmem:[#allocation3 + $0x1e0] sm:$0xff] %vm7404, %v8444
        %8494 = vst.msk [vmem:[#allocation3 + $0x1f8] sm:$0xff] %vm7404, %v8446
        %8495 = vst.msk [vmem:[#allocation3 + $0x210] sm:$0xff] %vm7404, %v8448
        %8496 = vst.msk [vmem:[#allocation3 + $0x228] sm:$0xff] %vm7404, %v8450
        %8497 = vst.msk [vmem:[#allocation3 + $0x240] sm:$0xff] %vm7404, %v8452
        %8498 = vst.msk [vmem:[#allocation3 + $0x258] sm:$0xff] %vm7404, %v8454
        %8499 = vst.msk [vmem:[#allocation3 + $0x270] sm:$0xff] %vm7404, %v8456
        %8500 = vst.msk [vmem:[#allocation3 + $0x288] sm:$0xff] %vm7404, %v8458
        %8501 = vst.msk [vmem:[#allocation3 + $0x2a0] sm:$0xff] %vm7404, %v8460
        %8502 = vst.msk [vmem:[#allocation3 + $0x2b8] sm:$0xff] %vm7404, %v8462
        %8503 = vst.msk [vmem:[#allocation3 + $0x2d0] sm:$0xff] %vm7404, %v8464
        %8504 = vst.msk [vmem:[#allocation3 + $0x2e8] sm:$0xff] %vm7404, %v8466
        %8505 = vst.msk [vmem:[#allocation3 + $0x300] sm:$0xff] %vm7404, %v8468
        %8506 = vst.msk [vmem:[#allocation3 + $0x318] sm:$0xff] %vm7404, %v8470
        %8507 = vst.msk [vmem:[#allocation3 + $0x330] sm:$0xff] %vm7404, %v8472
        %8508 = vst.msk [vmem:[#allocation3 + $0x348] sm:$0xff] %vm7404, %v8474
        %8509 = vst.msk [vmem:[#allocation3 + $0x1b0] sm:$0xff] %vm7528, 0
        %v8510 = vld [vmem:[#allocation3 + $0x1c8] sm:$0x1]
        %v8511 = vsel %vm7532, 0, %v8510
        %8512 = vst [vmem:[#allocation3 + $0x1c8] sm:$0x1] %v8511
        %v8513 = vrot.slane %v8202, 7
        %v8514 = vor.u32 %v8513, %v8205
        %v8515 = vrot.slane %v8210, 7
        %v8516 = vor.u32 %v8515, %v8213
        %v8517 = vsel %vm7531, %v8513, %v8516
        %v8518 = vrot.slane %v8219, 7
        %v8519 = vor.u32 %v8518, %v8222
        %v8520 = vsel %vm7531, %v8515, %v8519
        %v8521 = vrot.slane %v8228, 7
        %v8522 = vor.u32 %v8521, %v8231
        %v8523 = vsel %vm7531, %v8518, %v8522
        %v8524 = vrot.slane %v8237, 7
        %v8525 = vor.u32 %v8524, %v8240
        %v8526 = vsel %vm7531, %v8521, %v8525
        %v8527 = vrot.slane %v8246, 7
        %v8528 = vor.u32 %v8527, %v8249
        %v8529 = vsel %vm7531, %v8524, %v8528
        %v8530 = vrot.slane %v8255, 7
        %v8531 = vor.u32 %v8530, %v8258
        %v8532 = vsel %vm7531, %v8527, %v8531
        %v8533 = vrot.slane %v8264, 7
        %v8534 = vor.u32 %v8533, %v8267
        %v8535 = vsel %vm7531, %v8530, %v8534
        %v8536 = vrot.slane %v8273, 7
        %v8537 = vor.u32 %v8536, %v8276
        %v8538 = vsel %vm7531, %v8533, %v8537
        %v8539 = vrot.slane %v8282, 7
        %v8540 = vor.u32 %v8539, %v8285
        %v8541 = vsel %vm7531, %v8536, %v8540
        %v8542 = vrot.slane %v8291, 7
        %v8543 = vor.u32 %v8542, %v8294
        %v8544 = vsel %vm7531, %v8539, %v8543
        %v8545 = vrot.slane %v8300, 7
        %v8546 = vor.u32 %v8545, %v8303
        %v8547 = vsel %vm7531, %v8542, %v8546
        %v8548 = vrot.slane %v8309, 7
        %v8549 = vor.u32 %v8548, %v8312
        %v8550 = vsel %vm7531, %v8545, %v8549
        %v8551 = vrot.slane %v8318, 7
        %v8552 = vor.u32 %v8551, %v8321
        %v8553 = vsel %vm7531, %v8548, %v8552
        %v8554 = vrot.slane %v8327, 7
        %v8555 = vor.u32 %v8554, %v8330
        %v8556 = vsel %vm7531, %v8551, %v8555
        %v8557 = vrot.slane %v8336, 7
        %v8558 = vor.u32 %v8557, %v8339
        %v8559 = vsel %vm7531, %v8554, %v8558
        %v8560 = vrot.slane %v8345, 7
        %v8561 = vor.u32 %v8560, %v8348
        %v8562 = vsel %vm7531, %v8557, %v8561
        %8563 = vrot.lane.b32.xlu0 %v8514, 64
        %v8564 = vpop.permute.xlu0 %8563
        %8565 = vrot.lane.b32.xlu0 %v8517, 64
        %v8566 = vpop.permute.xlu0 %8565
        %8567 = vrot.lane.b32.xlu0 %v8520, 64
        %v8568 = vpop.permute.xlu0 %8567
        %8569 = vrot.lane.b32.xlu0 %v8523, 64
        %v8570 = vpop.permute.xlu0 %8569
        %8571 = vrot.lane.b32.xlu0 %v8526, 64
        %v8572 = vpop.permute.xlu0 %8571
        %8573 = vrot.lane.b32.xlu0 %v8529, 64
        %v8574 = vpop.permute.xlu0 %8573
        %8575 = vrot.lane.b32.xlu0 %v8532, 64
        %v8576 = vpop.permute.xlu0 %8575
        %8577 = vrot.lane.b32.xlu0 %v8535, 64
        %v8578 = vpop.permute.xlu0 %8577
        %8579 = vrot.lane.b32.xlu0 %v8538, 64
        %v8580 = vpop.permute.xlu0 %8579
        %8581 = vrot.lane.b32.xlu0 %v8541, 64
        %v8582 = vpop.permute.xlu0 %8581
        %8583 = vrot.lane.b32.xlu0 %v8544, 64
        %v8584 = vpop.permute.xlu0 %8583
        %8585 = vrot.lane.b32.xlu0 %v8547, 64
        %v8586 = vpop.permute.xlu0 %8585
        %8587 = vrot.lane.b32.xlu0 %v8550, 64
        %v8588 = vpop.permute.xlu0 %8587
        %8589 = vrot.lane.b32.xlu0 %v8553, 64
        %v8590 = vpop.permute.xlu0 %8589
        %8591 = vrot.lane.b32.xlu0 %v8556, 64
        %v8592 = vpop.permute.xlu0 %8591
        %8593 = vrot.lane.b32.xlu0 %v8559, 64
        %v8594 = vpop.permute.xlu0 %8593
        %8595 = vrot.lane.b32.xlu0 %v8562, 64
        %v8596 = vpop.permute.xlu0 %8595
        %v8614 = vld [vmem:[#allocation3 + $0x1c8] sm:$0xff]
        %v8615 = vsel %vm7639, %v8564, %v8614
        %8616 = vst [vmem:[#allocation3 + $0x1c8] sm:$0xff] %v8615
        %8617 = vst.msk [vmem:[#allocation3 + $0x1e0] sm:$0xff] %vm7528, %v8566
        %8618 = vst.msk [vmem:[#allocation3 + $0x1f8] sm:$0xff] %vm7528, %v8568
        %8619 = vst.msk [vmem:[#allocation3 + $0x210] sm:$0xff] %vm7528, %v8570
        %8620 = vst.msk [vmem:[#allocation3 + $0x228] sm:$0xff] %vm7528, %v8572
        %8621 = vst.msk [vmem:[#allocation3 + $0x240] sm:$0xff] %vm7528, %v8574
        %8622 = vst.msk [vmem:[#allocation3 + $0x258] sm:$0xff] %vm7528, %v8576
        %8623 = vst.msk [vmem:[#allocation3 + $0x270] sm:$0xff] %vm7528, %v8578
        %8624 = vst.msk [vmem:[#allocation3 + $0x288] sm:$0xff] %vm7528, %v8580
        %8625 = vst.msk [vmem:[#allocation3 + $0x2a0] sm:$0xff] %vm7528, %v8582
        %8626 = vst.msk [vmem:[#allocation3 + $0x2b8] sm:$0xff] %vm7528, %v8584
        %8627 = vst.msk [vmem:[#allocation3 + $0x2d0] sm:$0xff] %vm7528, %v8586
        %8628 = vst.msk [vmem:[#allocation3 + $0x2e8] sm:$0xff] %vm7528, %v8588
        %8629 = vst.msk [vmem:[#allocation3 + $0x300] sm:$0xff] %vm7528, %v8590
        %8630 = vst.msk [vmem:[#allocation3 + $0x318] sm:$0xff] %vm7528, %v8592
        %8631 = vst.msk [vmem:[#allocation3 + $0x330] sm:$0xff] %vm7528, %v8594
        %8632 = vst.msk [vmem:[#allocation3 + $0x348] sm:$0xff] %vm7528, %v8596
        %v8633 = vld [vmem:[#allocation3 + $0x1b0] sm:$0x1]
        %v8634 = vsel %vm7660, 0, %v8633
        %8635 = vst [vmem:[#allocation3 + $0x1b0] sm:$0x1] %v8634
        %v8637 = vshrl.u32 %v7204, 16
        %v8639 = vrot.slane %v8637, 7
        %v8640 = vshll.u32 %v7204, 16
        %v8642 = vor.u32 %v8639, %v8640
        %v8643 = vsel %vm7531, %v8560, %v8642
        %8644 = vrot.lane.b32.xlu0 %v8514, 96
        %v8645 = vpop.permute.xlu0 %8644
        %8646 = vrot.lane.b32.xlu0 %v8517, 96
        %v8647 = vpop.permute.xlu0 %8646
        %8648 = vrot.lane.b32.xlu0 %v8520, 96
        %v8649 = vpop.permute.xlu0 %8648
        %8650 = vrot.lane.b32.xlu0 %v8523, 96
        %v8651 = vpop.permute.xlu0 %8650
        %8652 = vrot.lane.b32.xlu0 %v8526, 96
        %v8653 = vpop.permute.xlu0 %8652
        %8654 = vrot.lane.b32.xlu0 %v8529, 96
        %v8655 = vpop.permute.xlu0 %8654
        %8656 = vrot.lane.b32.xlu0 %v8532, 96
        %v8657 = vpop.permute.xlu0 %8656
        %8658 = vrot.lane.b32.xlu0 %v8535, 96
        %v8659 = vpop.permute.xlu0 %8658
        %8660 = vrot.lane.b32.xlu0 %v8538, 96
        %v8661 = vpop.permute.xlu0 %8660
        %8662 = vrot.lane.b32.xlu0 %v8541, 96
        %v8663 = vpop.permute.xlu0 %8662
        %8664 = vrot.lane.b32.xlu0 %v8544, 96
        %v8665 = vpop.permute.xlu0 %8664
        %8666 = vrot.lane.b32.xlu0 %v8547, 96
        %v8667 = vpop.permute.xlu0 %8666
        %8668 = vrot.lane.b32.xlu0 %v8550, 96
        %v8669 = vpop.permute.xlu0 %8668
        %8670 = vrot.lane.b32.xlu0 %v8553, 96
        %v8671 = vpop.permute.xlu0 %8670
        %8672 = vrot.lane.b32.xlu0 %v8556, 96
        %v8673 = vpop.permute.xlu0 %8672
        %8674 = vrot.lane.b32.xlu0 %v8559, 96
        %v8675 = vpop.permute.xlu0 %8674
        %8676 = vrot.lane.b32.xlu0 %v8562, 96
        %v8677 = vpop.permute.xlu0 %8676
        %8678 = vrot.lane.b32.xlu0 %v8643, 96
        %v8679 = vpop.permute.xlu0 %8678
        %v8698 = vld [vmem:[#allocation3 + $0x1b0] sm:$0xff]
        %v8699 = vsel %vm7727, %v8645, %v8698
        %8700 = vst [vmem:[#allocation3 + $0x1b0] sm:$0xff] %v8699
        %8701 = vst.msk [vmem:[#allocation3 + $0x1c8] sm:$0xff] %vm7731, %v8647
        %8702 = vst.msk [vmem:[#allocation3 + $0x1e0] sm:$0xff] %vm7731, %v8649
        %8703 = vst.msk [vmem:[#allocation3 + $0x1f8] sm:$0xff] %vm7731, %v8651
        %8704 = vst.msk [vmem:[#allocation3 + $0x210] sm:$0xff] %vm7731, %v8653
        %8705 = vst.msk [vmem:[#allocation3 + $0x228] sm:$0xff] %vm7731, %v8655
        %8706 = vst.msk [vmem:[#allocation3 + $0x240] sm:$0xff] %vm7731, %v8657
        %8707 = vst.msk [vmem:[#allocation3 + $0x258] sm:$0xff] %vm7731, %v8659
        %8708 = vst.msk [vmem:[#allocation3 + $0x270] sm:$0xff] %vm7731, %v8661
        %8709 = vst.msk [vmem:[#allocation3 + $0x288] sm:$0xff] %vm7731, %v8663
        %8710 = vst.msk [vmem:[#allocation3 + $0x2a0] sm:$0xff] %vm7731, %v8665
        %8711 = vst.msk [vmem:[#allocation3 + $0x2b8] sm:$0xff] %vm7731, %v8667
        %8712 = vst.msk [vmem:[#allocation3 + $0x2d0] sm:$0xff] %vm7731, %v8669
        %8713 = vst.msk [vmem:[#allocation3 + $0x2e8] sm:$0xff] %vm7731, %v8671
        %8714 = vst.msk [vmem:[#allocation3 + $0x300] sm:$0xff] %vm7731, %v8673
        %8715 = vst.msk [vmem:[#allocation3 + $0x318] sm:$0xff] %vm7731, %v8675
        %8716 = vst.msk [vmem:[#allocation3 + $0x330] sm:$0xff] %vm7731, %v8677
        %8717 = vst.msk [vmem:[#allocation3 + $0x348] sm:$0xff] %vm7731, %v8679
        %8718 = vst.msk [vmem:[#allocation3 + $0x1b8] sm:$0xff] %vm7205, %v7187
        %8719 = vst.msk [vmem:[#allocation3 + $0x1d0] sm:$0xff] %vm7205, %v7188
        %8720 = vst.msk [vmem:[#allocation3 + $0x1e8] sm:$0xff] %vm7205, %v7189
        %8721 = vst.msk [vmem:[#allocation3 + $0x200] sm:$0xff] %vm7205, %v7190
        %8722 = vst.msk [vmem:[#allocation3 + $0x218] sm:$0xff] %vm7205, %v7191
        %8723 = vst.msk [vmem:[#allocation3 + $0x230] sm:$0xff] %vm7205, %v7192
        %8724 = vst.msk [vmem:[#allocation3 + $0x248] sm:$0xff] %vm7205, %v7193
        %8725 = vst.msk [vmem:[#allocation3 + $0x260] sm:$0xff] %vm7205, %v7194
        %8726 = vst.msk [vmem:[#allocation3 + $0x278] sm:$0xff] %vm7205, %v7195
        %8727 = vst.msk [vmem:[#allocation3 + $0x290] sm:$0xff] %vm7205, %v7196
        %8728 = vst.msk [vmem:[#allocation3 + $0x2a8] sm:$0xff] %vm7205, %v7197
        %8729 = vst.msk [vmem:[#allocation3 + $0x2c0] sm:$0xff] %vm7205, %v7198
        %8730 = vst.msk [vmem:[#allocation3 + $0x2d8] sm:$0xff] %vm7205, %v7199
        %8731 = vst.msk [vmem:[#allocation3 + $0x2f0] sm:$0xff] %vm7205, %v7200
        %8732 = vst.msk [vmem:[#allocation3 + $0x308] sm:$0xff] %vm7205, %v7201
        %8733 = vst.msk [vmem:[#allocation3 + $0x320] sm:$0xff] %vm7205, %v7202
        %8734 = vst.msk [vmem:[#allocation3 + $0x338] sm:$0xff] %vm7205, %v7203
        %8735 = vst.msk [vmem:[#allocation3 + $0x350] sm:$0xff] %vm7205, %v7204
        %v8736 = vld [vmem:[#allocation3 + $0x350] sm:$0x80]
        %v8737 = vsel %vm7769, 0, %v8736
        %8738 = vst [vmem:[#allocation3 + $0x350] sm:$0x80] %v8737
        %v8739 = vrot.slane %v8205, 1
        %v8740 = vor.u32 %v8202, %v8739
        %v8741 = vrot.slane %v8213, 1
        %v8742 = vsel %vm469, %v8740, %v8741
        %v8743 = vor.u32 %v8210, %v8741
        %v8744 = vrot.slane %v8222, 1
        %v8745 = vsel %vm469, %v8743, %v8744
        %v8746 = vor.u32 %v8219, %v8744
        %v8747 = vrot.slane %v8231, 1
        %v8748 = vsel %vm469, %v8746, %v8747
        %v8749 = vor.u32 %v8228, %v8747
        %v8750 = vrot.slane %v8240, 1
        %v8751 = vsel %vm469, %v8749, %v8750
        %v8752 = vor.u32 %v8237, %v8750
        %v8753 = vrot.slane %v8249, 1
        %v8754 = vsel %vm469, %v8752, %v8753
        %v8755 = vor.u32 %v8246, %v8753
        %v8756 = vrot.slane %v8258, 1
        %v8757 = vsel %vm469, %v8755, %v8756
        %v8758 = vor.u32 %v8255, %v8756
        %v8759 = vrot.slane %v8267, 1
        %v8760 = vsel %vm469, %v8758, %v8759
        %v8761 = vor.u32 %v8264, %v8759
        %v8762 = vrot.slane %v8276, 1
        %v8763 = vsel %vm469, %v8761, %v8762
        %v8764 = vor.u32 %v8273, %v8762
        %v8765 = vrot.slane %v8285, 1
        %v8766 = vsel %vm469, %v8764, %v8765
        %v8767 = vor.u32 %v8282, %v8765
        %v8768 = vrot.slane %v8294, 1
        %v8769 = vsel %vm469, %v8767, %v8768
        %v8770 = vor.u32 %v8291, %v8768
        %v8771 = vrot.slane %v8303, 1
        %v8772 = vsel %vm469, %v8770, %v8771
        %v8773 = vor.u32 %v8300, %v8771
        %v8774 = vrot.slane %v8312, 1
        %v8775 = vsel %vm469, %v8773, %v8774
        %v8776 = vor.u32 %v8309, %v8774
        %v8777 = vrot.slane %v8321, 1
        %v8778 = vsel %vm469, %v8776, %v8777
        %v8779 = vor.u32 %v8318, %v8777
        %v8780 = vrot.slane %v8330, 1
        %v8781 = vsel %vm469, %v8779, %v8780
        %v8782 = vor.u32 %v8327, %v8780
        %v8783 = vrot.slane %v8339, 1
        %v8784 = vsel %vm469, %v8782, %v8783
        %v8785 = vor.u32 %v8336, %v8783
        %v8786 = vrot.slane %v8348, 1
        %v8787 = vsel %vm469, %v8785, %v8786
        %v8788 = vor.u32 %v8345, %v8786
        %v8789 = vrot.slane %v8640, 1
        %v8790 = vsel %vm469, %v8788, %v8789
        %v8791 = vor.u32 %v8637, %v8789
        %8792 = vrot.lane.b32.xlu0 %v8742, 32
        %v8793 = vpop.permute.xlu0 %8792
        %8794 = vrot.lane.b32.xlu0 %v8745, 32
        %v8795 = vpop.permute.xlu0 %8794
        %8796 = vrot.lane.b32.xlu0 %v8748, 32
        %v8797 = vpop.permute.xlu0 %8796
        %8798 = vrot.lane.b32.xlu0 %v8751, 32
        %v8799 = vpop.permute.xlu0 %8798
        %8800 = vrot.lane.b32.xlu0 %v8754, 32
        %v8801 = vpop.permute.xlu0 %8800
        %8802 = vrot.lane.b32.xlu0 %v8757, 32
        %v8803 = vpop.permute.xlu0 %8802
        %8804 = vrot.lane.b32.xlu0 %v8760, 32
        %v8805 = vpop.permute.xlu0 %8804
        %8806 = vrot.lane.b32.xlu0 %v8763, 32
        %v8807 = vpop.permute.xlu0 %8806
        %8808 = vrot.lane.b32.xlu0 %v8766, 32
        %v8809 = vpop.permute.xlu0 %8808
        %8810 = vrot.lane.b32.xlu0 %v8769, 32
        %v8811 = vpop.permute.xlu0 %8810
        %8812 = vrot.lane.b32.xlu0 %v8772, 32
        %v8813 = vpop.permute.xlu0 %8812
        %8814 = vrot.lane.b32.xlu0 %v8775, 32
        %v8815 = vpop.permute.xlu0 %8814
        %8816 = vrot.lane.b32.xlu0 %v8778, 32
        %v8817 = vpop.permute.xlu0 %8816
        %8818 = vrot.lane.b32.xlu0 %v8781, 32
        %v8819 = vpop.permute.xlu0 %8818
        %8820 = vrot.lane.b32.xlu0 %v8784, 32
        %v8821 = vpop.permute.xlu0 %8820
        %8822 = vrot.lane.b32.xlu0 %v8787, 32
        %v8823 = vpop.permute.xlu0 %8822
        %8824 = vrot.lane.b32.xlu0 %v8790, 32
        %v8825 = vpop.permute.xlu0 %8824
        %8826 = vrot.lane.b32.xlu0 %v8791, 32
        %v8827 = vpop.permute.xlu0 %8826
        %8846 = vst.msk [vmem:[#allocation3 + $0x1b8] sm:$0xff] %vm7404, %v8793
        %8847 = vst.msk [vmem:[#allocation3 + $0x1d0] sm:$0xff] %vm7404, %v8795
        %8848 = vst.msk [vmem:[#allocation3 + $0x1e8] sm:$0xff] %vm7404, %v8797
        %8849 = vst.msk [vmem:[#allocation3 + $0x200] sm:$0xff] %vm7404, %v8799
        %8850 = vst.msk [vmem:[#allocation3 + $0x218] sm:$0xff] %vm7404, %v8801
        %8851 = vst.msk [vmem:[#allocation3 + $0x230] sm:$0xff] %vm7404, %v8803
        %8852 = vst.msk [vmem:[#allocation3 + $0x248] sm:$0xff] %vm7404, %v8805
        %8853 = vst.msk [vmem:[#allocation3 + $0x260] sm:$0xff] %vm7404, %v8807
        %8854 = vst.msk [vmem:[#allocation3 + $0x278] sm:$0xff] %vm7404, %v8809
        %8855 = vst.msk [vmem:[#allocation3 + $0x290] sm:$0xff] %vm7404, %v8811
        %8856 = vst.msk [vmem:[#allocation3 + $0x2a8] sm:$0xff] %vm7404, %v8813
        %8857 = vst.msk [vmem:[#allocation3 + $0x2c0] sm:$0xff] %vm7404, %v8815
        %8858 = vst.msk [vmem:[#allocation3 + $0x2d8] sm:$0xff] %vm7404, %v8817
        %8859 = vst.msk [vmem:[#allocation3 + $0x2f0] sm:$0xff] %vm7404, %v8819
        %8860 = vst.msk [vmem:[#allocation3 + $0x308] sm:$0xff] %vm7404, %v8821
        %8861 = vst.msk [vmem:[#allocation3 + $0x320] sm:$0xff] %vm7404, %v8823
        %8862 = vst.msk [vmem:[#allocation3 + $0x338] sm:$0xff] %vm7404, %v8825
        %v8863 = vld [vmem:[#allocation3 + $0x350] sm:$0xff]
        %v8864 = vsel %vm7898, %v8827, %v8863
        %8865 = vst [vmem:[#allocation3 + $0x350] sm:$0xff] %v8864
        %v8866 = vld [vmem:[#allocation3 + $0x338] sm:$0x80]
        %v8867 = vsel %vm7903, 0, %v8866
        %8868 = vst [vmem:[#allocation3 + $0x338] sm:$0x80] %v8867
        %8869 = vst.msk [vmem:[#allocation3 + $0x350] sm:$0xff] %vm7528, 0
        %8870 = vrot.lane.b32.xlu0 %v8745, 64
        %v8871 = vpop.permute.xlu0 %8870
        %8872 = vrot.lane.b32.xlu0 %v8748, 64
        %v8873 = vpop.permute.xlu0 %8872
        %8874 = vrot.lane.b32.xlu0 %v8751, 64
        %v8875 = vpop.permute.xlu0 %8874
        %8876 = vrot.lane.b32.xlu0 %v8754, 64
        %v8877 = vpop.permute.xlu0 %8876
        %8878 = vrot.lane.b32.xlu0 %v8757, 64
        %v8879 = vpop.permute.xlu0 %8878
        %8880 = vrot.lane.b32.xlu0 %v8760, 64
        %v8881 = vpop.permute.xlu0 %8880
        %8882 = vrot.lane.b32.xlu0 %v8763, 64
        %v8883 = vpop.permute.xlu0 %8882
        %8884 = vrot.lane.b32.xlu0 %v8766, 64
        %v8885 = vpop.permute.xlu0 %8884
        %8886 = vrot.lane.b32.xlu0 %v8769, 64
        %v8887 = vpop.permute.xlu0 %8886
        %8888 = vrot.lane.b32.xlu0 %v8772, 64
        %v8889 = vpop.permute.xlu0 %8888
        %8890 = vrot.lane.b32.xlu0 %v8775, 64
        %v8891 = vpop.permute.xlu0 %8890
        %8892 = vrot.lane.b32.xlu0 %v8778, 64
        %v8893 = vpop.permute.xlu0 %8892
        %8894 = vrot.lane.b32.xlu0 %v8781, 64
        %v8895 = vpop.permute.xlu0 %8894
        %8896 = vrot.lane.b32.xlu0 %v8784, 64
        %v8897 = vpop.permute.xlu0 %8896
        %8898 = vrot.lane.b32.xlu0 %v8787, 64
        %v8899 = vpop.permute.xlu0 %8898
        %8900 = vrot.lane.b32.xlu0 %v8790, 64
        %v8901 = vpop.permute.xlu0 %8900
        %8902 = vrot.lane.b32.xlu0 %v8791, 64
        %v8903 = vpop.permute.xlu0 %8902
        %8921 = vst.msk [vmem:[#allocation3 + $0x1b8] sm:$0xff] %vm7528, %v8871
        %8922 = vst.msk [vmem:[#allocation3 + $0x1d0] sm:$0xff] %vm7528, %v8873
        %8923 = vst.msk [vmem:[#allocation3 + $0x1e8] sm:$0xff] %vm7528, %v8875
        %8924 = vst.msk [vmem:[#allocation3 + $0x200] sm:$0xff] %vm7528, %v8877
        %8925 = vst.msk [vmem:[#allocation3 + $0x218] sm:$0xff] %vm7528, %v8879
        %8926 = vst.msk [vmem:[#allocation3 + $0x230] sm:$0xff] %vm7528, %v8881
        %8927 = vst.msk [vmem:[#allocation3 + $0x248] sm:$0xff] %vm7528, %v8883
        %8928 = vst.msk [vmem:[#allocation3 + $0x260] sm:$0xff] %vm7528, %v8885
        %8929 = vst.msk [vmem:[#allocation3 + $0x278] sm:$0xff] %vm7528, %v8887
        %8930 = vst.msk [vmem:[#allocation3 + $0x290] sm:$0xff] %vm7528, %v8889
        %8931 = vst.msk [vmem:[#allocation3 + $0x2a8] sm:$0xff] %vm7528, %v8891
        %8932 = vst.msk [vmem:[#allocation3 + $0x2c0] sm:$0xff] %vm7528, %v8893
        %8933 = vst.msk [vmem:[#allocation3 + $0x2d8] sm:$0xff] %vm7528, %v8895
        %8934 = vst.msk [vmem:[#allocation3 + $0x2f0] sm:$0xff] %vm7528, %v8897
        %8935 = vst.msk [vmem:[#allocation3 + $0x308] sm:$0xff] %vm7528, %v8899
        %8936 = vst.msk [vmem:[#allocation3 + $0x320] sm:$0xff] %vm7528, %v8901
        %v8937 = vld [vmem:[#allocation3 + $0x338] sm:$0xff]
        %v8938 = vsel %vm7975, %v8903, %v8937
        %8939 = vst [vmem:[#allocation3 + $0x338] sm:$0xff] %v8938
        %8940 = vst.msk [vmem:[#allocation3 + $0x338] sm:$0x80] %vm7979, 0
        %8941 = vst.msk [vmem:[#allocation3 + $0x350] sm:$0xff] %vm7731, 0
        %v8943 = vrot.slane %v7188, 1
        %v8944 = vrot.slane %v7189, 1
        %v8945 = vsel %vm821, %v8943, %v8944
        %v8946 = vrot.slane %v7190, 1
        %v8947 = vsel %vm821, %v8944, %v8946
        %v8948 = vrot.slane %v7191, 1
        %v8949 = vsel %vm821, %v8946, %v8948
        %v8950 = vrot.slane %v7192, 1
        %v8951 = vsel %vm821, %v8948, %v8950
        %v8952 = vrot.slane %v7193, 1
        %v8953 = vsel %vm821, %v8950, %v8952
        %v8954 = vrot.slane %v7194, 1
        %v8955 = vsel %vm821, %v8952, %v8954
        %v8956 = vrot.slane %v7195, 1
        %v8957 = vsel %vm821, %v8954, %v8956
        %v8958 = vrot.slane %v7196, 1
        %v8959 = vsel %vm821, %v8956, %v8958
        %v8960 = vrot.slane %v7197, 1
        %v8961 = vsel %vm821, %v8958, %v8960
        %v8962 = vrot.slane %v7198, 1
        %v8963 = vsel %vm821, %v8960, %v8962
        %v8964 = vrot.slane %v7199, 1
        %v8965 = vsel %vm821, %v8962, %v8964
        %v8966 = vrot.slane %v7200, 1
        %v8967 = vsel %vm821, %v8964, %v8966
        %v8968 = vrot.slane %v7201, 1
        %v8969 = vsel %vm821, %v8966, %v8968
        %v8970 = vrot.slane %v7202, 1
        %v8971 = vsel %vm821, %v8968, %v8970
        %v8972 = vrot.slane %v7203, 1
        %v8973 = vsel %vm821, %v8970, %v8972
        %v8974 = vrot.slane %v7204, 1
        %v8975 = vsel %vm821, %v8972, %v8974
        %8976 = vrot.lane.b32.xlu0 %v8945, 96
        %v8977 = vpop.permute.xlu0 %8976
        %8978 = vrot.lane.b32.xlu0 %v8947, 96
        %v8979 = vpop.permute.xlu0 %8978
        %8980 = vrot.lane.b32.xlu0 %v8949, 96
        %v8981 = vpop.permute.xlu0 %8980
        %8982 = vrot.lane.b32.xlu0 %v8951, 96
        %v8983 = vpop.permute.xlu0 %8982
        %8984 = vrot.lane.b32.xlu0 %v8953, 96
        %v8985 = vpop.permute.xlu0 %8984
        %8986 = vrot.lane.b32.xlu0 %v8955, 96
        %v8987 = vpop.permute.xlu0 %8986
        %8988 = vrot.lane.b32.xlu0 %v8957, 96
        %v8989 = vpop.permute.xlu0 %8988
        %8990 = vrot.lane.b32.xlu0 %v8959, 96
        %v8991 = vpop.permute.xlu0 %8990
        %8992 = vrot.lane.b32.xlu0 %v8961, 96
        %v8993 = vpop.permute.xlu0 %8992
        %8994 = vrot.lane.b32.xlu0 %v8963, 96
        %v8995 = vpop.permute.xlu0 %8994
        %8996 = vrot.lane.b32.xlu0 %v8965, 96
        %v8997 = vpop.permute.xlu0 %8996
        %8998 = vrot.lane.b32.xlu0 %v8967, 96
        %v8999 = vpop.permute.xlu0 %8998
        %9000 = vrot.lane.b32.xlu0 %v8969, 96
        %v9001 = vpop.permute.xlu0 %9000
        %9002 = vrot.lane.b32.xlu0 %v8971, 96
        %v9003 = vpop.permute.xlu0 %9002
        %9004 = vrot.lane.b32.xlu0 %v8973, 96
        %v9005 = vpop.permute.xlu0 %9004
        %9006 = vrot.lane.b32.xlu0 %v8975, 96
        %v9007 = vpop.permute.xlu0 %9006
        %9008 = vrot.lane.b32.xlu0 %v8974, 96
        %v9009 = vpop.permute.xlu0 %9008
        %9027 = vst.msk [vmem:[#allocation3 + $0x1b8] sm:$0xff] %vm7731, %v8977
        %9028 = vst.msk [vmem:[#allocation3 + $0x1d0] sm:$0xff] %vm7731, %v8979
        %9029 = vst.msk [vmem:[#allocation3 + $0x1e8] sm:$0xff] %vm7731, %v8981
        %9030 = vst.msk [vmem:[#allocation3 + $0x200] sm:$0xff] %vm7731, %v8983
        %9031 = vst.msk [vmem:[#allocation3 + $0x218] sm:$0xff] %vm7731, %v8985
        %9032 = vst.msk [vmem:[#allocation3 + $0x230] sm:$0xff] %vm7731, %v8987
        %9033 = vst.msk [vmem:[#allocation3 + $0x248] sm:$0xff] %vm7731, %v8989
        %9034 = vst.msk [vmem:[#allocation3 + $0x260] sm:$0xff] %vm7731, %v8991
        %9035 = vst.msk [vmem:[#allocation3 + $0x278] sm:$0xff] %vm7731, %v8993
        %9036 = vst.msk [vmem:[#allocation3 + $0x290] sm:$0xff] %vm7731, %v8995
        %9037 = vst.msk [vmem:[#allocation3 + $0x2a8] sm:$0xff] %vm7731, %v8997
        %9038 = vst.msk [vmem:[#allocation3 + $0x2c0] sm:$0xff] %vm7731, %v8999
        %9039 = vst.msk [vmem:[#allocation3 + $0x2d8] sm:$0xff] %vm7731, %v9001
        %9040 = vst.msk [vmem:[#allocation3 + $0x2f0] sm:$0xff] %vm7731, %v9003
        %9041 = vst.msk [vmem:[#allocation3 + $0x308] sm:$0xff] %vm7731, %v9005
        %9042 = vst.msk [vmem:[#allocation3 + $0x320] sm:$0xff] %vm7731, %v9007
        %9043 = vst.msk [vmem:[#allocation3 + $0x338] sm:$0x7f] %vm8083, %v9009
        %v9044 = vld [vmem:[#allocation3 + $0x340] sm:$0xc0]
        %v9045 = vsel %vm8087, 0, %v9044
        %9046 = vst [vmem:[#allocation3 + $0x340] sm:$0xc0] %v9045
        %9047 = vst.msk [vmem:[#allocation3 + $0x358] sm:$0xff] %vm7205, 0
        %v9048 = vrot.slane %v8210, 1
        %v9049 = vrot.slane %v8213, 2
        %v9050 = vor.u32 %v9048, %v9049
        %v9051 = vrot.slane %v8219, 1
        %v9052 = vrot.slane %v8222, 2
        %v9053 = vor.u32 %v9051, %v9052
        %v9054 = vsel %vm1302, %v9050, %v9053
        %v9055 = vrot.slane %v8228, 1
        %v9056 = vrot.slane %v8231, 2
        %v9057 = vor.u32 %v9055, %v9056
        %v9058 = vsel %vm1302, %v9053, %v9057
        %v9059 = vrot.slane %v8237, 1
        %v9060 = vrot.slane %v8240, 2
        %v9061 = vor.u32 %v9059, %v9060
        %v9062 = vsel %vm1302, %v9057, %v9061
        %v9063 = vrot.slane %v8246, 1
        %v9064 = vrot.slane %v8249, 2
        %v9065 = vor.u32 %v9063, %v9064
        %v9066 = vsel %vm1302, %v9061, %v9065
        %v9067 = vrot.slane %v8255, 1
        %v9068 = vrot.slane %v8258, 2
        %v9069 = vor.u32 %v9067, %v9068
        %v9070 = vsel %vm1302, %v9065, %v9069
        %v9071 = vrot.slane %v8264, 1
        %v9072 = vrot.slane %v8267, 2
        %v9073 = vor.u32 %v9071, %v9072
        %v9074 = vsel %vm1302, %v9069, %v9073
        %v9075 = vrot.slane %v8273, 1
        %v9076 = vrot.slane %v8276, 2
        %v9077 = vor.u32 %v9075, %v9076
        %v9078 = vsel %vm1302, %v9073, %v9077
        %v9079 = vrot.slane %v8282, 1
        %v9080 = vrot.slane %v8285, 2
        %v9081 = vor.u32 %v9079, %v9080
        %v9082 = vsel %vm1302, %v9077, %v9081
        %v9083 = vrot.slane %v8291, 1
        %v9084 = vrot.slane %v8294, 2
        %v9085 = vor.u32 %v9083, %v9084
        %v9086 = vsel %vm1302, %v9081, %v9085
        %v9087 = vrot.slane %v8300, 1
        %v9088 = vrot.slane %v8303, 2
        %v9089 = vor.u32 %v9087, %v9088
        %v9090 = vsel %vm1302, %v9085, %v9089
        %v9091 = vrot.slane %v8309, 1
        %v9092 = vrot.slane %v8312, 2
        %v9093 = vor.u32 %v9091, %v9092
        %v9094 = vsel %vm1302, %v9089, %v9093
        %v9095 = vrot.slane %v8318, 1
        %v9096 = vrot.slane %v8321, 2
        %v9097 = vor.u32 %v9095, %v9096
        %v9098 = vsel %vm1302, %v9093, %v9097
        %v9099 = vrot.slane %v8327, 1
        %v9100 = vrot.slane %v8330, 2
        %v9101 = vor.u32 %v9099, %v9100
        %v9102 = vsel %vm1302, %v9097, %v9101
        %v9103 = vrot.slane %v8336, 1
        %v9104 = vrot.slane %v8339, 2
        %v9105 = vor.u32 %v9103, %v9104
        %v9106 = vsel %vm1302, %v9101, %v9105
        %v9107 = vrot.slane %v8345, 1
        %v9108 = vrot.slane %v8348, 2
        %v9109 = vor.u32 %v9107, %v9108
        %v9110 = vsel %vm1302, %v9105, %v9109
        %v9111 = vrot.slane %v8637, 1
        %v9112 = vrot.slane %v8640, 2
        %v9113 = vor.u32 %v9111, %v9112
        %v9114 = vsel %vm1302, %v9109, %v9113
        %9132 = vst.msk [vmem:[#allocation3 + $0x1c0] sm:$0xff] %vm7205, %v9054
        %9133 = vst.msk [vmem:[#allocation3 + $0x1d8] sm:$0xff] %vm7205, %v9058
        %9134 = vst.msk [vmem:[#allocation3 + $0x1f0] sm:$0xff] %vm7205, %v9062
        %9135 = vst.msk [vmem:[#allocation3 + $0x208] sm:$0xff] %vm7205, %v9066
        %9136 = vst.msk [vmem:[#allocation3 + $0x220] sm:$0xff] %vm7205, %v9070
        %9137 = vst.msk [vmem:[#allocation3 + $0x238] sm:$0xff] %vm7205, %v9074
        %9138 = vst.msk [vmem:[#allocation3 + $0x250] sm:$0xff] %vm7205, %v9078
        %9139 = vst.msk [vmem:[#allocation3 + $0x268] sm:$0xff] %vm7205, %v9082
        %9140 = vst.msk [vmem:[#allocation3 + $0x280] sm:$0xff] %vm7205, %v9086
        %9141 = vst.msk [vmem:[#allocation3 + $0x298] sm:$0xff] %vm7205, %v9090
        %9142 = vst.msk [vmem:[#allocation3 + $0x2b0] sm:$0xff] %vm7205, %v9094
        %9143 = vst.msk [vmem:[#allocation3 + $0x2c8] sm:$0xff] %vm7205, %v9098
        %9144 = vst.msk [vmem:[#allocation3 + $0x2e0] sm:$0xff] %vm7205, %v9102
        %9145 = vst.msk [vmem:[#allocation3 + $0x2f8] sm:$0xff] %vm7205, %v9106
        %9146 = vst.msk [vmem:[#allocation3 + $0x310] sm:$0xff] %vm7205, %v9110
        %9147 = vst.msk [vmem:[#allocation3 + $0x328] sm:$0xff] %vm7205, %v9114
        %v9148 = vld [vmem:[#allocation3 + $0x340] sm:$0x7f]
        %v9149 = vsel %vm8193, %v9113, %v9148
        %9150 = vst [vmem:[#allocation3 + $0x340] sm:$0x7f] %v9149
        %v9151 = vld [vmem:[#allocation3] sm:$0xff]
        %v9152 = vld [vmem:[#allocation3 + $0x8] sm:$0xff]
        %v9153 = vld [vmem:[#allocation3 + $0x10] sm:$0xff]
        %v9154 = vld [vmem:[#allocation3 + $0x18] sm:$0xff]
        %v9155 = vld [vmem:[#allocation3 + $0x20] sm:$0xff]
        %v9156 = vld [vmem:[#allocation3 + $0x28] sm:$0xff]
        %v9157 = vld [vmem:[#allocation3 + $0x30] sm:$0xff]
        %v9158 = vld [vmem:[#allocation3 + $0x38] sm:$0xff]
        %v9159 = vld [vmem:[#allocation3 + $0x40] sm:$0xff]
        %v9160 = vld [vmem:[#allocation3 + $0x48] sm:$0xff]
        %v9161 = vld [vmem:[#allocation3 + $0x50] sm:$0xff]
        %v9162 = vld [vmem:[#allocation3 + $0x58] sm:$0xff]
        %v9163 = vld [vmem:[#allocation3 + $0x60] sm:$0xff]
        %v9164 = vld [vmem:[#allocation3 + $0x68] sm:$0xff]
        %v9165 = vld [vmem:[#allocation3 + $0x70] sm:$0xff]
        %v9166 = vld [vmem:[#allocation3 + $0x78] sm:$0xff]
        %v9167 = vld [vmem:[#allocation3 + $0x80] sm:$0xff]
        %v9168 = vld [vmem:[#allocation3 + $0x88] sm:$0xff]
        %v9169 = vld [vmem:[#allocation3 + $0x90] sm:$0xff]
        %v9170 = vld [vmem:[#allocation3 + $0x98] sm:$0xff]
        %v9171 = vld [vmem:[#allocation3 + $0xa0] sm:$0xff]
        %v9172 = vld [vmem:[#allocation3 + $0xa8] sm:$0xff]
        %v9173 = vld [vmem:[#allocation3 + $0xb0] sm:$0xff]
        %v9174 = vld [vmem:[#allocation3 + $0xb8] sm:$0xff]
        %v9175 = vld [vmem:[#allocation3 + $0xc0] sm:$0xff]
        %v9176 = vld [vmem:[#allocation3 + $0xc8] sm:$0xff]
        %v9177 = vld [vmem:[#allocation3 + $0xd0] sm:$0xff]
        %v9178 = vld [vmem:[#allocation3 + $0xd8] sm:$0xff]
        %v9179 = vld [vmem:[#allocation3 + $0xe0] sm:$0xff]
        %v9180 = vld [vmem:[#allocation3 + $0xe8] sm:$0xff]
        %v9181 = vld [vmem:[#allocation3 + $0xf0] sm:$0xff]
        %v9182 = vld [vmem:[#allocation3 + $0xf8] sm:$0xff]
        %v9183 = vld [vmem:[#allocation3 + $0x100] sm:$0xff]
        %v9184 = vld [vmem:[#allocation3 + $0x108] sm:$0xff]
        %v9185 = vld [vmem:[#allocation3 + $0x110] sm:$0xff]
        %v9186 = vld [vmem:[#allocation3 + $0x118] sm:$0xff]
        %v9187 = vld [vmem:[#allocation3 + $0x120] sm:$0xff]
        %v9188 = vld [vmem:[#allocation3 + $0x128] sm:$0xff]
        %v9189 = vld [vmem:[#allocation3 + $0x130] sm:$0xff]
        %v9190 = vld [vmem:[#allocation3 + $0x138] sm:$0xff]
        %v9191 = vld [vmem:[#allocation3 + $0x140] sm:$0xff]
        %v9192 = vld [vmem:[#allocation3 + $0x148] sm:$0xff]
        %v9193 = vld [vmem:[#allocation3 + $0x150] sm:$0xff]
        %v9194 = vld [vmem:[#allocation3 + $0x158] sm:$0xff]
        %v9195 = vld [vmem:[#allocation3 + $0x160] sm:$0xff]
        %v9196 = vld [vmem:[#allocation3 + $0x168] sm:$0xff]
        %v9197 = vld [vmem:[#allocation3 + $0x170] sm:$0xff]
        %v9198 = vld [vmem:[#allocation3 + $0x178] sm:$0xff]
        %v9199 = vld [vmem:[#allocation3 + $0x180] sm:$0xff]
        %v9200 = vld [vmem:[#allocation3 + $0x188] sm:$0xff]
        %v9201 = vld [vmem:[#allocation3 + $0x190] sm:$0xff]
        %v9202 = vld [vmem:[#allocation3 + $0x198] sm:$0xff]
        %v9203 = vld [vmem:[#allocation3 + $0x1a0] sm:$0xff]
        %v9204 = vld [vmem:[#allocation3 + $0x1a8] sm:$0xff]
        %v9205 = vld [vmem:[#allocation3 + $0x1b0] sm:$0xff]
        %v9206 = vld [vmem:[#allocation3 + $0x1b8] sm:$0xff]
        %v9207 = vld [vmem:[#allocation3 + $0x1c0] sm:$0xff]
        %v9208 = vld [vmem:[#allocation3 + $0x1c8] sm:$0xff]
        %v9209 = vld [vmem:[#allocation3 + $0x1d0] sm:$0xff]
        %v9210 = vld [vmem:[#allocation3 + $0x1d8] sm:$0xff]
        %v9211 = vld [vmem:[#allocation3 + $0x1e0] sm:$0xff]
        %v9212 = vld [vmem:[#allocation3 + $0x1e8] sm:$0xff]
        %v9213 = vld [vmem:[#allocation3 + $0x1f0] sm:$0xff]
        %v9214 = vld [vmem:[#allocation3 + $0x1f8] sm:$0xff]
        %v9215 = vld [vmem:[#allocation3 + $0x200] sm:$0xff]
        %v9216 = vld [vmem:[#allocation3 + $0x208] sm:$0xff]
        %v9217 = vld [vmem:[#allocation3 + $0x210] sm:$0xff]
        %v9218 = vld [vmem:[#allocation3 + $0x218] sm:$0xff]
        %v9219 = vld [vmem:[#allocation3 + $0x220] sm:$0xff]
        %v9220 = vld [vmem:[#allocation3 + $0x228] sm:$0xff]
        %v9221 = vld [vmem:[#allocation3 + $0x230] sm:$0xff]
        %v9222 = vld [vmem:[#allocation3 + $0x238] sm:$0xff]
        %v9223 = vld [vmem:[#allocation3 + $0x240] sm:$0xff]
        %v9224 = vld [vmem:[#allocation3 + $0x248] sm:$0xff]
        %v9225 = vld [vmem:[#allocation3 + $0x250] sm:$0xff]
        %v9226 = vld [vmem:[#allocation3 + $0x258] sm:$0xff]
        %v9227 = vld [vmem:[#allocation3 + $0x260] sm:$0xff]
        %v9228 = vld [vmem:[#allocation3 + $0x268] sm:$0xff]
        %v9229 = vld [vmem:[#allocation3 + $0x270] sm:$0xff]
        %v9230 = vld [vmem:[#allocation3 + $0x278] sm:$0xff]
        %v9231 = vld [vmem:[#allocation3 + $0x280] sm:$0xff]
        %v9232 = vld [vmem:[#allocation3 + $0x288] sm:$0xff]
        %v9233 = vld [vmem:[#allocation3 + $0x290] sm:$0xff]
        %v9234 = vld [vmem:[#allocation3 + $0x298] sm:$0xff]
        %v9235 = vld [vmem:[#allocation3 + $0x2a0] sm:$0xff]
        %v9236 = vld [vmem:[#allocation3 + $0x2a8] sm:$0xff]
        %v9237 = vld [vmem:[#allocation3 + $0x2b0] sm:$0xff]
        %v9238 = vld [vmem:[#allocation3 + $0x2b8] sm:$0xff]
        %v9239 = vld [vmem:[#allocation3 + $0x2c0] sm:$0xff]
        %v9240 = vld [vmem:[#allocation3 + $0x2c8] sm:$0xff]
        %v9241 = vld [vmem:[#allocation3 + $0x2d0] sm:$0xff]
        %v9242 = vld [vmem:[#allocation3 + $0x2d8] sm:$0xff]
        %v9243 = vld [vmem:[#allocation3 + $0x2e0] sm:$0xff]
        %v9244 = vld [vmem:[#allocation3 + $0x2e8] sm:$0xff]
        %v9245 = vld [vmem:[#allocation3 + $0x2f0] sm:$0xff]
        %v9246 = vld [vmem:[#allocation3 + $0x2f8] sm:$0xff]
        %v9247 = vld [vmem:[#allocation3 + $0x300] sm:$0xff]
        %v9248 = vld [vmem:[#allocation3 + $0x308] sm:$0xff]
        %v9249 = vld [vmem:[#allocation3 + $0x310] sm:$0xff]
        %v9250 = vld [vmem:[#allocation3 + $0x318] sm:$0xff]
        %v9251 = vld [vmem:[#allocation3 + $0x320] sm:$0xff]
        %v9252 = vld [vmem:[#allocation3 + $0x328] sm:$0xff]
        %v9253 = vld [vmem:[#allocation3 + $0x330] sm:$0xff]
        %v9254 = vld [vmem:[#allocation3 + $0x338] sm:$0xff]
        %v9255 = vld [vmem:[#allocation3 + $0x340] sm:$0xff]
        %v9256 = vld [vmem:[#allocation3 + $0x348] sm:$0xff]
        %v9257 = vld [vmem:[#allocation3 + $0x350] sm:$0xff]
        %v9258 = vld [vmem:[#allocation3 + $0x358] sm:$0xff]
        %v9259 = vld [vmem:[%s2] sm:$0xf]
        %v9260 = vld [vmem:[%s2 + $0x4] sm:$0xf]
        %v9261 = vld [vmem:[%s2 + $0x8] sm:$0xf]
        %v9262 = vld [vmem:[%s2 + $0xc] sm:$0xf]
        %v9263 = vld [vmem:[%s2 + $0x10] sm:$0xf]
        %v9264 = vld [vmem:[%s2 + $0x14] sm:$0xf]
        %v9265 = vld [vmem:[%s2 + $0x18] sm:$0xf]
        %v9266 = vld [vmem:[%s2 + $0x1c] sm:$0xf]
        %v9267 = vld [vmem:[%s2 + $0x20] sm:$0xf]
        %v9268 = vld [vmem:[%s2 + $0x24] sm:$0xf]
        %v9269 = vld [vmem:[%s2 + $0x28] sm:$0xf]
        %v9270 = vld [vmem:[%s2 + $0x2c] sm:$0xf]
        %v9271 = vld [vmem:[%s2 + $0x30] sm:$0xf]
        %v9272 = vld [vmem:[%s2 + $0x34] sm:$0xf]
        %v9273 = vld [vmem:[%s2 + $0x38] sm:$0xf]
        %v9274 = vld [vmem:[%s2 + $0x3c] sm:$0xf]
        %v9275 = vld [vmem:[%s2 + $0x40] sm:$0xf]
        %v9276 = vld [vmem:[%s2 + $0x44] sm:$0xf]
        %v9277 = vld [vmem:[%s2 + $0x48] sm:$0xf]
        %v9278 = vld [vmem:[%s2 + $0x4c] sm:$0xf]
        %v9279 = vld [vmem:[%s2 + $0x50] sm:$0xf]
        %v9280 = vld [vmem:[%s2 + $0x54] sm:$0xf]
        %v9281 = vld [vmem:[%s2 + $0x58] sm:$0xf]
        %v9282 = vld [vmem:[%s2 + $0x5c] sm:$0xf]
        %v9283 = vld [vmem:[%s2 + $0x60] sm:$0xf]
        %v9284 = vld [vmem:[%s2 + $0x64] sm:$0xf]
        %v9285 = vld [vmem:[%s2 + $0x68] sm:$0xf]
        %v9286 = vld [vmem:[%s2 + $0x6c] sm:$0xf]
        %v9287 = vld [vmem:[%s2 + $0x70] sm:$0xf]
        %v9288 = vld [vmem:[%s2 + $0x74] sm:$0xf]
        %v9289 = vld [vmem:[%s2 + $0x78] sm:$0xf]
        %v9290 = vld [vmem:[%s2 + $0x7c] sm:$0xf]
        %v9291 = vld [vmem:[%s2 + $0x80] sm:$0xf]
        %v9292 = vld [vmem:[%s2 + $0x84] sm:$0xf]
        %v9293 = vld [vmem:[%s2 + $0x88] sm:$0xf]
        %v9294 = vld [vmem:[%s2 + $0x8c] sm:$0xf]
        %v9331 = vunpack.c.l.b16 %v9259
        %v9332 = vunpack.c.l.b16 %v9260
        %v9333 = vunpack.c.l.b16 %v9261
        %v9334 = vunpack.c.l.b16 %v9262
        %v9335 = vunpack.c.l.b16 %v9263
        %v9336 = vunpack.c.l.b16 %v9264
        %v9337 = vunpack.c.l.b16 %v9265
        %v9338 = vunpack.c.l.b16 %v9266
        %v9339 = vunpack.c.l.b16 %v9267
        %v9340 = vunpack.c.l.b16 %v9268
        %v9341 = vunpack.c.l.b16 %v9269
        %v9342 = vunpack.c.l.b16 %v9270
        %v9343 = vunpack.c.l.b16 %v9271
        %v9344 = vunpack.c.l.b16 %v9272
        %v9345 = vunpack.c.l.b16 %v9273
        %v9346 = vunpack.c.l.b16 %v9274
        %v9347 = vunpack.c.l.b16 %v9275
        %v9348 = vunpack.c.l.b16 %v9276
        %v9349 = vunpack.c.l.b16 %v9277
        %v9350 = vunpack.c.l.b16 %v9278
        %v9351 = vunpack.c.l.b16 %v9279
        %v9352 = vunpack.c.l.b16 %v9280
        %v9353 = vunpack.c.l.b16 %v9281
        %v9354 = vunpack.c.l.b16 %v9282
        %v9355 = vunpack.c.l.b16 %v9283
        %v9356 = vunpack.c.l.b16 %v9284
        %v9357 = vunpack.c.l.b16 %v9285
        %v9358 = vunpack.c.l.b16 %v9286
        %v9359 = vunpack.c.l.b16 %v9287
        %v9360 = vunpack.c.l.b16 %v9288
        %v9361 = vunpack.c.l.b16 %v9289
        %v9362 = vunpack.c.l.b16 %v9290
        %v9363 = vunpack.c.l.b16 %v9291
        %v9364 = vunpack.c.l.b16 %v9292
        %v9365 = vunpack.c.l.b16 %v9293
        %v9366 = vunpack.c.l.b16 %v9294
        %v9367 = vpack.c.b16 %v9332, %v9331
        %v9368 = vpack.c.b16 %v9334, %v9333
        %v9369 = vpack.c.b16 %v9336, %v9335
        %v9370 = vpack.c.b16 %v9338, %v9337
        %v9371 = vpack.c.b16 %v9340, %v9339
        %v9372 = vpack.c.b16 %v9342, %v9341
        %v9373 = vpack.c.b16 %v9344, %v9343
        %v9374 = vpack.c.b16 %v9346, %v9345
        %v9375 = vpack.c.b16 %v9348, %v9347
        %v9376 = vpack.c.b16 %v9350, %v9349
        %v9377 = vpack.c.b16 %v9352, %v9351
        %v9378 = vpack.c.b16 %v9354, %v9353
        %v9379 = vpack.c.b16 %v9356, %v9355
        %v9380 = vpack.c.b16 %v9358, %v9357
        %v9381 = vpack.c.b16 %v9360, %v9359
        %v9382 = vpack.c.b16 %v9362, %v9361
        %v9383 = vpack.c.b16 %v9364, %v9363
        %v9384 = vpack.c.b16 %v9366, %v9365
        %v9404 = vsel %vm7205, %v9153, 0
        %v9407 = vsel %vm7205, %v9156, 0
        %v9410 = vsel %vm7205, %v9159, 0
        %v9413 = vsel %vm7205, %v9162, 0
        %v9416 = vsel %vm7205, %v9165, 0
        %v9419 = vsel %vm7205, %v9168, 0
        %v9422 = vsel %vm7205, %v9171, 0
        %v9425 = vsel %vm7205, %v9174, 0
        %v9428 = vsel %vm7205, %v9177, 0
        %v9431 = vsel %vm7205, %v9180, 0
        %v9434 = vsel %vm7205, %v9183, 0
        %v9437 = vsel %vm7205, %v9186, 0
        %v9440 = vsel %vm7205, %v9189, 0
        %v9443 = vsel %vm7205, %v9192, 0
        %v9446 = vsel %vm7205, %v9195, 0
        %v9449 = vsel %vm7205, %v9198, 0
        %v9452 = vsel %vm7205, %v9201, 0
        %v9455 = vsel %vm7205, %v9204, 0
        %v9458 = vsel %vm7205, %v9207, 0
        %v9461 = vsel %vm7205, %v9210, 0
        %v9464 = vsel %vm7205, %v9213, 0
        %v9467 = vsel %vm7205, %v9216, 0
        %v9470 = vsel %vm7205, %v9219, 0
        %v9473 = vsel %vm7205, %v9222, 0
        %v9476 = vsel %vm7205, %v9225, 0
        %v9479 = vsel %vm7205, %v9228, 0
        %v9482 = vsel %vm7205, %v9231, 0
        %v9485 = vsel %vm7205, %v9234, 0
        %v9488 = vsel %vm7205, %v9237, 0
        %v9491 = vsel %vm7205, %v9240, 0
        %v9494 = vsel %vm7205, %v9243, 0
        %v9497 = vsel %vm7205, %v9246, 0
        %v9500 = vsel %vm7205, %v9249, 0
        %v9503 = vsel %vm7205, %v9252, 0
        %v9506 = vsel %vm7205, %v9255, 0
        %v9509 = vsel %vm7205, %v9258, 0
        %9511 = vmatprep.subr.bf16.mxu0 0
        %9512 = vmatpush1.bf16.msra.mxu0 %v9367
        %9513 = vmatprep.subr.bf16.mxu0 0
        %9514 = vmatpush1.bf16.msra.mxu0 %v9368
        %9515 = vmatprep.subr.bf16.mxu0 0
        %9516 = vmatpush1.bf16.msra.mxu0 %v9369
        %9517 = vmatprep.subr.bf16.mxu0 0
        %9518 = vmatpush1.bf16.msra.mxu0 %v9370
        %9519 = vmatprep.subr.bf16.mxu0 0
        %9520 = vmatpush1.bf16.msra.mxu0 %v9371
        %9521 = vmatprep.subr.bf16.mxu0 0
        %9522 = vmatpush1.bf16.msra.mxu0 %v9372
        %9523 = vmatprep.subr.bf16.mxu0 0
        %9524 = vmatpush1.bf16.msra.mxu0 %v9373
        %9525 = vmatprep.subr.bf16.mxu0 0
        %9526 = vmatpush1.bf16.msra.mxu0 %v9374
        %9527 = vmatprep.subr.bf16.mxu0 0
        %9528 = vmatpush1.bf16.msra.mxu0 %v9375
        %9529 = vmatprep.subr.bf16.mxu0 0
        %9530 = vmatpush1.bf16.msra.mxu0 %v9376
        %9531 = vmatprep.subr.bf16.mxu0 0
        %9532 = vmatpush1.bf16.msra.mxu0 %v9377
        %9533 = vmatprep.subr.bf16.mxu0 0
        %9534 = vmatpush1.bf16.msra.mxu0 %v9378
        %9535 = vmatprep.subr.bf16.mxu0 0
        %9536 = vmatpush1.bf16.msra.mxu0 %v9379
        %9537 = vmatprep.subr.bf16.mxu0 0
        %9538 = vmatpush1.bf16.msra.mxu0 %v9380
        %9539 = vmatprep.subr.bf16.mxu0 0
        %9540 = vmatpush1.bf16.msra.mxu0 %v9381
        %9541 = vmatprep.subr.bf16.mxu0 0
        %9542 = vmatpush1.bf16.msra.mxu0 %v9382
        %9543 = vmatprep.mubr.bf16.mxu0 %v9152
        %9544 = vmatmul.mubr.bf16.gmra.mrb[0].mxu0 %v9151
        %v9545 = vpop.f32.mrb[0].mxu0
        %v9546 = vadd.f32 0.0, %v9545
        %v9547 = vpop.f32.mrb[0].mxu0
        %v9548 = vpop.f32.mrb[0].mxu0
        %v9549 = vadd.f32 0.0, %v9548
        %v9550 = vpop.f32.mrb[0].mxu0
        %9551 = vmatprep.mubr.bf16.mxu0 %v9155
        %9552 = vmatmul.mubr.bf16.gmra.mrb[0].mxu0 %v9154
        %v9553 = vpop.f32.mrb[0].mxu0
        %v9554 = vadd.f32 0.0, %v9553
        %v9555 = vpop.f32.mrb[0].mxu0
        %v9556 = vpop.f32.mrb[0].mxu0
        %v9557 = vadd.f32 0.0, %v9556
        %v9558 = vpop.f32.mrb[0].mxu0
        %9559 = vmatprep.mubr.bf16.mxu0 %v9158
        %9560 = vmatmul.mubr.bf16.gmra.mrb[0].mxu0 %v9157
        %v9561 = vpop.f32.mrb[0].mxu0
        %v9562 = vadd.f32 0.0, %v9561
        %v9563 = vpop.f32.mrb[0].mxu0
        %v9564 = vpop.f32.mrb[0].mxu0
        %v9565 = vadd.f32 0.0, %v9564
        %v9566 = vpop.f32.mrb[0].mxu0
        %9567 = vmatprep.mubr.bf16.mxu0 %v9161
        %9568 = vmatmul.mubr.bf16.gmra.mrb[0].mxu0 %v9160
        %v9569 = vpop.f32.mrb[0].mxu0
        %v9570 = vadd.f32 0.0, %v9569
        %v9571 = vpop.f32.mrb[0].mxu0
        %v9572 = vpop.f32.mrb[0].mxu0
        %v9573 = vadd.f32 0.0, %v9572
        %v9574 = vpop.f32.mrb[0].mxu0
        %9575 = vmatprep.mubr.bf16.mxu0 %v9164
        %9576 = vmatmul.mubr.bf16.gmra.mrb[0].mxu0 %v9163
        %v9577 = vpop.f32.mrb[0].mxu0
        %v9578 = vadd.f32 0.0, %v9577
        %v9579 = vpop.f32.mrb[0].mxu0
        %v9580 = vpop.f32.mrb[0].mxu0
        %v9581 = vadd.f32 0.0, %v9580
        %v9582 = vpop.f32.mrb[0].mxu0
        %9583 = vmatprep.mubr.bf16.mxu0 %v9167
        %9584 = vmatmul.mubr.bf16.gmra.mrb[0].mxu0 %v9166
        %v9585 = vpop.f32.mrb[0].mxu0
        %v9586 = vadd.f32 0.0, %v9585
        %v9587 = vpop.f32.mrb[0].mxu0
        %v9588 = vpop.f32.mrb[0].mxu0
        %v9589 = vadd.f32 0.0, %v9588
        %v9590 = vpop.f32.mrb[0].mxu0
        %9591 = vmatprep.mubr.bf16.mxu0 %v9170
        %9592 = vmatmul.mubr.bf16.gmra.mrb[0].mxu0 %v9169
        %v9593 = vpop.f32.mrb[0].mxu0
        %v9594 = vadd.f32 0.0, %v9593
        %v9595 = vpop.f32.mrb[0].mxu0
        %v9596 = vpop.f32.mrb[0].mxu0
        %v9597 = vadd.f32 0.0, %v9596
        %v9598 = vpop.f32.mrb[0].mxu0
        %9599 = vmatprep.mubr.bf16.mxu0 %v9173
        %9600 = vmatmul.mubr.bf16.gmra.mrb[0].mxu0 %v9172
        %v9601 = vpop.f32.mrb[0].mxu0
        %v9602 = vadd.f32 0.0, %v9601
        %v9603 = vpop.f32.mrb[0].mxu0
        %v9604 = vpop.f32.mrb[0].mxu0
        %v9605 = vadd.f32 0.0, %v9604
        %v9606 = vpop.f32.mrb[0].mxu0
        %9607 = vmatprep.mubr.bf16.mxu0 %v9176
        %9608 = vmatmul.mubr.bf16.gmra.mrb[0].mxu0 %v9175
        %v9609 = vpop.f32.mrb[0].mxu0
        %v9610 = vadd.f32 0.0, %v9609
        %v9611 = vpop.f32.mrb[0].mxu0
        %v9612 = vpop.f32.mrb[0].mxu0
        %v9613 = vadd.f32 0.0, %v9612
        %v9614 = vpop.f32.mrb[0].mxu0
        %9615 = vmatprep.mubr.bf16.mxu0 %v9179
        %9616 = vmatmul.mubr.bf16.gmra.mrb[0].mxu0 %v9178
        %v9617 = vpop.f32.mrb[0].mxu0
        %v9618 = vadd.f32 0.0, %v9617
        %v9619 = vpop.f32.mrb[0].mxu0
        %v9620 = vpop.f32.mrb[0].mxu0
        %v9621 = vadd.f32 0.0, %v9620
        %v9622 = vpop.f32.mrb[0].mxu0
        %9623 = vmatprep.mubr.bf16.mxu0 %v9182
        %9624 = vmatmul.mubr.bf16.gmra.mrb[0].mxu0 %v9181
        %v9625 = vpop.f32.mrb[0].mxu0
        %v9626 = vadd.f32 0.0, %v9625
        %v9627 = vpop.f32.mrb[0].mxu0
        %v9628 = vpop.f32.mrb[0].mxu0
        %v9629 = vadd.f32 0.0, %v9628
        %v9630 = vpop.f32.mrb[0].mxu0
        %9631 = vmatprep.mubr.bf16.mxu0 %v9185
        %9632 = vmatmul.mubr.bf16.gmra.mrb[0].mxu0 %v9184
        %v9633 = vpop.f32.mrb[0].mxu0
        %v9634 = vadd.f32 0.0, %v9633
        %v9635 = vpop.f32.mrb[0].mxu0
        %v9636 = vpop.f32.mrb[0].mxu0
        %v9637 = vadd.f32 0.0, %v9636
        %v9638 = vpop.f32.mrb[0].mxu0
        %9639 = vmatprep.mubr.bf16.mxu0 %v9188
        %9640 = vmatmul.mubr.bf16.gmra.mrb[0].mxu0 %v9187
        %v9641 = vpop.f32.mrb[0].mxu0
        %v9642 = vadd.f32 0.0, %v9641
        %v9643 = vpop.f32.mrb[0].mxu0
        %v9644 = vpop.f32.mrb[0].mxu0
        %v9645 = vadd.f32 0.0, %v9644
        %v9646 = vpop.f32.mrb[0].mxu0
        %9647 = vmatprep.mubr.bf16.mxu0 %v9191
        %9648 = vmatmul.mubr.bf16.gmra.mrb[0].mxu0 %v9190
        %v9649 = vpop.f32.mrb[0].mxu0
        %v9650 = vadd.f32 0.0, %v9649
        %v9651 = vpop.f32.mrb[0].mxu0
        %v9652 = vpop.f32.mrb[0].mxu0
        %v9653 = vadd.f32 0.0, %v9652
        %v9654 = vpop.f32.mrb[0].mxu0
        %9655 = vmatprep.mubr.bf16.mxu0 %v9194
        %9656 = vmatmul.mubr.bf16.gmra.mrb[0].mxu0 %v9193
        %v9657 = vpop.f32.mrb[0].mxu0
        %v9658 = vadd.f32 0.0, %v9657
        %v9659 = vpop.f32.mrb[0].mxu0
        %v9660 = vpop.f32.mrb[0].mxu0
        %v9661 = vadd.f32 0.0, %v9660
        %v9662 = vpop.f32.mrb[0].mxu0
        %9663 = vmatprep.mubr.bf16.mxu0 %v9197
        %9664 = vmatmul.mubr.bf16.gmra.mrb[0].mxu0 %v9196
        %v9665 = vpop.f32.mrb[0].mxu0
        %v9666 = vadd.f32 0.0, %v9665
        %v9667 = vpop.f32.mrb[0].mxu0
        %v9668 = vpop.f32.mrb[0].mxu0
        %v9669 = vadd.f32 0.0, %v9668
        %v9670 = vpop.f32.mrb[0].mxu0
        %9671 = vmatprep.mubr.bf16.mxu0 %v9200
        %9672 = vmatmul.mubr.bf16.gmra.mrb[0].mxu0 %v9199
        %v9673 = vpop.f32.mrb[0].mxu0
        %v9674 = vadd.f32 0.0, %v9673
        %v9675 = vpop.f32.mrb[0].mxu0
        %v9676 = vpop.f32.mrb[0].mxu0
        %v9677 = vadd.f32 0.0, %v9676
        %v9678 = vpop.f32.mrb[0].mxu0
        %9679 = vmatprep.mubr.bf16.mxu0 %v9203
        %9680 = vmatmul.mubr.bf16.gmra.mrb[0].mxu0 %v9202
        %v9681 = vpop.f32.mrb[0].mxu0
        %v9682 = vadd.f32 0.0, %v9681
        %v9683 = vpop.f32.mrb[0].mxu0
        %v9684 = vpop.f32.mrb[0].mxu0
        %v9685 = vadd.f32 0.0, %v9684
        %v9686 = vpop.f32.mrb[0].mxu0
        %9687 = vmatprep.mubr.bf16.mxu0 %v9206
        %9688 = vmatmul.mubr.bf16.gmra.mrb[0].mxu0 %v9205
        %v9689 = vpop.f32.mrb[0].mxu0
        %v9690 = vadd.f32 0.0, %v9689
        %v9691 = vpop.f32.mrb[0].mxu0
        %v9692 = vpop.f32.mrb[0].mxu0
        %v9693 = vadd.f32 0.0, %v9692
        %v9694 = vpop.f32.mrb[0].mxu0
        %9695 = vmatprep.mubr.bf16.mxu0 %v9209
        %9696 = vmatmul.mubr.bf16.gmra.mrb[0].mxu0 %v9208
        %v9697 = vpop.f32.mrb[0].mxu0
        %v9698 = vadd.f32 0.0, %v9697
        %v9699 = vpop.f32.mrb[0].mxu0
        %v9700 = vpop.f32.mrb[0].mxu0
        %v9701 = vadd.f32 0.0, %v9700
        %v9702 = vpop.f32.mrb[0].mxu0
        %9703 = vmatprep.mubr.bf16.mxu0 %v9212
        %9704 = vmatmul.mubr.bf16.gmra.mrb[0].mxu0 %v9211
        %v9705 = vpop.f32.mrb[0].mxu0
        %v9706 = vadd.f32 0.0, %v9705
        %v9707 = vpop.f32.mrb[0].mxu0
        %v9708 = vpop.f32.mrb[0].mxu0
        %v9709 = vadd.f32 0.0, %v9708
        %v9710 = vpop.f32.mrb[0].mxu0
        %9711 = vmatprep.mubr.bf16.mxu0 %v9215
        %9712 = vmatmul.mubr.bf16.gmra.mrb[0].mxu0 %v9214
        %v9713 = vpop.f32.mrb[0].mxu0
        %v9714 = vadd.f32 0.0, %v9713
        %v9715 = vpop.f32.mrb[0].mxu0
        %v9716 = vpop.f32.mrb[0].mxu0
        %v9717 = vadd.f32 0.0, %v9716
        %v9718 = vpop.f32.mrb[0].mxu0
        %9719 = vmatprep.mubr.bf16.mxu0 %v9218
        %9720 = vmatmul.mubr.bf16.gmra.mrb[0].mxu0 %v9217
        %v9721 = vpop.f32.mrb[0].mxu0
        %v9722 = vadd.f32 0.0, %v9721
        %v9723 = vpop.f32.mrb[0].mxu0
        %v9724 = vpop.f32.mrb[0].mxu0
        %v9725 = vadd.f32 0.0, %v9724
        %v9726 = vpop.f32.mrb[0].mxu0
        %9727 = vmatprep.mubr.bf16.mxu0 %v9221
        %9728 = vmatmul.mubr.bf16.gmra.mrb[0].mxu0 %v9220
        %v9729 = vpop.f32.mrb[0].mxu0
        %v9730 = vadd.f32 0.0, %v9729
        %v9731 = vpop.f32.mrb[0].mxu0
        %v9732 = vpop.f32.mrb[0].mxu0
        %v9733 = vadd.f32 0.0, %v9732
        %v9734 = vpop.f32.mrb[0].mxu0
        %9735 = vmatprep.mubr.bf16.mxu0 %v9224
        %9736 = vmatmul.mubr.bf16.gmra.mrb[0].mxu0 %v9223
        %v9737 = vpop.f32.mrb[0].mxu0
        %v9738 = vadd.f32 0.0, %v9737
        %v9739 = vpop.f32.mrb[0].mxu0
        %v9740 = vpop.f32.mrb[0].mxu0
        %v9741 = vadd.f32 0.0, %v9740
        %v9742 = vpop.f32.mrb[0].mxu0
        %9743 = vmatprep.mubr.bf16.mxu0 %v9227
        %9744 = vmatmul.mubr.bf16.gmra.mrb[0].mxu0 %v9226
        %v9745 = vpop.f32.mrb[0].mxu0
        %v9746 = vadd.f32 0.0, %v9745
        %v9747 = vpop.f32.mrb[0].mxu0
        %v9748 = vpop.f32.mrb[0].mxu0
        %v9749 = vadd.f32 0.0, %v9748
        %v9750 = vpop.f32.mrb[0].mxu0
        %9751 = vmatprep.mubr.bf16.mxu0 %v9230
        %9752 = vmatmul.mubr.bf16.gmra.mrb[0].mxu0 %v9229
        %v9753 = vpop.f32.mrb[0].mxu0
        %v9754 = vadd.f32 0.0, %v9753
        %v9755 = vpop.f32.mrb[0].mxu0
        %v9756 = vpop.f32.mrb[0].mxu0
        %v9757 = vadd.f32 0.0, %v9756
        %v9758 = vpop.f32.mrb[0].mxu0
        %9759 = vmatprep.mubr.bf16.mxu0 %v9233
        %9760 = vmatmul.mubr.bf16.gmra.mrb[0].mxu0 %v9232
        %v9761 = vpop.f32.mrb[0].mxu0
        %v9762 = vadd.f32 0.0, %v9761
        %v9763 = vpop.f32.mrb[0].mxu0
        %v9764 = vpop.f32.mrb[0].mxu0
        %v9765 = vadd.f32 0.0, %v9764
        %v9766 = vpop.f32.mrb[0].mxu0
        %9767 = vmatprep.mubr.bf16.mxu0 %v9236
        %9768 = vmatmul.mubr.bf16.gmra.mrb[0].mxu0 %v9235
        %v9769 = vpop.f32.mrb[0].mxu0
        %v9770 = vadd.f32 0.0, %v9769
        %v9771 = vpop.f32.mrb[0].mxu0
        %v9772 = vpop.f32.mrb[0].mxu0
        %v9773 = vadd.f32 0.0, %v9772
        %v9774 = vpop.f32.mrb[0].mxu0
        %9775 = vmatprep.mubr.bf16.mxu0 %v9239
        %9776 = vmatmul.mubr.bf16.gmra.mrb[0].mxu0 %v9238
        %v9777 = vpop.f32.mrb[0].mxu0
        %v9778 = vadd.f32 0.0, %v9777
        %v9779 = vpop.f32.mrb[0].mxu0
        %v9780 = vpop.f32.mrb[0].mxu0
        %v9781 = vadd.f32 0.0, %v9780
        %v9782 = vpop.f32.mrb[0].mxu0
        %9783 = vmatprep.mubr.bf16.mxu0 %v9242
        %9784 = vmatmul.mubr.bf16.gmra.mrb[0].mxu0 %v9241
        %v9785 = vpop.f32.mrb[0].mxu0
        %v9786 = vadd.f32 0.0, %v9785
        %v9787 = vpop.f32.mrb[0].mxu0
        %v9788 = vpop.f32.mrb[0].mxu0
        %v9789 = vadd.f32 0.0, %v9788
        %v9790 = vpop.f32.mrb[0].mxu0
        %9791 = vmatprep.mubr.bf16.mxu0 %v9245
        %9792 = vmatmul.mubr.bf16.gmra.mrb[0].mxu0 %v9244
        %v9793 = vpop.f32.mrb[0].mxu0
        %v9794 = vadd.f32 0.0, %v9793
        %v9795 = vpop.f32.mrb[0].mxu0
        %v9796 = vpop.f32.mrb[0].mxu0
        %v9797 = vadd.f32 0.0, %v9796
        %v9798 = vpop.f32.mrb[0].mxu0
        %9799 = vmatprep.mubr.bf16.mxu0 %v9248
        %9800 = vmatmul.mubr.bf16.gmra.mrb[0].mxu0 %v9247
        %v9801 = vpop.f32.mrb[0].mxu0
        %v9802 = vadd.f32 0.0, %v9801
        %v9803 = vpop.f32.mrb[0].mxu0
        %v9804 = vpop.f32.mrb[0].mxu0
        %v9805 = vadd.f32 0.0, %v9804
        %v9806 = vpop.f32.mrb[0].mxu0
        %9807 = vmatprep.mubr.bf16.mxu0 %v9251
        %9808 = vmatmul.mubr.bf16.gmra.mrb[0].mxu0 %v9250
        %v9809 = vpop.f32.mrb[0].mxu0
        %v9810 = vadd.f32 0.0, %v9809
        %v9811 = vpop.f32.mrb[0].mxu0
        %v9812 = vpop.f32.mrb[0].mxu0
        %v9813 = vadd.f32 0.0, %v9812
        %v9814 = vpop.f32.mrb[0].mxu0
        %9815 = vmatprep.mubr.bf16.mxu0 %v9254
        %9816 = vmatmul.mubr.bf16.gmra.mrb[0].mxu0 %v9253
        %v9817 = vpop.f32.mrb[0].mxu0
        %v9818 = vadd.f32 0.0, %v9817
        %v9819 = vpop.f32.mrb[0].mxu0
        %v9820 = vpop.f32.mrb[0].mxu0
        %v9821 = vadd.f32 0.0, %v9820
        %v9822 = vpop.f32.mrb[0].mxu0
        %9823 = vmatprep.mubr.bf16.mxu0 %v9257
        %9824 = vmatmul.mubr.bf16.gmra.mrb[0].mxu0 %v9256
        %v9825 = vpop.f32.mrb[0].mxu0
        %v9826 = vadd.f32 0.0, %v9825
        %v9827 = vpop.f32.mrb[0].mxu0
        %v9828 = vpop.f32.mrb[0].mxu0
        %v9829 = vadd.f32 0.0, %v9828
        %v9830 = vpop.f32.mrb[0].mxu0
        %9831 = vdwg.mxu0
        %9832 = vmatprep.subr.bf16.mxu0 0
        %9833 = vmatpush1.bf16.msra.mxu0 %v9383
        %9834 = vmatprep.subr.bf16.mxu0 0
        %9835 = vmatpush1.bf16.msra.mxu0 %v9384
        %9836 = vmatprep.subr.bf16.mxu0 0
        %9837 = vmatpush1.bf16.msra.mxu0 0
        %9838 = vmatprep.subr.bf16.mxu0 0
        %9839 = vmatpush1.bf16.msra.mxu0 0
        %9840 = vmatprep.subr.bf16.mxu0 0
        %9841 = vmatpush1.bf16.msra.mxu0 0
        %9842 = vmatprep.subr.bf16.mxu0 0
        %9843 = vmatpush1.bf16.msra.mxu0 0
        %9844 = vmatprep.subr.bf16.mxu0 0
        %9845 = vmatpush1.bf16.msra.mxu0 0
        %9846 = vmatprep.subr.bf16.mxu0 0
        %9847 = vmatpush1.bf16.msra.mxu0 0
        %9848 = vmatprep.subr.bf16.mxu0 0
        %9849 = vmatpush1.bf16.msra.mxu0 0
        %9850 = vmatprep.subr.bf16.mxu0 0
        %9851 = vmatpush1.bf16.msra.mxu0 0
        %9852 = vmatprep.subr.bf16.mxu0 0
        %9853 = vmatpush1.bf16.msra.mxu0 0
        %9854 = vmatprep.subr.bf16.mxu0 0
        %9855 = vmatpush1.bf16.msra.mxu0 0
        %9856 = vmatprep.subr.bf16.mxu0 0
        %9857 = vmatpush1.bf16.msra.mxu0 0
        %9858 = vmatprep.subr.bf16.mxu0 0
        %9859 = vmatpush1.bf16.msra.mxu0 0
        %9860 = vmatprep.subr.bf16.mxu0 0
        %9861 = vmatpush1.bf16.msra.mxu0 0
        %9862 = vmatprep.subr.bf16.mxu0 0
        %9863 = vmatpush1.bf16.msra.mxu0 0
        %9864 = vmatprep.mubr.bf16.mxu0 0
        %9865 = vmatmul.mubr.bf16.gmra.mrb[0].mxu0 %v9404
        %v9866 = vpop.f32.mrb[0].mxu0
        %v9867 = vadd.f32 %v9546, %v9866
        %v9868 = vpop.f32.mrb[0].mxu0
        %v9869 = vpop.f32.mrb[0].mxu0
        %v9870 = vadd.f32 %v9549, %v9869
        %v9871 = vpop.f32.mrb[0].mxu0
        %9872 = vmatprep.mubr.bf16.mxu0 0
        %9873 = vmatmul.mubr.bf16.gmra.mrb[0].mxu0 %v9407
        %v9874 = vpop.f32.mrb[0].mxu0
        %v9875 = vadd.f32 %v9554, %v9874
        %v9876 = vpop.f32.mrb[0].mxu0
        %v9877 = vpop.f32.mrb[0].mxu0
        %v9878 = vadd.f32 %v9557, %v9877
        %v9879 = vpop.f32.mrb[0].mxu0
        %9880 = vmatprep.mubr.bf16.mxu0 0
        %9881 = vmatmul.mubr.bf16.gmra.mrb[0].mxu0 %v9410
        %v9882 = vpop.f32.mrb[0].mxu0
        %v9883 = vadd.f32 %v9562, %v9882
        %v9884 = vpop.f32.mrb[0].mxu0
        %v9885 = vpop.f32.mrb[0].mxu0
        %v9886 = vadd.f32 %v9565, %v9885
        %v9887 = vpop.f32.mrb[0].mxu0
        %9888 = vmatprep.mubr.bf16.mxu0 0
        %9889 = vmatmul.mubr.bf16.gmra.mrb[0].mxu0 %v9413
        %v9890 = vpop.f32.mrb[0].mxu0
        %v9891 = vadd.f32 %v9570, %v9890
        %v9892 = vpop.f32.mrb[0].mxu0
        %v9893 = vpop.f32.mrb[0].mxu0
        %v9894 = vadd.f32 %v9573, %v9893
        %v9895 = vpop.f32.mrb[0].mxu0
        %9896 = vmatprep.mubr.bf16.mxu0 0
        %9897 = vmatmul.mubr.bf16.gmra.mrb[0].mxu0 %v9416
        %v9898 = vpop.f32.mrb[0].mxu0
        %v9899 = vadd.f32 %v9578, %v9898
        %v9900 = vpop.f32.mrb[0].mxu0
        %v9901 = vpop.f32.mrb[0].mxu0
        %v9902 = vadd.f32 %v9581, %v9901
        %v9903 = vpop.f32.mrb[0].mxu0
        %9904 = vmatprep.mubr.bf16.mxu0 0
        %9905 = vmatmul.mubr.bf16.gmra.mrb[0].mxu0 %v9419
        %v9906 = vpop.f32.mrb[0].mxu0
        %v9907 = vadd.f32 %v9586, %v9906
        %v9908 = vpop.f32.mrb[0].mxu0
        %v9909 = vpop.f32.mrb[0].mxu0
        %v9910 = vadd.f32 %v9589, %v9909
        %v9911 = vpop.f32.mrb[0].mxu0
        %9912 = vmatprep.mubr.bf16.mxu0 0
        %9913 = vmatmul.mubr.bf16.gmra.mrb[0].mxu0 %v9422
        %v9914 = vpop.f32.mrb[0].mxu0
        %v9915 = vadd.f32 %v9594, %v9914
        %v9916 = vpop.f32.mrb[0].mxu0
        %v9917 = vpop.f32.mrb[0].mxu0
        %v9918 = vadd.f32 %v9597, %v9917
        %v9919 = vpop.f32.mrb[0].mxu0
        %9920 = vmatprep.mubr.bf16.mxu0 0
        %9921 = vmatmul.mubr.bf16.gmra.mrb[0].mxu0 %v9425
        %v9922 = vpop.f32.mrb[0].mxu0
        %v9923 = vadd.f32 %v9602, %v9922
        %v9924 = vpop.f32.mrb[0].mxu0
        %v9925 = vpop.f32.mrb[0].mxu0
        %v9926 = vadd.f32 %v9605, %v9925
        %v9927 = vpop.f32.mrb[0].mxu0
        %9928 = vmatprep.mubr.bf16.mxu0 0
        %9929 = vmatmul.mubr.bf16.gmra.mrb[0].mxu0 %v9428
        %v9930 = vpop.f32.mrb[0].mxu0
        %v9931 = vadd.f32 %v9610, %v9930
        %v9932 = vpop.f32.mrb[0].mxu0
        %v9933 = vpop.f32.mrb[0].mxu0
        %v9934 = vadd.f32 %v9613, %v9933
        %v9935 = vpop.f32.mrb[0].mxu0
        %9936 = vmatprep.mubr.bf16.mxu0 0
        %9937 = vmatmul.mubr.bf16.gmra.mrb[0].mxu0 %v9431
        %v9938 = vpop.f32.mrb[0].mxu0
        %v9939 = vadd.f32 %v9618, %v9938
        %v9940 = vpop.f32.mrb[0].mxu0
        %v9941 = vpop.f32.mrb[0].mxu0
        %v9942 = vadd.f32 %v9621, %v9941
        %v9943 = vpop.f32.mrb[0].mxu0
        %9944 = vmatprep.mubr.bf16.mxu0 0
        %9945 = vmatmul.mubr.bf16.gmra.mrb[0].mxu0 %v9434
        %v9946 = vpop.f32.mrb[0].mxu0
        %v9947 = vadd.f32 %v9626, %v9946
        %v9948 = vpop.f32.mrb[0].mxu0
        %v9949 = vpop.f32.mrb[0].mxu0
        %v9950 = vadd.f32 %v9629, %v9949
        %v9951 = vpop.f32.mrb[0].mxu0
        %9952 = vmatprep.mubr.bf16.mxu0 0
        %9953 = vmatmul.mubr.bf16.gmra.mrb[0].mxu0 %v9437
        %v9954 = vpop.f32.mrb[0].mxu0
        %v9955 = vadd.f32 %v9634, %v9954
        %v9956 = vpop.f32.mrb[0].mxu0
        %v9957 = vpop.f32.mrb[0].mxu0
        %v9958 = vadd.f32 %v9637, %v9957
        %v9959 = vpop.f32.mrb[0].mxu0
        %9960 = vmatprep.mubr.bf16.mxu0 0
        %9961 = vmatmul.mubr.bf16.gmra.mrb[0].mxu0 %v9440
        %v9962 = vpop.f32.mrb[0].mxu0
        %v9963 = vadd.f32 %v9642, %v9962
        %v9964 = vpop.f32.mrb[0].mxu0
        %v9965 = vpop.f32.mrb[0].mxu0
        %v9966 = vadd.f32 %v9645, %v9965
        %v9967 = vpop.f32.mrb[0].mxu0
        %9968 = vmatprep.mubr.bf16.mxu0 0
        %9969 = vmatmul.mubr.bf16.gmra.mrb[0].mxu0 %v9443
        %v9970 = vpop.f32.mrb[0].mxu0
        %v9971 = vadd.f32 %v9650, %v9970
        %v9972 = vpop.f32.mrb[0].mxu0
        %v9973 = vpop.f32.mrb[0].mxu0
        %v9974 = vadd.f32 %v9653, %v9973
        %v9975 = vpop.f32.mrb[0].mxu0
        %9976 = vmatprep.mubr.bf16.mxu0 0
        %9977 = vmatmul.mubr.bf16.gmra.mrb[0].mxu0 %v9446
        %v9978 = vpop.f32.mrb[0].mxu0
        %v9979 = vadd.f32 %v9658, %v9978
        %v9980 = vpop.f32.mrb[0].mxu0
        %v9981 = vpop.f32.mrb[0].mxu0
        %v9982 = vadd.f32 %v9661, %v9981
        %v9983 = vpop.f32.mrb[0].mxu0
        %9984 = vmatprep.mubr.bf16.mxu0 0
        %9985 = vmatmul.mubr.bf16.gmra.mrb[0].mxu0 %v9449
        %v9986 = vpop.f32.mrb[0].mxu0
        %v9987 = vadd.f32 %v9666, %v9986
        %v9988 = vpop.f32.mrb[0].mxu0
        %v9989 = vpop.f32.mrb[0].mxu0
        %v9990 = vadd.f32 %v9669, %v9989
        %v9991 = vpop.f32.mrb[0].mxu0
        %9992 = vmatprep.mubr.bf16.mxu0 0
        %9993 = vmatmul.mubr.bf16.gmra.mrb[0].mxu0 %v9452
        %v9994 = vpop.f32.mrb[0].mxu0
        %v9995 = vadd.f32 %v9674, %v9994
        %v9996 = vpop.f32.mrb[0].mxu0
        %v9997 = vpop.f32.mrb[0].mxu0
        %v9998 = vadd.f32 %v9677, %v9997
        %v9999 = vpop.f32.mrb[0].mxu0
        %10000 = vmatprep.mubr.bf16.mxu0 0
        %10001 = vmatmul.mubr.bf16.gmra.mrb[0].mxu0 %v9455
        %v10002 = vpop.f32.mrb[0].mxu0
        %v10003 = vadd.f32 %v9682, %v10002
        %v10004 = vpop.f32.mrb[0].mxu0
        %v10005 = vpop.f32.mrb[0].mxu0
        %v10006 = vadd.f32 %v9685, %v10005
        %v10007 = vpop.f32.mrb[0].mxu0
        %10008 = vmatprep.mubr.bf16.mxu0 0
        %10009 = vmatmul.mubr.bf16.gmra.mrb[0].mxu0 %v9458
        %v10010 = vpop.f32.mrb[0].mxu0
        %v10011 = vadd.f32 %v9690, %v10010
        %v10012 = vpop.f32.mrb[0].mxu0
        %v10013 = vpop.f32.mrb[0].mxu0
        %v10014 = vadd.f32 %v9693, %v10013
        %v10015 = vpop.f32.mrb[0].mxu0
        %10016 = vmatprep.mubr.bf16.mxu0 0
        %10017 = vmatmul.mubr.bf16.gmra.mrb[0].mxu0 %v9461
        %v10018 = vpop.f32.mrb[0].mxu0
        %v10019 = vadd.f32 %v9698, %v10018
        %v10020 = vpop.f32.mrb[0].mxu0
        %v10021 = vpop.f32.mrb[0].mxu0
        %v10022 = vadd.f32 %v9701, %v10021
        %v10023 = vpop.f32.mrb[0].mxu0
        %10024 = vmatprep.mubr.bf16.mxu0 0
        %10025 = vmatmul.mubr.bf16.gmra.mrb[0].mxu0 %v9464
        %v10026 = vpop.f32.mrb[0].mxu0
        %v10027 = vadd.f32 %v9706, %v10026
        %v10028 = vpop.f32.mrb[0].mxu0
        %v10029 = vpop.f32.mrb[0].mxu0
        %v10030 = vadd.f32 %v9709, %v10029
        %v10031 = vpop.f32.mrb[0].mxu0
        %10032 = vmatprep.mubr.bf16.mxu0 0
        %10033 = vmatmul.mubr.bf16.gmra.mrb[0].mxu0 %v9467
        %v10034 = vpop.f32.mrb[0].mxu0
        %v10035 = vadd.f32 %v9714, %v10034
        %v10036 = vpop.f32.mrb[0].mxu0
        %v10037 = vpop.f32.mrb[0].mxu0
        %v10038 = vadd.f32 %v9717, %v10037
        %v10039 = vpop.f32.mrb[0].mxu0
        %10040 = vmatprep.mubr.bf16.mxu0 0
        %10041 = vmatmul.mubr.bf16.gmra.mrb[0].mxu0 %v9470
        %v10042 = vpop.f32.mrb[0].mxu0
        %v10043 = vadd.f32 %v9722, %v10042
        %v10044 = vpop.f32.mrb[0].mxu0
        %v10045 = vpop.f32.mrb[0].mxu0
        %v10046 = vadd.f32 %v9725, %v10045
        %v10047 = vpop.f32.mrb[0].mxu0
        %10048 = vmatprep.mubr.bf16.mxu0 0
        %10049 = vmatmul.mubr.bf16.gmra.mrb[0].mxu0 %v9473
        %v10050 = vpop.f32.mrb[0].mxu0
        %v10051 = vadd.f32 %v9730, %v10050
        %v10052 = vpop.f32.mrb[0].mxu0
        %v10053 = vpop.f32.mrb[0].mxu0
        %v10054 = vadd.f32 %v9733, %v10053
        %v10055 = vpop.f32.mrb[0].mxu0
        %10056 = vmatprep.mubr.bf16.mxu0 0
        %10057 = vmatmul.mubr.bf16.gmra.mrb[0].mxu0 %v9476
        %v10058 = vpop.f32.mrb[0].mxu0
        %v10059 = vadd.f32 %v9738, %v10058
        %v10060 = vpop.f32.mrb[0].mxu0
        %v10061 = vpop.f32.mrb[0].mxu0
        %v10062 = vadd.f32 %v9741, %v10061
        %v10063 = vpop.f32.mrb[0].mxu0
        %10064 = vmatprep.mubr.bf16.mxu0 0
        %10065 = vmatmul.mubr.bf16.gmra.mrb[0].mxu0 %v9479
        %v10066 = vpop.f32.mrb[0].mxu0
        %v10067 = vadd.f32 %v9746, %v10066
        %v10068 = vpop.f32.mrb[0].mxu0
        %v10069 = vpop.f32.mrb[0].mxu0
        %v10070 = vadd.f32 %v9749, %v10069
        %v10071 = vpop.f32.mrb[0].mxu0
        %10072 = vmatprep.mubr.bf16.mxu0 0
        %10073 = vmatmul.mubr.bf16.gmra.mrb[0].mxu0 %v9482
        %v10074 = vpop.f32.mrb[0].mxu0
        %v10075 = vadd.f32 %v9754, %v10074
        %v10076 = vpop.f32.mrb[0].mxu0
        %v10077 = vpop.f32.mrb[0].mxu0
        %v10078 = vadd.f32 %v9757, %v10077
        %v10079 = vpop.f32.mrb[0].mxu0
        %10080 = vmatprep.mubr.bf16.mxu0 0
        %10081 = vmatmul.mubr.bf16.gmra.mrb[0].mxu0 %v9485
        %v10082 = vpop.f32.mrb[0].mxu0
        %v10083 = vadd.f32 %v9762, %v10082
        %v10084 = vpop.f32.mrb[0].mxu0
        %v10085 = vpop.f32.mrb[0].mxu0
        %v10086 = vadd.f32 %v9765, %v10085
        %v10087 = vpop.f32.mrb[0].mxu0
        %10088 = vmatprep.mubr.bf16.mxu0 0
        %10089 = vmatmul.mubr.bf16.gmra.mrb[0].mxu0 %v9488
        %v10090 = vpop.f32.mrb[0].mxu0
        %v10091 = vadd.f32 %v9770, %v10090
        %v10092 = vpop.f32.mrb[0].mxu0
        %v10093 = vpop.f32.mrb[0].mxu0
        %v10094 = vadd.f32 %v9773, %v10093
        %v10095 = vpop.f32.mrb[0].mxu0
        %10096 = vmatprep.mubr.bf16.mxu0 0
        %10097 = vmatmul.mubr.bf16.gmra.mrb[0].mxu0 %v9491
        %v10098 = vpop.f32.mrb[0].mxu0
        %v10099 = vadd.f32 %v9778, %v10098
        %v10100 = vpop.f32.mrb[0].mxu0
        %v10101 = vpop.f32.mrb[0].mxu0
        %v10102 = vadd.f32 %v9781, %v10101
        %v10103 = vpop.f32.mrb[0].mxu0
        %10104 = vmatprep.mubr.bf16.mxu0 0
        %10105 = vmatmul.mubr.bf16.gmra.mrb[0].mxu0 %v9494
        %v10106 = vpop.f32.mrb[0].mxu0
        %v10107 = vadd.f32 %v9786, %v10106
        %v10108 = vpop.f32.mrb[0].mxu0
        %v10109 = vpop.f32.mrb[0].mxu0
        %v10110 = vadd.f32 %v9789, %v10109
        %v10111 = vpop.f32.mrb[0].mxu0
        %10112 = vmatprep.mubr.bf16.mxu0 0
        %10113 = vmatmul.mubr.bf16.gmra.mrb[0].mxu0 %v9497
        %v10114 = vpop.f32.mrb[0].mxu0
        %v10115 = vadd.f32 %v9794, %v10114
        %v10116 = vpop.f32.mrb[0].mxu0
        %v10117 = vpop.f32.mrb[0].mxu0
        %v10118 = vadd.f32 %v9797, %v10117
        %v10119 = vpop.f32.mrb[0].mxu0
        %10120 = vmatprep.mubr.bf16.mxu0 0
        %10121 = vmatmul.mubr.bf16.gmra.mrb[0].mxu0 %v9500
        %v10122 = vpop.f32.mrb[0].mxu0
        %v10123 = vadd.f32 %v9802, %v10122
        %v10124 = vpop.f32.mrb[0].mxu0
        %v10125 = vpop.f32.mrb[0].mxu0
        %v10126 = vadd.f32 %v9805, %v10125
        %v10127 = vpop.f32.mrb[0].mxu0
        %10128 = vmatprep.mubr.bf16.mxu0 0
        %10129 = vmatmul.mubr.bf16.gmra.mrb[0].mxu0 %v9503
        %v10130 = vpop.f32.mrb[0].mxu0
        %v10131 = vadd.f32 %v9810, %v10130
        %v10132 = vpop.f32.mrb[0].mxu0
        %v10133 = vpop.f32.mrb[0].mxu0
        %v10134 = vadd.f32 %v9813, %v10133
        %v10135 = vpop.f32.mrb[0].mxu0
        %10136 = vmatprep.mubr.bf16.mxu0 0
        %10137 = vmatmul.mubr.bf16.gmra.mrb[0].mxu0 %v9506
        %v10138 = vpop.f32.mrb[0].mxu0
        %v10139 = vadd.f32 %v9818, %v10138
        %v10140 = vpop.f32.mrb[0].mxu0
        %v10141 = vpop.f32.mrb[0].mxu0
        %v10142 = vadd.f32 %v9821, %v10141
        %v10143 = vpop.f32.mrb[0].mxu0
        %10144 = vmatprep.mubr.bf16.mxu0 0
        %10145 = vmatmul.mubr.bf16.gmra.mrb[0].mxu0 %v9509
        %v10146 = vpop.f32.mrb[0].mxu0
        %v10147 = vadd.f32 %v9826, %v10146
        %v10148 = vpop.f32.mrb[0].mxu0
        %v10149 = vpop.f32.mrb[0].mxu0
        %v10150 = vadd.f32 %v9829, %v10149
        %v10151 = vpop.f32.mrb[0].mxu0
        %10152 = vdwg.mxu0
        %v10153 = vsel %vm7025, %v9867, 0.0
        %v10154 = vsel %vm7026, %v9870, 0.0
        %v10155 = vsel %vm7027, %v9875, 0.0
        %v10156 = vsel %vm7028, %v9878, 0.0
        %v10157 = vsel %vm7029, %v9883, 0.0
        %v10158 = vsel %vm7030, %v9886, 0.0
        %v10159 = vsel %vm7031, %v9891, 0.0
        %v10160 = vsel %vm7032, %v9894, 0.0
        %v10161 = vsel %vm7033, %v9899, 0.0
        %v10162 = vsel %vm7034, %v9902, 0.0
        %v10163 = vsel %vm7035, %v9907, 0.0
        %v10164 = vsel %vm7036, %v9910, 0.0
        %v10165 = vsel %vm7037, %v9915, 0.0
        %v10166 = vsel %vm7038, %v9918, 0.0
        %v10167 = vsel %vm7039, %v9923, 0.0
        %v10168 = vsel %vm7040, %v9926, 0.0
        %v10169 = vsel %vm7041, %v9931, 0.0
        %v10170 = vsel %vm7042, %v9934, 0.0
        %v10171 = vsel %vm7043, %v9939, 0.0
        %v10172 = vsel %vm7044, %v9942, 0.0
        %v10173 = vsel %vm7045, %v9947, 0.0
        %v10174 = vsel %vm7046, %v9950, 0.0
        %v10175 = vsel %vm7047, %v9955, 0.0
        %v10176 = vsel %vm7048, %v9958, 0.0
        %v10177 = vsel %vm7049, %v9963, 0.0
        %v10178 = vsel %vm7050, %v9966, 0.0
        %v10179 = vsel %vm7051, %v9971, 0.0
        %v10180 = vsel %vm7052, %v9974, 0.0
        %v10181 = vsel %vm7053, %v9979, 0.0
        %v10182 = vsel %vm7054, %v9982, 0.0
        %v10183 = vsel %vm7055, %v9987, 0.0
        %v10184 = vsel %vm7056, %v9990, 0.0
        %v10185 = vsel %vm7057, %v9995, 0.0
        %v10186 = vsel %vm7058, %v9998, 0.0
        %v10187 = vsel %vm7059, %v10003, 0.0
        %v10188 = vsel %vm7060, %v10006, 0.0
        %v10189 = vsel %vm7205, %v10153, 0.0
        %v10190 = vsel %vm7205, %v10154, 0.0
        %v10191 = vadd.f32 %v10189, %v10190
        %v10192 = vsel %vm7205, %v10155, 0.0
        %v10193 = vadd.f32 %v10191, %v10192
        %v10194 = vsel %vm7205, %v10156, 0.0
        %v10195 = vadd.f32 %v10193, %v10194
        %v10196 = vsel %vm7205, %v10157, 0.0
        %v10197 = vadd.f32 %v10195, %v10196
        %v10198 = vsel %vm7205, %v10158, 0.0
        %v10199 = vadd.f32 %v10197, %v10198
        %v10200 = vsel %vm7205, %v10159, 0.0
        %v10201 = vadd.f32 %v10199, %v10200
        %v10202 = vsel %vm7205, %v10160, 0.0
        %v10203 = vadd.f32 %v10201, %v10202
        %v10204 = vsel %vm7205, %v10161, 0.0
        %v10205 = vadd.f32 %v10203, %v10204
        %v10206 = vsel %vm7205, %v10162, 0.0
        %v10207 = vadd.f32 %v10205, %v10206
        %v10208 = vsel %vm7205, %v10163, 0.0
        %v10209 = vadd.f32 %v10207, %v10208
        %v10210 = vsel %vm7205, %v10164, 0.0
        %v10211 = vadd.f32 %v10209, %v10210
        %v10212 = vsel %vm7205, %v10165, 0.0
        %v10213 = vadd.f32 %v10211, %v10212
        %v10214 = vsel %vm7205, %v10166, 0.0
        %v10215 = vadd.f32 %v10213, %v10214
        %v10216 = vsel %vm7205, %v10167, 0.0
        %v10217 = vadd.f32 %v10215, %v10216
        %v10218 = vsel %vm7205, %v10168, 0.0
        %v10219 = vadd.f32 %v10217, %v10218
        %v10220 = vsel %vm7205, %v10169, 0.0
        %v10221 = vadd.f32 %v10219, %v10220
        %v10222 = vsel %vm7205, %v10170, 0.0
        %v10223 = vadd.f32 %v10221, %v10222
        %v10224 = vsel %vm7205, %v10171, 0.0
        %v10225 = vadd.f32 %v10223, %v10224
        %v10226 = vsel %vm7205, %v10172, 0.0
        %v10227 = vadd.f32 %v10225, %v10226
        %v10228 = vsel %vm7205, %v10173, 0.0
        %v10229 = vadd.f32 %v10227, %v10228
        %v10230 = vsel %vm7205, %v10174, 0.0
        %v10231 = vadd.f32 %v10229, %v10230
        %v10232 = vsel %vm7205, %v10175, 0.0
        %v10233 = vadd.f32 %v10231, %v10232
        %v10234 = vsel %vm7205, %v10176, 0.0
        %v10235 = vadd.f32 %v10233, %v10234
        %v10236 = vsel %vm7205, %v10177, 0.0
        %v10237 = vadd.f32 %v10235, %v10236
        %v10238 = vsel %vm7205, %v10178, 0.0
        %v10239 = vadd.f32 %v10237, %v10238
        %v10240 = vsel %vm7205, %v10179, 0.0
        %v10241 = vadd.f32 %v10239, %v10240
        %v10242 = vsel %vm7205, %v10180, 0.0
        %v10243 = vadd.f32 %v10241, %v10242
        %v10244 = vsel %vm7205, %v10181, 0.0
        %v10245 = vadd.f32 %v10243, %v10244
        %v10246 = vsel %vm7205, %v10182, 0.0
        %v10247 = vadd.f32 %v10245, %v10246
        %v10248 = vsel %vm7205, %v10183, 0.0
        %v10249 = vadd.f32 %v10247, %v10248
        %v10250 = vsel %vm7205, %v10184, 0.0
        %v10251 = vadd.f32 %v10249, %v10250
        %v10252 = vsel %vm7205, %v10185, 0.0
        %v10253 = vadd.f32 %v10251, %v10252
        %v10254 = vsel %vm7205, %v10186, 0.0
        %v10255 = vadd.f32 %v10253, %v10254
        %v10256 = vsel %vm7205, %v10187, 0.0
        %v10257 = vadd.f32 %v10255, %v10256
        %v10258 = vsel %vm7205, %v10188, 0.0
        %v10259 = vadd.f32 %v10257, %v10258
        %v10260 = vrot.slane %v10259, 4
        %v10261 = vadd.f32 %v10259, %v10260
        %v10262 = vrot.slane %v10261, 2
        %v10263 = vadd.f32 %v10261, %v10262
        %v10264 = vrot.slane %v10263, 1
        %v10265 = vadd.f32 %v10263, %v10264
        %v10266 = vmul.f32 %v10153, %v10153
        %v10267 = vmul.f32 %v10154, %v10154
        %v10268 = vmul.f32 %v10155, %v10155
        %v10269 = vmul.f32 %v10156, %v10156
        %v10270 = vmul.f32 %v10157, %v10157
        %v10271 = vmul.f32 %v10158, %v10158
        %v10272 = vmul.f32 %v10159, %v10159
        %v10273 = vmul.f32 %v10160, %v10160
        %v10274 = vmul.f32 %v10161, %v10161
        %v10275 = vmul.f32 %v10162, %v10162
        %v10276 = vmul.f32 %v10163, %v10163
        %v10277 = vmul.f32 %v10164, %v10164
        %v10278 = vmul.f32 %v10165, %v10165
        %v10279 = vmul.f32 %v10166, %v10166
        %v10280 = vmul.f32 %v10167, %v10167
        %v10281 = vmul.f32 %v10168, %v10168
        %v10282 = vmul.f32 %v10169, %v10169
        %v10283 = vmul.f32 %v10170, %v10170
        %v10284 = vmul.f32 %v10171, %v10171
        %v10285 = vmul.f32 %v10172, %v10172
        %v10286 = vmul.f32 %v10173, %v10173
        %v10287 = vmul.f32 %v10174, %v10174
        %v10288 = vmul.f32 %v10175, %v10175
        %v10289 = vmul.f32 %v10176, %v10176
        %v10290 = vmul.f32 %v10177, %v10177
        %v10291 = vmul.f32 %v10178, %v10178
        %v10292 = vmul.f32 %v10179, %v10179
        %v10293 = vmul.f32 %v10180, %v10180
        %v10294 = vmul.f32 %v10181, %v10181
        %v10295 = vmul.f32 %v10182, %v10182
        %v10296 = vmul.f32 %v10183, %v10183
        %v10297 = vmul.f32 %v10184, %v10184
        %v10298 = vmul.f32 %v10185, %v10185
        %v10299 = vmul.f32 %v10186, %v10186
        %v10300 = vmul.f32 %v10187, %v10187
        %v10301 = vmul.f32 %v10188, %v10188
        %v10302 = vsel %vm7205, %v10266, 0.0
        %v10303 = vsel %vm7205, %v10267, 0.0
        %v10304 = vadd.f32 %v10302, %v10303
        %v10305 = vsel %vm7205, %v10268, 0.0
        %v10306 = vadd.f32 %v10304, %v10305
        %v10307 = vsel %vm7205, %v10269, 0.0
        %v10308 = vadd.f32 %v10306, %v10307
        %v10309 = vsel %vm7205, %v10270, 0.0
        %v10310 = vadd.f32 %v10308, %v10309
        %v10311 = vsel %vm7205, %v10271, 0.0
        %v10312 = vadd.f32 %v10310, %v10311
        %v10313 = vsel %vm7205, %v10272, 0.0
        %v10314 = vadd.f32 %v10312, %v10313
        %v10315 = vsel %vm7205, %v10273, 0.0
        %v10316 = vadd.f32 %v10314, %v10315
        %v10317 = vsel %vm7205, %v10274, 0.0
        %v10318 = vadd.f32 %v10316, %v10317
        %v10319 = vsel %vm7205, %v10275, 0.0
        %v10320 = vadd.f32 %v10318, %v10319
        %v10321 = vsel %vm7205, %v10276, 0.0
        %v10322 = vadd.f32 %v10320, %v10321
        %v10323 = vsel %vm7205, %v10277, 0.0
        %v10324 = vadd.f32 %v10322, %v10323
        %v10325 = vsel %vm7205, %v10278, 0.0
        %v10326 = vadd.f32 %v10324, %v10325
        %v10327 = vsel %vm7205, %v10279, 0.0
        %v10328 = vadd.f32 %v10326, %v10327
        %v10329 = vsel %vm7205, %v10280, 0.0
        %v10330 = vadd.f32 %v10328, %v10329
        %v10331 = vsel %vm7205, %v10281, 0.0
        %v10332 = vadd.f32 %v10330, %v10331
        %v10333 = vsel %vm7205, %v10282, 0.0
        %v10334 = vadd.f32 %v10332, %v10333
        %v10335 = vsel %vm7205, %v10283, 0.0
        %v10336 = vadd.f32 %v10334, %v10335
        %v10337 = vsel %vm7205, %v10284, 0.0
        %v10338 = vadd.f32 %v10336, %v10337
        %v10339 = vsel %vm7205, %v10285, 0.0
        %v10340 = vadd.f32 %v10338, %v10339
        %v10341 = vsel %vm7205, %v10286, 0.0
        %v10342 = vadd.f32 %v10340, %v10341
        %v10343 = vsel %vm7205, %v10287, 0.0
        %v10344 = vadd.f32 %v10342, %v10343
        %v10345 = vsel %vm7205, %v10288, 0.0
        %v10346 = vadd.f32 %v10344, %v10345
        %v10347 = vsel %vm7205, %v10289, 0.0
        %v10348 = vadd.f32 %v10346, %v10347
        %v10349 = vsel %vm7205, %v10290, 0.0
        %v10350 = vadd.f32 %v10348, %v10349
        %v10351 = vsel %vm7205, %v10291, 0.0
        %v10352 = vadd.f32 %v10350, %v10351
        %v10353 = vsel %vm7205, %v10292, 0.0
        %v10354 = vadd.f32 %v10352, %v10353
        %v10355 = vsel %vm7205, %v10293, 0.0
        %v10356 = vadd.f32 %v10354, %v10355
        %v10357 = vsel %vm7205, %v10294, 0.0
        %v10358 = vadd.f32 %v10356, %v10357
        %v10359 = vsel %vm7205, %v10295, 0.0
        %v10360 = vadd.f32 %v10358, %v10359
        %v10361 = vsel %vm7205, %v10296, 0.0
        %v10362 = vadd.f32 %v10360, %v10361
        %v10363 = vsel %vm7205, %v10297, 0.0
        %v10364 = vadd.f32 %v10362, %v10363
        %v10365 = vsel %vm7205, %v10298, 0.0
        %v10366 = vadd.f32 %v10364, %v10365
        %v10367 = vsel %vm7205, %v10299, 0.0
        %v10368 = vadd.f32 %v10366, %v10367
        %v10369 = vsel %vm7205, %v10300, 0.0
        %v10370 = vadd.f32 %v10368, %v10369
        %v10371 = vsel %vm7205, %v10301, 0.0
        %v10372 = vadd.f32 %v10370, %v10371
        %v10373 = vrot.slane %v10372, 4
        %v10374 = vadd.f32 %v10372, %v10373
        %v10375 = vrot.slane %v10374, 2
        %v10376 = vadd.f32 %v10374, %v10375
        %v10377 = vrot.slane %v10376, 1
        %v10378 = vadd.f32 %v10376, %v10377
        %v10379 = vmul.f32 %v10265, 0.00390625
        %v10380 = vmul.f32 %v10378, 0.00390625
        %v10381 = vmul.f32 %v10379, %v10379
        %v10382 = vsub.f32 %v10380, %v10381
        %v10383 = vmax.f32 %v10382, 0.0
        %v10384 = vsub.f32 %v9867, %v10379
        %v10385 = vsub.f32 %v9870, %v10379
        %v10386 = vsub.f32 %v9875, %v10379
        %v10387 = vsub.f32 %v9878, %v10379
        %v10388 = vsub.f32 %v9883, %v10379
        %v10389 = vsub.f32 %v9886, %v10379
        %v10390 = vsub.f32 %v9891, %v10379
        %v10391 = vsub.f32 %v9894, %v10379
        %v10392 = vsub.f32 %v9899, %v10379
        %v10393 = vsub.f32 %v9902, %v10379
        %v10394 = vsub.f32 %v9907, %v10379
        %v10395 = vsub.f32 %v9910, %v10379
        %v10396 = vsub.f32 %v9915, %v10379
        %v10397 = vsub.f32 %v9918, %v10379
        %v10398 = vsub.f32 %v9923, %v10379
        %v10399 = vsub.f32 %v9926, %v10379
        %v10400 = vsub.f32 %v9931, %v10379
        %v10401 = vsub.f32 %v9934, %v10379
        %v10402 = vsub.f32 %v9939, %v10379
        %v10403 = vsub.f32 %v9942, %v10379
        %v10404 = vsub.f32 %v9947, %v10379
        %v10405 = vsub.f32 %v9950, %v10379
        %v10406 = vsub.f32 %v9955, %v10379
        %v10407 = vsub.f32 %v9958, %v10379
        %v10408 = vsub.f32 %v9963, %v10379
        %v10409 = vsub.f32 %v9966, %v10379
        %v10410 = vsub.f32 %v9971, %v10379
        %v10411 = vsub.f32 %v9974, %v10379
        %v10412 = vsub.f32 %v9979, %v10379
        %v10413 = vsub.f32 %v9982, %v10379
        %v10414 = vsub.f32 %v9987, %v10379
        %v10415 = vsub.f32 %v9990, %v10379
        %v10416 = vsub.f32 %v9995, %v10379
        %v10417 = vsub.f32 %v9998, %v10379
        %v10418 = vsub.f32 %v10003, %v10379
        %v10419 = vsub.f32 %v10006, %v10379
        %v10420 = vadd.f32 %v10383, 1e-05
        %v10421 = vrsqrt.pop %v10420
        %v10422 = vmul.f32 %v10384, %v10421
        %v10423 = vmul.f32 %v10385, %v10421
        %v10424 = vmul.f32 %v10386, %v10421
        %v10425 = vmul.f32 %v10387, %v10421
        %v10426 = vmul.f32 %v10388, %v10421
        %v10427 = vmul.f32 %v10389, %v10421
        %v10428 = vmul.f32 %v10390, %v10421
        %v10429 = vmul.f32 %v10391, %v10421
        %v10430 = vmul.f32 %v10392, %v10421
        %v10431 = vmul.f32 %v10393, %v10421
        %v10432 = vmul.f32 %v10394, %v10421
        %v10433 = vmul.f32 %v10395, %v10421
        %v10434 = vmul.f32 %v10396, %v10421
        %v10435 = vmul.f32 %v10397, %v10421
        %v10436 = vmul.f32 %v10398, %v10421
        %v10437 = vmul.f32 %v10399, %v10421
        %v10438 = vmul.f32 %v10400, %v10421
        %v10439 = vmul.f32 %v10401, %v10421
        %v10440 = vmul.f32 %v10402, %v10421
        %v10441 = vmul.f32 %v10403, %v10421
        %v10442 = vmul.f32 %v10404, %v10421
        %v10443 = vmul.f32 %v10405, %v10421
        %v10444 = vmul.f32 %v10406, %v10421
        %v10445 = vmul.f32 %v10407, %v10421
        %v10446 = vmul.f32 %v10408, %v10421
        %v10447 = vmul.f32 %v10409, %v10421
        %v10448 = vmul.f32 %v10410, %v10421
        %v10449 = vmul.f32 %v10411, %v10421
        %v10450 = vmul.f32 %v10412, %v10421
        %v10451 = vmul.f32 %v10413, %v10421
        %v10452 = vmul.f32 %v10414, %v10421
        %v10453 = vmul.f32 %v10415, %v10421
        %v10454 = vmul.f32 %v10416, %v10421
        %v10455 = vmul.f32 %v10417, %v10421
        %v10456 = vmul.f32 %v10418, %v10421
        %v10457 = vmul.f32 %v10419, %v10421
        %v10458 = vmax.f32 %v10422, 0.0
        %v10459 = vmax.f32 %v10423, 0.0
        %v10460 = vmax.f32 %v10424, 0.0
        %v10461 = vmax.f32 %v10425, 0.0
        %v10462 = vmax.f32 %v10426, 0.0
        %v10463 = vmax.f32 %v10427, 0.0
        %v10464 = vmax.f32 %v10428, 0.0
        %v10465 = vmax.f32 %v10429, 0.0
        %v10466 = vmax.f32 %v10430, 0.0
        %v10467 = vmax.f32 %v10431, 0.0
        %v10468 = vmax.f32 %v10432, 0.0
        %v10469 = vmax.f32 %v10433, 0.0
        %v10470 = vmax.f32 %v10434, 0.0
        %v10471 = vmax.f32 %v10435, 0.0
        %v10472 = vmax.f32 %v10436, 0.0
        %v10473 = vmax.f32 %v10437, 0.0
        %v10474 = vmax.f32 %v10438, 0.0
        %v10475 = vmax.f32 %v10439, 0.0
        %v10476 = vmax.f32 %v10440, 0.0
        %v10477 = vmax.f32 %v10441, 0.0
        %v10478 = vmax.f32 %v10442, 0.0
        %v10479 = vmax.f32 %v10443, 0.0
        %v10480 = vmax.f32 %v10444, 0.0
        %v10481 = vmax.f32 %v10445, 0.0
        %v10482 = vmax.f32 %v10446, 0.0
        %v10483 = vmax.f32 %v10447, 0.0
        %v10484 = vmax.f32 %v10448, 0.0
        %v10485 = vmax.f32 %v10449, 0.0
        %v10486 = vmax.f32 %v10450, 0.0
        %v10487 = vmax.f32 %v10451, 0.0
        %v10488 = vmax.f32 %v10452, 0.0
        %v10489 = vmax.f32 %v10453, 0.0
        %v10490 = vmax.f32 %v10454, 0.0
        %v10491 = vmax.f32 %v10455, 0.0
        %v10492 = vmax.f32 %v10456, 0.0
        %v10493 = vmax.f32 %v10457, 0.0
        %10494 = vst.msk [vmem:[%s166] sm:$0xff] %vm7205, %v10458
        %10495 = vst.msk [vmem:[%s166 + $0x8] sm:$0xff] %vm7205, %v10459
        %vm10496 = vcmask 261122
        %10497 = vst.msk [vmem:[%s166 + $0xe] sm:$0xfc] %vm10496, %v10460
        %10498 = vst.msk [vmem:[%s166 + $0x16] sm:$0xff] %vm7205, %v10461
        %vm10499 = vcmask 254976
        %10500 = vst.msk [vmem:[%s166 + $0x1e] sm:$0x3] %vm10499, %v10462
        %vm10501 = vcmask 261124
        %10502 = vst.msk [vmem:[%s166 + $0x1c] sm:$0xf0] %vm10501, %v10462
        %10503 = vst.msk [vmem:[%s166 + $0x24] sm:$0xff] %vm7205, %v10463
        %vm10504 = vcmask 257024
        %10505 = vst.msk [vmem:[%s166 + $0x2c] sm:$0xf] %vm10504, %v10464
        %vm10506 = vcmask 261126
        %10507 = vst.msk [vmem:[%s166 + $0x2a] sm:$0xc0] %vm10506, %v10464
        %10508 = vst.msk [vmem:[%s166 + $0x32] sm:$0xff] %vm7205, %v10465
        %vm10509 = vcmask 259072
        %10510 = vst.msk [vmem:[%s166 + $0x3a] sm:$0x3f] %vm10509, %v10466
        %10511 = vst.msk [vmem:[%s166 + $0x40] sm:$0xff] %vm7205, %v10467
        %10512 = vst.msk [vmem:[%s166 + $0x48] sm:$0xff] %vm7205, %v10468
        %10513 = vst.msk [vmem:[%s166 + $0x4e] sm:$0xfc] %vm10496, %v10469
        %10514 = vst.msk [vmem:[%s166 + $0x56] sm:$0xff] %vm7205, %v10470
        %10515 = vst.msk [vmem:[%s166 + $0x5e] sm:$0x3] %vm10499, %v10471
        %10516 = vst.msk [vmem:[%s166 + $0x5c] sm:$0xf0] %vm10501, %v10471
        %10517 = vst.msk [vmem:[%s166 + $0x64] sm:$0xff] %vm7205, %v10472
        %10518 = vst.msk [vmem:[%s166 + $0x6c] sm:$0xf] %vm10504, %v10473
        %10519 = vst.msk [vmem:[%s166 + $0x6a] sm:$0xc0] %vm10506, %v10473
        %10520 = vst.msk [vmem:[%s166 + $0x72] sm:$0xff] %vm7205, %v10474
        %10521 = vst.msk [vmem:[%s166 + $0x7a] sm:$0x3f] %vm10509, %v10475
        %10522 = vst.msk [vmem:[%s166 + $0x80] sm:$0xff] %vm7205, %v10476
        %10523 = vst.msk [vmem:[%s166 + $0x88] sm:$0xff] %vm7205, %v10477
        %10524 = vst.msk [vmem:[%s166 + $0x8e] sm:$0xfc] %vm10496, %v10478
        %10525 = vst.msk [vmem:[%s166 + $0x96] sm:$0xff] %vm7205, %v10479
        %10526 = vst.msk [vmem:[%s166 + $0x9e] sm:$0x3] %vm10499, %v10480
        %10527 = vst.msk [vmem:[%s166 + $0x9c] sm:$0xf0] %vm10501, %v10480
        %10528 = vst.msk [vmem:[%s166 + $0xa4] sm:$0xff] %vm7205, %v10481
        %10529 = vst.msk [vmem:[%s166 + $0xac] sm:$0xf] %vm10504, %v10482
        %10530 = vst.msk [vmem:[%s166 + $0xaa] sm:$0xc0] %vm10506, %v10482
        %10531 = vst.msk [vmem:[%s166 + $0xb2] sm:$0xff] %vm7205, %v10483
        %10532 = vst.msk [vmem:[%s166 + $0xba] sm:$0x3f] %vm10509, %v10484
        %10533 = vst.msk [vmem:[%s166 + $0xc0] sm:$0xff] %vm7205, %v10485
        %10534 = vst.msk [vmem:[%s166 + $0xc8] sm:$0xff] %vm7205, %v10486
        %10535 = vst.msk [vmem:[%s166 + $0xce] sm:$0xfc] %vm10496, %v10487
        %10536 = vst.msk [vmem:[%s166 + $0xd6] sm:$0xff] %vm7205, %v10488
        %10537 = vst.msk [vmem:[%s166 + $0xde] sm:$0x3] %vm10499, %v10489
        %10538 = vst.msk [vmem:[%s166 + $0xdc] sm:$0xf0] %vm10501, %v10489
        %10539 = vst.msk [vmem:[%s166 + $0xe4] sm:$0xff] %vm7205, %v10490
        %10540 = vst.msk [vmem:[%s166 + $0xec] sm:$0xf] %vm10504, %v10491
        %10541 = vst.msk [vmem:[%s166 + $0xea] sm:$0xc0] %vm10506, %v10491
        %10542 = vst.msk [vmem:[%s166 + $0xf2] sm:$0xff] %vm7205, %v10492
        %10543 = vst.msk [vmem:[%s166 + $0xfa] sm:$0x3f] %vm10509, %v10493
        %v10544 = vsel %vm7025, %v10011, 0.0
        %v10545 = vsel %vm7026, %v10014, 0.0
        %v10546 = vsel %vm7027, %v10019, 0.0
        %v10547 = vsel %vm7028, %v10022, 0.0
        %v10548 = vsel %vm7029, %v10027, 0.0
        %v10549 = vsel %vm7030, %v10030, 0.0
        %v10550 = vsel %vm7031, %v10035, 0.0
        %v10551 = vsel %vm7032, %v10038, 0.0
        %v10552 = vsel %vm7033, %v10043, 0.0
        %v10553 = vsel %vm7034, %v10046, 0.0
        %v10554 = vsel %vm7035, %v10051, 0.0
        %v10555 = vsel %vm7036, %v10054, 0.0
        %v10556 = vsel %vm7037, %v10059, 0.0
        %v10557 = vsel %vm7038, %v10062, 0.0
        %v10558 = vsel %vm7039, %v10067, 0.0
        %v10559 = vsel %vm7040, %v10070, 0.0
        %v10560 = vsel %vm7041, %v10075, 0.0
        %v10561 = vsel %vm7042, %v10078, 0.0
        %v10562 = vsel %vm7043, %v10083, 0.0
        %v10563 = vsel %vm7044, %v10086, 0.0
        %v10564 = vsel %vm7045, %v10091, 0.0
        %v10565 = vsel %vm7046, %v10094, 0.0
        %v10566 = vsel %vm7047, %v10099, 0.0
        %v10567 = vsel %vm7048, %v10102, 0.0
        %v10568 = vsel %vm7049, %v10107, 0.0
        %v10569 = vsel %vm7050, %v10110, 0.0
        %v10570 = vsel %vm7051, %v10115, 0.0
        %v10571 = vsel %vm7052, %v10118, 0.0
        %v10572 = vsel %vm7053, %v10123, 0.0
        %v10573 = vsel %vm7054, %v10126, 0.0
        %v10574 = vsel %vm7055, %v10131, 0.0
        %v10575 = vsel %vm7056, %v10134, 0.0
        %v10576 = vsel %vm7057, %v10139, 0.0
        %v10577 = vsel %vm7058, %v10142, 0.0
        %v10578 = vsel %vm7059, %v10147, 0.0
        %v10579 = vsel %vm7060, %v10150, 0.0
        %v10580 = vsel %vm7205, %v10544, 0.0
        %v10581 = vsel %vm7205, %v10545, 0.0
        %v10582 = vadd.f32 %v10580, %v10581
        %v10583 = vsel %vm7205, %v10546, 0.0
        %v10584 = vadd.f32 %v10582, %v10583
        %v10585 = vsel %vm7205, %v10547, 0.0
        %v10586 = vadd.f32 %v10584, %v10585
        %v10587 = vsel %vm7205, %v10548, 0.0
        %v10588 = vadd.f32 %v10586, %v10587
        %v10589 = vsel %vm7205, %v10549, 0.0
        %v10590 = vadd.f32 %v10588, %v10589
        %v10591 = vsel %vm7205, %v10550, 0.0
        %v10592 = vadd.f32 %v10590, %v10591
        %v10593 = vsel %vm7205, %v10551, 0.0
        %v10594 = vadd.f32 %v10592, %v10593
        %v10595 = vsel %vm7205, %v10552, 0.0
        %v10596 = vadd.f32 %v10594, %v10595
        %v10597 = vsel %vm7205, %v10553, 0.0
        %v10598 = vadd.f32 %v10596, %v10597
        %v10599 = vsel %vm7205, %v10554, 0.0
        %v10600 = vadd.f32 %v10598, %v10599
        %v10601 = vsel %vm7205, %v10555, 0.0
        %v10602 = vadd.f32 %v10600, %v10601
        %v10603 = vsel %vm7205, %v10556, 0.0
        %v10604 = vadd.f32 %v10602, %v10603
        %v10605 = vsel %vm7205, %v10557, 0.0
        %v10606 = vadd.f32 %v10604, %v10605
        %v10607 = vsel %vm7205, %v10558, 0.0
        %v10608 = vadd.f32 %v10606, %v10607
        %v10609 = vsel %vm7205, %v10559, 0.0
        %v10610 = vadd.f32 %v10608, %v10609
        %v10611 = vsel %vm7205, %v10560, 0.0
        %v10612 = vadd.f32 %v10610, %v10611
        %v10613 = vsel %vm7205, %v10561, 0.0
        %v10614 = vadd.f32 %v10612, %v10613
        %v10615 = vsel %vm7205, %v10562, 0.0
        %v10616 = vadd.f32 %v10614, %v10615
        %v10617 = vsel %vm7205, %v10563, 0.0
        %v10618 = vadd.f32 %v10616, %v10617
        %v10619 = vsel %vm7205, %v10564, 0.0
        %v10620 = vadd.f32 %v10618, %v10619
        %v10621 = vsel %vm7205, %v10565, 0.0
        %v10622 = vadd.f32 %v10620, %v10621
        %v10623 = vsel %vm7205, %v10566, 0.0
        %v10624 = vadd.f32 %v10622, %v10623
        %v10625 = vsel %vm7205, %v10567, 0.0
        %v10626 = vadd.f32 %v10624, %v10625
        %v10627 = vsel %vm7205, %v10568, 0.0
        %v10628 = vadd.f32 %v10626, %v10627
        %v10629 = vsel %vm7205, %v10569, 0.0
        %v10630 = vadd.f32 %v10628, %v10629
        %v10631 = vsel %vm7205, %v10570, 0.0
        %v10632 = vadd.f32 %v10630, %v10631
        %v10633 = vsel %vm7205, %v10571, 0.0
        %v10634 = vadd.f32 %v10632, %v10633
        %v10635 = vsel %vm7205, %v10572, 0.0
        %v10636 = vadd.f32 %v10634, %v10635
        %v10637 = vsel %vm7205, %v10573, 0.0
        %v10638 = vadd.f32 %v10636, %v10637
        %v10639 = vsel %vm7205, %v10574, 0.0
        %v10640 = vadd.f32 %v10638, %v10639
        %v10641 = vsel %vm7205, %v10575, 0.0
        %v10642 = vadd.f32 %v10640, %v10641
        %v10643 = vsel %vm7205, %v10576, 0.0
        %v10644 = vadd.f32 %v10642, %v10643
        %v10645 = vsel %vm7205, %v10577, 0.0
        %v10646 = vadd.f32 %v10644, %v10645
        %v10647 = vsel %vm7205, %v10578, 0.0
        %v10648 = vadd.f32 %v10646, %v10647
        %v10649 = vsel %vm7205, %v10579, 0.0
        %v10650 = vadd.f32 %v10648, %v10649
        %v10651 = vrot.slane %v10650, 4
        %v10652 = vadd.f32 %v10650, %v10651
        %v10653 = vrot.slane %v10652, 2
        %v10654 = vadd.f32 %v10652, %v10653
        %v10655 = vrot.slane %v10654, 1
        %v10656 = vadd.f32 %v10654, %v10655
        %v10657 = vmul.f32 %v10544, %v10544
        %v10658 = vmul.f32 %v10545, %v10545
        %v10659 = vmul.f32 %v10546, %v10546
        %v10660 = vmul.f32 %v10547, %v10547
        %v10661 = vmul.f32 %v10548, %v10548
        %v10662 = vmul.f32 %v10549, %v10549
        %v10663 = vmul.f32 %v10550, %v10550
        %v10664 = vmul.f32 %v10551, %v10551
        %v10665 = vmul.f32 %v10552, %v10552
        %v10666 = vmul.f32 %v10553, %v10553
        %v10667 = vmul.f32 %v10554, %v10554
        %v10668 = vmul.f32 %v10555, %v10555
        %v10669 = vmul.f32 %v10556, %v10556
        %v10670 = vmul.f32 %v10557, %v10557
        %v10671 = vmul.f32 %v10558, %v10558
        %v10672 = vmul.f32 %v10559, %v10559
        %v10673 = vmul.f32 %v10560, %v10560
        %v10674 = vmul.f32 %v10561, %v10561
        %v10675 = vmul.f32 %v10562, %v10562
        %v10676 = vmul.f32 %v10563, %v10563
        %v10677 = vmul.f32 %v10564, %v10564
        %v10678 = vmul.f32 %v10565, %v10565
        %v10679 = vmul.f32 %v10566, %v10566
        %v10680 = vmul.f32 %v10567, %v10567
        %v10681 = vmul.f32 %v10568, %v10568
        %v10682 = vmul.f32 %v10569, %v10569
        %v10683 = vmul.f32 %v10570, %v10570
        %v10684 = vmul.f32 %v10571, %v10571
        %v10685 = vmul.f32 %v10572, %v10572
        %v10686 = vmul.f32 %v10573, %v10573
        %v10687 = vmul.f32 %v10574, %v10574
        %v10688 = vmul.f32 %v10575, %v10575
        %v10689 = vmul.f32 %v10576, %v10576
        %v10690 = vmul.f32 %v10577, %v10577
        %v10691 = vmul.f32 %v10578, %v10578
        %v10692 = vmul.f32 %v10579, %v10579
        %v10693 = vsel %vm7205, %v10657, 0.0
        %v10694 = vsel %vm7205, %v10658, 0.0
        %v10695 = vadd.f32 %v10693, %v10694
        %v10696 = vsel %vm7205, %v10659, 0.0
        %v10697 = vadd.f32 %v10695, %v10696
        %v10698 = vsel %vm7205, %v10660, 0.0
        %v10699 = vadd.f32 %v10697, %v10698
        %v10700 = vsel %vm7205, %v10661, 0.0
        %v10701 = vadd.f32 %v10699, %v10700
        %v10702 = vsel %vm7205, %v10662, 0.0
        %v10703 = vadd.f32 %v10701, %v10702
        %v10704 = vsel %vm7205, %v10663, 0.0
        %v10705 = vadd.f32 %v10703, %v10704
        %v10706 = vsel %vm7205, %v10664, 0.0
        %v10707 = vadd.f32 %v10705, %v10706
        %v10708 = vsel %vm7205, %v10665, 0.0
        %v10709 = vadd.f32 %v10707, %v10708
        %v10710 = vsel %vm7205, %v10666, 0.0
        %v10711 = vadd.f32 %v10709, %v10710
        %v10712 = vsel %vm7205, %v10667, 0.0
        %v10713 = vadd.f32 %v10711, %v10712
        %v10714 = vsel %vm7205, %v10668, 0.0
        %v10715 = vadd.f32 %v10713, %v10714
        %v10716 = vsel %vm7205, %v10669, 0.0
        %v10717 = vadd.f32 %v10715, %v10716
        %v10718 = vsel %vm7205, %v10670, 0.0
        %v10719 = vadd.f32 %v10717, %v10718
        %v10720 = vsel %vm7205, %v10671, 0.0
        %v10721 = vadd.f32 %v10719, %v10720
        %v10722 = vsel %vm7205, %v10672, 0.0
        %v10723 = vadd.f32 %v10721, %v10722
        %v10724 = vsel %vm7205, %v10673, 0.0
        %v10725 = vadd.f32 %v10723, %v10724
        %v10726 = vsel %vm7205, %v10674, 0.0
        %v10727 = vadd.f32 %v10725, %v10726
        %v10728 = vsel %vm7205, %v10675, 0.0
        %v10729 = vadd.f32 %v10727, %v10728
        %v10730 = vsel %vm7205, %v10676, 0.0
        %v10731 = vadd.f32 %v10729, %v10730
        %v10732 = vsel %vm7205, %v10677, 0.0
        %v10733 = vadd.f32 %v10731, %v10732
        %v10734 = vsel %vm7205, %v10678, 0.0
        %v10735 = vadd.f32 %v10733, %v10734
        %v10736 = vsel %vm7205, %v10679, 0.0
        %v10737 = vadd.f32 %v10735, %v10736
        %v10738 = vsel %vm7205, %v10680, 0.0
        %v10739 = vadd.f32 %v10737, %v10738
        %v10740 = vsel %vm7205, %v10681, 0.0
        %v10741 = vadd.f32 %v10739, %v10740
        %v10742 = vsel %vm7205, %v10682, 0.0
        %v10743 = vadd.f32 %v10741, %v10742
        %v10744 = vsel %vm7205, %v10683, 0.0
        %v10745 = vadd.f32 %v10743, %v10744
        %v10746 = vsel %vm7205, %v10684, 0.0
        %v10747 = vadd.f32 %v10745, %v10746
        %v10748 = vsel %vm7205, %v10685, 0.0
        %v10749 = vadd.f32 %v10747, %v10748
        %v10750 = vsel %vm7205, %v10686, 0.0
        %v10751 = vadd.f32 %v10749, %v10750
        %v10752 = vsel %vm7205, %v10687, 0.0
        %v10753 = vadd.f32 %v10751, %v10752
        %v10754 = vsel %vm7205, %v10688, 0.0
        %v10755 = vadd.f32 %v10753, %v10754
        %v10756 = vsel %vm7205, %v10689, 0.0
        %v10757 = vadd.f32 %v10755, %v10756
        %v10758 = vsel %vm7205, %v10690, 0.0
        %v10759 = vadd.f32 %v10757, %v10758
        %v10760 = vsel %vm7205, %v10691, 0.0
        %v10761 = vadd.f32 %v10759, %v10760
        %v10762 = vsel %vm7205, %v10692, 0.0
        %v10763 = vadd.f32 %v10761, %v10762
        %v10764 = vrot.slane %v10763, 4
        %v10765 = vadd.f32 %v10763, %v10764
        %v10766 = vrot.slane %v10765, 2
        %v10767 = vadd.f32 %v10765, %v10766
        %v10768 = vrot.slane %v10767, 1
        %v10769 = vadd.f32 %v10767, %v10768
        %v10770 = vmul.f32 %v10656, 0.00390625
        %v10771 = vmul.f32 %v10769, 0.00390625
        %v10772 = vmul.f32 %v10770, %v10770
        %v10773 = vsub.f32 %v10771, %v10772
        %v10774 = vmax.f32 %v10773, 0.0
        %v10775 = vsub.f32 %v10011, %v10770
        %v10776 = vsub.f32 %v10014, %v10770
        %v10777 = vsub.f32 %v10019, %v10770
        %v10778 = vsub.f32 %v10022, %v10770
        %v10779 = vsub.f32 %v10027, %v10770
        %v10780 = vsub.f32 %v10030, %v10770
        %v10781 = vsub.f32 %v10035, %v10770
        %v10782 = vsub.f32 %v10038, %v10770
        %v10783 = vsub.f32 %v10043, %v10770
        %v10784 = vsub.f32 %v10046, %v10770
        %v10785 = vsub.f32 %v10051, %v10770
        %v10786 = vsub.f32 %v10054, %v10770
        %v10787 = vsub.f32 %v10059, %v10770
        %v10788 = vsub.f32 %v10062, %v10770
        %v10789 = vsub.f32 %v10067, %v10770
        %v10790 = vsub.f32 %v10070, %v10770
        %v10791 = vsub.f32 %v10075, %v10770
        %v10792 = vsub.f32 %v10078, %v10770
        %v10793 = vsub.f32 %v10083, %v10770
        %v10794 = vsub.f32 %v10086, %v10770
        %v10795 = vsub.f32 %v10091, %v10770
        %v10796 = vsub.f32 %v10094, %v10770
        %v10797 = vsub.f32 %v10099, %v10770
        %v10798 = vsub.f32 %v10102, %v10770
        %v10799 = vsub.f32 %v10107, %v10770
        %v10800 = vsub.f32 %v10110, %v10770
        %v10801 = vsub.f32 %v10115, %v10770
        %v10802 = vsub.f32 %v10118, %v10770
        %v10803 = vsub.f32 %v10123, %v10770
        %v10804 = vsub.f32 %v10126, %v10770
        %v10805 = vsub.f32 %v10131, %v10770
        %v10806 = vsub.f32 %v10134, %v10770
        %v10807 = vsub.f32 %v10139, %v10770
        %v10808 = vsub.f32 %v10142, %v10770
        %v10809 = vsub.f32 %v10147, %v10770
        %v10810 = vsub.f32 %v10150, %v10770
        %v10811 = vadd.f32 %v10774, 1e-05
        %v10812 = vrsqrt.pop %v10811
        %v10813 = vmul.f32 %v10775, %v10812
        %v10814 = vmul.f32 %v10776, %v10812
        %v10815 = vmul.f32 %v10777, %v10812
        %v10816 = vmul.f32 %v10778, %v10812
        %v10817 = vmul.f32 %v10779, %v10812
        %v10818 = vmul.f32 %v10780, %v10812
        %v10819 = vmul.f32 %v10781, %v10812
        %v10820 = vmul.f32 %v10782, %v10812
        %v10821 = vmul.f32 %v10783, %v10812
        %v10822 = vmul.f32 %v10784, %v10812
        %v10823 = vmul.f32 %v10785, %v10812
        %v10824 = vmul.f32 %v10786, %v10812
        %v10825 = vmul.f32 %v10787, %v10812
        %v10826 = vmul.f32 %v10788, %v10812
        %v10827 = vmul.f32 %v10789, %v10812
        %v10828 = vmul.f32 %v10790, %v10812
        %v10829 = vmul.f32 %v10791, %v10812
        %v10830 = vmul.f32 %v10792, %v10812
        %v10831 = vmul.f32 %v10793, %v10812
        %v10832 = vmul.f32 %v10794, %v10812
        %v10833 = vmul.f32 %v10795, %v10812
        %v10834 = vmul.f32 %v10796, %v10812
        %v10835 = vmul.f32 %v10797, %v10812
        %v10836 = vmul.f32 %v10798, %v10812
        %v10837 = vmul.f32 %v10799, %v10812
        %v10838 = vmul.f32 %v10800, %v10812
        %v10839 = vmul.f32 %v10801, %v10812
        %v10840 = vmul.f32 %v10802, %v10812
        %v10841 = vmul.f32 %v10803, %v10812
        %v10842 = vmul.f32 %v10804, %v10812
        %v10843 = vmul.f32 %v10805, %v10812
        %v10844 = vmul.f32 %v10806, %v10812
        %v10845 = vmul.f32 %v10807, %v10812
        %v10846 = vmul.f32 %v10808, %v10812
        %v10847 = vmul.f32 %v10809, %v10812
        %v10848 = vmul.f32 %v10810, %v10812
        %v10849 = vmax.f32 %v10813, 0.0
        %v10850 = vmax.f32 %v10814, 0.0
        %v10851 = vmax.f32 %v10815, 0.0
        %v10852 = vmax.f32 %v10816, 0.0
        %v10853 = vmax.f32 %v10817, 0.0
        %v10854 = vmax.f32 %v10818, 0.0
        %v10855 = vmax.f32 %v10819, 0.0
        %v10856 = vmax.f32 %v10820, 0.0
        %v10857 = vmax.f32 %v10821, 0.0
        %v10858 = vmax.f32 %v10822, 0.0
        %v10859 = vmax.f32 %v10823, 0.0
        %v10860 = vmax.f32 %v10824, 0.0
        %v10861 = vmax.f32 %v10825, 0.0
        %v10862 = vmax.f32 %v10826, 0.0
        %v10863 = vmax.f32 %v10827, 0.0
        %v10864 = vmax.f32 %v10828, 0.0
        %v10865 = vmax.f32 %v10829, 0.0
        %v10866 = vmax.f32 %v10830, 0.0
        %v10867 = vmax.f32 %v10831, 0.0
        %v10868 = vmax.f32 %v10832, 0.0
        %v10869 = vmax.f32 %v10833, 0.0
        %v10870 = vmax.f32 %v10834, 0.0
        %v10871 = vmax.f32 %v10835, 0.0
        %v10872 = vmax.f32 %v10836, 0.0
        %v10873 = vmax.f32 %v10837, 0.0
        %v10874 = vmax.f32 %v10838, 0.0
        %v10875 = vmax.f32 %v10839, 0.0
        %v10876 = vmax.f32 %v10840, 0.0
        %v10877 = vmax.f32 %v10841, 0.0
        %v10878 = vmax.f32 %v10842, 0.0
        %v10879 = vmax.f32 %v10843, 0.0
        %v10880 = vmax.f32 %v10844, 0.0
        %v10881 = vmax.f32 %v10845, 0.0
        %v10882 = vmax.f32 %v10846, 0.0
        %v10883 = vmax.f32 %v10847, 0.0
        %v10884 = vmax.f32 %v10848, 0.0
        %s10885 = scalar_lea.vmem %s166, 256 [#allocation4]
        %10886 = vst.msk [vmem:[%s10885] sm:$0xff] %vm7205, %v10849
        %10887 = vst.msk [vmem:[%s10885 + $0x8] sm:$0xff] %vm7205, %v10850
        %10888 = vst.msk [vmem:[%s10885 + $0xe] sm:$0xfc] %vm10496, %v10851
        %10889 = vst.msk [vmem:[%s10885 + $0x16] sm:$0xff] %vm7205, %v10852
        %10890 = vst.msk [vmem:[%s10885 + $0x1e] sm:$0x3] %vm10499, %v10853
        %10891 = vst.msk [vmem:[%s10885 + $0x1c] sm:$0xf0] %vm10501, %v10853
        %10892 = vst.msk [vmem:[%s10885 + $0x24] sm:$0xff] %vm7205, %v10854
        %10893 = vst.msk [vmem:[%s10885 + $0x2c] sm:$0xf] %vm10504, %v10855
        %10894 = vst.msk [vmem:[%s10885 + $0x2a] sm:$0xc0] %vm10506, %v10855
        %10895 = vst.msk [vmem:[%s10885 + $0x32] sm:$0xff] %vm7205, %v10856
        %10896 = vst.msk [vmem:[%s10885 + $0x3a] sm:$0x3f] %vm10509, %v10857
        %10897 = vst.msk [vmem:[%s10885 + $0x40] sm:$0xff] %vm7205, %v10858
        %10898 = vst.msk [vmem:[%s10885 + $0x48] sm:$0xff] %vm7205, %v10859
        %10899 = vst.msk [vmem:[%s10885 + $0x4e] sm:$0xfc] %vm10496, %v10860
        %10900 = vst.msk [vmem:[%s10885 + $0x56] sm:$0xff] %vm7205, %v10861
        %10901 = vst.msk [vmem:[%s10885 + $0x5e] sm:$0x3] %vm10499, %v10862
        %10902 = vst.msk [vmem:[%s10885 + $0x5c] sm:$0xf0] %vm10501, %v10862
        %10903 = vst.msk [vmem:[%s10885 + $0x64] sm:$0xff] %vm7205, %v10863
        %10904 = vst.msk [vmem:[%s10885 + $0x6c] sm:$0xf] %vm10504, %v10864
        %10905 = vst.msk [vmem:[%s10885 + $0x6a] sm:$0xc0] %vm10506, %v10864
        %10906 = vst.msk [vmem:[%s10885 + $0x72] sm:$0xff] %vm7205, %v10865
        %10907 = vst.msk [vmem:[%s10885 + $0x7a] sm:$0x3f] %vm10509, %v10866
        %10908 = vst.msk [vmem:[%s10885 + $0x80] sm:$0xff] %vm7205, %v10867
        %10909 = vst.msk [vmem:[%s10885 + $0x88] sm:$0xff] %vm7205, %v10868
        %10910 = vst.msk [vmem:[%s10885 + $0x8e] sm:$0xfc] %vm10496, %v10869
        %10911 = vst.msk [vmem:[%s10885 + $0x96] sm:$0xff] %vm7205, %v10870
        %10912 = vst.msk [vmem:[%s10885 + $0x9e] sm:$0x3] %vm10499, %v10871
        %10913 = vst.msk [vmem:[%s10885 + $0x9c] sm:$0xf0] %vm10501, %v10871
        %10914 = vst.msk [vmem:[%s10885 + $0xa4] sm:$0xff] %vm7205, %v10872
        %10915 = vst.msk [vmem:[%s10885 + $0xac] sm:$0xf] %vm10504, %v10873
        %10916 = vst.msk [vmem:[%s10885 + $0xaa] sm:$0xc0] %vm10506, %v10873
        %10917 = vst.msk [vmem:[%s10885 + $0xb2] sm:$0xff] %vm7205, %v10874
        %10918 = vst.msk [vmem:[%s10885 + $0xba] sm:$0x3f] %vm10509, %v10875
        %10919 = vst.msk [vmem:[%s10885 + $0xc0] sm:$0xff] %vm7205, %v10876
        %10920 = vst.msk [vmem:[%s10885 + $0xc8] sm:$0xff] %vm7205, %v10877
        %10921 = vst.msk [vmem:[%s10885 + $0xce] sm:$0xfc] %vm10496, %v10878
        %10922 = vst.msk [vmem:[%s10885 + $0xd6] sm:$0xff] %vm7205, %v10879
        %10923 = vst.msk [vmem:[%s10885 + $0xde] sm:$0x3] %vm10499, %v10880
        %10924 = vst.msk [vmem:[%s10885 + $0xdc] sm:$0xf0] %vm10501, %v10880
        %10925 = vst.msk [vmem:[%s10885 + $0xe4] sm:$0xff] %vm7205, %v10881
        %10926 = vst.msk [vmem:[%s10885 + $0xec] sm:$0xf] %vm10504, %v10882
        %10927 = vst.msk [vmem:[%s10885 + $0xea] sm:$0xc0] %vm10506, %v10882
        %10928 = vst.msk [vmem:[%s10885 + $0xf2] sm:$0xff] %vm7205, %v10883
        %10929 = vst.msk [vmem:[%s10885 + $0xfa] sm:$0x3f] %vm10509, %v10884
        %s10930 = sand.u32 %s93, 1
        %s10931 = scalar_lea.sflag [#allocation5], %s10930
        %s10932 = sand.u32 %s93, 1
        %s10933 = smul.addr %s10932, 512
        %s10934 = scalar_lea.vmem [#allocation4], %s10933
        // Predicated region
        $region33: #{block_forward.1} parent=31 // pred_check
          %p10935 = pneg %p103
        $region34: #{block_forward.1} parent=31 // pred_check_branch
          %10937 = sbr.rel (%p10935) target = $region36
        $region35: #{block_forward.1} parent=31 // pred_region
          %s10938 = smul.u32 2, %s17
          %s10940 = ssub.s32 8192, 8192
          %10941 = vsyncadd %s10931, %s10940
          %s10942 = smul.addr %s10938, 32
          %s10943 = smul.addr %s10942, 128
          %s10944 = scalar_lea.hbm %s3, %s10943
          %s10945 = sshll.u32 %s10934, 4
          %s10946 = int_to_ptr.vmem [resolvable:$true] %s10945
          %10951 = dma.vmem_to_hbm [thread:$0]  %s10946, 8192, %s10944, %s10931, 128, 128, 8
        $region36: #{block_forward.1} parent=31 // pred_fallthru
          _
      $region32: #{block_forward.1} parent=5 // pred_fallthru
        _
      %p10952 = scmp.le.s32.totalorder 2, %s12
      // Predicated region
      $region37: #{block_forward.1} parent=5 // pred_check
        %p10953 = pneg %p10952
      $region38: #{block_forward.1} parent=5 // pred_check_branch
        %10955 = sbr.rel (%p10953) target = $region40
      $region39: #{block_forward.1} parent=5 // pred_region
        %s10956 = ssub.s32 %s12, 2
        // Predicated region
        $region41: #{block_forward.1} parent=39 // pred_check
          %p10957 = pneg %p109
        $region42: #{block_forward.1} parent=39 // pred_check_branch
          %10959 = sbr.rel (%p10957) target = $region44
        $region43: #{block_forward.1} parent=39 // pred_region
          %s10960 = sand.u32 %s94, 1
          %s10961 = scalar_lea.sflag [#allocation5], %s10960
          %s10962 = sand.u32 %s94, 1
          %s10963 = smul.addr %s10962, 512
          %s10964 = scalar_lea.vmem [#allocation4], %s10963
          %10965 = dma.done %s10961, 8192
        $region44: #{block_forward.1} parent=39 // pred_fallthru
          _
      $region40: #{block_forward.1} parent=5 // pred_fallthru
        _
    $region6: #{block_forward.1} parent=1 // loop_footer
      %s16 = sadd.s32 1, %s12
    $region7: #{block_forward.1} parent=1 // loop_footer_branch
      %11 = sbr.rel target = $region3
    $region8: #{block_forward.1} parent=1 // loop_exit
      _
    %10966 = vsyncpa [#allocation5], 1
    %s10967 = scalar_lea.sflag [#allocation5], 1
    %10968 = vsyncpa %s10967, 1

</llo_original>
